<compile_context>
chip_gen: v7x
topology: tpu7x:2x2x1
jax: 0.10.0
libtpu: 0.0.40
codegen_flags: <defaults>
</compile_context>

<pallas_src>
import functools

import jax
import jax.numpy as jnp
from jax.experimental import pallas as pl
from jax.experimental.pallas import tpu as pltpu


# ----------------------------------------------------------------------------
# Hyperparameters (small, consistent with the module's __init__)
# ----------------------------------------------------------------------------
B = 2
FEAT_DIMS = 8          # mel channels
T_MEL = 8              # mel frames
PAD = 2
UPSAMPLE_FACTORS = (2, 2)
TOTAL_SCALE = 1
for _s in UPSAMPLE_FACTORS:
    TOTAL_SCALE *= _s                      # 4
HOP_LENGTH = TOTAL_SCALE
COMPUTE_DIMS = 16
RES_OUT_DIMS = 16
RES_BLOCKS = 2
RNN_DIMS = 32
FC_DIMS = 32
BITS = 4
N_CLASSES = 2 ** BITS                      # mode == 'RAW'
AUX_DIMS = RES_OUT_DIMS // 4               # 4
T_OUT = (T_MEL - 2 * PAD) * TOTAL_SCALE    # 16  (audio length expected by forward)

# Column layout of the packed input slab: [x(1) | mels(F) | a1 | a2 | a3 | a4]
SLAB_DIM = 1 + FEAT_DIMS + 4 * AUX_DIMS    # 25
OFF_A2 = 1 + FEAT_DIMS + AUX_DIMS          # 13
OFF_A3 = OFF_A2 + AUX_DIMS                 # 17
OFF_A4 = OFF_A3 + AUX_DIMS                 # 21


# ----------------------------------------------------------------------------
# Helpers for full-array BlockSpecs (grid=(1,), whole arrays resident in VMEM)
# ----------------------------------------------------------------------------
def _full_block_specs(arrays):
    specs = []
    for a in arrays:
        zeros = (0,) * a.ndim
        specs.append(pl.BlockSpec(a.shape, lambda i, _z=zeros: _z))
    return specs


# ----------------------------------------------------------------------------
# Fused MelResNet kernel: conv_in + BN + ReLU + res-blocks + conv_out
# Operates on the im2col'd slab (B*L, Cin*k); BN batch stats computed in-kernel
# over the full slab (matches PyTorch training-mode BatchNorm1d).
# ----------------------------------------------------------------------------
def _melresnet_kernel(cols_ref, win_ref, bng_ref, bnb_ref,
                      c1_ref, bn1g_ref, bn1b_ref,
                      c2_ref, bn2g_ref, bn2b_ref,
                      wout_ref, bout_ref, out_ref, *, n_blocks):
    f32 = jnp.float32

    def bn(v, g, b):
        mean = jnp.mean(v, axis=0, keepdims=True)
        var = jnp.mean(jnp.square(v - mean), axis=0, keepdims=True)
        return (v - mean) / jnp.sqrt(var + 1e-5) * g + b

    x = jnp.dot(cols_ref[...], win_ref[...], preferred_element_type=f32)
    x = jnp.maximum(bn(x, bng_ref[...], bnb_ref[...]), 0.0)
    for i in range(n_blocks):
        residual = x
        h = jnp.dot(x, c1_ref[i], preferred_element_type=f32)
        h = jnp.maximum(bn(h, bn1g_ref[i], bn1b_ref[i]), 0.0)
        h = jnp.dot(h, c2_ref[i], preferred_element_type=f32)
        h = bn(h, bn2g_ref[i], bn2b_ref[i])
        x = h + residual
    out_ref[...] = (jnp.dot(x, wout_ref[...], preferred_element_type=f32)
                    + bout_ref[...])


def melresnet_fused(cols, rp):
    f32 = jnp.float32
    C = COMPUTE_DIMS
    blocks = rp["res_blocks"]
    nb = len(blocks)
    c1 = jnp.stack([b["c1_w"][:, :, 0].T.astype(f32) for b in blocks])     # (nb,C,C)
    c2 = jnp.stack([b["c2_w"][:, :, 0].T.astype(f32) for b in blocks])
    bn1g = jnp.stack([b["bn1_g"].reshape(1, C).astype(f32) for b in blocks])
    bn1b = jnp.stack([b["bn1_b"].reshape(1, C).astype(f32) for b in blocks])
    bn2g = jnp.stack([b["bn2_g"].reshape(1, C).astype(f32) for b in blocks])
    bn2b = jnp.stack([b["bn2_b"].reshape(1, C).astype(f32) for b in blocks])

    args = [
        cols.astype(f32),
        rp["conv_in_w"].reshape(C, -1).T.astype(f32),       # (Cin*k, C)
        rp["bn_g"].reshape(1, C).astype(f32),
        rp["bn_b"].reshape(1, C).astype(f32),
        c1, bn1g, bn1b, c2, bn2g, bn2b,
        rp["conv_out_w"][:, :, 0].T.astype(f32),             # (C, R)
        rp["conv_out_b"].reshape(1, -1).astype(f32),
    ]
    M = cols.shape[0]
    return pl.pallas_call(
        functools.partial(_melresnet_kernel, n_blocks=nb),
        out_shape=jax.ShapeDtypeStruct((M, RES_OUT_DIMS), f32),
        grid=(1,),
        in_specs=_full_block_specs(args),
        out_specs=pl.BlockSpec((M, RES_OUT_DIMS), lambda i: (0, 0)),
        compiler_params=pltpu.CompilerParams(dimension_semantics=("arbitrary",)),
    )(*args)


# ----------------------------------------------------------------------------
# Fused sequence-model kernel: I -> GRU1 -> GRU2 -> fc1 -> fc2 -> fc3
# Data layout: one time-major slab (T*B, SLAB_DIM); row = t*B + b.
# ----------------------------------------------------------------------------
def _gru_time_loop(gx, whh, bhh, hseq_ref, Bsz, T, H):
    """gx: (T*B, 3H) precomputed input gates (time-major).  Writes h sequence
    into hseq_ref (T*B, H) and returns it.  Matches torch.nn.GRU gate math."""
    h = jnp.zeros((Bsz, H), jnp.float32)
    for t in range(T):                      # static unroll, T is small
        gx_t = gx[t * Bsz:(t + 1) * Bsz, :]
        gh = jnp.dot(h, whh, preferred_element_type=jnp.float32) + bhh
        r = jax.nn.sigmoid(gx_t[:, 0:H] + gh[:, 0:H])
        z = jax.nn.sigmoid(gx_t[:, H:2 * H] + gh[:, H:2 * H])
        n = jnp.tanh(gx_t[:, 2 * H:3 * H] + r * gh[:, 2 * H:3 * H])
        h = (1.0 - z) * n + z * h
        hseq_ref[t * Bsz:(t + 1) * Bsz, :] = h
    return hseq_ref[...]


def _wavernn_seq_kernel(slab_ref, iw_ref, ib_ref,
                        r1_wih_ref, r1_whh_ref, r1_bih_ref, r1_bhh_ref,
                        r2_wih_ref, r2_wia_ref, r2_whh_ref, r2_bih_ref, r2_bhh_ref,
                        fc1_wh_ref, fc1_wa_ref, fc1_b_ref,
                        fc2_wh_ref, fc2_wa_ref, fc2_b_ref,
                        fc3_w_ref, fc3_b_ref,
                        out_ref, h1seq_ref, h2seq_ref, *, Bsz, T, H):
    f32 = jnp.float32
    slab = slab_ref[...]                                        # (T*B, SLAB_DIM)

    # Input layer I.  iw is zero-padded to SLAB_DIM rows so the whole slab is
    # the operand (the zero rows kill the a2/a3/a4 columns).
    x = jnp.dot(slab, iw_ref[...], preferred_element_type=f32) + ib_ref[...]

    # --- GRU 1 (+ residual) ---
    res = x
    gx1 = jnp.dot(x, r1_wih_ref[...], preferred_element_type=f32) + r1_bih_ref[...]
    h1 = _gru_time_loop(gx1, r1_whh_ref[...], r1_bhh_ref[...], h1seq_ref, Bsz, T, H)
    x = h1 + res

    # --- GRU 2 on [x, a2] (+ residual); a2 term via zero-padded slab weight ---
    res = x
    gx2 = (jnp.dot(x, r2_wih_ref[...], preferred_element_type=f32)
           + jnp.dot(slab, r2_wia_ref[...], preferred_element_type=f32)
           + r2_bih_ref[...])
    h2 = _gru_time_loop(gx2, r2_whh_ref[...], r2_bhh_ref[...], h2seq_ref, Bsz, T, H)
    x = h2 + res

    # --- fc1 on [x, a3], fc2 on [x, a4], fc3 ---
    x = jnp.maximum(jnp.dot(x, fc1_wh_ref[...], preferred_element_type=f32)
                    + jnp.dot(slab, fc1_wa_ref[...], preferred_element_type=f32)
                    + fc1_b_ref[...], 0.0)
    x = jnp.maximum(jnp.dot(x, fc2_wh_ref[...], preferred_element_type=f32)
                    + jnp.dot(slab, fc2_wa_ref[...], preferred_element_type=f32)
                    + fc2_b_ref[...], 0.0)
    out_ref[...] = (jnp.dot(x, fc3_w_ref[...], preferred_element_type=f32)
                    + fc3_b_ref[...])


def wavernn_seq_fused(slab_tm, p, Bsz, T):
    f32 = jnp.float32
    H = RNN_DIMS
    TB, Din = slab_tm.shape

    def pad_rows(w, offset):
        out = jnp.zeros((Din, w.shape[1]), f32)
        return out.at[offset:offset + w.shape[0]].set(w.astype(f32))

    r2_wih_t = p["rnn2_wih"].T.astype(f32)        # (H + d, 3H)
    fc1_wt = p["fc1_w"].T.astype(f32)             # (H + d, FC)
    fc2_wt = p["fc2_w"].T.astype(f32)             # (FC + d, FC)

    args = [
        slab_tm.astype(f32),
        pad_rows(p["I_w"].T, 0),                                   # iw (Din, H)
        p["I_b"].reshape(1, -1).astype(f32),
        p["rnn1_wih"].T.astype(f32), p["rnn1_whh"].T.astype(f32),
        p["rnn1_bih"].reshape(1, -1).astype(f32),
        p["rnn1_bhh"].reshape(1, -1).astype(f32),
        r2_wih_t[:H], pad_rows(r2_wih_t[H:], OFF_A2),
        p["rnn2_whh"].T.astype(f32),
        p["rnn2_bih"].reshape(1, -1).astype(f32),
        p["rnn2_bhh"].reshape(1, -1).astype(f32),
        fc1_wt[:H], pad_rows(fc1_wt[H:], OFF_A3),
        p["fc1_b"].reshape(1, -1).astype(f32),
        fc2_wt[:FC_DIMS], pad_rows(fc2_wt[FC_DIMS:], OFF_A4),
        p["fc2_b"].reshape(1, -1).astype(f32),
        p["fc3_w"].T.astype(f32), p["fc3_b"].reshape(1, -1).astype(f32),
    ]

    kernel = functools.partial(_wavernn_seq_kernel, Bsz=Bsz, T=T, H=H)
    return pl.pallas_call(
        kernel,
        out_shape=jax.ShapeDtypeStruct((TB, N_CLASSES), f32),
        grid=(1,),
        in_specs=_full_block_specs(args),
        out_specs=pl.BlockSpec((TB, N_CLASSES), lambda i: (0, 0)),
        scratch_shapes=[pltpu.VMEM((TB, H), f32),
                        pltpu.VMEM((TB, H), f32)],
        compiler_params=pltpu.CompilerParams(dimension_semantics=("arbitrary",)),
    )(*args)


# ----------------------------------------------------------------------------
# Upsample network (Pallas MelResNet + thin JAX layout glue)
# ----------------------------------------------------------------------------
def box_filter_width(x, s):
    """Fixed-weight Conv2d(1,1,(1,2s+1),padding=(0,s)) with weights 1/(2s+1)."""
    k = 2 * s + 1
    W = x.shape[-1]
    xp = jnp.pad(x, ((0, 0), (0, 0), (s, s)))
    out = xp[:, :, 0:W]
    for i in range(1, k):
        out = out + xp[:, :, i:i + W]
    return out / float(k)


def upsample_network(mels, p):
    Bsz, F, Tm = mels.shape
    k = 2 * PAD + 1
    L = Tm - 2 * PAD
    # im2col for the width-k valid conv (layout plumbing stays in JAX)
    cols = jnp.stack([mels[:, :, i:i + L] for i in range(k)], axis=2)   # (B,F,k,L)
    cols = cols.transpose(0, 3, 1, 2).reshape(Bsz * L, F * k)           # rows=(b,t)
    aux = melresnet_fused(cols, p["resnet"]).reshape(Bsz, L, RES_OUT_DIMS)
    aux = jnp.repeat(aux, TOTAL_SCALE, axis=1)                          # Stretch2d

    m = mels
    for s in UPSAMPLE_FACTORS:
        m = jnp.repeat(m, s, axis=-1)                                   # Stretch2d
        m = box_filter_width(m, s)                                      # fixed conv
    indent = PAD * TOTAL_SCALE
    m = m[:, :, indent:-indent]
    return m.transpose(0, 2, 1), aux                                    # (B,T,F),(B,T,R)


def wavernn_forward(x, mels, p):
    """x: (B, T_out) audio, mels: (B, feat_dims, T_mel) -> (B, T_out, n_classes)."""
    mels_up, aux = upsample_network(mels, p["upsample"])
    Bsz, T, _ = mels_up.shape
    # Single packed slab: [x | mels | a1 | a2 | a3 | a4], time-major rows.
    slab = jnp.concatenate([x[:, :, None].astype(jnp.float32), mels_up, aux], axis=2)
    slab_tm = slab.transpose(1, 0, 2).reshape(T * Bsz, SLAB_DIM)
    out_tm = wavernn_seq_fused(slab_tm, p, Bsz, T)                      # (T*B, nc)
    return out_tm.reshape(T, Bsz, N_CLASSES).transpose(1, 0, 2)


# ----------------------------------------------------------------------------
# Deterministic parameter initialization (shapes from the module's __init__)
# ----------------------------------------------------------------------------
def init_params(key):
    def nxt():
        nonlocal key
        key, sub = jax.random.split(key)
        return sub

    def randn(shape, scale=0.1):
        return (scale * jax.random.normal(nxt(), shape)).astype(jnp.float32)

    k_size = 2 * PAD + 1
    resnet = {
        "conv_in_w": randn((COMPUTE_DIMS, FEAT_DIMS, k_size)),
        "bn_g": jnp.ones((COMPUTE_DIMS,), jnp.float32),
        "bn_b": jnp.zeros((COMPUTE_DIMS,), jnp.float32),
        "res_blocks": [],
        "conv_out_w": randn((RES_OUT_DIMS, COMPUTE_DIMS, 1)),
        "conv_out_b": randn((RES_OUT_DIMS,)),
    }
    for _ in range(RES_BLOCKS):
        resnet["res_blocks"].append({
            "c1_w": randn((COMPUTE_DIMS, COMPUTE_DIMS, 1)),
            "bn1_g": jnp.ones((COMPUTE_DIMS,), jnp.float32),
            "bn1_b": jnp.zeros((COMPUTE_DIMS,), jnp.float32),
            "c2_w": randn((COMPUTE_DIMS, COMPUTE_DIMS, 1)),
            "bn2_g": jnp.ones((COMPUTE_DIMS,), jnp.float32),
            "bn2_b": jnp.zeros((COMPUTE_DIMS,), jnp.float32),
        })

    in_i = FEAT_DIMS + AUX_DIMS + 1
    params = {
        "upsample": {"resnet": resnet},
        "I_w": randn((RNN_DIMS, in_i)), "I_b": randn((RNN_DIMS,)),
        "rnn1_wih": randn((3 * RNN_DIMS, RNN_DIMS)),
        "rnn1_whh": randn((3 * RNN_DIMS, RNN_DIMS)),
        "rnn1_bih": randn((3 * RNN_DIMS,)),
        "rnn1_bhh": randn((3 * RNN_DIMS,)),
        "rnn2_wih": randn((3 * RNN_DIMS, RNN_DIMS + AUX_DIMS)),
        "rnn2_whh": randn((3 * RNN_DIMS, RNN_DIMS)),
        "rnn2_bih": randn((3 * RNN_DIMS,)),
        "rnn2_bhh": randn((3 * RNN_DIMS,)),
        "fc1_w": randn((FC_DIMS, RNN_DIMS + AUX_DIMS)), "fc1_b": randn((FC_DIMS,)),
        "fc2_w": randn((FC_DIMS, FC_DIMS + AUX_DIMS)), "fc2_b": randn((FC_DIMS,)),
        "fc3_w": randn((N_CLASSES, FC_DIMS)), "fc3_b": randn((N_CLASSES,)),
    }
    return params


# TODO(synk): generate() (autoregressive sampling / Categorical draw / mu-law
# decode / fold+crossfade) is inference-only host logic, not part of forward();
# AdaptNet is unused on the forward() path (adaptnet=False) and is omitted.

if __name__ == "__main__":
    key = jax.random.PRNGKey(0)
    key, kx, km, kp = jax.random.split(key, 4)

    params = init_params(kp)
    x = jax.random.uniform(kx, (B, T_OUT), jnp.float32, minval=-1.0, maxval=1.0)
    mels = jax.random.normal(km, (B, FEAT_DIMS, T_MEL), jnp.float32)

    fwd = jax.jit(wavernn_forward)
    out = jax.block_until_ready(fwd(x, mels, params))
    assert out.shape == (B, T_OUT, N_CLASSES), out.shape
    print("KERNEL_OK")
</pallas_src>

<mosaic_0001>
module attributes {stable_mosaic.version = 11 : i64} {
  func.func @_melresnet_kernel(%arg0: i32, %arg1: memref<8x40xf32, #tpu.memory_space<vmem>>, %arg2: memref<40x16xf32, #tpu.memory_space<vmem>>, %arg3: memref<1x16xf32, #tpu.memory_space<vmem>>, %arg4: memref<1x16xf32, #tpu.memory_space<vmem>>, %arg5: memref<2x16x16xf32, #tpu.memory_space<vmem>>, %arg6: memref<2x1x16xf32, #tpu.memory_space<vmem>>, %arg7: memref<2x1x16xf32, #tpu.memory_space<vmem>>, %arg8: memref<2x16x16xf32, #tpu.memory_space<vmem>>, %arg9: memref<2x1x16xf32, #tpu.memory_space<vmem>>, %arg10: memref<2x1x16xf32, #tpu.memory_space<vmem>>, %arg11: memref<16x16xf32, #tpu.memory_space<vmem>>, %arg12: memref<1x16xf32, #tpu.memory_space<vmem>>, %arg13: memref<8x16xf32, #tpu.memory_space<vmem>>) attributes {dimension_semantics = [#tpu.dimension_semantics<arbitrary>], iteration_bounds = array<i64: 1>, scalar_prefetch = 0 : i64, scratch_operands = 0 : i64, tpu.core_type = #tpu.core_type<tc>, window_params = [{pipeline_mode = #tpu.pipeline_mode<synchronous>, transform_indices = @transform_0, window_bounds = array<i64: 8, 40>}, {pipeline_mode = #tpu.pipeline_mode<synchronous>, transform_indices = @transform_1, window_bounds = array<i64: 40, 16>}, {pipeline_mode = #tpu.pipeline_mode<synchronous>, transform_indices = @transform_2, window_bounds = array<i64: 1, 16>}, {pipeline_mode = #tpu.pipeline_mode<synchronous>, transform_indices = @transform_3, window_bounds = array<i64: 1, 16>}, {pipeline_mode = #tpu.pipeline_mode<synchronous>, transform_indices = @transform_4, window_bounds = array<i64: 2, 16, 16>}, {pipeline_mode = #tpu.pipeline_mode<synchronous>, transform_indices = @transform_5, window_bounds = array<i64: 2, 1, 16>}, {pipeline_mode = #tpu.pipeline_mode<synchronous>, transform_indices = @transform_6, window_bounds = array<i64: 2, 1, 16>}, {pipeline_mode = #tpu.pipeline_mode<synchronous>, transform_indices = @transform_7, window_bounds = array<i64: 2, 16, 16>}, {pipeline_mode = #tpu.pipeline_mode<synchronous>, transform_indices = @transform_8, window_bounds = array<i64: 2, 1, 16>}, {pipeline_mode = #tpu.pipeline_mode<synchronous>, transform_indices = @transform_9, window_bounds = array<i64: 2, 1, 16>}, {pipeline_mode = #tpu.pipeline_mode<synchronous>, transform_indices = @transform_10, window_bounds = array<i64: 16, 16>}, {pipeline_mode = #tpu.pipeline_mode<synchronous>, transform_indices = @transform_11, window_bounds = array<i64: 1, 16>}, {pipeline_mode = #tpu.pipeline_mode<synchronous>, transform_indices = @transform_12, window_bounds = array<i64: 8, 16>}]} {
    %c0 = arith.constant 0 : index
    %c0_0 = arith.constant 0 : index
    %0 = vector.load %arg1[%c0, %c0_0] : memref<8x40xf32, #tpu.memory_space<vmem>>, vector<8x40xf32>
    %c0_1 = arith.constant 0 : index
    %c0_2 = arith.constant 0 : index
    %1 = vector.load %arg2[%c0_1, %c0_2] : memref<40x16xf32, #tpu.memory_space<vmem>>, vector<40x16xf32>
    %cst = arith.constant dense<0.000000e+00> : vector<8x16xf32>
    %2 = tpu.matmul %0, %1, %cst {dimension_numbers = #tpu.dot_dimension_numbers<[1], [0], [0], [1], [0, 0, 1, 1], [], []>} : vector<8x40xf32>, vector<40x16xf32>, vector<8x16xf32> -> vector<8x16xf32>
    %c0_3 = arith.constant 0 : index
    %c0_4 = arith.constant 0 : index
    %3 = vector.load %arg3[%c0_3, %c0_4] : memref<1x16xf32, #tpu.memory_space<vmem>>, vector<1x16xf32>
    %c0_5 = arith.constant 0 : index
    %c0_6 = arith.constant 0 : index
    %4 = vector.load %arg4[%c0_5, %c0_6] : memref<1x16xf32, #tpu.memory_space<vmem>>, vector<1x16xf32>
    %cst_7 = arith.constant dense<0.000000e+00> : vector<16xf32>
    %5 = vector.multi_reduction <add>, %2, %cst_7 [0] : vector<8x16xf32> to vector<16xf32>
    %6 = vector.shape_cast %5 : vector<16xf32> to vector<1x16xf32>
    %cst_8 = arith.constant 8.000000e+00 : f32
    %7 = vector.broadcast %cst_8 : f32 to vector<1x16xf32>
    %8 = arith.divf %6, %7 : vector<1x16xf32>
    %9 = vector.broadcast %8 : vector<1x16xf32> to vector<8x16xf32>
    %10 = arith.subf %2, %9 : vector<8x16xf32>
    %11 = arith.mulf %10, %10 : vector<8x16xf32>
    %cst_9 = arith.constant dense<0.000000e+00> : vector<16xf32>
    %12 = vector.multi_reduction <add>, %11, %cst_9 [0] : vector<8x16xf32> to vector<16xf32>
    %13 = vector.shape_cast %12 : vector<16xf32> to vector<1x16xf32>
    %cst_10 = arith.constant 8.000000e+00 : f32
    %14 = vector.broadcast %cst_10 : f32 to vector<1x16xf32>
    %15 = arith.divf %13, %14 : vector<1x16xf32>
    %16 = vector.broadcast %8 : vector<1x16xf32> to vector<8x16xf32>
    %17 = arith.subf %2, %16 : vector<8x16xf32>
    %cst_11 = arith.constant 9.99999974E-6 : f32
    %18 = vector.broadcast %cst_11 : f32 to vector<1x16xf32>
    %19 = arith.addf %15, %18 : vector<1x16xf32>
    %20 = math.sqrt %19 : vector<1x16xf32>
    %21 = vector.broadcast %20 : vector<1x16xf32> to vector<8x16xf32>
    %22 = arith.divf %17, %21 : vector<8x16xf32>
    %23 = vector.broadcast %3 : vector<1x16xf32> to vector<8x16xf32>
    %24 = arith.mulf %22, %23 : vector<8x16xf32>
    %25 = vector.broadcast %4 : vector<1x16xf32> to vector<8x16xf32>
    %26 = arith.addf %24, %25 : vector<8x16xf32>
    %cst_12 = arith.constant 0.000000e+00 : f32
    %27 = vector.broadcast %cst_12 : f32 to vector<8x16xf32>
    %28 = arith.maximumf %26, %27 : vector<8x16xf32>
    %c0_13 = arith.constant 0 : index
    %c0_14 = arith.constant 0 : index
    %c0_15 = arith.constant 0 : index
    %29 = vector.load %arg5[%c0_13, %c0_14, %c0_15] : memref<2x16x16xf32, #tpu.memory_space<vmem>>, vector<1x16x16xf32>
    %30 = vector.shape_cast %29 : vector<1x16x16xf32> to vector<16x16xf32>
    %cst_16 = arith.constant dense<0.000000e+00> : vector<8x16xf32>
    %31 = tpu.matmul %28, %30, %cst_16 {dimension_numbers = #tpu.dot_dimension_numbers<[1], [0], [0], [1], [0, 0, 1, 1], [], []>} : vector<8x16xf32>, vector<16x16xf32>, vector<8x16xf32> -> vector<8x16xf32>
    %c0_17 = arith.constant 0 : index
    %c0_18 = arith.constant 0 : index
    %c0_19 = arith.constant 0 : index
    %32 = vector.load %arg6[%c0_17, %c0_18, %c0_19] : memref<2x1x16xf32, #tpu.memory_space<vmem>>, vector<1x1x16xf32>
    %33 = vector.shape_cast %32 : vector<1x1x16xf32> to vector<1x16xf32>
    %c0_20 = arith.constant 0 : index
    %c0_21 = arith.constant 0 : index
    %c0_22 = arith.constant 0 : index
    %34 = vector.load %arg7[%c0_20, %c0_21, %c0_22] : memref<2x1x16xf32, #tpu.memory_space<vmem>>, vector<1x1x16xf32>
    %35 = vector.shape_cast %34 : vector<1x1x16xf32> to vector<1x16xf32>
    %cst_23 = arith.constant dense<0.000000e+00> : vector<16xf32>
    %36 = vector.multi_reduction <add>, %31, %cst_23 [0] : vector<8x16xf32> to vector<16xf32>
    %37 = vector.shape_cast %36 : vector<16xf32> to vector<1x16xf32>
    %cst_24 = arith.constant 8.000000e+00 : f32
    %38 = vector.broadcast %cst_24 : f32 to vector<1x16xf32>
    %39 = arith.divf %37, %38 : vector<1x16xf32>
    %40 = vector.broadcast %39 : vector<1x16xf32> to vector<8x16xf32>
    %41 = arith.subf %31, %40 : vector<8x16xf32>
    %42 = arith.mulf %41, %41 : vector<8x16xf32>
    %cst_25 = arith.constant dense<0.000000e+00> : vector<16xf32>
    %43 = vector.multi_reduction <add>, %42, %cst_25 [0] : vector<8x16xf32> to vector<16xf32>
    %44 = vector.shape_cast %43 : vector<16xf32> to vector<1x16xf32>
    %cst_26 = arith.constant 8.000000e+00 : f32
    %45 = vector.broadcast %cst_26 : f32 to vector<1x16xf32>
    %46 = arith.divf %44, %45 : vector<1x16xf32>
    %47 = vector.broadcast %39 : vector<1x16xf32> to vector<8x16xf32>
    %48 = arith.subf %31, %47 : vector<8x16xf32>
    %cst_27 = arith.constant 9.99999974E-6 : f32
    %49 = vector.broadcast %cst_27 : f32 to vector<1x16xf32>
    %50 = arith.addf %46, %49 : vector<1x16xf32>
    %51 = math.sqrt %50 : vector<1x16xf32>
    %52 = vector.broadcast %51 : vector<1x16xf32> to vector<8x16xf32>
    %53 = arith.divf %48, %52 : vector<8x16xf32>
    %54 = vector.broadcast %33 : vector<1x16xf32> to vector<8x16xf32>
    %55 = arith.mulf %53, %54 : vector<8x16xf32>
    %56 = vector.broadcast %35 : vector<1x16xf32> to vector<8x16xf32>
    %57 = arith.addf %55, %56 : vector<8x16xf32>
    %cst_28 = arith.constant 0.000000e+00 : f32
    %58 = vector.broadcast %cst_28 : f32 to vector<8x16xf32>
    %59 = arith.maximumf %57, %58 : vector<8x16xf32>
    %c0_29 = arith.constant 0 : index
    %c0_30 = arith.constant 0 : index
    %c0_31 = arith.constant 0 : index
    %60 = vector.load %arg8[%c0_29, %c0_30, %c0_31] : memref<2x16x16xf32, #tpu.memory_space<vmem>>, vector<1x16x16xf32>
    %61 = vector.shape_cast %60 : vector<1x16x16xf32> to vector<16x16xf32>
    %cst_32 = arith.constant dense<0.000000e+00> : vector<8x16xf32>
    %62 = tpu.matmul %59, %61, %cst_32 {dimension_numbers = #tpu.dot_dimension_numbers<[1], [0], [0], [1], [0, 0, 1, 1], [], []>} : vector<8x16xf32>, vector<16x16xf32>, vector<8x16xf32> -> vector<8x16xf32>
    %c0_33 = arith.constant 0 : index
    %c0_34 = arith.constant 0 : index
    %c0_35 = arith.constant 0 : index
    %63 = vector.load %arg9[%c0_33, %c0_34, %c0_35] : memref<2x1x16xf32, #tpu.memory_space<vmem>>, vector<1x1x16xf32>
    %64 = vector.shape_cast %63 : vector<1x1x16xf32> to vector<1x16xf32>
    %c0_36 = arith.constant 0 : index
    %c0_37 = arith.constant 0 : index
    %c0_38 = arith.constant 0 : index
    %65 = vector.load %arg10[%c0_36, %c0_37, %c0_38] : memref<2x1x16xf32, #tpu.memory_space<vmem>>, vector<1x1x16xf32>
    %66 = vector.shape_cast %65 : vector<1x1x16xf32> to vector<1x16xf32>
    %cst_39 = arith.constant dense<0.000000e+00> : vector<16xf32>
    %67 = vector.multi_reduction <add>, %62, %cst_39 [0] : vector<8x16xf32> to vector<16xf32>
    %68 = vector.shape_cast %67 : vector<16xf32> to vector<1x16xf32>
    %cst_40 = arith.constant 8.000000e+00 : f32
    %69 = vector.broadcast %cst_40 : f32 to vector<1x16xf32>
    %70 = arith.divf %68, %69 : vector<1x16xf32>
    %71 = vector.broadcast %70 : vector<1x16xf32> to vector<8x16xf32>
    %72 = arith.subf %62, %71 : vector<8x16xf32>
    %73 = arith.mulf %72, %72 : vector<8x16xf32>
    %cst_41 = arith.constant dense<0.000000e+00> : vector<16xf32>
    %74 = vector.multi_reduction <add>, %73, %cst_41 [0] : vector<8x16xf32> to vector<16xf32>
    %75 = vector.shape_cast %74 : vector<16xf32> to vector<1x16xf32>
    %cst_42 = arith.constant 8.000000e+00 : f32
    %76 = vector.broadcast %cst_42 : f32 to vector<1x16xf32>
    %77 = arith.divf %75, %76 : vector<1x16xf32>
    %78 = vector.broadcast %70 : vector<1x16xf32> to vector<8x16xf32>
    %79 = arith.subf %62, %78 : vector<8x16xf32>
    %cst_43 = arith.constant 9.99999974E-6 : f32
    %80 = vector.broadcast %cst_43 : f32 to vector<1x16xf32>
    %81 = arith.addf %77, %80 : vector<1x16xf32>
    %82 = math.sqrt %81 : vector<1x16xf32>
    %83 = vector.broadcast %82 : vector<1x16xf32> to vector<8x16xf32>
    %84 = arith.divf %79, %83 : vector<8x16xf32>
    %85 = vector.broadcast %64 : vector<1x16xf32> to vector<8x16xf32>
    %86 = arith.mulf %84, %85 : vector<8x16xf32>
    %87 = vector.broadcast %66 : vector<1x16xf32> to vector<8x16xf32>
    %88 = arith.addf %86, %87 : vector<8x16xf32>
    %89 = arith.addf %88, %28 : vector<8x16xf32>
    %c1 = arith.constant 1 : index
    %c0_44 = arith.constant 0 : index
    %c0_45 = arith.constant 0 : index
    %90 = vector.load %arg5[%c1, %c0_44, %c0_45] : memref<2x16x16xf32, #tpu.memory_space<vmem>>, vector<1x16x16xf32>
    %91 = vector.shape_cast %90 : vector<1x16x16xf32> to vector<16x16xf32>
    %cst_46 = arith.constant dense<0.000000e+00> : vector<8x16xf32>
    %92 = tpu.matmul %89, %91, %cst_46 {dimension_numbers = #tpu.dot_dimension_numbers<[1], [0], [0], [1], [0, 0, 1, 1], [], []>} : vector<8x16xf32>, vector<16x16xf32>, vector<8x16xf32> -> vector<8x16xf32>
    %c1_47 = arith.constant 1 : index
    %c0_48 = arith.constant 0 : index
    %c0_49 = arith.constant 0 : index
    %93 = vector.load %arg6[%c1_47, %c0_48, %c0_49] : memref<2x1x16xf32, #tpu.memory_space<vmem>>, vector<1x1x16xf32>
    %94 = vector.shape_cast %93 : vector<1x1x16xf32> to vector<1x16xf32>
    %c1_50 = arith.constant 1 : index
    %c0_51 = arith.constant 0 : index
    %c0_52 = arith.constant 0 : index
    %95 = vector.load %arg7[%c1_50, %c0_51, %c0_52] : memref<2x1x16xf32, #tpu.memory_space<vmem>>, vector<1x1x16xf32>
    %96 = vector.shape_cast %95 : vector<1x1x16xf32> to vector<1x16xf32>
    %cst_53 = arith.constant dense<0.000000e+00> : vector<16xf32>
    %97 = vector.multi_reduction <add>, %92, %cst_53 [0] : vector<8x16xf32> to vector<16xf32>
    %98 = vector.shape_cast %97 : vector<16xf32> to vector<1x16xf32>
    %cst_54 = arith.constant 8.000000e+00 : f32
    %99 = vector.broadcast %cst_54 : f32 to vector<1x16xf32>
    %100 = arith.divf %98, %99 : vector<1x16xf32>
    %101 = vector.broadcast %100 : vector<1x16xf32> to vector<8x16xf32>
    %102 = arith.subf %92, %101 : vector<8x16xf32>
    %103 = arith.mulf %102, %102 : vector<8x16xf32>
    %cst_55 = arith.constant dense<0.000000e+00> : vector<16xf32>
    %104 = vector.multi_reduction <add>, %103, %cst_55 [0] : vector<8x16xf32> to vector<16xf32>
    %105 = vector.shape_cast %104 : vector<16xf32> to vector<1x16xf32>
    %cst_56 = arith.constant 8.000000e+00 : f32
    %106 = vector.broadcast %cst_56 : f32 to vector<1x16xf32>
    %107 = arith.divf %105, %106 : vector<1x16xf32>
    %108 = vector.broadcast %100 : vector<1x16xf32> to vector<8x16xf32>
    %109 = arith.subf %92, %108 : vector<8x16xf32>
    %cst_57 = arith.constant 9.99999974E-6 : f32
    %110 = vector.broadcast %cst_57 : f32 to vector<1x16xf32>
    %111 = arith.addf %107, %110 : vector<1x16xf32>
    %112 = math.sqrt %111 : vector<1x16xf32>
    %113 = vector.broadcast %112 : vector<1x16xf32> to vector<8x16xf32>
    %114 = arith.divf %109, %113 : vector<8x16xf32>
    %115 = vector.broadcast %94 : vector<1x16xf32> to vector<8x16xf32>
    %116 = arith.mulf %114, %115 : vector<8x16xf32>
    %117 = vector.broadcast %96 : vector<1x16xf32> to vector<8x16xf32>
    %118 = arith.addf %116, %117 : vector<8x16xf32>
    %cst_58 = arith.constant 0.000000e+00 : f32
    %119 = vector.broadcast %cst_58 : f32 to vector<8x16xf32>
    %120 = arith.maximumf %118, %119 : vector<8x16xf32>
    %c1_59 = arith.constant 1 : index
    %c0_60 = arith.constant 0 : index
    %c0_61 = arith.constant 0 : index
    %121 = vector.load %arg8[%c1_59, %c0_60, %c0_61] : memref<2x16x16xf32, #tpu.memory_space<vmem>>, vector<1x16x16xf32>
    %122 = vector.shape_cast %121 : vector<1x16x16xf32> to vector<16x16xf32>
    %cst_62 = arith.constant dense<0.000000e+00> : vector<8x16xf32>
    %123 = tpu.matmul %120, %122, %cst_62 {dimension_numbers = #tpu.dot_dimension_numbers<[1], [0], [0], [1], [0, 0, 1, 1], [], []>} : vector<8x16xf32>, vector<16x16xf32>, vector<8x16xf32> -> vector<8x16xf32>
    %c1_63 = arith.constant 1 : index
    %c0_64 = arith.constant 0 : index
    %c0_65 = arith.constant 0 : index
    %124 = vector.load %arg9[%c1_63, %c0_64, %c0_65] : memref<2x1x16xf32, #tpu.memory_space<vmem>>, vector<1x1x16xf32>
    %125 = vector.shape_cast %124 : vector<1x1x16xf32> to vector<1x16xf32>
    %c1_66 = arith.constant 1 : index
    %c0_67 = arith.constant 0 : index
    %c0_68 = arith.constant 0 : index
    %126 = vector.load %arg10[%c1_66, %c0_67, %c0_68] : memref<2x1x16xf32, #tpu.memory_space<vmem>>, vector<1x1x16xf32>
    %127 = vector.shape_cast %126 : vector<1x1x16xf32> to vector<1x16xf32>
    %cst_69 = arith.constant dense<0.000000e+00> : vector<16xf32>
    %128 = vector.multi_reduction <add>, %123, %cst_69 [0] : vector<8x16xf32> to vector<16xf32>
    %129 = vector.shape_cast %128 : vector<16xf32> to vector<1x16xf32>
    %cst_70 = arith.constant 8.000000e+00 : f32
    %130 = vector.broadcast %cst_70 : f32 to vector<1x16xf32>
    %131 = arith.divf %129, %130 : vector<1x16xf32>
    %132 = vector.broadcast %131 : vector<1x16xf32> to vector<8x16xf32>
    %133 = arith.subf %123, %132 : vector<8x16xf32>
    %134 = arith.mulf %133, %133 : vector<8x16xf32>
    %cst_71 = arith.constant dense<0.000000e+00> : vector<16xf32>
    %135 = vector.multi_reduction <add>, %134, %cst_71 [0] : vector<8x16xf32> to vector<16xf32>
    %136 = vector.shape_cast %135 : vector<16xf32> to vector<1x16xf32>
    %cst_72 = arith.constant 8.000000e+00 : f32
    %137 = vector.broadcast %cst_72 : f32 to vector<1x16xf32>
    %138 = arith.divf %136, %137 : vector<1x16xf32>
    %139 = vector.broadcast %131 : vector<1x16xf32> to vector<8x16xf32>
    %140 = arith.subf %123, %139 : vector<8x16xf32>
    %cst_73 = arith.constant 9.99999974E-6 : f32
    %141 = vector.broadcast %cst_73 : f32 to vector<1x16xf32>
    %142 = arith.addf %138, %141 : vector<1x16xf32>
    %143 = math.sqrt %142 : vector<1x16xf32>
    %144 = vector.broadcast %143 : vector<1x16xf32> to vector<8x16xf32>
    %145 = arith.divf %140, %144 : vector<8x16xf32>
    %146 = vector.broadcast %125 : vector<1x16xf32> to vector<8x16xf32>
    %147 = arith.mulf %145, %146 : vector<8x16xf32>
    %148 = vector.broadcast %127 : vector<1x16xf32> to vector<8x16xf32>
    %149 = arith.addf %147, %148 : vector<8x16xf32>
    %150 = arith.addf %149, %89 : vector<8x16xf32>
    %c0_74 = arith.constant 0 : index
    %c0_75 = arith.constant 0 : index
    %151 = vector.load %arg11[%c0_74, %c0_75] : memref<16x16xf32, #tpu.memory_space<vmem>>, vector<16x16xf32>
    %cst_76 = arith.constant dense<0.000000e+00> : vector<8x16xf32>
    %152 = tpu.matmul %150, %151, %cst_76 {dimension_numbers = #tpu.dot_dimension_numbers<[1], [0], [0], [1], [0, 0, 1, 1], [], []>} : vector<8x16xf32>, vector<16x16xf32>, vector<8x16xf32> -> vector<8x16xf32>
    %c0_77 = arith.constant 0 : index
    %c0_78 = arith.constant 0 : index
    %153 = vector.load %arg12[%c0_77, %c0_78] : memref<1x16xf32, #tpu.memory_space<vmem>>, vector<1x16xf32>
    %154 = vector.broadcast %153 : vector<1x16xf32> to vector<8x16xf32>
    %155 = arith.addf %152, %154 : vector<8x16xf32>
    %c0_79 = arith.constant 0 : index
    %c0_80 = arith.constant 0 : index
    %156 = vector.load %arg13[%c0_79, %c0_80] : memref<8x16xf32, #tpu.memory_space<vmem>>, vector<8x16xf32>
    tpu.vector_store %arg13[%c0_79, %c0_80], %155 {strides = array<i32>} : memref<8x16xf32, #tpu.memory_space<vmem>>, vector<8x16xf32>,
    return
  }
  func.func @transform_0(%arg0: i32) -> (i32, i32) {
    %c0_i32 = arith.constant 0 : i32
    %c0_i32_0 = arith.constant 0 : i32
    %c0_i32_1 = arith.constant 0 : i32
    return %c0_i32, %c0_i32_0 : i32, i32
  }
  func.func @transform_1(%arg0: i32) -> (i32, i32) {
    %c0_i32 = arith.constant 0 : i32
    %c0_i32_0 = arith.constant 0 : i32
    %c0_i32_1 = arith.constant 0 : i32
    return %c0_i32, %c0_i32_0 : i32, i32
  }
  func.func @transform_2(%arg0: i32) -> (i32, i32) {
    %c0_i32 = arith.constant 0 : i32
    %c0_i32_0 = arith.constant 0 : i32
    %c0_i32_1 = arith.constant 0 : i32
    return %c0_i32, %c0_i32_0 : i32, i32
  }
  func.func @transform_3(%arg0: i32) -> (i32, i32) {
    %c0_i32 = arith.constant 0 : i32
    %c0_i32_0 = arith.constant 0 : i32
    %c0_i32_1 = arith.constant 0 : i32
    return %c0_i32, %c0_i32_0 : i32, i32
  }
  func.func @transform_4(%arg0: i32) -> (i32, i32, i32) {
    %c0_i32 = arith.constant 0 : i32
    %c0_i32_0 = arith.constant 0 : i32
    %c0_i32_1 = arith.constant 0 : i32
    %c0_i32_2 = arith.constant 0 : i32
    return %c0_i32, %c0_i32_0, %c0_i32_1 : i32, i32, i32
  }
  func.func @transform_5(%arg0: i32) -> (i32, i32, i32) {
    %c0_i32 = arith.constant 0 : i32
    %c0_i32_0 = arith.constant 0 : i32
    %c0_i32_1 = arith.constant 0 : i32
    %c0_i32_2 = arith.constant 0 : i32
    return %c0_i32, %c0_i32_0, %c0_i32_1 : i32, i32, i32
  }
  func.func @transform_6(%arg0: i32) -> (i32, i32, i32) {
    %c0_i32 = arith.constant 0 : i32
    %c0_i32_0 = arith.constant 0 : i32
    %c0_i32_1 = arith.constant 0 : i32
    %c0_i32_2 = arith.constant 0 : i32
    return %c0_i32, %c0_i32_0, %c0_i32_1 : i32, i32, i32
  }
  func.func @transform_7(%arg0: i32) -> (i32, i32, i32) {
    %c0_i32 = arith.constant 0 : i32
    %c0_i32_0 = arith.constant 0 : i32
    %c0_i32_1 = arith.constant 0 : i32
    %c0_i32_2 = arith.constant 0 : i32
    return %c0_i32, %c0_i32_0, %c0_i32_1 : i32, i32, i32
  }
  func.func @transform_8(%arg0: i32) -> (i32, i32, i32) {
    %c0_i32 = arith.constant 0 : i32
    %c0_i32_0 = arith.constant 0 : i32
    %c0_i32_1 = arith.constant 0 : i32
    %c0_i32_2 = arith.constant 0 : i32
    return %c0_i32, %c0_i32_0, %c0_i32_1 : i32, i32, i32
  }
  func.func @transform_9(%arg0: i32) -> (i32, i32, i32) {
    %c0_i32 = arith.constant 0 : i32
    %c0_i32_0 = arith.constant 0 : i32
    %c0_i32_1 = arith.constant 0 : i32
    %c0_i32_2 = arith.constant 0 : i32
    return %c0_i32, %c0_i32_0, %c0_i32_1 : i32, i32, i32
  }
  func.func @transform_10(%arg0: i32) -> (i32, i32) {
    %c0_i32 = arith.constant 0 : i32
    %c0_i32_0 = arith.constant 0 : i32
    %c0_i32_1 = arith.constant 0 : i32
    return %c0_i32, %c0_i32_0 : i32, i32
  }
  func.func @transform_11(%arg0: i32) -> (i32, i32) {
    %c0_i32 = arith.constant 0 : i32
    %c0_i32_0 = arith.constant 0 : i32
    %c0_i32_1 = arith.constant 0 : i32
    return %c0_i32, %c0_i32_0 : i32, i32
  }
  func.func @transform_12(%arg0: i32) -> (i32, i32) {
    %c0_i32 = arith.constant 0 : i32
    %c0_i32_0 = arith.constant 0 : i32
    %c0_i32_1 = arith.constant 0 : i32
    return %c0_i32, %c0_i32_0 : i32, i32
  }
}

module attributes {stable_mosaic.version = 11 : i64} {
  func.func @_wavernn_seq_kernel(%arg0: i32, %arg1: memref<32x25xf32, #tpu.memory_space<vmem>>, %arg2: memref<25x32xf32, #tpu.memory_space<vmem>>, %arg3: memref<1x32xf32, #tpu.memory_space<vmem>>, %arg4: memref<32x96xf32, #tpu.memory_space<vmem>>, %arg5: memref<32x96xf32, #tpu.memory_space<vmem>>, %arg6: memref<1x96xf32, #tpu.memory_space<vmem>>, %arg7: memref<1x96xf32, #tpu.memory_space<vmem>>, %arg8: memref<32x96xf32, #tpu.memory_space<vmem>>, %arg9: memref<25x96xf32, #tpu.memory_space<vmem>>, %arg10: memref<32x96xf32, #tpu.memory_space<vmem>>, %arg11: memref<1x96xf32, #tpu.memory_space<vmem>>, %arg12: memref<1x96xf32, #tpu.memory_space<vmem>>, %arg13: memref<32x32xf32, #tpu.memory_space<vmem>>, %arg14: memref<25x32xf32, #tpu.memory_space<vmem>>, %arg15: memref<1x32xf32, #tpu.memory_space<vmem>>, %arg16: memref<32x32xf32, #tpu.memory_space<vmem>>, %arg17: memref<25x32xf32, #tpu.memory_space<vmem>>, %arg18: memref<1x32xf32, #tpu.memory_space<vmem>>, %arg19: memref<32x16xf32, #tpu.memory_space<vmem>>, %arg20: memref<1x16xf32, #tpu.memory_space<vmem>>, %arg21: memref<32x16xf32, #tpu.memory_space<vmem>>, %arg22: memref<32x32xf32, #tpu.memory_space<vmem>>, %arg23: memref<32x32xf32, #tpu.memory_space<vmem>>) attributes {dimension_semantics = [#tpu.dimension_semantics<arbitrary>], iteration_bounds = array<i64: 1>, scalar_prefetch = 0 : i64, scratch_operands = 2 : i64, tpu.core_type = #tpu.core_type<tc>, window_params = [{pipeline_mode = #tpu.pipeline_mode<synchronous>, transform_indices = @transform_0, window_bounds = array<i64: 32, 25>}, {pipeline_mode = #tpu.pipeline_mode<synchronous>, transform_indices = @transform_1, window_bounds = array<i64: 25, 32>}, {pipeline_mode = #tpu.pipeline_mode<synchronous>, transform_indices = @transform_2, window_bounds = array<i64: 1, 32>}, {pipeline_mode = #tpu.pipeline_mode<synchronous>, transform_indices = @transform_3, window_bounds = array<i64: 32, 96>}, {pipeline_mode = #tpu.pipeline_mode<synchronous>, transform_indices = @transform_4, window_bounds = array<i64: 32, 96>}, {pipeline_mode = #tpu.pipeline_mode<synchronous>, transform_indices = @transform_5, window_bounds = array<i64: 1, 96>}, {pipeline_mode = #tpu.pipeline_mode<synchronous>, transform_indices = @transform_6, window_bounds = array<i64: 1, 96>}, {pipeline_mode = #tpu.pipeline_mode<synchronous>, transform_indices = @transform_7, window_bounds = array<i64: 32, 96>}, {pipeline_mode = #tpu.pipeline_mode<synchronous>, transform_indices = @transform_8, window_bounds = array<i64: 25, 96>}, {pipeline_mode = #tpu.pipeline_mode<synchronous>, transform_indices = @transform_9, window_bounds = array<i64: 32, 96>}, {pipeline_mode = #tpu.pipeline_mode<synchronous>, transform_indices = @transform_10, window_bounds = array<i64: 1, 96>}, {pipeline_mode = #tpu.pipeline_mode<synchronous>, transform_indices = @transform_11, window_bounds = array<i64: 1, 96>}, {pipeline_mode = #tpu.pipeline_mode<synchronous>, transform_indices = @transform_12, window_bounds = array<i64: 32, 32>}, {pipeline_mode = #tpu.pipeline_mode<synchronous>, transform_indices = @transform_13, window_bounds = array<i64: 25, 32>}, {pipeline_mode = #tpu.pipeline_mode<synchronous>, transform_indices = @transform_14, window_bounds = array<i64: 1, 32>}, {pipeline_mode = #tpu.pipeline_mode<synchronous>, transform_indices = @transform_15, window_bounds = array<i64: 32, 32>}, {pipeline_mode = #tpu.pipeline_mode<synchronous>, transform_indices = @transform_16, window_bounds = array<i64: 25, 32>}, {pipeline_mode = #tpu.pipeline_mode<synchronous>, transform_indices = @transform_17, window_bounds = array<i64: 1, 32>}, {pipeline_mode = #tpu.pipeline_mode<synchronous>, transform_indices = @transform_18, window_bounds = array<i64: 32, 16>}, {pipeline_mode = #tpu.pipeline_mode<synchronous>, transform_indices = @transform_19, window_bounds = array<i64: 1, 16>}, {pipeline_mode = #tpu.pipeline_mode<synchronous>, transform_indices = @transform_20, window_bounds = array<i64: 32, 16>}]} {
    %c0 = arith.constant 0 : index
    %c0_0 = arith.constant 0 : index
    %0 = vector.load %arg1[%c0, %c0_0] : memref<32x25xf32, #tpu.memory_space<vmem>>, vector<32x25xf32>
    %c0_1 = arith.constant 0 : index
    %c0_2 = arith.constant 0 : index
    %1 = vector.load %arg2[%c0_1, %c0_2] : memref<25x32xf32, #tpu.memory_space<vmem>>, vector<25x32xf32>
    %cst = arith.constant dense<0.000000e+00> : vector<32x32xf32>
    %2 = tpu.matmul %0, %1, %cst {dimension_numbers = #tpu.dot_dimension_numbers<[1], [0], [0], [1], [0, 0, 1, 1], [], []>} : vector<32x25xf32>, vector<25x32xf32>, vector<32x32xf32> -> vector<32x32xf32>
    %c0_3 = arith.constant 0 : index
    %c0_4 = arith.constant 0 : index
    %3 = vector.load %arg3[%c0_3, %c0_4] : memref<1x32xf32, #tpu.memory_space<vmem>>, vector<1x32xf32>
    %4 = vector.broadcast %3 : vector<1x32xf32> to vector<32x32xf32>
    %5 = arith.addf %2, %4 : vector<32x32xf32>
    %c0_5 = arith.constant 0 : index
    %c0_6 = arith.constant 0 : index
    %6 = vector.load %arg4[%c0_5, %c0_6] : memref<32x96xf32, #tpu.memory_space<vmem>>, vector<32x96xf32>
    %cst_7 = arith.constant dense<0.000000e+00> : vector<32x96xf32>
    %7 = tpu.matmul %5, %6, %cst_7 {dimension_numbers = #tpu.dot_dimension_numbers<[1], [0], [0], [1], [0, 0, 1, 1], [], []>} : vector<32x32xf32>, vector<32x96xf32>, vector<32x96xf32> -> vector<32x96xf32>
    %c0_8 = arith.constant 0 : index
    %c0_9 = arith.constant 0 : index
    %8 = vector.load %arg6[%c0_8, %c0_9] : memref<1x96xf32, #tpu.memory_space<vmem>>, vector<1x96xf32>
    %9 = vector.broadcast %8 : vector<1x96xf32> to vector<32x96xf32>
    %10 = arith.addf %7, %9 : vector<32x96xf32>
    %c0_10 = arith.constant 0 : index
    %c0_11 = arith.constant 0 : index
    %11 = vector.load %arg5[%c0_10, %c0_11] : memref<32x96xf32, #tpu.memory_space<vmem>>, vector<32x96xf32>
    %c0_12 = arith.constant 0 : index
    %c0_13 = arith.constant 0 : index
    %12 = vector.load %arg7[%c0_12, %c0_13] : memref<1x96xf32, #tpu.memory_space<vmem>>, vector<1x96xf32>
    %cst_14 = arith.constant 0.000000e+00 : f32
    %13 = vector.broadcast %cst_14 : f32 to vector<2x32xf32>
    %14 = vector.extract_strided_slice %10 {offsets = [0, 0], sizes = [2, 96], strides = [1, 1]} : vector<32x96xf32> to vector<2x96xf32>
    %cst_15 = arith.constant dense<0.000000e+00> : vector<2x96xf32>
    %15 = tpu.matmul %13, %11, %cst_15 {dimension_numbers = #tpu.dot_dimension_numbers<[1], [0], [0], [1], [0, 0, 1, 1], [], []>} : vector<2x32xf32>, vector<32x96xf32>, vector<2x96xf32> -> vector<2x96xf32>
    %16 = vector.broadcast %12 : vector<1x96xf32> to vector<2x96xf32>
    %17 = arith.addf %15, %16 : vector<2x96xf32>
    %18 = vector.extract_strided_slice %14 {offsets = [0, 0], sizes = [2, 32], strides = [1, 1]} : vector<2x96xf32> to vector<2x32xf32>
    %19 = vector.extract_strided_slice %17 {offsets = [0, 0], sizes = [2, 32], strides = [1, 1]} : vector<2x96xf32> to vector<2x32xf32>
    %20 = arith.addf %18, %19 : vector<2x32xf32>
    %21 = arith.negf %20 : vector<2x32xf32>
    %22 = math.exp %21 : vector<2x32xf32>
    %cst_16 = arith.constant 1.000000e+00 : f32
    %23 = vector.broadcast %cst_16 : f32 to vector<2x32xf32>
    %24 = arith.addf %23, %22 : vector<2x32xf32>
    %25 = arith.divf %23, %24 : vector<2x32xf32>
    %26 = vector.extract_strided_slice %14 {offsets = [0, 32], sizes = [2, 32], strides = [1, 1]} : vector<2x96xf32> to vector<2x32xf32>
    %27 = vector.extract_strided_slice %17 {offsets = [0, 32], sizes = [2, 32], strides = [1, 1]} : vector<2x96xf32> to vector<2x32xf32>
    %28 = arith.addf %26, %27 : vector<2x32xf32>
    %29 = arith.negf %28 : vector<2x32xf32>
    %30 = math.exp %29 : vector<2x32xf32>
    %cst_17 = arith.constant 1.000000e+00 : f32
    %31 = vector.broadcast %cst_17 : f32 to vector<2x32xf32>
    %32 = arith.addf %31, %30 : vector<2x32xf32>
    %33 = arith.divf %31, %32 : vector<2x32xf32>
    %34 = vector.extract_strided_slice %14 {offsets = [0, 64], sizes = [2, 32], strides = [1, 1]} : vector<2x96xf32> to vector<2x32xf32>
    %35 = vector.extract_strided_slice %17 {offsets = [0, 64], sizes = [2, 32], strides = [1, 1]} : vector<2x96xf32> to vector<2x32xf32>
    %36 = arith.mulf %25, %35 : vector<2x32xf32>
    %37 = arith.addf %34, %36 : vector<2x32xf32>
    %38 = math.tanh %37 : vector<2x32xf32>
    %cst_18 = arith.constant 1.000000e+00 : f32
    %39 = vector.broadcast %cst_18 : f32 to vector<2x32xf32>
    %40 = arith.subf %39, %33 : vector<2x32xf32>
    %41 = arith.mulf %40, %38 : vector<2x32xf32>
    %42 = arith.mulf %33, %13 : vector<2x32xf32>
    %43 = arith.addf %41, %42 : vector<2x32xf32>
    %c0_19 = arith.constant 0 : index
    %c0_20 = arith.constant 0 : index
    %44 = vector.load %arg22[%c0_19, %c0_20] : memref<32x32xf32, #tpu.memory_space<vmem>>, vector<2x32xf32>
    tpu.vector_store %arg22[%c0_19, %c0_20], %43 {strides = array<i32>} : memref<32x32xf32, #tpu.memory_space<vmem>>, vector<2x32xf32>,
    %45 = vector.extract_strided_slice %10 {offsets = [2, 0], sizes = [2, 96], strides = [1, 1]} : vector<32x96xf32> to vector<2x96xf32>
    %cst_21 = arith.constant dense<0.000000e+00> : vector<2x96xf32>
    %46 = tpu.matmul %43, %11, %cst_21 {dimension_numbers = #tpu.dot_dimension_numbers<[1], [0], [0], [1], [0, 0, 1, 1], [], []>} : vector<2x32xf32>, vector<32x96xf32>, vector<2x96xf32> -> vector<2x96xf32>
    %47 = vector.broadcast %12 : vector<1x96xf32> to vector<2x96xf32>
    %48 = arith.addf %46, %47 : vector<2x96xf32>
    %49 = vector.extract_strided_slice %45 {offsets = [0, 0], sizes = [2, 32], strides = [1, 1]} : vector<2x96xf32> to vector<2x32xf32>
    %50 = vector.extract_strided_slice %48 {offsets = [0, 0], sizes = [2, 32], strides = [1, 1]} : vector<2x96xf32> to vector<2x32xf32>
    %51 = arith.addf %49, %50 : vector<2x32xf32>
    %52 = arith.negf %51 : vector<2x32xf32>
    %53 = math.exp %52 : vector<2x32xf32>
    %cst_22 = arith.constant 1.000000e+00 : f32
    %54 = vector.broadcast %cst_22 : f32 to vector<2x32xf32>
    %55 = arith.addf %54, %53 : vector<2x32xf32>
    %56 = arith.divf %54, %55 : vector<2x32xf32>
    %57 = vector.extract_strided_slice %45 {offsets = [0, 32], sizes = [2, 32], strides = [1, 1]} : vector<2x96xf32> to vector<2x32xf32>
    %58 = vector.extract_strided_slice %48 {offsets = [0, 32], sizes = [2, 32], strides = [1, 1]} : vector<2x96xf32> to vector<2x32xf32>
    %59 = arith.addf %57, %58 : vector<2x32xf32>
    %60 = arith.negf %59 : vector<2x32xf32>
    %61 = math.exp %60 : vector<2x32xf32>
    %cst_23 = arith.constant 1.000000e+00 : f32
    %62 = vector.broadcast %cst_23 : f32 to vector<2x32xf32>
    %63 = arith.addf %62, %61 : vector<2x32xf32>
    %64 = arith.divf %62, %63 : vector<2x32xf32>
    %65 = vector.extract_strided_slice %45 {offsets = [0, 64], sizes = [2, 32], strides = [1, 1]} : vector<2x96xf32> to vector<2x32xf32>
    %66 = vector.extract_strided_slice %48 {offsets = [0, 64], sizes = [2, 32], strides = [1, 1]} : vector<2x96xf32> to vector<2x32xf32>
    %67 = arith.mulf %56, %66 : vector<2x32xf32>
    %68 = arith.addf %65, %67 : vector<2x32xf32>
    %69 = math.tanh %68 : vector<2x32xf32>
    %cst_24 = arith.constant 1.000000e+00 : f32
    %70 = vector.broadcast %cst_24 : f32 to vector<2x32xf32>
    %71 = arith.subf %70, %64 : vector<2x32xf32>
    %72 = arith.mulf %71, %69 : vector<2x32xf32>
    %73 = arith.mulf %64, %43 : vector<2x32xf32>
    %74 = arith.addf %72, %73 : vector<2x32xf32>
    %c2 = arith.constant 2 : index
    %c0_25 = arith.constant 0 : index
    %75 = vector.load %arg22[%c2, %c0_25] : memref<32x32xf32, #tpu.memory_space<vmem>>, vector<2x32xf32>
    tpu.vector_store %arg22[%c2, %c0_25], %74 {strides = array<i32>} : memref<32x32xf32, #tpu.memory_space<vmem>>, vector<2x32xf32>,
    %76 = vector.extract_strided_slice %10 {offsets = [4, 0], sizes = [2, 96], strides = [1, 1]} : vector<32x96xf32> to vector<2x96xf32>
    %cst_26 = arith.constant dense<0.000000e+00> : vector<2x96xf32>
    %77 = tpu.matmul %74, %11, %cst_26 {dimension_numbers = #tpu.dot_dimension_numbers<[1], [0], [0], [1], [0, 0, 1, 1], [], []>} : vector<2x32xf32>, vector<32x96xf32>, vector<2x96xf32> -> vector<2x96xf32>
    %78 = vector.broadcast %12 : vector<1x96xf32> to vector<2x96xf32>
    %79 = arith.addf %77, %78 : vector<2x96xf32>
    %80 = vector.extract_strided_slice %76 {offsets = [0, 0], sizes = [2, 32], strides = [1, 1]} : vector<2x96xf32> to vector<2x32xf32>
    %81 = vector.extract_strided_slice %79 {offsets = [0, 0], sizes = [2, 32], strides = [1, 1]} : vector<2x96xf32> to vector<2x32xf32>
    %82 = arith.addf %80, %81 : vector<2x32xf32>
    %83 = arith.negf %82 : vector<2x32xf32>
    %84 = math.exp %83 : vector<2x32xf32>
    %cst_27 = arith.constant 1.000000e+00 : f32
    %85 = vector.broadcast %cst_27 : f32 to vector<2x32xf32>
    %86 = arith.addf %85, %84 : vector<2x32xf32>
    %87 = arith.divf %85, %86 : vector<2x32xf32>
    %88 = vector.extract_strided_slice %76 {offsets = [0, 32], sizes = [2, 32], strides = [1, 1]} : vector<2x96xf32> to vector<2x32xf32>
    %89 = vector.extract_strided_slice %79 {offsets = [0, 32], sizes = [2, 32], strides = [1, 1]} : vector<2x96xf32> to vector<2x32xf32>
    %90 = arith.addf %88, %89 : vector<2x32xf32>
    %91 = arith.negf %90 : vector<2x32xf32>
    %92 = math.exp %91 : vector<2x32xf32>
    %cst_28 = arith.constant 1.000000e+00 : f32
    %93 = vector.broadcast %cst_28 : f32 to vector<2x32xf32>
    %94 = arith.addf %93, %92 : vector<2x32xf32>
    %95 = arith.divf %93, %94 : vector<2x32xf32>
    %96 = vector.extract_strided_slice %76 {offsets = [0, 64], sizes = [2, 32], strides = [1, 1]} : vector<2x96xf32> to vector<2x32xf32>
    %97 = vector.extract_strided_slice %79 {offsets = [0, 64], sizes = [2, 32], strides = [1, 1]} : vector<2x96xf32> to vector<2x32xf32>
    %98 = arith.mulf %87, %97 : vector<2x32xf32>
    %99 = arith.addf %96, %98 : vector<2x32xf32>
    %100 = math.tanh %99 : vector<2x32xf32>
    %cst_29 = arith.constant 1.000000e+00 : f32
    %101 = vector.broadcast %cst_29 : f32 to vector<2x32xf32>
    %102 = arith.subf %101, %95 : vector<2x32xf32>
    %103 = arith.mulf %102, %100 : vector<2x32xf32>
    %104 = arith.mulf %95, %74 : vector<2x32xf32>
    %105 = arith.addf %103, %104 : vector<2x32xf32>
    %c4 = arith.constant 4 : index
    %c0_30 = arith.constant 0 : index
    %106 = vector.load %arg22[%c4, %c0_30] : memref<32x32xf32, #tpu.memory_space<vmem>>, vector<2x32xf32>
    tpu.vector_store %arg22[%c4, %c0_30], %105 {strides = array<i32>} : memref<32x32xf32, #tpu.memory_space<vmem>>, vector<2x32xf32>,
    %107 = vector.extract_strided_slice %10 {offsets = [6, 0], sizes = [2, 96], strides = [1, 1]} : vector<32x96xf32> to vector<2x96xf32>
    %cst_31 = arith.constant dense<0.000000e+00> : vector<2x96xf32>
    %108 = tpu.matmul %105, %11, %cst_31 {dimension_numbers = #tpu.dot_dimension_numbers<[1], [0], [0], [1], [0, 0, 1, 1], [], []>} : vector<2x32xf32>, vector<32x96xf32>, vector<2x96xf32> -> vector<2x96xf32>
    %109 = vector.broadcast %12 : vector<1x96xf32> to vector<2x96xf32>
    %110 = arith.addf %108, %109 : vector<2x96xf32>
    %111 = vector.extract_strided_slice %107 {offsets = [0, 0], sizes = [2, 32], strides = [1, 1]} : vector<2x96xf32> to vector<2x32xf32>
    %112 = vector.extract_strided_slice %110 {offsets = [0, 0], sizes = [2, 32], strides = [1, 1]} : vector<2x96xf32> to vector<2x32xf32>
    %113 = arith.addf %111, %112 : vector<2x32xf32>
    %114 = arith.negf %113 : vector<2x32xf32>
    %115 = math.exp %114 : vector<2x32xf32>
    %cst_32 = arith.constant 1.000000e+00 : f32
    %116 = vector.broadcast %cst_32 : f32 to vector<2x32xf32>
    %117 = arith.addf %116, %115 : vector<2x32xf32>
    %118 = arith.divf %116, %117 : vector<2x32xf32>
    %119 = vector.extract_strided_slice %107 {offsets = [0, 32], sizes = [2, 32], strides = [1, 1]} : vector<2x96xf32> to vector<2x32xf32>
    %120 = vector.extract_strided_slice %110 {offsets = [0, 32], sizes = [2, 32], strides = [1, 1]} : vector<2x96xf32> to vector<2x32xf32>
    %121 = arith.addf %119, %120 : vector<2x32xf32>
    %122 = arith.negf %121 : vector<2x32xf32>
    %123 = math.exp %122 : vector<2x32xf32>
    %cst_33 = arith.constant 1.000000e+00 : f32
    %124 = vector.broadcast %cst_33 : f32 to vector<2x32xf32>
    %125 = arith.addf %124, %123 : vector<2x32xf32>
    %126 = arith.divf %124, %125 : vector<2x32xf32>
    %127 = vector.extract_strided_slice %107 {offsets = [0, 64], sizes = [2, 32], strides = [1, 1]} : vector<2x96xf32> to vector<2x32xf32>
    %128 = vector.extract_strided_slice %110 {offsets = [0, 64], sizes = [2, 32], strides = [1, 1]} : vector<2x96xf32> to vector<2x32xf32>
    %129 = arith.mulf %118, %128 : vector<2x32xf32>
    %130 = arith.addf %127, %129 : vector<2x32xf32>
    %131 = math.tanh %130 : vector<2x32xf32>
    %cst_34 = arith.constant 1.000000e+00 : f32
    %132 = vector.broadcast %cst_34 : f32 to vector<2x32xf32>
    %133 = arith.subf %132, %126 : vector<2x32xf32>
    %134 = arith.mulf %133, %131 : vector<2x32xf32>
    %135 = arith.mulf %126, %105 : vector<2x32xf32>
    %136 = arith.addf %134, %135 : vector<2x32xf32>
    %c6 = arith.constant 6 : index
    %c0_35 = arith.constant 0 : index
    %137 = vector.load %arg22[%c6, %c0_35] : memref<32x32xf32, #tpu.memory_space<vmem>>, vector<2x32xf32>
    tpu.vector_store %arg22[%c6, %c0_35], %136 {strides = array<i32>} : memref<32x32xf32, #tpu.memory_space<vmem>>, vector<2x32xf32>,
    %138 = vector.extract_strided_slice %10 {offsets = [8, 0], sizes = [2, 96], strides = [1, 1]} : vector<32x96xf32> to vector<2x96xf32>
    %cst_36 = arith.constant dense<0.000000e+00> : vector<2x96xf32>
    %139 = tpu.matmul %136, %11, %cst_36 {dimension_numbers = #tpu.dot_dimension_numbers<[1], [0], [0], [1], [0, 0, 1, 1], [], []>} : vector<2x32xf32>, vector<32x96xf32>, vector<2x96xf32> -> vector<2x96xf32>
    %140 = vector.broadcast %12 : vector<1x96xf32> to vector<2x96xf32>
    %141 = arith.addf %139, %140 : vector<2x96xf32>
    %142 = vector.extract_strided_slice %138 {offsets = [0, 0], sizes = [2, 32], strides = [1, 1]} : vector<2x96xf32> to vector<2x32xf32>
    %143 = vector.extract_strided_slice %141 {offsets = [0, 0], sizes = [2, 32], strides = [1, 1]} : vector<2x96xf32> to vector<2x32xf32>
    %144 = arith.addf %142, %143 : vector<2x32xf32>
    %145 = arith.negf %144 : vector<2x32xf32>
    %146 = math.exp %145 : vector<2x32xf32>
    %cst_37 = arith.constant 1.000000e+00 : f32
    %147 = vector.broadcast %cst_37 : f32 to vector<2x32xf32>
    %148 = arith.addf %147, %146 : vector<2x32xf32>
    %149 = arith.divf %147, %148 : vector<2x32xf32>
    %150 = vector.extract_strided_slice %138 {offsets = [0, 32], sizes = [2, 32], strides = [1, 1]} : vector<2x96xf32> to vector<2x32xf32>
    %151 = vector.extract_strided_slice %141 {offsets = [0, 32], sizes = [2, 32], strides = [1, 1]} : vector<2x96xf32> to vector<2x32xf32>
    %152 = arith.addf %150, %151 : vector<2x32xf32>
    %153 = arith.negf %152 : vector<2x32xf32>
    %154 = math.exp %153 : vector<2x32xf32>
    %cst_38 = arith.constant 1.000000e+00 : f32
    %155 = vector.broadcast %cst_38 : f32 to vector<2x32xf32>
    %156 = arith.addf %155, %154 : vector<2x32xf32>
    %157 = arith.divf %155, %156 : vector<2x32xf32>
    %158 = vector.extract_strided_slice %138 {offsets = [0, 64], sizes = [2, 32], strides = [1, 1]} : vector<2x96xf32> to vector<2x32xf32>
    %159 = vector.extract_strided_slice %141 {offsets = [0, 64], sizes = [2, 32], strides = [1, 1]} : vector<2x96xf32> to vector<2x32xf32>
    %160 = arith.mulf %149, %159 : vector<2x32xf32>
    %161 = arith.addf %158, %160 : vector<2x32xf32>
    %162 = math.tanh %161 : vector<2x32xf32>
    %cst_39 = arith.constant 1.000000e+00 : f32
    %163 = vector.broadcast %cst_39 : f32 to vector<2x32xf32>
    %164 = arith.subf %163, %157 : vector<2x32xf32>
    %165 = arith.mulf %164, %162 : vector<2x32xf32>
    %166 = arith.mulf %157, %136 : vector<2x32xf32>
    %167 = arith.addf %165, %166 : vector<2x32xf32>
    %c8 = arith.constant 8 : index
    %c0_40 = arith.constant 0 : index
    %168 = vector.load %arg22[%c8, %c0_40] : memref<32x32xf32, #tpu.memory_space<vmem>>, vector<2x32xf32>
    tpu.vector_store %arg22[%c8, %c0_40], %167 {strides = array<i32>} : memref<32x32xf32, #tpu.memory_space<vmem>>, vector<2x32xf32>,
    %169 = vector.extract_strided_slice %10 {offsets = [10, 0], sizes = [2, 96], strides = [1, 1]} : vector<32x96xf32> to vector<2x96xf32>
    %cst_41 = arith.constant dense<0.000000e+00> : vector<2x96xf32>
    %170 = tpu.matmul %167, %11, %cst_41 {dimension_numbers = #tpu.dot_dimension_numbers<[1], [0], [0], [1], [0, 0, 1, 1], [], []>} : vector<2x32xf32>, vector<32x96xf32>, vector<2x96xf32> -> vector<2x96xf32>
    %171 = vector.broadcast %12 : vector<1x96xf32> to vector<2x96xf32>
    %172 = arith.addf %170, %171 : vector<2x96xf32>
    %173 = vector.extract_strided_slice %169 {offsets = [0, 0], sizes = [2, 32], strides = [1, 1]} : vector<2x96xf32> to vector<2x32xf32>
    %174 = vector.extract_strided_slice %172 {offsets = [0, 0], sizes = [2, 32], strides = [1, 1]} : vector<2x96xf32> to vector<2x32xf32>
    %175 = arith.addf %173, %174 : vector<2x32xf32>
    %176 = arith.negf %175 : vector<2x32xf32>
    %177 = math.exp %176 : vector<2x32xf32>
    %cst_42 = arith.constant 1.000000e+00 : f32
    %178 = vector.broadcast %cst_42 : f32 to vector<2x32xf32>
    %179 = arith.addf %178, %177 : vector<2x32xf32>
    %180 = arith.divf %178, %179 : vector<2x32xf32>
    %181 = vector.extract_strided_slice %169 {offsets = [0, 32], sizes = [2, 32], strides = [1, 1]} : vector<2x96xf32> to vector<2x32xf32>
    %182 = vector.extract_strided_slice %172 {offsets = [0, 32], sizes = [2, 32], strides = [1, 1]} : vector<2x96xf32> to vector<2x32xf32>
    %183 = arith.addf %181, %182 : vector<2x32xf32>
    %184 = arith.negf %183 : vector<2x32xf32>
    %185 = math.exp %184 : vector<2x32xf32>
    %cst_43 = arith.constant 1.000000e+00 : f32
    %186 = vector.broadcast %cst_43 : f32 to vector<2x32xf32>
    %187 = arith.addf %186, %185 : vector<2x32xf32>
    %188 = arith.divf %186, %187 : vector<2x32xf32>
    %189 = vector.extract_strided_slice %169 {offsets = [0, 64], sizes = [2, 32], strides = [1, 1]} : vector<2x96xf32> to vector<2x32xf32>
    %190 = vector.extract_strided_slice %172 {offsets = [0, 64], sizes = [2, 32], strides = [1, 1]} : vector<2x96xf32> to vector<2x32xf32>
    %191 = arith.mulf %180, %190 : vector<2x32xf32>
    %192 = arith.addf %189, %191 : vector<2x32xf32>
    %193 = math.tanh %192 : vector<2x32xf32>
    %cst_44 = arith.constant 1.000000e+00 : f32
    %194 = vector.broadcast %cst_44 : f32 to vector<2x32xf32>
    %195 = arith.subf %194, %188 : vector<2x32xf32>
    %196 = arith.mulf %195, %193 : vector<2x32xf32>
    %197 = arith.mulf %188, %167 : vector<2x32xf32>
    %198 = arith.addf %196, %197 : vector<2x32xf32>
    %c10 = arith.constant 10 : index
    %c0_45 = arith.constant 0 : index
    %199 = vector.load %arg22[%c10, %c0_45] : memref<32x32xf32, #tpu.memory_space<vmem>>, vector<2x32xf32>
    tpu.vector_store %arg22[%c10, %c0_45], %198 {strides = array<i32>} : memref<32x32xf32, #tpu.memory_space<vmem>>, vector<2x32xf32>,
    %200 = vector.extract_strided_slice %10 {offsets = [12, 0], sizes = [2, 96], strides = [1, 1]} : vector<32x96xf32> to vector<2x96xf32>
    %cst_46 = arith.constant dense<0.000000e+00> : vector<2x96xf32>
    %201 = tpu.matmul %198, %11, %cst_46 {dimension_numbers = #tpu.dot_dimension_numbers<[1], [0], [0], [1], [0, 0, 1, 1], [], []>} : vector<2x32xf32>, vector<32x96xf32>, vector<2x96xf32> -> vector<2x96xf32>
    %202 = vector.broadcast %12 : vector<1x96xf32> to vector<2x96xf32>
    %203 = arith.addf %201, %202 : vector<2x96xf32>
    %204 = vector.extract_strided_slice %200 {offsets = [0, 0], sizes = [2, 32], strides = [1, 1]} : vector<2x96xf32> to vector<2x32xf32>
    %205 = vector.extract_strided_slice %203 {offsets = [0, 0], sizes = [2, 32], strides = [1, 1]} : vector<2x96xf32> to vector<2x32xf32>
    %206 = arith.addf %204, %205 : vector<2x32xf32>
    %207 = arith.negf %206 : vector<2x32xf32>
    %208 = math.exp %207 : vector<2x32xf32>
    %cst_47 = arith.constant 1.000000e+00 : f32
    %209 = vector.broadcast %cst_47 : f32 to vector<2x32xf32>
    %210 = arith.addf %209, %208 : vector<2x32xf32>
    %211 = arith.divf %209, %210 : vector<2x32xf32>
    %212 = vector.extract_strided_slice %200 {offsets = [0, 32], sizes = [2, 32], strides = [1, 1]} : vector<2x96xf32> to vector<2x32xf32>
    %213 = vector.extract_strided_slice %203 {offsets = [0, 32], sizes = [2, 32], strides = [1, 1]} : vector<2x96xf32> to vector<2x32xf32>
    %214 = arith.addf %212, %213 : vector<2x32xf32>
    %215 = arith.negf %214 : vector<2x32xf32>
    %216 = math.exp %215 : vector<2x32xf32>
    %cst_48 = arith.constant 1.000000e+00 : f32
    %217 = vector.broadcast %cst_48 : f32 to vector<2x32xf32>
    %218 = arith.addf %217, %216 : vector<2x32xf32>
    %219 = arith.divf %217, %218 : vector<2x32xf32>
    %220 = vector.extract_strided_slice %200 {offsets = [0, 64], sizes = [2, 32], strides = [1, 1]} : vector<2x96xf32> to vector<2x32xf32>
    %221 = vector.extract_strided_slice %203 {offsets = [0, 64], sizes = [2, 32], strides = [1, 1]} : vector<2x96xf32> to vector<2x32xf32>
    %222 = arith.mulf %211, %221 : vector<2x32xf32>
    %223 = arith.addf %220, %222 : vector<2x32xf32>
    %224 = math.tanh %223 : vector<2x32xf32>
    %cst_49 = arith.constant 1.000000e+00 : f32
    %225 = vector.broadcast %cst_49 : f32 to vector<2x32xf32>
    %226 = arith.subf %225, %219 : vector<2x32xf32>
    %227 = arith.mulf %226, %224 : vector<2x32xf32>
    %228 = arith.mulf %219, %198 : vector<2x32xf32>
    %229 = arith.addf %227, %228 : vector<2x32xf32>
    %c12 = arith.constant 12 : index
    %c0_50 = arith.constant 0 : index
    %230 = vector.load %arg22[%c12, %c0_50] : memref<32x32xf32, #tpu.memory_space<vmem>>, vector<2x32xf32>
    tpu.vector_store %arg22[%c12, %c0_50], %229 {strides = array<i32>} : memref<32x32xf32, #tpu.memory_space<vmem>>, vector<2x32xf32>,
    %231 = vector.extract_strided_slice %10 {offsets = [14, 0], sizes = [2, 96], strides = [1, 1]} : vector<32x96xf32> to vector<2x96xf32>
    %cst_51 = arith.constant dense<0.000000e+00> : vector<2x96xf32>
    %232 = tpu.matmul %229, %11, %cst_51 {dimension_numbers = #tpu.dot_dimension_numbers<[1], [0], [0], [1], [0, 0, 1, 1], [], []>} : vector<2x32xf32>, vector<32x96xf32>, vector<2x96xf32> -> vector<2x96xf32>
    %233 = vector.broadcast %12 : vector<1x96xf32> to vector<2x96xf32>
    %234 = arith.addf %232, %233 : vector<2x96xf32>
    %235 = vector.extract_strided_slice %231 {offsets = [0, 0], sizes = [2, 32], strides = [1, 1]} : vector<2x96xf32> to vector<2x32xf32>
    %236 = vector.extract_strided_slice %234 {offsets = [0, 0], sizes = [2, 32], strides = [1, 1]} : vector<2x96xf32> to vector<2x32xf32>
    %237 = arith.addf %235, %236 : vector<2x32xf32>
    %238 = arith.negf %237 : vector<2x32xf32>
    %239 = math.exp %238 : vector<2x32xf32>
    %cst_52 = arith.constant 1.000000e+00 : f32
    %240 = vector.broadcast %cst_52 : f32 to vector<2x32xf32>
    %241 = arith.addf %240, %239 : vector<2x32xf32>
    %242 = arith.divf %240, %241 : vector<2x32xf32>
    %243 = vector.extract_strided_slice %231 {offsets = [0, 32], sizes = [2, 32], strides = [1, 1]} : vector<2x96xf32> to vector<2x32xf32>
    %244 = vector.extract_strided_slice %234 {offsets = [0, 32], sizes = [2, 32], strides = [1, 1]} : vector<2x96xf32> to vector<2x32xf32>
    %245 = arith.addf %243, %244 : vector<2x32xf32>
    %246 = arith.negf %245 : vector<2x32xf32>
    %247 = math.exp %246 : vector<2x32xf32>
    %cst_53 = arith.constant 1.000000e+00 : f32
    %248 = vector.broadcast %cst_53 : f32 to vector<2x32xf32>
    %249 = arith.addf %248, %247 : vector<2x32xf32>
    %250 = arith.divf %248, %249 : vector<2x32xf32>
    %251 = vector.extract_strided_slice %231 {offsets = [0, 64], sizes = [2, 32], strides = [1, 1]} : vector<2x96xf32> to vector<2x32xf32>
    %252 = vector.extract_strided_slice %234 {offsets = [0, 64], sizes = [2, 32], strides = [1, 1]} : vector<2x96xf32> to vector<2x32xf32>
    %253 = arith.mulf %242, %252 : vector<2x32xf32>
    %254 = arith.addf %251, %253 : vector<2x32xf32>
    %255 = math.tanh %254 : vector<2x32xf32>
    %cst_54 = arith.constant 1.000000e+00 : f32
    %256 = vector.broadcast %cst_54 : f32 to vector<2x32xf32>
    %257 = arith.subf %256, %250 : vector<2x32xf32>
    %258 = arith.mulf %257, %255 : vector<2x32xf32>
    %259 = arith.mulf %250, %229 : vector<2x32xf32>
    %260 = arith.addf %258, %259 : vector<2x32xf32>
    %c14 = arith.constant 14 : index
    %c0_55 = arith.constant 0 : index
    %261 = vector.load %arg22[%c14, %c0_55] : memref<32x32xf32, #tpu.memory_space<vmem>>, vector<2x32xf32>
    tpu.vector_store %arg22[%c14, %c0_55], %260 {strides = array<i32>} : memref<32x32xf32, #tpu.memory_space<vmem>>, vector<2x32xf32>,
    %262 = vector.extract_strided_slice %10 {offsets = [16, 0], sizes = [2, 96], strides = [1, 1]} : vector<32x96xf32> to vector<2x96xf32>
    %cst_56 = arith.constant dense<0.000000e+00> : vector<2x96xf32>
    %263 = tpu.matmul %260, %11, %cst_56 {dimension_numbers = #tpu.dot_dimension_numbers<[1], [0], [0], [1], [0, 0, 1, 1], [], []>} : vector<2x32xf32>, vector<32x96xf32>, vector<2x96xf32> -> vector<2x96xf32>
    %264 = vector.broadcast %12 : vector<1x96xf32> to vector<2x96xf32>
    %265 = arith.addf %263, %264 : vector<2x96xf32>
    %266 = vector.extract_strided_slice %262 {offsets = [0, 0], sizes = [2, 32], strides = [1, 1]} : vector<2x96xf32> to vector<2x32xf32>
    %267 = vector.extract_strided_slice %265 {offsets = [0, 0], sizes = [2, 32], strides = [1, 1]} : vector<2x96xf32> to vector<2x32xf32>
    %268 = arith.addf %266, %267 : vector<2x32xf32>
    %269 = arith.negf %268 : vector<2x32xf32>
    %270 = math.exp %269 : vector<2x32xf32>
    %cst_57 = arith.constant 1.000000e+00 : f32
    %271 = vector.broadcast %cst_57 : f32 to vector<2x32xf32>
    %272 = arith.addf %271, %270 : vector<2x32xf32>
    %273 = arith.divf %271, %272 : vector<2x32xf32>
    %274 = vector.extract_strided_slice %262 {offsets = [0, 32], sizes = [2, 32], strides = [1, 1]} : vector<2x96xf32> to vector<2x32xf32>
    %275 = vector.extract_strided_slice %265 {offsets = [0, 32], sizes = [2, 32], strides = [1, 1]} : vector<2x96xf32> to vector<2x32xf32>
    %276 = arith.addf %274, %275 : vector<2x32xf32>
    %277 = arith.negf %276 : vector<2x32xf32>
    %278 = math.exp %277 : vector<2x32xf32>
    %cst_58 = arith.constant 1.000000e+00 : f32
    %279 = vector.broadcast %cst_58 : f32 to vector<2x32xf32>
    %280 = arith.addf %279, %278 : vector<2x32xf32>
    %281 = arith.divf %279, %280 : vector<2x32xf32>
    %282 = vector.extract_strided_slice %262 {offsets = [0, 64], sizes = [2, 32], strides = [1, 1]} : vector<2x96xf32> to vector<2x32xf32>
    %283 = vector.extract_strided_slice %265 {offsets = [0, 64], sizes = [2, 32], strides = [1, 1]} : vector<2x96xf32> to vector<2x32xf32>
    %284 = arith.mulf %273, %283 : vector<2x32xf32>
    %285 = arith.addf %282, %284 : vector<2x32xf32>
    %286 = math.tanh %285 : vector<2x32xf32>
    %cst_59 = arith.constant 1.000000e+00 : f32
    %287 = vector.broadcast %cst_59 : f32 to vector<2x32xf32>
    %288 = arith.subf %287, %281 : vector<2x32xf32>
    %289 = arith.mulf %288, %286 : vector<2x32xf32>
    %290 = arith.mulf %281, %260 : vector<2x32xf32>
    %291 = arith.addf %289, %290 : vector<2x32xf32>
    %c16 = arith.constant 16 : index
    %c0_60 = arith.constant 0 : index
    %292 = vector.load %arg22[%c16, %c0_60] : memref<32x32xf32, #tpu.memory_space<vmem>>, vector<2x32xf32>
    tpu.vector_store %arg22[%c16, %c0_60], %291 {strides = array<i32>} : memref<32x32xf32, #tpu.memory_space<vmem>>, vector<2x32xf32>,
    %293 = vector.extract_strided_slice %10 {offsets = [18, 0], sizes = [2, 96], strides = [1, 1]} : vector<32x96xf32> to vector<2x96xf32>
    %cst_61 = arith.constant dense<0.000000e+00> : vector<2x96xf32>
    %294 = tpu.matmul %291, %11, %cst_61 {dimension_numbers = #tpu.dot_dimension_numbers<[1], [0], [0], [1], [0, 0, 1, 1], [], []>} : vector<2x32xf32>, vector<32x96xf32>, vector<2x96xf32> -> vector<2x96xf32>
    %295 = vector.broadcast %12 : vector<1x96xf32> to vector<2x96xf32>
    %296 = arith.addf %294, %295 : vector<2x96xf32>
    %297 = vector.extract_strided_slice %293 {offsets = [0, 0], sizes = [2, 32], strides = [1, 1]} : vector<2x96xf32> to vector<2x32xf32>
    %298 = vector.extract_strided_slice %296 {offsets = [0, 0], sizes = [2, 32], strides = [1, 1]} : vector<2x96xf32> to vector<2x32xf32>
    %299 = arith.addf %297, %298 : vector<2x32xf32>
    %300 = arith.negf %299 : vector<2x32xf32>
    %301 = math.exp %300 : vector<2x32xf32>
    %cst_62 = arith.constant 1.000000e+00 : f32
    %302 = vector.broadcast %cst_62 : f32 to vector<2x32xf32>
    %303 = arith.addf %302, %301 : vector<2x32xf32>
    %304 = arith.divf %302, %303 : vector<2x32xf32>
    %305 = vector.extract_strided_slice %293 {offsets = [0, 32], sizes = [2, 32], strides = [1, 1]} : vector<2x96xf32> to vector<2x32xf32>
    %306 = vector.extract_strided_slice %296 {offsets = [0, 32], sizes = [2, 32], strides = [1, 1]} : vector<2x96xf32> to vector<2x32xf32>
    %307 = arith.addf %305, %306 : vector<2x32xf32>
    %308 = arith.negf %307 : vector<2x32xf32>
    %309 = math.exp %308 : vector<2x32xf32>
    %cst_63 = arith.constant 1.000000e+00 : f32
    %310 = vector.broadcast %cst_63 : f32 to vector<2x32xf32>
    %311 = arith.addf %310, %309 : vector<2x32xf32>
    %312 = arith.divf %310, %311 : vector<2x32xf32>
    %313 = vector.extract_strided_slice %293 {offsets = [0, 64], sizes = [2, 32], strides = [1, 1]} : vector<2x96xf32> to vector<2x32xf32>
    %314 = vector.extract_strided_slice %296 {offsets = [0, 64], sizes = [2, 32], strides = [1, 1]} : vector<2x96xf32> to vector<2x32xf32>
    %315 = arith.mulf %304, %314 : vector<2x32xf32>
    %316 = arith.addf %313, %315 : vector<2x32xf32>
    %317 = math.tanh %316 : vector<2x32xf32>
    %cst_64 = arith.constant 1.000000e+00 : f32
    %318 = vector.broadcast %cst_64 : f32 to vector<2x32xf32>
    %319 = arith.subf %318, %312 : vector<2x32xf32>
    %320 = arith.mulf %319, %317 : vector<2x32xf32>
    %321 = arith.mulf %312, %291 : vector<2x32xf32>
    %322 = arith.addf %320, %321 : vector<2x32xf32>
    %c18 = arith.constant 18 : index
    %c0_65 = arith.constant 0 : index
    %323 = vector.load %arg22[%c18, %c0_65] : memref<32x32xf32, #tpu.memory_space<vmem>>, vector<2x32xf32>
    tpu.vector_store %arg22[%c18, %c0_65], %322 {strides = array<i32>} : memref<32x32xf32, #tpu.memory_space<vmem>>, vector<2x32xf32>,
    %324 = vector.extract_strided_slice %10 {offsets = [20, 0], sizes = [2, 96], strides = [1, 1]} : vector<32x96xf32> to vector<2x96xf32>
    %cst_66 = arith.constant dense<0.000000e+00> : vector<2x96xf32>
    %325 = tpu.matmul %322, %11, %cst_66 {dimension_numbers = #tpu.dot_dimension_numbers<[1], [0], [0], [1], [0, 0, 1, 1], [], []>} : vector<2x32xf32>, vector<32x96xf32>, vector<2x96xf32> -> vector<2x96xf32>
    %326 = vector.broadcast %12 : vector<1x96xf32> to vector<2x96xf32>
    %327 = arith.addf %325, %326 : vector<2x96xf32>
    %328 = vector.extract_strided_slice %324 {offsets = [0, 0], sizes = [2, 32], strides = [1, 1]} : vector<2x96xf32> to vector<2x32xf32>
    %329 = vector.extract_strided_slice %327 {offsets = [0, 0], sizes = [2, 32], strides = [1, 1]} : vector<2x96xf32> to vector<2x32xf32>
    %330 = arith.addf %328, %329 : vector<2x32xf32>
    %331 = arith.negf %330 : vector<2x32xf32>
    %332 = math.exp %331 : vector<2x32xf32>
    %cst_67 = arith.constant 1.000000e+00 : f32
    %333 = vector.broadcast %cst_67 : f32 to vector<2x32xf32>
    %334 = arith.addf %333, %332 : vector<2x32xf32>
    %335 = arith.divf %333, %334 : vector<2x32xf32>
    %336 = vector.extract_strided_slice %324 {offsets = [0, 32], sizes = [2, 32], strides = [1, 1]} : vector<2x96xf32> to vector<2x32xf32>
    %337 = vector.extract_strided_slice %327 {offsets = [0, 32], sizes = [2, 32], strides = [1, 1]} : vector<2x96xf32> to vector<2x32xf32>
    %338 = arith.addf %336, %337 : vector<2x32xf32>
    %339 = arith.negf %338 : vector<2x32xf32>
    %340 = math.exp %339 : vector<2x32xf32>
    %cst_68 = arith.constant 1.000000e+00 : f32
    %341 = vector.broadcast %cst_68 : f32 to vector<2x32xf32>
    %342 = arith.addf %341, %340 : vector<2x32xf32>
    %343 = arith.divf %341, %342 : vector<2x32xf32>
    %344 = vector.extract_strided_slice %324 {offsets = [0, 64], sizes = [2, 32], strides = [1, 1]} : vector<2x96xf32> to vector<2x32xf32>
    %345 = vector.extract_strided_slice %327 {offsets = [0, 64], sizes = [2, 32], strides = [1, 1]} : vector<2x96xf32> to vector<2x32xf32>
    %346 = arith.mulf %335, %345 : vector<2x32xf32>
    %347 = arith.addf %344, %346 : vector<2x32xf32>
    %348 = math.tanh %347 : vector<2x32xf32>
    %cst_69 = arith.constant 1.000000e+00 : f32
    %349 = vector.broadcast %cst_69 : f32 to vector<2x32xf32>
    %350 = arith.subf %349, %343 : vector<2x32xf32>
    %351 = arith.mulf %350, %348 : vector<2x32xf32>
    %352 = arith.mulf %343, %322 : vector<2x32xf32>
    %353 = arith.addf %351, %352 : vector<2x32xf32>
    %c20 = arith.constant 20 : index
    %c0_70 = arith.constant 0 : index
    %354 = vector.load %arg22[%c20, %c0_70] : memref<32x32xf32, #tpu.memory_space<vmem>>, vector<2x32xf32>
    tpu.vector_store %arg22[%c20, %c0_70], %353 {strides = array<i32>} : memref<32x32xf32, #tpu.memory_space<vmem>>, vector<2x32xf32>,
    %355 = vector.extract_strided_slice %10 {offsets = [22, 0], sizes = [2, 96], strides = [1, 1]} : vector<32x96xf32> to vector<2x96xf32>
    %cst_71 = arith.constant dense<0.000000e+00> : vector<2x96xf32>
    %356 = tpu.matmul %353, %11, %cst_71 {dimension_numbers = #tpu.dot_dimension_numbers<[1], [0], [0], [1], [0, 0, 1, 1], [], []>} : vector<2x32xf32>, vector<32x96xf32>, vector<2x96xf32> -> vector<2x96xf32>
    %357 = vector.broadcast %12 : vector<1x96xf32> to vector<2x96xf32>
    %358 = arith.addf %356, %357 : vector<2x96xf32>
    %359 = vector.extract_strided_slice %355 {offsets = [0, 0], sizes = [2, 32], strides = [1, 1]} : vector<2x96xf32> to vector<2x32xf32>
    %360 = vector.extract_strided_slice %358 {offsets = [0, 0], sizes = [2, 32], strides = [1, 1]} : vector<2x96xf32> to vector<2x32xf32>
    %361 = arith.addf %359, %360 : vector<2x32xf32>
    %362 = arith.negf %361 : vector<2x32xf32>
    %363 = math.exp %362 : vector<2x32xf32>
    %cst_72 = arith.constant 1.000000e+00 : f32
    %364 = vector.broadcast %cst_72 : f32 to vector<2x32xf32>
    %365 = arith.addf %364, %363 : vector<2x32xf32>
    %366 = arith.divf %364, %365 : vector<2x32xf32>
    %367 = vector.extract_strided_slice %355 {offsets = [0, 32], sizes = [2, 32], strides = [1, 1]} : vector<2x96xf32> to vector<2x32xf32>
    %368 = vector.extract_strided_slice %358 {offsets = [0, 32], sizes = [2, 32], strides = [1, 1]} : vector<2x96xf32> to vector<2x32xf32>
    %369 = arith.addf %367, %368 : vector<2x32xf32>
    %370 = arith.negf %369 : vector<2x32xf32>
    %371 = math.exp %370 : vector<2x32xf32>
    %cst_73 = arith.constant 1.000000e+00 : f32
    %372 = vector.broadcast %cst_73 : f32 to vector<2x32xf32>
    %373 = arith.addf %372, %371 : vector<2x32xf32>
    %374 = arith.divf %372, %373 : vector<2x32xf32>
    %375 = vector.extract_strided_slice %355 {offsets = [0, 64], sizes = [2, 32], strides = [1, 1]} : vector<2x96xf32> to vector<2x32xf32>
    %376 = vector.extract_strided_slice %358 {offsets = [0, 64], sizes = [2, 32], strides = [1, 1]} : vector<2x96xf32> to vector<2x32xf32>
    %377 = arith.mulf %366, %376 : vector<2x32xf32>
    %378 = arith.addf %375, %377 : vector<2x32xf32>
    %379 = math.tanh %378 : vector<2x32xf32>
    %cst_74 = arith.constant 1.000000e+00 : f32
    %380 = vector.broadcast %cst_74 : f32 to vector<2x32xf32>
    %381 = arith.subf %380, %374 : vector<2x32xf32>
    %382 = arith.mulf %381, %379 : vector<2x32xf32>
    %383 = arith.mulf %374, %353 : vector<2x32xf32>
    %384 = arith.addf %382, %383 : vector<2x32xf32>
    %c22 = arith.constant 22 : index
    %c0_75 = arith.constant 0 : index
    %385 = vector.load %arg22[%c22, %c0_75] : memref<32x32xf32, #tpu.memory_space<vmem>>, vector<2x32xf32>
    tpu.vector_store %arg22[%c22, %c0_75], %384 {strides = array<i32>} : memref<32x32xf32, #tpu.memory_space<vmem>>, vector<2x32xf32>,
    %386 = vector.extract_strided_slice %10 {offsets = [24, 0], sizes = [2, 96], strides = [1, 1]} : vector<32x96xf32> to vector<2x96xf32>
    %cst_76 = arith.constant dense<0.000000e+00> : vector<2x96xf32>
    %387 = tpu.matmul %384, %11, %cst_76 {dimension_numbers = #tpu.dot_dimension_numbers<[1], [0], [0], [1], [0, 0, 1, 1], [], []>} : vector<2x32xf32>, vector<32x96xf32>, vector<2x96xf32> -> vector<2x96xf32>
    %388 = vector.broadcast %12 : vector<1x96xf32> to vector<2x96xf32>
    %389 = arith.addf %387, %388 : vector<2x96xf32>
    %390 = vector.extract_strided_slice %386 {offsets = [0, 0], sizes = [2, 32], strides = [1, 1]} : vector<2x96xf32> to vector<2x32xf32>
    %391 = vector.extract_strided_slice %389 {offsets = [0, 0], sizes = [2, 32], strides = [1, 1]} : vector<2x96xf32> to vector<2x32xf32>
    %392 = arith.addf %390, %391 : vector<2x32xf32>
    %393 = arith.negf %392 : vector<2x32xf32>
    %394 = math.exp %393 : vector<2x32xf32>
    %cst_77 = arith.constant 1.000000e+00 : f32
    %395 = vector.broadcast %cst_77 : f32 to vector<2x32xf32>
    %396 = arith.addf %395, %394 : vector<2x32xf32>
    %397 = arith.divf %395, %396 : vector<2x32xf32>
    %398 = vector.extract_strided_slice %386 {offsets = [0, 32], sizes = [2, 32], strides = [1, 1]} : vector<2x96xf32> to vector<2x32xf32>
    %399 = vector.extract_strided_slice %389 {offsets = [0, 32], sizes = [2, 32], strides = [1, 1]} : vector<2x96xf32> to vector<2x32xf32>
    %400 = arith.addf %398, %399 : vector<2x32xf32>
    %401 = arith.negf %400 : vector<2x32xf32>
    %402 = math.exp %401 : vector<2x32xf32>
    %cst_78 = arith.constant 1.000000e+00 : f32
    %403 = vector.broadcast %cst_78 : f32 to vector<2x32xf32>
    %404 = arith.addf %403, %402 : vector<2x32xf32>
    %405 = arith.divf %403, %404 : vector<2x32xf32>
    %406 = vector.extract_strided_slice %386 {offsets = [0, 64], sizes = [2, 32], strides = [1, 1]} : vector<2x96xf32> to vector<2x32xf32>
    %407 = vector.extract_strided_slice %389 {offsets = [0, 64], sizes = [2, 32], strides = [1, 1]} : vector<2x96xf32> to vector<2x32xf32>
    %408 = arith.mulf %397, %407 : vector<2x32xf32>
    %409 = arith.addf %406, %408 : vector<2x32xf32>
    %410 = math.tanh %409 : vector<2x32xf32>
    %cst_79 = arith.constant 1.000000e+00 : f32
    %411 = vector.broadcast %cst_79 : f32 to vector<2x32xf32>
    %412 = arith.subf %411, %405 : vector<2x32xf32>
    %413 = arith.mulf %412, %410 : vector<2x32xf32>
    %414 = arith.mulf %405, %384 : vector<2x32xf32>
    %415 = arith.addf %413, %414 : vector<2x32xf32>
    %c24 = arith.constant 24 : index
    %c0_80 = arith.constant 0 : index
    %416 = vector.load %arg22[%c24, %c0_80] : memref<32x32xf32, #tpu.memory_space<vmem>>, vector<2x32xf32>
    tpu.vector_store %arg22[%c24, %c0_80], %415 {strides = array<i32>} : memref<32x32xf32, #tpu.memory_space<vmem>>, vector<2x32xf32>,
    %417 = vector.extract_strided_slice %10 {offsets = [26, 0], sizes = [2, 96], strides = [1, 1]} : vector<32x96xf32> to vector<2x96xf32>
    %cst_81 = arith.constant dense<0.000000e+00> : vector<2x96xf32>
    %418 = tpu.matmul %415, %11, %cst_81 {dimension_numbers = #tpu.dot_dimension_numbers<[1], [0], [0], [1], [0, 0, 1, 1], [], []>} : vector<2x32xf32>, vector<32x96xf32>, vector<2x96xf32> -> vector<2x96xf32>
    %419 = vector.broadcast %12 : vector<1x96xf32> to vector<2x96xf32>
    %420 = arith.addf %418, %419 : vector<2x96xf32>
    %421 = vector.extract_strided_slice %417 {offsets = [0, 0], sizes = [2, 32], strides = [1, 1]} : vector<2x96xf32> to vector<2x32xf32>
    %422 = vector.extract_strided_slice %420 {offsets = [0, 0], sizes = [2, 32], strides = [1, 1]} : vector<2x96xf32> to vector<2x32xf32>
    %423 = arith.addf %421, %422 : vector<2x32xf32>
    %424 = arith.negf %423 : vector<2x32xf32>
    %425 = math.exp %424 : vector<2x32xf32>
    %cst_82 = arith.constant 1.000000e+00 : f32
    %426 = vector.broadcast %cst_82 : f32 to vector<2x32xf32>
    %427 = arith.addf %426, %425 : vector<2x32xf32>
    %428 = arith.divf %426, %427 : vector<2x32xf32>
    %429 = vector.extract_strided_slice %417 {offsets = [0, 32], sizes = [2, 32], strides = [1, 1]} : vector<2x96xf32> to vector<2x32xf32>
    %430 = vector.extract_strided_slice %420 {offsets = [0, 32], sizes = [2, 32], strides = [1, 1]} : vector<2x96xf32> to vector<2x32xf32>
    %431 = arith.addf %429, %430 : vector<2x32xf32>
    %432 = arith.negf %431 : vector<2x32xf32>
    %433 = math.exp %432 : vector<2x32xf32>
    %cst_83 = arith.constant 1.000000e+00 : f32
    %434 = vector.broadcast %cst_83 : f32 to vector<2x32xf32>
    %435 = arith.addf %434, %433 : vector<2x32xf32>
    %436 = arith.divf %434, %435 : vector<2x32xf32>
    %437 = vector.extract_strided_slice %417 {offsets = [0, 64], sizes = [2, 32], strides = [1, 1]} : vector<2x96xf32> to vector<2x32xf32>
    %438 = vector.extract_strided_slice %420 {offsets = [0, 64], sizes = [2, 32], strides = [1, 1]} : vector<2x96xf32> to vector<2x32xf32>
    %439 = arith.mulf %428, %438 : vector<2x32xf32>
    %440 = arith.addf %437, %439 : vector<2x32xf32>
    %441 = math.tanh %440 : vector<2x32xf32>
    %cst_84 = arith.constant 1.000000e+00 : f32
    %442 = vector.broadcast %cst_84 : f32 to vector<2x32xf32>
    %443 = arith.subf %442, %436 : vector<2x32xf32>
    %444 = arith.mulf %443, %441 : vector<2x32xf32>
    %445 = arith.mulf %436, %415 : vector<2x32xf32>
    %446 = arith.addf %444, %445 : vector<2x32xf32>
    %c26 = arith.constant 26 : index
    %c0_85 = arith.constant 0 : index
    %447 = vector.load %arg22[%c26, %c0_85] : memref<32x32xf32, #tpu.memory_space<vmem>>, vector<2x32xf32>
    tpu.vector_store %arg22[%c26, %c0_85], %446 {strides = array<i32>} : memref<32x32xf32, #tpu.memory_space<vmem>>, vector<2x32xf32>,
    %448 = vector.extract_strided_slice %10 {offsets = [28, 0], sizes = [2, 96], strides = [1, 1]} : vector<32x96xf32> to vector<2x96xf32>
    %cst_86 = arith.constant dense<0.000000e+00> : vector<2x96xf32>
    %449 = tpu.matmul %446, %11, %cst_86 {dimension_numbers = #tpu.dot_dimension_numbers<[1], [0], [0], [1], [0, 0, 1, 1], [], []>} : vector<2x32xf32>, vector<32x96xf32>, vector<2x96xf32> -> vector<2x96xf32>
    %450 = vector.broadcast %12 : vector<1x96xf32> to vector<2x96xf32>
    %451 = arith.addf %449, %450 : vector<2x96xf32>
    %452 = vector.extract_strided_slice %448 {offsets = [0, 0], sizes = [2, 32], strides = [1, 1]} : vector<2x96xf32> to vector<2x32xf32>
    %453 = vector.extract_strided_slice %451 {offsets = [0, 0], sizes = [2, 32], strides = [1, 1]} : vector<2x96xf32> to vector<2x32xf32>
    %454 = arith.addf %452, %453 : vector<2x32xf32>
    %455 = arith.negf %454 : vector<2x32xf32>
    %456 = math.exp %455 : vector<2x32xf32>
    %cst_87 = arith.constant 1.000000e+00 : f32
    %457 = vector.broadcast %cst_87 : f32 to vector<2x32xf32>
    %458 = arith.addf %457, %456 : vector<2x32xf32>
    %459 = arith.divf %457, %458 : vector<2x32xf32>
    %460 = vector.extract_strided_slice %448 {offsets = [0, 32], sizes = [2, 32], strides = [1, 1]} : vector<2x96xf32> to vector<2x32xf32>
    %461 = vector.extract_strided_slice %451 {offsets = [0, 32], sizes = [2, 32], strides = [1, 1]} : vector<2x96xf32> to vector<2x32xf32>
    %462 = arith.addf %460, %461 : vector<2x32xf32>
    %463 = arith.negf %462 : vector<2x32xf32>
    %464 = math.exp %463 : vector<2x32xf32>
    %cst_88 = arith.constant 1.000000e+00 : f32
    %465 = vector.broadcast %cst_88 : f32 to vector<2x32xf32>
    %466 = arith.addf %465, %464 : vector<2x32xf32>
    %467 = arith.divf %465, %466 : vector<2x32xf32>
    %468 = vector.extract_strided_slice %448 {offsets = [0, 64], sizes = [2, 32], strides = [1, 1]} : vector<2x96xf32> to vector<2x32xf32>
    %469 = vector.extract_strided_slice %451 {offsets = [0, 64], sizes = [2, 32], strides = [1, 1]} : vector<2x96xf32> to vector<2x32xf32>
    %470 = arith.mulf %459, %469 : vector<2x32xf32>
    %471 = arith.addf %468, %470 : vector<2x32xf32>
    %472 = math.tanh %471 : vector<2x32xf32>
    %cst_89 = arith.constant 1.000000e+00 : f32
    %473 = vector.broadcast %cst_89 : f32 to vector<2x32xf32>
    %474 = arith.subf %473, %467 : vector<2x32xf32>
    %475 = arith.mulf %474, %472 : vector<2x32xf32>
    %476 = arith.mulf %467, %446 : vector<2x32xf32>
    %477 = arith.addf %475, %476 : vector<2x32xf32>
    %c28 = arith.constant 28 : index
    %c0_90 = arith.constant 0 : index
    %478 = vector.load %arg22[%c28, %c0_90] : memref<32x32xf32, #tpu.memory_space<vmem>>, vector<2x32xf32>
    tpu.vector_store %arg22[%c28, %c0_90], %477 {strides = array<i32>} : memref<32x32xf32, #tpu.memory_space<vmem>>, vector<2x32xf32>,
    %479 = vector.extract_strided_slice %10 {offsets = [30, 0], sizes = [2, 96], strides = [1, 1]} : vector<32x96xf32> to vector<2x96xf32>
    %cst_91 = arith.constant dense<0.000000e+00> : vector<2x96xf32>
    %480 = tpu.matmul %477, %11, %cst_91 {dimension_numbers = #tpu.dot_dimension_numbers<[1], [0], [0], [1], [0, 0, 1, 1], [], []>} : vector<2x32xf32>, vector<32x96xf32>, vector<2x96xf32> -> vector<2x96xf32>
    %481 = vector.broadcast %12 : vector<1x96xf32> to vector<2x96xf32>
    %482 = arith.addf %480, %481 : vector<2x96xf32>
    %483 = vector.extract_strided_slice %479 {offsets = [0, 0], sizes = [2, 32], strides = [1, 1]} : vector<2x96xf32> to vector<2x32xf32>
    %484 = vector.extract_strided_slice %482 {offsets = [0, 0], sizes = [2, 32], strides = [1, 1]} : vector<2x96xf32> to vector<2x32xf32>
    %485 = arith.addf %483, %484 : vector<2x32xf32>
    %486 = arith.negf %485 : vector<2x32xf32>
    %487 = math.exp %486 : vector<2x32xf32>
    %cst_92 = arith.constant 1.000000e+00 : f32
    %488 = vector.broadcast %cst_92 : f32 to vector<2x32xf32>
    %489 = arith.addf %488, %487 : vector<2x32xf32>
    %490 = arith.divf %488, %489 : vector<2x32xf32>
    %491 = vector.extract_strided_slice %479 {offsets = [0, 32], sizes = [2, 32], strides = [1, 1]} : vector<2x96xf32> to vector<2x32xf32>
    %492 = vector.extract_strided_slice %482 {offsets = [0, 32], sizes = [2, 32], strides = [1, 1]} : vector<2x96xf32> to vector<2x32xf32>
    %493 = arith.addf %491, %492 : vector<2x32xf32>
    %494 = arith.negf %493 : vector<2x32xf32>
    %495 = math.exp %494 : vector<2x32xf32>
    %cst_93 = arith.constant 1.000000e+00 : f32
    %496 = vector.broadcast %cst_93 : f32 to vector<2x32xf32>
    %497 = arith.addf %496, %495 : vector<2x32xf32>
    %498 = arith.divf %496, %497 : vector<2x32xf32>
    %499 = vector.extract_strided_slice %479 {offsets = [0, 64], sizes = [2, 32], strides = [1, 1]} : vector<2x96xf32> to vector<2x32xf32>
    %500 = vector.extract_strided_slice %482 {offsets = [0, 64], sizes = [2, 32], strides = [1, 1]} : vector<2x96xf32> to vector<2x32xf32>
    %501 = arith.mulf %490, %500 : vector<2x32xf32>
    %502 = arith.addf %499, %501 : vector<2x32xf32>
    %503 = math.tanh %502 : vector<2x32xf32>
    %cst_94 = arith.constant 1.000000e+00 : f32
    %504 = vector.broadcast %cst_94 : f32 to vector<2x32xf32>
    %505 = arith.subf %504, %498 : vector<2x32xf32>
    %506 = arith.mulf %505, %503 : vector<2x32xf32>
    %507 = arith.mulf %498, %477 : vector<2x32xf32>
    %508 = arith.addf %506, %507 : vector<2x32xf32>
    %c30 = arith.constant 30 : index
    %c0_95 = arith.constant 0 : index
    %509 = vector.load %arg22[%c30, %c0_95] : memref<32x32xf32, #tpu.memory_space<vmem>>, vector<2x32xf32>
    tpu.vector_store %arg22[%c30, %c0_95], %508 {strides = array<i32>} : memref<32x32xf32, #tpu.memory_space<vmem>>, vector<2x32xf32>,
    %c0_96 = arith.constant 0 : index
    %c0_97 = arith.constant 0 : index
    %510 = vector.load %arg22[%c0_96, %c0_97] : memref<32x32xf32, #tpu.memory_space<vmem>>, vector<32x32xf32>
    %511 = arith.addf %510, %5 : vector<32x32xf32>
    %c0_98 = arith.constant 0 : index
    %c0_99 = arith.constant 0 : index
    %512 = vector.load %arg8[%c0_98, %c0_99] : memref<32x96xf32, #tpu.memory_space<vmem>>, vector<32x96xf32>
    %cst_100 = arith.constant dense<0.000000e+00> : vector<32x96xf32>
    %513 = tpu.matmul %511, %512, %cst_100 {dimension_numbers = #tpu.dot_dimension_numbers<[1], [0], [0], [1], [0, 0, 1, 1], [], []>} : vector<32x32xf32>, vector<32x96xf32>, vector<32x96xf32> -> vector<32x96xf32>
    %c0_101 = arith.constant 0 : index
    %c0_102 = arith.constant 0 : index
    %514 = vector.load %arg9[%c0_101, %c0_102] : memref<25x96xf32, #tpu.memory_space<vmem>>, vector<25x96xf32>
    %cst_103 = arith.constant dense<0.000000e+00> : vector<32x96xf32>
    %515 = tpu.matmul %0, %514, %cst_103 {dimension_numbers = #tpu.dot_dimension_numbers<[1], [0], [0], [1], [0, 0, 1, 1], [], []>} : vector<32x25xf32>, vector<25x96xf32>, vector<32x96xf32> -> vector<32x96xf32>
    %516 = arith.addf %513, %515 : vector<32x96xf32>
    %c0_104 = arith.constant 0 : index
    %c0_105 = arith.constant 0 : index
    %517 = vector.load %arg11[%c0_104, %c0_105] : memref<1x96xf32, #tpu.memory_space<vmem>>, vector<1x96xf32>
    %518 = vector.broadcast %517 : vector<1x96xf32> to vector<32x96xf32>
    %519 = arith.addf %516, %518 : vector<32x96xf32>
    %c0_106 = arith.constant 0 : index
    %c0_107 = arith.constant 0 : index
    %520 = vector.load %arg10[%c0_106, %c0_107] : memref<32x96xf32, #tpu.memory_space<vmem>>, vector<32x96xf32>
    %c0_108 = arith.constant 0 : index
    %c0_109 = arith.constant 0 : index
    %521 = vector.load %arg12[%c0_108, %c0_109] : memref<1x96xf32, #tpu.memory_space<vmem>>, vector<1x96xf32>
    %cst_110 = arith.constant 0.000000e+00 : f32
    %522 = vector.broadcast %cst_110 : f32 to vector<2x32xf32>
    %523 = vector.extract_strided_slice %519 {offsets = [0, 0], sizes = [2, 96], strides = [1, 1]} : vector<32x96xf32> to vector<2x96xf32>
    %cst_111 = arith.constant dense<0.000000e+00> : vector<2x96xf32>
    %524 = tpu.matmul %522, %520, %cst_111 {dimension_numbers = #tpu.dot_dimension_numbers<[1], [0], [0], [1], [0, 0, 1, 1], [], []>} : vector<2x32xf32>, vector<32x96xf32>, vector<2x96xf32> -> vector<2x96xf32>
    %525 = vector.broadcast %521 : vector<1x96xf32> to vector<2x96xf32>
    %526 = arith.addf %524, %525 : vector<2x96xf32>
    %527 = vector.extract_strided_slice %523 {offsets = [0, 0], sizes = [2, 32], strides = [1, 1]} : vector<2x96xf32> to vector<2x32xf32>
    %528 = vector.extract_strided_slice %526 {offsets = [0, 0], sizes = [2, 32], strides = [1, 1]} : vector<2x96xf32> to vector<2x32xf32>
    %529 = arith.addf %527, %528 : vector<2x32xf32>
    %530 = arith.negf %529 : vector<2x32xf32>
    %531 = math.exp %530 : vector<2x32xf32>
    %cst_112 = arith.constant 1.000000e+00 : f32
    %532 = vector.broadcast %cst_112 : f32 to vector<2x32xf32>
    %533 = arith.addf %532, %531 : vector<2x32xf32>
    %534 = arith.divf %532, %533 : vector<2x32xf32>
    %535 = vector.extract_strided_slice %523 {offsets = [0, 32], sizes = [2, 32], strides = [1, 1]} : vector<2x96xf32> to vector<2x32xf32>
    %536 = vector.extract_strided_slice %526 {offsets = [0, 32], sizes = [2, 32], strides = [1, 1]} : vector<2x96xf32> to vector<2x32xf32>
    %537 = arith.addf %535, %536 : vector<2x32xf32>
    %538 = arith.negf %537 : vector<2x32xf32>
    %539 = math.exp %538 : vector<2x32xf32>
    %cst_113 = arith.constant 1.000000e+00 : f32
    %540 = vector.broadcast %cst_113 : f32 to vector<2x32xf32>
    %541 = arith.addf %540, %539 : vector<2x32xf32>
    %542 = arith.divf %540, %541 : vector<2x32xf32>
    %543 = vector.extract_strided_slice %523 {offsets = [0, 64], sizes = [2, 32], strides = [1, 1]} : vector<2x96xf32> to vector<2x32xf32>
    %544 = vector.extract_strided_slice %526 {offsets = [0, 64], sizes = [2, 32], strides = [1, 1]} : vector<2x96xf32> to vector<2x32xf32>
    %545 = arith.mulf %534, %544 : vector<2x32xf32>
    %546 = arith.addf %543, %545 : vector<2x32xf32>
    %547 = math.tanh %546 : vector<2x32xf32>
    %cst_114 = arith.constant 1.000000e+00 : f32
    %548 = vector.broadcast %cst_114 : f32 to vector<2x32xf32>
    %549 = arith.subf %548, %542 : vector<2x32xf32>
    %550 = arith.mulf %549, %547 : vector<2x32xf32>
    %551 = arith.mulf %542, %522 : vector<2x32xf32>
    %552 = arith.addf %550, %551 : vector<2x32xf32>
    %c0_115 = arith.constant 0 : index
    %c0_116 = arith.constant 0 : index
    %553 = vector.load %arg23[%c0_115, %c0_116] : memref<32x32xf32, #tpu.memory_space<vmem>>, vector<2x32xf32>
    tpu.vector_store %arg23[%c0_115, %c0_116], %552 {strides = array<i32>} : memref<32x32xf32, #tpu.memory_space<vmem>>, vector<2x32xf32>,
    %554 = vector.extract_strided_slice %519 {offsets = [2, 0], sizes = [2, 96], strides = [1, 1]} : vector<32x96xf32> to vector<2x96xf32>
    %cst_117 = arith.constant dense<0.000000e+00> : vector<2x96xf32>
    %555 = tpu.matmul %552, %520, %cst_117 {dimension_numbers = #tpu.dot_dimension_numbers<[1], [0], [0], [1], [0, 0, 1, 1], [], []>} : vector<2x32xf32>, vector<32x96xf32>, vector<2x96xf32> -> vector<2x96xf32>
    %556 = vector.broadcast %521 : vector<1x96xf32> to vector<2x96xf32>
    %557 = arith.addf %555, %556 : vector<2x96xf32>
    %558 = vector.extract_strided_slice %554 {offsets = [0, 0], sizes = [2, 32], strides = [1, 1]} : vector<2x96xf32> to vector<2x32xf32>
    %559 = vector.extract_strided_slice %557 {offsets = [0, 0], sizes = [2, 32], strides = [1, 1]} : vector<2x96xf32> to vector<2x32xf32>
    %560 = arith.addf %558, %559 : vector<2x32xf32>
    %561 = arith.negf %560 : vector<2x32xf32>
    %562 = math.exp %561 : vector<2x32xf32>
    %cst_118 = arith.constant 1.000000e+00 : f32
    %563 = vector.broadcast %cst_118 : f32 to vector<2x32xf32>
    %564 = arith.addf %563, %562 : vector<2x32xf32>
    %565 = arith.divf %563, %564 : vector<2x32xf32>
    %566 = vector.extract_strided_slice %554 {offsets = [0, 32], sizes = [2, 32], strides = [1, 1]} : vector<2x96xf32> to vector<2x32xf32>
    %567 = vector.extract_strided_slice %557 {offsets = [0, 32], sizes = [2, 32], strides = [1, 1]} : vector<2x96xf32> to vector<2x32xf32>
    %568 = arith.addf %566, %567 : vector<2x32xf32>
    %569 = arith.negf %568 : vector<2x32xf32>
    %570 = math.exp %569 : vector<2x32xf32>
    %cst_119 = arith.constant 1.000000e+00 : f32
    %571 = vector.broadcast %cst_119 : f32 to vector<2x32xf32>
    %572 = arith.addf %571, %570 : vector<2x32xf32>
    %573 = arith.divf %571, %572 : vector<2x32xf32>
    %574 = vector.extract_strided_slice %554 {offsets = [0, 64], sizes = [2, 32], strides = [1, 1]} : vector<2x96xf32> to vector<2x32xf32>
    %575 = vector.extract_strided_slice %557 {offsets = [0, 64], sizes = [2, 32], strides = [1, 1]} : vector<2x96xf32> to vector<2x32xf32>
    %576 = arith.mulf %565, %575 : vector<2x32xf32>
    %577 = arith.addf %574, %576 : vector<2x32xf32>
    %578 = math.tanh %577 : vector<2x32xf32>
    %cst_120 = arith.constant 1.000000e+00 : f32
    %579 = vector.broadcast %cst_120 : f32 to vector<2x32xf32>
    %580 = arith.subf %579, %573 : vector<2x32xf32>
    %581 = arith.mulf %580, %578 : vector<2x32xf32>
    %582 = arith.mulf %573, %552 : vector<2x32xf32>
    %583 = arith.addf %581, %582 : vector<2x32xf32>
    %c2_121 = arith.constant 2 : index
    %c0_122 = arith.constant 0 : index
    %584 = vector.load %arg23[%c2_121, %c0_122] : memref<32x32xf32, #tpu.memory_space<vmem>>, vector<2x32xf32>
    tpu.vector_store %arg23[%c2_121, %c0_122], %583 {strides = array<i32>} : memref<32x32xf32, #tpu.memory_space<vmem>>, vector<2x32xf32>,
    %585 = vector.extract_strided_slice %519 {offsets = [4, 0], sizes = [2, 96], strides = [1, 1]} : vector<32x96xf32> to vector<2x96xf32>
    %cst_123 = arith.constant dense<0.000000e+00> : vector<2x96xf32>
    %586 = tpu.matmul %583, %520, %cst_123 {dimension_numbers = #tpu.dot_dimension_numbers<[1], [0], [0], [1], [0, 0, 1, 1], [], []>} : vector<2x32xf32>, vector<32x96xf32>, vector<2x96xf32> -> vector<2x96xf32>
    %587 = vector.broadcast %521 : vector<1x96xf32> to vector<2x96xf32>
    %588 = arith.addf %586, %587 : vector<2x96xf32>
    %589 = vector.extract_strided_slice %585 {offsets = [0, 0], sizes = [2, 32], strides = [1, 1]} : vector<2x96xf32> to vector<2x32xf32>
    %590 = vector.extract_strided_slice %588 {offsets = [0, 0], sizes = [2, 32], strides = [1, 1]} : vector<2x96xf32> to vector<2x32xf32>
    %591 = arith.addf %589, %590 : vector<2x32xf32>
    %592 = arith.negf %591 : vector<2x32xf32>
    %593 = math.exp %592 : vector<2x32xf32>
    %cst_124 = arith.constant 1.000000e+00 : f32
    %594 = vector.broadcast %cst_124 : f32 to vector<2x32xf32>
    %595 = arith.addf %594, %593 : vector<2x32xf32>
    %596 = arith.divf %594, %595 : vector<2x32xf32>
    %597 = vector.extract_strided_slice %585 {offsets = [0, 32], sizes = [2, 32], strides = [1, 1]} : vector<2x96xf32> to vector<2x32xf32>
    %598 = vector.extract_strided_slice %588 {offsets = [0, 32], sizes = [2, 32], strides = [1, 1]} : vector<2x96xf32> to vector<2x32xf32>
    %599 = arith.addf %597, %598 : vector<2x32xf32>
    %600 = arith.negf %599 : vector<2x32xf32>
    %601 = math.exp %600 : vector<2x32xf32>
    %cst_125 = arith.constant 1.000000e+00 : f32
    %602 = vector.broadcast %cst_125 : f32 to vector<2x32xf32>
    %603 = arith.addf %602, %601 : vector<2x32xf32>
    %604 = arith.divf %602, %603 : vector<2x32xf32>
    %605 = vector.extract_strided_slice %585 {offsets = [0, 64], sizes = [2, 32], strides = [1, 1]} : vector<2x96xf32> to vector<2x32xf32>
    %606 = vector.extract_strided_slice %588 {offsets = [0, 64], sizes = [2, 32], strides = [1, 1]} : vector<2x96xf32> to vector<2x32xf32>
    %607 = arith.mulf %596, %606 : vector<2x32xf32>
    %608 = arith.addf %605, %607 : vector<2x32xf32>
    %609 = math.tanh %608 : vector<2x32xf32>
    %cst_126 = arith.constant 1.000000e+00 : f32
    %610 = vector.broadcast %cst_126 : f32 to vector<2x32xf32>
    %611 = arith.subf %610, %604 : vector<2x32xf32>
    %612 = arith.mulf %611, %609 : vector<2x32xf32>
    %613 = arith.mulf %604, %583 : vector<2x32xf32>
    %614 = arith.addf %612, %613 : vector<2x32xf32>
    %c4_127 = arith.constant 4 : index
    %c0_128 = arith.constant 0 : index
    %615 = vector.load %arg23[%c4_127, %c0_128] : memref<32x32xf32, #tpu.memory_space<vmem>>, vector<2x32xf32>
    tpu.vector_store %arg23[%c4_127, %c0_128], %614 {strides = array<i32>} : memref<32x32xf32, #tpu.memory_space<vmem>>, vector<2x32xf32>,
    %616 = vector.extract_strided_slice %519 {offsets = [6, 0], sizes = [2, 96], strides = [1, 1]} : vector<32x96xf32> to vector<2x96xf32>
    %cst_129 = arith.constant dense<0.000000e+00> : vector<2x96xf32>
    %617 = tpu.matmul %614, %520, %cst_129 {dimension_numbers = #tpu.dot_dimension_numbers<[1], [0], [0], [1], [0, 0, 1, 1], [], []>} : vector<2x32xf32>, vector<32x96xf32>, vector<2x96xf32> -> vector<2x96xf32>
    %618 = vector.broadcast %521 : vector<1x96xf32> to vector<2x96xf32>
    %619 = arith.addf %617, %618 : vector<2x96xf32>
    %620 = vector.extract_strided_slice %616 {offsets = [0, 0], sizes = [2, 32], strides = [1, 1]} : vector<2x96xf32> to vector<2x32xf32>
    %621 = vector.extract_strided_slice %619 {offsets = [0, 0], sizes = [2, 32], strides = [1, 1]} : vector<2x96xf32> to vector<2x32xf32>
    %622 = arith.addf %620, %621 : vector<2x32xf32>
    %623 = arith.negf %622 : vector<2x32xf32>
    %624 = math.exp %623 : vector<2x32xf32>
    %cst_130 = arith.constant 1.000000e+00 : f32
    %625 = vector.broadcast %cst_130 : f32 to vector<2x32xf32>
    %626 = arith.addf %625, %624 : vector<2x32xf32>
    %627 = arith.divf %625, %626 : vector<2x32xf32>
    %628 = vector.extract_strided_slice %616 {offsets = [0, 32], sizes = [2, 32], strides = [1, 1]} : vector<2x96xf32> to vector<2x32xf32>
    %629 = vector.extract_strided_slice %619 {offsets = [0, 32], sizes = [2, 32], strides = [1, 1]} : vector<2x96xf32> to vector<2x32xf32>
    %630 = arith.addf %628, %629 : vector<2x32xf32>
    %631 = arith.negf %630 : vector<2x32xf32>
    %632 = math.exp %631 : vector<2x32xf32>
    %cst_131 = arith.constant 1.000000e+00 : f32
    %633 = vector.broadcast %cst_131 : f32 to vector<2x32xf32>
    %634 = arith.addf %633, %632 : vector<2x32xf32>
    %635 = arith.divf %633, %634 : vector<2x32xf32>
    %636 = vector.extract_strided_slice %616 {offsets = [0, 64], sizes = [2, 32], strides = [1, 1]} : vector<2x96xf32> to vector<2x32xf32>
    %637 = vector.extract_strided_slice %619 {offsets = [0, 64], sizes = [2, 32], strides = [1, 1]} : vector<2x96xf32> to vector<2x32xf32>
    %638 = arith.mulf %627, %637 : vector<2x32xf32>
    %639 = arith.addf %636, %638 : vector<2x32xf32>
    %640 = math.tanh %639 : vector<2x32xf32>
    %cst_132 = arith.constant 1.000000e+00 : f32
    %641 = vector.broadcast %cst_132 : f32 to vector<2x32xf32>
    %642 = arith.subf %641, %635 : vector<2x32xf32>
    %643 = arith.mulf %642, %640 : vector<2x32xf32>
    %644 = arith.mulf %635, %614 : vector<2x32xf32>
    %645 = arith.addf %643, %644 : vector<2x32xf32>
    %c6_133 = arith.constant 6 : index
    %c0_134 = arith.constant 0 : index
    %646 = vector.load %arg23[%c6_133, %c0_134] : memref<32x32xf32, #tpu.memory_space<vmem>>, vector<2x32xf32>
    tpu.vector_store %arg23[%c6_133, %c0_134], %645 {strides = array<i32>} : memref<32x32xf32, #tpu.memory_space<vmem>>, vector<2x32xf32>,
    %647 = vector.extract_strided_slice %519 {offsets = [8, 0], sizes = [2, 96], strides = [1, 1]} : vector<32x96xf32> to vector<2x96xf32>
    %cst_135 = arith.constant dense<0.000000e+00> : vector<2x96xf32>
    %648 = tpu.matmul %645, %520, %cst_135 {dimension_numbers = #tpu.dot_dimension_numbers<[1], [0], [0], [1], [0, 0, 1, 1], [], []>} : vector<2x32xf32>, vector<32x96xf32>, vector<2x96xf32> -> vector<2x96xf32>
    %649 = vector.broadcast %521 : vector<1x96xf32> to vector<2x96xf32>
    %650 = arith.addf %648, %649 : vector<2x96xf32>
    %651 = vector.extract_strided_slice %647 {offsets = [0, 0], sizes = [2, 32], strides = [1, 1]} : vector<2x96xf32> to vector<2x32xf32>
    %652 = vector.extract_strided_slice %650 {offsets = [0, 0], sizes = [2, 32], strides = [1, 1]} : vector<2x96xf32> to vector<2x32xf32>
    %653 = arith.addf %651, %652 : vector<2x32xf32>
    %654 = arith.negf %653 : vector<2x32xf32>
    %655 = math.exp %654 : vector<2x32xf32>
    %cst_136 = arith.constant 1.000000e+00 : f32
    %656 = vector.broadcast %cst_136 : f32 to vector<2x32xf32>
    %657 = arith.addf %656, %655 : vector<2x32xf32>
    %658 = arith.divf %656, %657 : vector<2x32xf32>
    %659 = vector.extract_strided_slice %647 {offsets = [0, 32], sizes = [2, 32], strides = [1, 1]} : vector<2x96xf32> to vector<2x32xf32>
    %660 = vector.extract_strided_slice %650 {offsets = [0, 32], sizes = [2, 32], strides = [1, 1]} : vector<2x96xf32> to vector<2x32xf32>
    %661 = arith.addf %659, %660 : vector<2x32xf32>
    %662 = arith.negf %661 : vector<2x32xf32>
    %663 = math.exp %662 : vector<2x32xf32>
    %cst_137 = arith.constant 1.000000e+00 : f32
    %664 = vector.broadcast %cst_137 : f32 to vector<2x32xf32>
    %665 = arith.addf %664, %663 : vector<2x32xf32>
    %666 = arith.divf %664, %665 : vector<2x32xf32>
    %667 = vector.extract_strided_slice %647 {offsets = [0, 64], sizes = [2, 32], strides = [1, 1]} : vector<2x96xf32> to vector<2x32xf32>
    %668 = vector.extract_strided_slice %650 {offsets = [0, 64], sizes = [2, 32], strides = [1, 1]} : vector<2x96xf32> to vector<2x32xf32>
    %669 = arith.mulf %658, %668 : vector<2x32xf32>
    %670 = arith.addf %667, %669 : vector<2x32xf32>
    %671 = math.tanh %670 : vector<2x32xf32>
    %cst_138 = arith.constant 1.000000e+00 : f32
    %672 = vector.broadcast %cst_138 : f32 to vector<2x32xf32>
    %673 = arith.subf %672, %666 : vector<2x32xf32>
    %674 = arith.mulf %673, %671 : vector<2x32xf32>
    %675 = arith.mulf %666, %645 : vector<2x32xf32>
    %676 = arith.addf %674, %675 : vector<2x32xf32>
    %c8_139 = arith.constant 8 : index
    %c0_140 = arith.constant 0 : index
    %677 = vector.load %arg23[%c8_139, %c0_140] : memref<32x32xf32, #tpu.memory_space<vmem>>, vector<2x32xf32>
    tpu.vector_store %arg23[%c8_139, %c0_140], %676 {strides = array<i32>} : memref<32x32xf32, #tpu.memory_space<vmem>>, vector<2x32xf32>,
    %678 = vector.extract_strided_slice %519 {offsets = [10, 0], sizes = [2, 96], strides = [1, 1]} : vector<32x96xf32> to vector<2x96xf32>
    %cst_141 = arith.constant dense<0.000000e+00> : vector<2x96xf32>
    %679 = tpu.matmul %676, %520, %cst_141 {dimension_numbers = #tpu.dot_dimension_numbers<[1], [0], [0], [1], [0, 0, 1, 1], [], []>} : vector<2x32xf32>, vector<32x96xf32>, vector<2x96xf32> -> vector<2x96xf32>
    %680 = vector.broadcast %521 : vector<1x96xf32> to vector<2x96xf32>
    %681 = arith.addf %679, %680 : vector<2x96xf32>
    %682 = vector.extract_strided_slice %678 {offsets = [0, 0], sizes = [2, 32], strides = [1, 1]} : vector<2x96xf32> to vector<2x32xf32>
    %683 = vector.extract_strided_slice %681 {offsets = [0, 0], sizes = [2, 32], strides = [1, 1]} : vector<2x96xf32> to vector<2x32xf32>
    %684 = arith.addf %682, %683 : vector<2x32xf32>
    %685 = arith.negf %684 : vector<2x32xf32>
    %686 = math.exp %685 : vector<2x32xf32>
    %cst_142 = arith.constant 1.000000e+00 : f32
    %687 = vector.broadcast %cst_142 : f32 to vector<2x32xf32>
    %688 = arith.addf %687, %686 : vector<2x32xf32>
    %689 = arith.divf %687, %688 : vector<2x32xf32>
    %690 = vector.extract_strided_slice %678 {offsets = [0, 32], sizes = [2, 32], strides = [1, 1]} : vector<2x96xf32> to vector<2x32xf32>
    %691 = vector.extract_strided_slice %681 {offsets = [0, 32], sizes = [2, 32], strides = [1, 1]} : vector<2x96xf32> to vector<2x32xf32>
    %692 = arith.addf %690, %691 : vector<2x32xf32>
    %693 = arith.negf %692 : vector<2x32xf32>
    %694 = math.exp %693 : vector<2x32xf32>
    %cst_143 = arith.constant 1.000000e+00 : f32
    %695 = vector.broadcast %cst_143 : f32 to vector<2x32xf32>
    %696 = arith.addf %695, %694 : vector<2x32xf32>
    %697 = arith.divf %695, %696 : vector<2x32xf32>
    %698 = vector.extract_strided_slice %678 {offsets = [0, 64], sizes = [2, 32], strides = [1, 1]} : vector<2x96xf32> to vector<2x32xf32>
    %699 = vector.extract_strided_slice %681 {offsets = [0, 64], sizes = [2, 32], strides = [1, 1]} : vector<2x96xf32> to vector<2x32xf32>
    %700 = arith.mulf %689, %699 : vector<2x32xf32>
    %701 = arith.addf %698, %700 : vector<2x32xf32>
    %702 = math.tanh %701 : vector<2x32xf32>
    %cst_144 = arith.constant 1.000000e+00 : f32
    %703 = vector.broadcast %cst_144 : f32 to vector<2x32xf32>
    %704 = arith.subf %703, %697 : vector<2x32xf32>
    %705 = arith.mulf %704, %702 : vector<2x32xf32>
    %706 = arith.mulf %697, %676 : vector<2x32xf32>
    %707 = arith.addf %705, %706 : vector<2x32xf32>
    %c10_145 = arith.constant 10 : index
    %c0_146 = arith.constant 0 : index
    %708 = vector.load %arg23[%c10_145, %c0_146] : memref<32x32xf32, #tpu.memory_space<vmem>>, vector<2x32xf32>
    tpu.vector_store %arg23[%c10_145, %c0_146], %707 {strides = array<i32>} : memref<32x32xf32, #tpu.memory_space<vmem>>, vector<2x32xf32>,
    %709 = vector.extract_strided_slice %519 {offsets = [12, 0], sizes = [2, 96], strides = [1, 1]} : vector<32x96xf32> to vector<2x96xf32>
    %cst_147 = arith.constant dense<0.000000e+00> : vector<2x96xf32>
    %710 = tpu.matmul %707, %520, %cst_147 {dimension_numbers = #tpu.dot_dimension_numbers<[1], [0], [0], [1], [0, 0, 1, 1], [], []>} : vector<2x32xf32>, vector<32x96xf32>, vector<2x96xf32> -> vector<2x96xf32>
    %711 = vector.broadcast %521 : vector<1x96xf32> to vector<2x96xf32>
    %712 = arith.addf %710, %711 : vector<2x96xf32>
    %713 = vector.extract_strided_slice %709 {offsets = [0, 0], sizes = [2, 32], strides = [1, 1]} : vector<2x96xf32> to vector<2x32xf32>
    %714 = vector.extract_strided_slice %712 {offsets = [0, 0], sizes = [2, 32], strides = [1, 1]} : vector<2x96xf32> to vector<2x32xf32>
    %715 = arith.addf %713, %714 : vector<2x32xf32>
    %716 = arith.negf %715 : vector<2x32xf32>
    %717 = math.exp %716 : vector<2x32xf32>
    %cst_148 = arith.constant 1.000000e+00 : f32
    %718 = vector.broadcast %cst_148 : f32 to vector<2x32xf32>
    %719 = arith.addf %718, %717 : vector<2x32xf32>
    %720 = arith.divf %718, %719 : vector<2x32xf32>
    %721 = vector.extract_strided_slice %709 {offsets = [0, 32], sizes = [2, 32], strides = [1, 1]} : vector<2x96xf32> to vector<2x32xf32>
    %722 = vector.extract_strided_slice %712 {offsets = [0, 32], sizes = [2, 32], strides = [1, 1]} : vector<2x96xf32> to vector<2x32xf32>
    %723 = arith.addf %721, %722 : vector<2x32xf32>
    %724 = arith.negf %723 : vector<2x32xf32>
    %725 = math.exp %724 : vector<2x32xf32>
    %cst_149 = arith.constant 1.000000e+00 : f32
    %726 = vector.broadcast %cst_149 : f32 to vector<2x32xf32>
    %727 = arith.addf %726, %725 : vector<2x32xf32>
    %728 = arith.divf %726, %727 : vector<2x32xf32>
    %729 = vector.extract_strided_slice %709 {offsets = [0, 64], sizes = [2, 32], strides = [1, 1]} : vector<2x96xf32> to vector<2x32xf32>
    %730 = vector.extract_strided_slice %712 {offsets = [0, 64], sizes = [2, 32], strides = [1, 1]} : vector<2x96xf32> to vector<2x32xf32>
    %731 = arith.mulf %720, %730 : vector<2x32xf32>
    %732 = arith.addf %729, %731 : vector<2x32xf32>
    %733 = math.tanh %732 : vector<2x32xf32>
    %cst_150 = arith.constant 1.000000e+00 : f32
    %734 = vector.broadcast %cst_150 : f32 to vector<2x32xf32>
    %735 = arith.subf %734, %728 : vector<2x32xf32>
    %736 = arith.mulf %735, %733 : vector<2x32xf32>
    %737 = arith.mulf %728, %707 : vector<2x32xf32>
    %738 = arith.addf %736, %737 : vector<2x32xf32>
    %c12_151 = arith.constant 12 : index
    %c0_152 = arith.constant 0 : index
    %739 = vector.load %arg23[%c12_151, %c0_152] : memref<32x32xf32, #tpu.memory_space<vmem>>, vector<2x32xf32>
    tpu.vector_store %arg23[%c12_151, %c0_152], %738 {strides = array<i32>} : memref<32x32xf32, #tpu.memory_space<vmem>>, vector<2x32xf32>,
    %740 = vector.extract_strided_slice %519 {offsets = [14, 0], sizes = [2, 96], strides = [1, 1]} : vector<32x96xf32> to vector<2x96xf32>
    %cst_153 = arith.constant dense<0.000000e+00> : vector<2x96xf32>
    %741 = tpu.matmul %738, %520, %cst_153 {dimension_numbers = #tpu.dot_dimension_numbers<[1], [0], [0], [1], [0, 0, 1, 1], [], []>} : vector<2x32xf32>, vector<32x96xf32>, vector<2x96xf32> -> vector<2x96xf32>
    %742 = vector.broadcast %521 : vector<1x96xf32> to vector<2x96xf32>
    %743 = arith.addf %741, %742 : vector<2x96xf32>
    %744 = vector.extract_strided_slice %740 {offsets = [0, 0], sizes = [2, 32], strides = [1, 1]} : vector<2x96xf32> to vector<2x32xf32>
    %745 = vector.extract_strided_slice %743 {offsets = [0, 0], sizes = [2, 32], strides = [1, 1]} : vector<2x96xf32> to vector<2x32xf32>
    %746 = arith.addf %744, %745 : vector<2x32xf32>
    %747 = arith.negf %746 : vector<2x32xf32>
    %748 = math.exp %747 : vector<2x32xf32>
    %cst_154 = arith.constant 1.000000e+00 : f32
    %749 = vector.broadcast %cst_154 : f32 to vector<2x32xf32>
    %750 = arith.addf %749, %748 : vector<2x32xf32>
    %751 = arith.divf %749, %750 : vector<2x32xf32>
    %752 = vector.extract_strided_slice %740 {offsets = [0, 32], sizes = [2, 32], strides = [1, 1]} : vector<2x96xf32> to vector<2x32xf32>
    %753 = vector.extract_strided_slice %743 {offsets = [0, 32], sizes = [2, 32], strides = [1, 1]} : vector<2x96xf32> to vector<2x32xf32>
    %754 = arith.addf %752, %753 : vector<2x32xf32>
    %755 = arith.negf %754 : vector<2x32xf32>
    %756 = math.exp %755 : vector<2x32xf32>
    %cst_155 = arith.constant 1.000000e+00 : f32
    %757 = vector.broadcast %cst_155 : f32 to vector<2x32xf32>
    %758 = arith.addf %757, %756 : vector<2x32xf32>
    %759 = arith.divf %757, %758 : vector<2x32xf32>
    %760 = vector.extract_strided_slice %740 {offsets = [0, 64], sizes = [2, 32], strides = [1, 1]} : vector<2x96xf32> to vector<2x32xf32>
    %761 = vector.extract_strided_slice %743 {offsets = [0, 64], sizes = [2, 32], strides = [1, 1]} : vector<2x96xf32> to vector<2x32xf32>
    %762 = arith.mulf %751, %761 : vector<2x32xf32>
    %763 = arith.addf %760, %762 : vector<2x32xf32>
    %764 = math.tanh %763 : vector<2x32xf32>
    %cst_156 = arith.constant 1.000000e+00 : f32
    %765 = vector.broadcast %cst_156 : f32 to vector<2x32xf32>
    %766 = arith.subf %765, %759 : vector<2x32xf32>
    %767 = arith.mulf %766, %764 : vector<2x32xf32>
    %768 = arith.mulf %759, %738 : vector<2x32xf32>
    %769 = arith.addf %767, %768 : vector<2x32xf32>
    %c14_157 = arith.constant 14 : index
    %c0_158 = arith.constant 0 : index
    %770 = vector.load %arg23[%c14_157, %c0_158] : memref<32x32xf32, #tpu.memory_space<vmem>>, vector<2x32xf32>
    tpu.vector_store %arg23[%c14_157, %c0_158], %769 {strides = array<i32>} : memref<32x32xf32, #tpu.memory_space<vmem>>, vector<2x32xf32>,
    %771 = vector.extract_strided_slice %519 {offsets = [16, 0], sizes = [2, 96], strides = [1, 1]} : vector<32x96xf32> to vector<2x96xf32>
    %cst_159 = arith.constant dense<0.000000e+00> : vector<2x96xf32>
    %772 = tpu.matmul %769, %520, %cst_159 {dimension_numbers = #tpu.dot_dimension_numbers<[1], [0], [0], [1], [0, 0, 1, 1], [], []>} : vector<2x32xf32>, vector<32x96xf32>, vector<2x96xf32> -> vector<2x96xf32>
    %773 = vector.broadcast %521 : vector<1x96xf32> to vector<2x96xf32>
    %774 = arith.addf %772, %773 : vector<2x96xf32>
    %775 = vector.extract_strided_slice %771 {offsets = [0, 0], sizes = [2, 32], strides = [1, 1]} : vector<2x96xf32> to vector<2x32xf32>
    %776 = vector.extract_strided_slice %774 {offsets = [0, 0], sizes = [2, 32], strides = [1, 1]} : vector<2x96xf32> to vector<2x32xf32>
    %777 = arith.addf %775, %776 : vector<2x32xf32>
    %778 = arith.negf %777 : vector<2x32xf32>
    %779 = math.exp %778 : vector<2x32xf32>
    %cst_160 = arith.constant 1.000000e+00 : f32
    %780 = vector.broadcast %cst_160 : f32 to vector<2x32xf32>
    %781 = arith.addf %780, %779 : vector<2x32xf32>
    %782 = arith.divf %780, %781 : vector<2x32xf32>
    %783 = vector.extract_strided_slice %771 {offsets = [0, 32], sizes = [2, 32], strides = [1, 1]} : vector<2x96xf32> to vector<2x32xf32>
    %784 = vector.extract_strided_slice %774 {offsets = [0, 32], sizes = [2, 32], strides = [1, 1]} : vector<2x96xf32> to vector<2x32xf32>
    %785 = arith.addf %783, %784 : vector<2x32xf32>
    %786 = arith.negf %785 : vector<2x32xf32>
    %787 = math.exp %786 : vector<2x32xf32>
    %cst_161 = arith.constant 1.000000e+00 : f32
    %788 = vector.broadcast %cst_161 : f32 to vector<2x32xf32>
    %789 = arith.addf %788, %787 : vector<2x32xf32>
    %790 = arith.divf %788, %789 : vector<2x32xf32>
    %791 = vector.extract_strided_slice %771 {offsets = [0, 64], sizes = [2, 32], strides = [1, 1]} : vector<2x96xf32> to vector<2x32xf32>
    %792 = vector.extract_strided_slice %774 {offsets = [0, 64], sizes = [2, 32], strides = [1, 1]} : vector<2x96xf32> to vector<2x32xf32>
    %793 = arith.mulf %782, %792 : vector<2x32xf32>
    %794 = arith.addf %791, %793 : vector<2x32xf32>
    %795 = math.tanh %794 : vector<2x32xf32>
    %cst_162 = arith.constant 1.000000e+00 : f32
    %796 = vector.broadcast %cst_162 : f32 to vector<2x32xf32>
    %797 = arith.subf %796, %790 : vector<2x32xf32>
    %798 = arith.mulf %797, %795 : vector<2x32xf32>
    %799 = arith.mulf %790, %769 : vector<2x32xf32>
    %800 = arith.addf %798, %799 : vector<2x32xf32>
    %c16_163 = arith.constant 16 : index
    %c0_164 = arith.constant 0 : index
    %801 = vector.load %arg23[%c16_163, %c0_164] : memref<32x32xf32, #tpu.memory_space<vmem>>, vector<2x32xf32>
    tpu.vector_store %arg23[%c16_163, %c0_164], %800 {strides = array<i32>} : memref<32x32xf32, #tpu.memory_space<vmem>>, vector<2x32xf32>,
    %802 = vector.extract_strided_slice %519 {offsets = [18, 0], sizes = [2, 96], strides = [1, 1]} : vector<32x96xf32> to vector<2x96xf32>
    %cst_165 = arith.constant dense<0.000000e+00> : vector<2x96xf32>
    %803 = tpu.matmul %800, %520, %cst_165 {dimension_numbers = #tpu.dot_dimension_numbers<[1], [0], [0], [1], [0, 0, 1, 1], [], []>} : vector<2x32xf32>, vector<32x96xf32>, vector<2x96xf32> -> vector<2x96xf32>
    %804 = vector.broadcast %521 : vector<1x96xf32> to vector<2x96xf32>
    %805 = arith.addf %803, %804 : vector<2x96xf32>
    %806 = vector.extract_strided_slice %802 {offsets = [0, 0], sizes = [2, 32], strides = [1, 1]} : vector<2x96xf32> to vector<2x32xf32>
    %807 = vector.extract_strided_slice %805 {offsets = [0, 0], sizes = [2, 32], strides = [1, 1]} : vector<2x96xf32> to vector<2x32xf32>
    %808 = arith.addf %806, %807 : vector<2x32xf32>
    %809 = arith.negf %808 : vector<2x32xf32>
    %810 = math.exp %809 : vector<2x32xf32>
    %cst_166 = arith.constant 1.000000e+00 : f32
    %811 = vector.broadcast %cst_166 : f32 to vector<2x32xf32>
    %812 = arith.addf %811, %810 : vector<2x32xf32>
    %813 = arith.divf %811, %812 : vector<2x32xf32>
    %814 = vector.extract_strided_slice %802 {offsets = [0, 32], sizes = [2, 32], strides = [1, 1]} : vector<2x96xf32> to vector<2x32xf32>
    %815 = vector.extract_strided_slice %805 {offsets = [0, 32], sizes = [2, 32], strides = [1, 1]} : vector<2x96xf32> to vector<2x32xf32>
    %816 = arith.addf %814, %815 : vector<2x32xf32>
    %817 = arith.negf %816 : vector<2x32xf32>
    %818 = math.exp %817 : vector<2x32xf32>
    %cst_167 = arith.constant 1.000000e+00 : f32
    %819 = vector.broadcast %cst_167 : f32 to vector<2x32xf32>
    %820 = arith.addf %819, %818 : vector<2x32xf32>
    %821 = arith.divf %819, %820 : vector<2x32xf32>
    %822 = vector.extract_strided_slice %802 {offsets = [0, 64], sizes = [2, 32], strides = [1, 1]} : vector<2x96xf32> to vector<2x32xf32>
    %823 = vector.extract_strided_slice %805 {offsets = [0, 64], sizes = [2, 32], strides = [1, 1]} : vector<2x96xf32> to vector<2x32xf32>
    %824 = arith.mulf %813, %823 : vector<2x32xf32>
    %825 = arith.addf %822, %824 : vector<2x32xf32>
    %826 = math.tanh %825 : vector<2x32xf32>
    %cst_168 = arith.constant 1.000000e+00 : f32
    %827 = vector.broadcast %cst_168 : f32 to vector<2x32xf32>
    %828 = arith.subf %827, %821 : vector<2x32xf32>
    %829 = arith.mulf %828, %826 : vector<2x32xf32>
    %830 = arith.mulf %821, %800 : vector<2x32xf32>
    %831 = arith.addf %829, %830 : vector<2x32xf32>
    %c18_169 = arith.constant 18 : index
    %c0_170 = arith.constant 0 : index
    %832 = vector.load %arg23[%c18_169, %c0_170] : memref<32x32xf32, #tpu.memory_space<vmem>>, vector<2x32xf32>
    tpu.vector_store %arg23[%c18_169, %c0_170], %831 {strides = array<i32>} : memref<32x32xf32, #tpu.memory_space<vmem>>, vector<2x32xf32>,
    %833 = vector.extract_strided_slice %519 {offsets = [20, 0], sizes = [2, 96], strides = [1, 1]} : vector<32x96xf32> to vector<2x96xf32>
    %cst_171 = arith.constant dense<0.000000e+00> : vector<2x96xf32>
    %834 = tpu.matmul %831, %520, %cst_171 {dimension_numbers = #tpu.dot_dimension_numbers<[1], [0], [0], [1], [0, 0, 1, 1], [], []>} : vector<2x32xf32>, vector<32x96xf32>, vector<2x96xf32> -> vector<2x96xf32>
    %835 = vector.broadcast %521 : vector<1x96xf32> to vector<2x96xf32>
    %836 = arith.addf %834, %835 : vector<2x96xf32>
    %837 = vector.extract_strided_slice %833 {offsets = [0, 0], sizes = [2, 32], strides = [1, 1]} : vector<2x96xf32> to vector<2x32xf32>
    %838 = vector.extract_strided_slice %836 {offsets = [0, 0], sizes = [2, 32], strides = [1, 1]} : vector<2x96xf32> to vector<2x32xf32>
    %839 = arith.addf %837, %838 : vector<2x32xf32>
    %840 = arith.negf %839 : vector<2x32xf32>
    %841 = math.exp %840 : vector<2x32xf32>
    %cst_172 = arith.constant 1.000000e+00 : f32
    %842 = vector.broadcast %cst_172 : f32 to vector<2x32xf32>
    %843 = arith.addf %842, %841 : vector<2x32xf32>
    %844 = arith.divf %842, %843 : vector<2x32xf32>
    %845 = vector.extract_strided_slice %833 {offsets = [0, 32], sizes = [2, 32], strides = [1, 1]} : vector<2x96xf32> to vector<2x32xf32>
    %846 = vector.extract_strided_slice %836 {offsets = [0, 32], sizes = [2, 32], strides = [1, 1]} : vector<2x96xf32> to vector<2x32xf32>
    %847 = arith.addf %845, %846 : vector<2x32xf32>
    %848 = arith.negf %847 : vector<2x32xf32>
    %849 = math.exp %848 : vector<2x32xf32>
    %cst_173 = arith.constant 1.000000e+00 : f32
    %850 = vector.broadcast %cst_173 : f32 to vector<2x32xf32>
    %851 = arith.addf %850, %849 : vector<2x32xf32>
    %852 = arith.divf %850, %851 : vector<2x32xf32>
    %853 = vector.extract_strided_slice %833 {offsets = [0, 64], sizes = [2, 32], strides = [1, 1]} : vector<2x96xf32> to vector<2x32xf32>
    %854 = vector.extract_strided_slice %836 {offsets = [0, 64], sizes = [2, 32], strides = [1, 1]} : vector<2x96xf32> to vector<2x32xf32>
    %855 = arith.mulf %844, %854 : vector<2x32xf32>
    %856 = arith.addf %853, %855 : vector<2x32xf32>
    %857 = math.tanh %856 : vector<2x32xf32>
    %cst_174 = arith.constant 1.000000e+00 : f32
    %858 = vector.broadcast %cst_174 : f32 to vector<2x32xf32>
    %859 = arith.subf %858, %852 : vector<2x32xf32>
    %860 = arith.mulf %859, %857 : vector<2x32xf32>
    %861 = arith.mulf %852, %831 : vector<2x32xf32>
    %862 = arith.addf %860, %861 : vector<2x32xf32>
    %c20_175 = arith.constant 20 : index
    %c0_176 = arith.constant 0 : index
    %863 = vector.load %arg23[%c20_175, %c0_176] : memref<32x32xf32, #tpu.memory_space<vmem>>, vector<2x32xf32>
    tpu.vector_store %arg23[%c20_175, %c0_176], %862 {strides = array<i32>} : memref<32x32xf32, #tpu.memory_space<vmem>>, vector<2x32xf32>,
    %864 = vector.extract_strided_slice %519 {offsets = [22, 0], sizes = [2, 96], strides = [1, 1]} : vector<32x96xf32> to vector<2x96xf32>
    %cst_177 = arith.constant dense<0.000000e+00> : vector<2x96xf32>
    %865 = tpu.matmul %862, %520, %cst_177 {dimension_numbers = #tpu.dot_dimension_numbers<[1], [0], [0], [1], [0, 0, 1, 1], [], []>} : vector<2x32xf32>, vector<32x96xf32>, vector<2x96xf32> -> vector<2x96xf32>
    %866 = vector.broadcast %521 : vector<1x96xf32> to vector<2x96xf32>
    %867 = arith.addf %865, %866 : vector<2x96xf32>
    %868 = vector.extract_strided_slice %864 {offsets = [0, 0], sizes = [2, 32], strides = [1, 1]} : vector<2x96xf32> to vector<2x32xf32>
    %869 = vector.extract_strided_slice %867 {offsets = [0, 0], sizes = [2, 32], strides = [1, 1]} : vector<2x96xf32> to vector<2x32xf32>
    %870 = arith.addf %868, %869 : vector<2x32xf32>
    %871 = arith.negf %870 : vector<2x32xf32>
    %872 = math.exp %871 : vector<2x32xf32>
    %cst_178 = arith.constant 1.000000e+00 : f32
    %873 = vector.broadcast %cst_178 : f32 to vector<2x32xf32>
    %874 = arith.addf %873, %872 : vector<2x32xf32>
    %875 = arith.divf %873, %874 : vector<2x32xf32>
    %876 = vector.extract_strided_slice %864 {offsets = [0, 32], sizes = [2, 32], strides = [1, 1]} : vector<2x96xf32> to vector<2x32xf32>
    %877 = vector.extract_strided_slice %867 {offsets = [0, 32], sizes = [2, 32], strides = [1, 1]} : vector<2x96xf32> to vector<2x32xf32>
    %878 = arith.addf %876, %877 : vector<2x32xf32>
    %879 = arith.negf %878 : vector<2x32xf32>
    %880 = math.exp %879 : vector<2x32xf32>
    %cst_179 = arith.constant 1.000000e+00 : f32
    %881 = vector.broadcast %cst_179 : f32 to vector<2x32xf32>
    %882 = arith.addf %881, %880 : vector<2x32xf32>
    %883 = arith.divf %881, %882 : vector<2x32xf32>
    %884 = vector.extract_strided_slice %864 {offsets = [0, 64], sizes = [2, 32], strides = [1, 1]} : vector<2x96xf32> to vector<2x32xf32>
    %885 = vector.extract_strided_slice %867 {offsets = [0, 64], sizes = [2, 32], strides = [1, 1]} : vector<2x96xf32> to vector<2x32xf32>
    %886 = arith.mulf %875, %885 : vector<2x32xf32>
    %887 = arith.addf %884, %886 : vector<2x32xf32>
    %888 = math.tanh %887 : vector<2x32xf32>
    %cst_180 = arith.constant 1.000000e+00 : f32
    %889 = vector.broadcast %cst_180 : f32 to vector<2x32xf32>
    %890 = arith.subf %889, %883 : vector<2x32xf32>
    %891 = arith.mulf %890, %888 : vector<2x32xf32>
    %892 = arith.mulf %883, %862 : vector<2x32xf32>
    %893 = arith.addf %891, %892 : vector<2x32xf32>
    %c22_181 = arith.constant 22 : index
    %c0_182 = arith.constant 0 : index
    %894 = vector.load %arg23[%c22_181, %c0_182] : memref<32x32xf32, #tpu.memory_space<vmem>>, vector<2x32xf32>
    tpu.vector_store %arg23[%c22_181, %c0_182], %893 {strides = array<i32>} : memref<32x32xf32, #tpu.memory_space<vmem>>, vector<2x32xf32>,
    %895 = vector.extract_strided_slice %519 {offsets = [24, 0], sizes = [2, 96], strides = [1, 1]} : vector<32x96xf32> to vector<2x96xf32>
    %cst_183 = arith.constant dense<0.000000e+00> : vector<2x96xf32>
    %896 = tpu.matmul %893, %520, %cst_183 {dimension_numbers = #tpu.dot_dimension_numbers<[1], [0], [0], [1], [0, 0, 1, 1], [], []>} : vector<2x32xf32>, vector<32x96xf32>, vector<2x96xf32> -> vector<2x96xf32>
    %897 = vector.broadcast %521 : vector<1x96xf32> to vector<2x96xf32>
    %898 = arith.addf %896, %897 : vector<2x96xf32>
    %899 = vector.extract_strided_slice %895 {offsets = [0, 0], sizes = [2, 32], strides = [1, 1]} : vector<2x96xf32> to vector<2x32xf32>
    %900 = vector.extract_strided_slice %898 {offsets = [0, 0], sizes = [2, 32], strides = [1, 1]} : vector<2x96xf32> to vector<2x32xf32>
    %901 = arith.addf %899, %900 : vector<2x32xf32>
    %902 = arith.negf %901 : vector<2x32xf32>
    %903 = math.exp %902 : vector<2x32xf32>
    %cst_184 = arith.constant 1.000000e+00 : f32
    %904 = vector.broadcast %cst_184 : f32 to vector<2x32xf32>
    %905 = arith.addf %904, %903 : vector<2x32xf32>
    %906 = arith.divf %904, %905 : vector<2x32xf32>
    %907 = vector.extract_strided_slice %895 {offsets = [0, 32], sizes = [2, 32], strides = [1, 1]} : vector<2x96xf32> to vector<2x32xf32>
    %908 = vector.extract_strided_slice %898 {offsets = [0, 32], sizes = [2, 32], strides = [1, 1]} : vector<2x96xf32> to vector<2x32xf32>
    %909 = arith.addf %907, %908 : vector<2x32xf32>
    %910 = arith.negf %909 : vector<2x32xf32>
    %911 = math.exp %910 : vector<2x32xf32>
    %cst_185 = arith.constant 1.000000e+00 : f32
    %912 = vector.broadcast %cst_185 : f32 to vector<2x32xf32>
    %913 = arith.addf %912, %911 : vector<2x32xf32>
    %914 = arith.divf %912, %913 : vector<2x32xf32>
    %915 = vector.extract_strided_slice %895 {offsets = [0, 64], sizes = [2, 32], strides = [1, 1]} : vector<2x96xf32> to vector<2x32xf32>
    %916 = vector.extract_strided_slice %898 {offsets = [0, 64], sizes = [2, 32], strides = [1, 1]} : vector<2x96xf32> to vector<2x32xf32>
    %917 = arith.mulf %906, %916 : vector<2x32xf32>
    %918 = arith.addf %915, %917 : vector<2x32xf32>
    %919 = math.tanh %918 : vector<2x32xf32>
    %cst_186 = arith.constant 1.000000e+00 : f32
    %920 = vector.broadcast %cst_186 : f32 to vector<2x32xf32>
    %921 = arith.subf %920, %914 : vector<2x32xf32>
    %922 = arith.mulf %921, %919 : vector<2x32xf32>
    %923 = arith.mulf %914, %893 : vector<2x32xf32>
    %924 = arith.addf %922, %923 : vector<2x32xf32>
    %c24_187 = arith.constant 24 : index
    %c0_188 = arith.constant 0 : index
    %925 = vector.load %arg23[%c24_187, %c0_188] : memref<32x32xf32, #tpu.memory_space<vmem>>, vector<2x32xf32>
    tpu.vector_store %arg23[%c24_187, %c0_188], %924 {strides = array<i32>} : memref<32x32xf32, #tpu.memory_space<vmem>>, vector<2x32xf32>,
    %926 = vector.extract_strided_slice %519 {offsets = [26, 0], sizes = [2, 96], strides = [1, 1]} : vector<32x96xf32> to vector<2x96xf32>
    %cst_189 = arith.constant dense<0.000000e+00> : vector<2x96xf32>
    %927 = tpu.matmul %924, %520, %cst_189 {dimension_numbers = #tpu.dot_dimension_numbers<[1], [0], [0], [1], [0, 0, 1, 1], [], []>} : vector<2x32xf32>, vector<32x96xf32>, vector<2x96xf32> -> vector<2x96xf32>
    %928 = vector.broadcast %521 : vector<1x96xf32> to vector<2x96xf32>
    %929 = arith.addf %927, %928 : vector<2x96xf32>
    %930 = vector.extract_strided_slice %926 {offsets = [0, 0], sizes = [2, 32], strides = [1, 1]} : vector<2x96xf32> to vector<2x32xf32>
    %931 = vector.extract_strided_slice %929 {offsets = [0, 0], sizes = [2, 32], strides = [1, 1]} : vector<2x96xf32> to vector<2x32xf32>
    %932 = arith.addf %930, %931 : vector<2x32xf32>
    %933 = arith.negf %932 : vector<2x32xf32>
    %934 = math.exp %933 : vector<2x32xf32>
    %cst_190 = arith.constant 1.000000e+00 : f32
    %935 = vector.broadcast %cst_190 : f32 to vector<2x32xf32>
    %936 = arith.addf %935, %934 : vector<2x32xf32>
    %937 = arith.divf %935, %936 : vector<2x32xf32>
    %938 = vector.extract_strided_slice %926 {offsets = [0, 32], sizes = [2, 32], strides = [1, 1]} : vector<2x96xf32> to vector<2x32xf32>
    %939 = vector.extract_strided_slice %929 {offsets = [0, 32], sizes = [2, 32], strides = [1, 1]} : vector<2x96xf32> to vector<2x32xf32>
    %940 = arith.addf %938, %939 : vector<2x32xf32>
    %941 = arith.negf %940 : vector<2x32xf32>
    %942 = math.exp %941 : vector<2x32xf32>
    %cst_191 = arith.constant 1.000000e+00 : f32
    %943 = vector.broadcast %cst_191 : f32 to vector<2x32xf32>
    %944 = arith.addf %943, %942 : vector<2x32xf32>
    %945 = arith.divf %943, %944 : vector<2x32xf32>
    %946 = vector.extract_strided_slice %926 {offsets = [0, 64], sizes = [2, 32], strides = [1, 1]} : vector<2x96xf32> to vector<2x32xf32>
    %947 = vector.extract_strided_slice %929 {offsets = [0, 64], sizes = [2, 32], strides = [1, 1]} : vector<2x96xf32> to vector<2x32xf32>
    %948 = arith.mulf %937, %947 : vector<2x32xf32>
    %949 = arith.addf %946, %948 : vector<2x32xf32>
    %950 = math.tanh %949 : vector<2x32xf32>
    %cst_192 = arith.constant 1.000000e+00 : f32
    %951 = vector.broadcast %cst_192 : f32 to vector<2x32xf32>
    %952 = arith.subf %951, %945 : vector<2x32xf32>
    %953 = arith.mulf %952, %950 : vector<2x32xf32>
    %954 = arith.mulf %945, %924 : vector<2x32xf32>
    %955 = arith.addf %953, %954 : vector<2x32xf32>
    %c26_193 = arith.constant 26 : index
    %c0_194 = arith.constant 0 : index
    %956 = vector.load %arg23[%c26_193, %c0_194] : memref<32x32xf32, #tpu.memory_space<vmem>>, vector<2x32xf32>
    tpu.vector_store %arg23[%c26_193, %c0_194], %955 {strides = array<i32>} : memref<32x32xf32, #tpu.memory_space<vmem>>, vector<2x32xf32>,
    %957 = vector.extract_strided_slice %519 {offsets = [28, 0], sizes = [2, 96], strides = [1, 1]} : vector<32x96xf32> to vector<2x96xf32>
    %cst_195 = arith.constant dense<0.000000e+00> : vector<2x96xf32>
    %958 = tpu.matmul %955, %520, %cst_195 {dimension_numbers = #tpu.dot_dimension_numbers<[1], [0], [0], [1], [0, 0, 1, 1], [], []>} : vector<2x32xf32>, vector<32x96xf32>, vector<2x96xf32> -> vector<2x96xf32>
    %959 = vector.broadcast %521 : vector<1x96xf32> to vector<2x96xf32>
    %960 = arith.addf %958, %959 : vector<2x96xf32>
    %961 = vector.extract_strided_slice %957 {offsets = [0, 0], sizes = [2, 32], strides = [1, 1]} : vector<2x96xf32> to vector<2x32xf32>
    %962 = vector.extract_strided_slice %960 {offsets = [0, 0], sizes = [2, 32], strides = [1, 1]} : vector<2x96xf32> to vector<2x32xf32>
    %963 = arith.addf %961, %962 : vector<2x32xf32>
    %964 = arith.negf %963 : vector<2x32xf32>
    %965 = math.exp %964 : vector<2x32xf32>
    %cst_196 = arith.constant 1.000000e+00 : f32
    %966 = vector.broadcast %cst_196 : f32 to vector<2x32xf32>
    %967 = arith.addf %966, %965 : vector<2x32xf32>
    %968 = arith.divf %966, %967 : vector<2x32xf32>
    %969 = vector.extract_strided_slice %957 {offsets = [0, 32], sizes = [2, 32], strides = [1, 1]} : vector<2x96xf32> to vector<2x32xf32>
    %970 = vector.extract_strided_slice %960 {offsets = [0, 32], sizes = [2, 32], strides = [1, 1]} : vector<2x96xf32> to vector<2x32xf32>
    %971 = arith.addf %969, %970 : vector<2x32xf32>
    %972 = arith.negf %971 : vector<2x32xf32>
    %973 = math.exp %972 : vector<2x32xf32>
    %cst_197 = arith.constant 1.000000e+00 : f32
    %974 = vector.broadcast %cst_197 : f32 to vector<2x32xf32>
    %975 = arith.addf %974, %973 : vector<2x32xf32>
    %976 = arith.divf %974, %975 : vector<2x32xf32>
    %977 = vector.extract_strided_slice %957 {offsets = [0, 64], sizes = [2, 32], strides = [1, 1]} : vector<2x96xf32> to vector<2x32xf32>
    %978 = vector.extract_strided_slice %960 {offsets = [0, 64], sizes = [2, 32], strides = [1, 1]} : vector<2x96xf32> to vector<2x32xf32>
    %979 = arith.mulf %968, %978 : vector<2x32xf32>
    %980 = arith.addf %977, %979 : vector<2x32xf32>
    %981 = math.tanh %980 : vector<2x32xf32>
    %cst_198 = arith.constant 1.000000e+00 : f32
    %982 = vector.broadcast %cst_198 : f32 to vector<2x32xf32>
    %983 = arith.subf %982, %976 : vector<2x32xf32>
    %984 = arith.mulf %983, %981 : vector<2x32xf32>
    %985 = arith.mulf %976, %955 : vector<2x32xf32>
    %986 = arith.addf %984, %985 : vector<2x32xf32>
    %c28_199 = arith.constant 28 : index
    %c0_200 = arith.constant 0 : index
    %987 = vector.load %arg23[%c28_199, %c0_200] : memref<32x32xf32, #tpu.memory_space<vmem>>, vector<2x32xf32>
    tpu.vector_store %arg23[%c28_199, %c0_200], %986 {strides = array<i32>} : memref<32x32xf32, #tpu.memory_space<vmem>>, vector<2x32xf32>,
    %988 = vector.extract_strided_slice %519 {offsets = [30, 0], sizes = [2, 96], strides = [1, 1]} : vector<32x96xf32> to vector<2x96xf32>
    %cst_201 = arith.constant dense<0.000000e+00> : vector<2x96xf32>
    %989 = tpu.matmul %986, %520, %cst_201 {dimension_numbers = #tpu.dot_dimension_numbers<[1], [0], [0], [1], [0, 0, 1, 1], [], []>} : vector<2x32xf32>, vector<32x96xf32>, vector<2x96xf32> -> vector<2x96xf32>
    %990 = vector.broadcast %521 : vector<1x96xf32> to vector<2x96xf32>
    %991 = arith.addf %989, %990 : vector<2x96xf32>
    %992 = vector.extract_strided_slice %988 {offsets = [0, 0], sizes = [2, 32], strides = [1, 1]} : vector<2x96xf32> to vector<2x32xf32>
    %993 = vector.extract_strided_slice %991 {offsets = [0, 0], sizes = [2, 32], strides = [1, 1]} : vector<2x96xf32> to vector<2x32xf32>
    %994 = arith.addf %992, %993 : vector<2x32xf32>
    %995 = arith.negf %994 : vector<2x32xf32>
    %996 = math.exp %995 : vector<2x32xf32>
    %cst_202 = arith.constant 1.000000e+00 : f32
    %997 = vector.broadcast %cst_202 : f32 to vector<2x32xf32>
    %998 = arith.addf %997, %996 : vector<2x32xf32>
    %999 = arith.divf %997, %998 : vector<2x32xf32>
    %1000 = vector.extract_strided_slice %988 {offsets = [0, 32], sizes = [2, 32], strides = [1, 1]} : vector<2x96xf32> to vector<2x32xf32>
    %1001 = vector.extract_strided_slice %991 {offsets = [0, 32], sizes = [2, 32], strides = [1, 1]} : vector<2x96xf32> to vector<2x32xf32>
    %1002 = arith.addf %1000, %1001 : vector<2x32xf32>
    %1003 = arith.negf %1002 : vector<2x32xf32>
    %1004 = math.exp %1003 : vector<2x32xf32>
    %cst_203 = arith.constant 1.000000e+00 : f32
    %1005 = vector.broadcast %cst_203 : f32 to vector<2x32xf32>
    %1006 = arith.addf %1005, %1004 : vector<2x32xf32>
    %1007 = arith.divf %1005, %1006 : vector<2x32xf32>
    %1008 = vector.extract_strided_slice %988 {offsets = [0, 64], sizes = [2, 32], strides = [1, 1]} : vector<2x96xf32> to vector<2x32xf32>
    %1009 = vector.extract_strided_slice %991 {offsets = [0, 64], sizes = [2, 32], strides = [1, 1]} : vector<2x96xf32> to vector<2x32xf32>
    %1010 = arith.mulf %999, %1009 : vector<2x32xf32>
    %1011 = arith.addf %1008, %1010 : vector<2x32xf32>
    %1012 = math.tanh %1011 : vector<2x32xf32>
    %cst_204 = arith.constant 1.000000e+00 : f32
    %1013 = vector.broadcast %cst_204 : f32 to vector<2x32xf32>
    %1014 = arith.subf %1013, %1007 : vector<2x32xf32>
    %1015 = arith.mulf %1014, %1012 : vector<2x32xf32>
    %1016 = arith.mulf %1007, %986 : vector<2x32xf32>
    %1017 = arith.addf %1015, %1016 : vector<2x32xf32>
    %c30_205 = arith.constant 30 : index
    %c0_206 = arith.constant 0 : index
    %1018 = vector.load %arg23[%c30_205, %c0_206] : memref<32x32xf32, #tpu.memory_space<vmem>>, vector<2x32xf32>
    tpu.vector_store %arg23[%c30_205, %c0_206], %1017 {strides = array<i32>} : memref<32x32xf32, #tpu.memory_space<vmem>>, vector<2x32xf32>,
    %c0_207 = arith.constant 0 : index
    %c0_208 = arith.constant 0 : index
    %1019 = vector.load %arg23[%c0_207, %c0_208] : memref<32x32xf32, #tpu.memory_space<vmem>>, vector<32x32xf32>
    %1020 = arith.addf %1019, %511 : vector<32x32xf32>
    %c0_209 = arith.constant 0 : index
    %c0_210 = arith.constant 0 : index
    %1021 = vector.load %arg13[%c0_209, %c0_210] : memref<32x32xf32, #tpu.memory_space<vmem>>, vector<32x32xf32>
    %cst_211 = arith.constant dense<0.000000e+00> : vector<32x32xf32>
    %1022 = tpu.matmul %1020, %1021, %cst_211 {dimension_numbers = #tpu.dot_dimension_numbers<[1], [0], [0], [1], [0, 0, 1, 1], [], []>} : vector<32x32xf32>, vector<32x32xf32>, vector<32x32xf32> -> vector<32x32xf32>
    %c0_212 = arith.constant 0 : index
    %c0_213 = arith.constant 0 : index
    %1023 = vector.load %arg14[%c0_212, %c0_213] : memref<25x32xf32, #tpu.memory_space<vmem>>, vector<25x32xf32>
    %cst_214 = arith.constant dense<0.000000e+00> : vector<32x32xf32>
    %1024 = tpu.matmul %0, %1023, %cst_214 {dimension_numbers = #tpu.dot_dimension_numbers<[1], [0], [0], [1], [0, 0, 1, 1], [], []>} : vector<32x25xf32>, vector<25x32xf32>, vector<32x32xf32> -> vector<32x32xf32>
    %1025 = arith.addf %1022, %1024 : vector<32x32xf32>
    %c0_215 = arith.constant 0 : index
    %c0_216 = arith.constant 0 : index
    %1026 = vector.load %arg15[%c0_215, %c0_216] : memref<1x32xf32, #tpu.memory_space<vmem>>, vector<1x32xf32>
    %1027 = vector.broadcast %1026 : vector<1x32xf32> to vector<32x32xf32>
    %1028 = arith.addf %1025, %1027 : vector<32x32xf32>
    %cst_217 = arith.constant 0.000000e+00 : f32
    %1029 = vector.broadcast %cst_217 : f32 to vector<32x32xf32>
    %1030 = arith.maximumf %1028, %1029 : vector<32x32xf32>
    %c0_218 = arith.constant 0 : index
    %c0_219 = arith.constant 0 : index
    %1031 = vector.load %arg16[%c0_218, %c0_219] : memref<32x32xf32, #tpu.memory_space<vmem>>, vector<32x32xf32>
    %cst_220 = arith.constant dense<0.000000e+00> : vector<32x32xf32>
    %1032 = tpu.matmul %1030, %1031, %cst_220 {dimension_numbers = #tpu.dot_dimension_numbers<[1], [0], [0], [1], [0, 0, 1, 1], [], []>} : vector<32x32xf32>, vector<32x32xf32>, vector<32x32xf32> -> vector<32x32xf32>
    %c0_221 = arith.constant 0 : index
    %c0_222 = arith.constant 0 : index
    %1033 = vector.load %arg17[%c0_221, %c0_222] : memref<25x32xf32, #tpu.memory_space<vmem>>, vector<25x32xf32>
    %cst_223 = arith.constant dense<0.000000e+00> : vector<32x32xf32>
    %1034 = tpu.matmul %0, %1033, %cst_223 {dimension_numbers = #tpu.dot_dimension_numbers<[1], [0], [0], [1], [0, 0, 1, 1], [], []>} : vector<32x25xf32>, vector<25x32xf32>, vector<32x32xf32> -> vector<32x32xf32>
    %1035 = arith.addf %1032, %1034 : vector<32x32xf32>
    %c0_224 = arith.constant 0 : index
    %c0_225 = arith.constant 0 : index
    %1036 = vector.load %arg18[%c0_224, %c0_225] : memref<1x32xf32, #tpu.memory_space<vmem>>, vector<1x32xf32>
    %1037 = vector.broadcast %1036 : vector<1x32xf32> to vector<32x32xf32>
    %1038 = arith.addf %1035, %1037 : vector<32x32xf32>
    %cst_226 = arith.constant 0.000000e+00 : f32
    %1039 = vector.broadcast %cst_226 : f32 to vector<32x32xf32>
    %1040 = arith.maximumf %1038, %1039 : vector<32x32xf32>
    %c0_227 = arith.constant 0 : index
    %c0_228 = arith.constant 0 : index
    %1041 = vector.load %arg19[%c0_227, %c0_228] : memref<32x16xf32, #tpu.memory_space<vmem>>, vector<32x16xf32>
    %cst_229 = arith.constant dense<0.000000e+00> : vector<32x16xf32>
    %1042 = tpu.matmul %1040, %1041, %cst_229 {dimension_numbers = #tpu.dot_dimension_numbers<[1], [0], [0], [1], [0, 0, 1, 1], [], []>} : vector<32x32xf32>, vector<32x16xf32>, vector<32x16xf32> -> vector<32x16xf32>
    %c0_230 = arith.constant 0 : index
    %c0_231 = arith.constant 0 : index
    %1043 = vector.load %arg20[%c0_230, %c0_231] : memref<1x16xf32, #tpu.memory_space<vmem>>, vector<1x16xf32>
    %1044 = vector.broadcast %1043 : vector<1x16xf32> to vector<32x16xf32>
    %1045 = arith.addf %1042, %1044 : vector<32x16xf32>
    %c0_232 = arith.constant 0 : index
    %c0_233 = arith.constant 0 : index
    %1046 = vector.load %arg21[%c0_232, %c0_233] : memref<32x16xf32, #tpu.memory_space<vmem>>, vector<32x16xf32>
    tpu.vector_store %arg21[%c0_232, %c0_233], %1045 {strides = array<i32>} : memref<32x16xf32, #tpu.memory_space<vmem>>, vector<32x16xf32>,
    return
  }
  func.func @transform_0(%arg0: i32) -> (i32, i32) {
    %c0_i32 = arith.constant 0 : i32
    %c0_i32_0 = arith.constant 0 : i32
    %c0_i32_1 = arith.constant 0 : i32
    return %c0_i32, %c0_i32_0 : i32, i32
  }
  func.func @transform_1(%arg0: i32) -> (i32, i32) {
    %c0_i32 = arith.constant 0 : i32
    %c0_i32_0 = arith.constant 0 : i32
    %c0_i32_1 = arith.constant 0 : i32
    return %c0_i32, %c0_i32_0 : i32, i32
  }
  func.func @transform_2(%arg0: i32) -> (i32, i32) {
    %c0_i32 = arith.constant 0 : i32
    %c0_i32_0 = arith.constant 0 : i32
    %c0_i32_1 = arith.constant 0 : i32
    return %c0_i32, %c0_i32_0 : i32, i32
  }
  func.func @transform_3(%arg0: i32) -> (i32, i32) {
    %c0_i32 = arith.constant 0 : i32
    %c0_i32_0 = arith.constant 0 : i32
    %c0_i32_1 = arith.constant 0 : i32
    return %c0_i32, %c0_i32_0 : i32, i32
  }
  func.func @transform_4(%arg0: i32) -> (i32, i32) {
    %c0_i32 = arith.constant 0 : i32
    %c0_i32_0 = arith.constant 0 : i32
    %c0_i32_1 = arith.constant 0 : i32
    return %c0_i32, %c0_i32_0 : i32, i32
  }
  func.func @transform_5(%arg0: i32) -> (i32, i32) {
    %c0_i32 = arith.constant 0 : i32
    %c0_i32_0 = arith.constant 0 : i32
    %c0_i32_1 = arith.constant 0 : i32
    return %c0_i32, %c0_i32_0 : i32, i32
  }
  func.func @transform_6(%arg0: i32) -> (i32, i32) {
    %c0_i32 = arith.constant 0 : i32
    %c0_i32_0 = arith.constant 0 : i32
    %c0_i32_1 = arith.constant 0 : i32
    return %c0_i32, %c0_i32_0 : i32, i32
  }
  func.func @transform_7(%arg0: i32) -> (i32, i32) {
    %c0_i32 = arith.constant 0 : i32
    %c0_i32_0 = arith.constant 0 : i32
    %c0_i32_1 = arith.constant 0 : i32
    return %c0_i32, %c0_i32_0 : i32, i32
  }
  func.func @transform_8(%arg0: i32) -> (i32, i32) {
    %c0_i32 = arith.constant 0 : i32
    %c0_i32_0 = arith.constant 0 : i32
    %c0_i32_1 = arith.constant 0 : i32
    return %c0_i32, %c0_i32_0 : i32, i32
  }
  func.func @transform_9(%arg0: i32) -> (i32, i32) {
    %c0_i32 = arith.constant 0 : i32
    %c0_i32_0 = arith.constant 0 : i32
    %c0_i32_1 = arith.constant 0 : i32
    return %c0_i32, %c0_i32_0 : i32, i32
  }
  func.func @transform_10(%arg0: i32) -> (i32, i32) {
    %c0_i32 = arith.constant 0 : i32
    %c0_i32_0 = arith.constant 0 : i32
    %c0_i32_1 = arith.constant 0 : i32
    return %c0_i32, %c0_i32_0 : i32, i32
  }
  func.func @transform_11(%arg0: i32) -> (i32, i32) {
    %c0_i32 = arith.constant 0 : i32
    %c0_i32_0 = arith.constant 0 : i32
    %c0_i32_1 = arith.constant 0 : i32
    return %c0_i32, %c0_i32_0 : i32, i32
  }
  func.func @transform_12(%arg0: i32) -> (i32, i32) {
    %c0_i32 = arith.constant 0 : i32
    %c0_i32_0 = arith.constant 0 : i32
    %c0_i32_1 = arith.constant 0 : i32
    return %c0_i32, %c0_i32_0 : i32, i32
  }
  func.func @transform_13(%arg0: i32) -> (i32, i32) {
    %c0_i32 = arith.constant 0 : i32
    %c0_i32_0 = arith.constant 0 : i32
    %c0_i32_1 = arith.constant 0 : i32
    return %c0_i32, %c0_i32_0 : i32, i32
  }
  func.func @transform_14(%arg0: i32) -> (i32, i32) {
    %c0_i32 = arith.constant 0 : i32
    %c0_i32_0 = arith.constant 0 : i32
    %c0_i32_1 = arith.constant 0 : i32
    return %c0_i32, %c0_i32_0 : i32, i32
  }
  func.func @transform_15(%arg0: i32) -> (i32, i32) {
    %c0_i32 = arith.constant 0 : i32
    %c0_i32_0 = arith.constant 0 : i32
    %c0_i32_1 = arith.constant 0 : i32
    return %c0_i32, %c0_i32_0 : i32, i32
  }
  func.func @transform_16(%arg0: i32) -> (i32, i32) {
    %c0_i32 = arith.constant 0 : i32
    %c0_i32_0 = arith.constant 0 : i32
    %c0_i32_1 = arith.constant 0 : i32
    return %c0_i32, %c0_i32_0 : i32, i32
  }
  func.func @transform_17(%arg0: i32) -> (i32, i32) {
    %c0_i32 = arith.constant 0 : i32
    %c0_i32_0 = arith.constant 0 : i32
    %c0_i32_1 = arith.constant 0 : i32
    return %c0_i32, %c0_i32_0 : i32, i32
  }
  func.func @transform_18(%arg0: i32) -> (i32, i32) {
    %c0_i32 = arith.constant 0 : i32
    %c0_i32_0 = arith.constant 0 : i32
    %c0_i32_1 = arith.constant 0 : i32
    return %c0_i32, %c0_i32_0 : i32, i32
  }
  func.func @transform_19(%arg0: i32) -> (i32, i32) {
    %c0_i32 = arith.constant 0 : i32
    %c0_i32_0 = arith.constant 0 : i32
    %c0_i32_1 = arith.constant 0 : i32
    return %c0_i32, %c0_i32_0 : i32, i32
  }
  func.func @transform_20(%arg0: i32) -> (i32, i32) {
    %c0_i32 = arith.constant 0 : i32
    %c0_i32_0 = arith.constant 0 : i32
    %c0_i32_1 = arith.constant 0 : i32
    return %c0_i32, %c0_i32_0 : i32, i32
  }
}

</mosaic_0001>

<llo_original>
// kernel: wavernn_forward.2
$region0: #{wavernn_forward.2}
  #allocation0 [shape = 'u32[]', space=smem, size = 0x4, offset = 0x4, fixed_abs, tag = 'smem constant byte address 0x4 - core index']
  #allocation1 [shape = 'u32[144,128]{1,0:T(1,128)}', space=vmem, size = 0x12000, scoped, tag = 'internal scratch']
  %s0 = inlined_call_operand.vmem [shape: f32[8,40], index: 0, kind: input, shape index: {}]
  %s1 = inlined_call_operand.vmem [shape: f32[40,16], index: 1, kind: input, shape index: {}]
  %s2 = inlined_call_operand.vmem [shape: f32[1,16], index: 2, kind: input, shape index: {}]
  %s3 = inlined_call_operand.vmem [shape: f32[1,16], index: 3, kind: input, shape index: {}]
  %s4 = inlined_call_operand.vmem [shape: f32[2,16,16], index: 4, kind: input, shape index: {}]
  %s5 = inlined_call_operand.vmem [shape: f32[2,1,16], index: 5, kind: input, shape index: {}]
  %s6 = inlined_call_operand.vmem [shape: f32[2,1,16], index: 6, kind: input, shape index: {}]
  %s7 = inlined_call_operand.vmem [shape: f32[2,16,16], index: 7, kind: input, shape index: {}]
  %s8 = inlined_call_operand.vmem [shape: f32[2,1,16], index: 8, kind: input, shape index: {}]
  %s9 = inlined_call_operand.vmem [shape: f32[2,1,16], index: 9, kind: input, shape index: {}]
  %s10 = inlined_call_operand.vmem [shape: f32[16,16], index: 10, kind: input, shape index: {}]
  %s11 = inlined_call_operand.vmem [shape: f32[1,16], index: 11, kind: input, shape index: {}]
  %s12 = inlined_call_operand.vmem [shape: f32[8,16], index: 12, kind: output, shape index: {}]
  %s13 = sld [smem:[#allocation0]]
  $region58: #{wavernn_forward.2} parent=0
    _
  %s15 = ssub.s32 1, %s13
  %s16 = scalar_select 0, %s15, %s13
  // Predicated region
  $region2: #{wavernn_forward.2} parent=0 // pred_check
    _
  $region3: #{wavernn_forward.2} parent=0 // pred_check_branch
    %18 = sbr.rel (0) target = $region5
  $region4: #{wavernn_forward.2} parent=0 // pred_region
    _
  $region5: #{wavernn_forward.2} parent=0 // pred_fallthru
    _
  // Predicated region
  $region6: #{wavernn_forward.2} parent=0 // pred_check
    _
  $region7: #{wavernn_forward.2} parent=0 // pred_check_branch
    %20 = sbr.rel (0) target = $region9
  $region8: #{wavernn_forward.2} parent=0 // pred_region
    _
  $region9: #{wavernn_forward.2} parent=0 // pred_fallthru
    _
  // Predicated region
  $region10: #{wavernn_forward.2} parent=0 // pred_check
    _
  $region11: #{wavernn_forward.2} parent=0 // pred_check_branch
    %22 = sbr.rel (0) target = $region13
  $region12: #{wavernn_forward.2} parent=0 // pred_region
    _
  $region13: #{wavernn_forward.2} parent=0 // pred_fallthru
    _
  // Predicated region
  $region14: #{wavernn_forward.2} parent=0 // pred_check
    _
  $region15: #{wavernn_forward.2} parent=0 // pred_check_branch
    %24 = sbr.rel (0) target = $region17
  $region16: #{wavernn_forward.2} parent=0 // pred_region
    _
  $region17: #{wavernn_forward.2} parent=0 // pred_fallthru
    _
  // Predicated region
  $region18: #{wavernn_forward.2} parent=0 // pred_check
    _
  $region19: #{wavernn_forward.2} parent=0 // pred_check_branch
    %26 = sbr.rel (0) target = $region21
  $region20: #{wavernn_forward.2} parent=0 // pred_region
    _
  $region21: #{wavernn_forward.2} parent=0 // pred_fallthru
    _
  // Predicated region
  $region22: #{wavernn_forward.2} parent=0 // pred_check
    _
  $region23: #{wavernn_forward.2} parent=0 // pred_check_branch
    %28 = sbr.rel (0) target = $region25
  $region24: #{wavernn_forward.2} parent=0 // pred_region
    _
  $region25: #{wavernn_forward.2} parent=0 // pred_fallthru
    _
  // Predicated region
  $region26: #{wavernn_forward.2} parent=0 // pred_check
    _
  $region27: #{wavernn_forward.2} parent=0 // pred_check_branch
    %30 = sbr.rel (0) target = $region29
  $region28: #{wavernn_forward.2} parent=0 // pred_region
    _
  $region29: #{wavernn_forward.2} parent=0 // pred_fallthru
    _
  // Predicated region
  $region30: #{wavernn_forward.2} parent=0 // pred_check
    _
  $region31: #{wavernn_forward.2} parent=0 // pred_check_branch
    %32 = sbr.rel (0) target = $region33
  $region32: #{wavernn_forward.2} parent=0 // pred_region
    _
  $region33: #{wavernn_forward.2} parent=0 // pred_fallthru
    _
  // Predicated region
  $region34: #{wavernn_forward.2} parent=0 // pred_check
    _
  $region35: #{wavernn_forward.2} parent=0 // pred_check_branch
    %34 = sbr.rel (0) target = $region37
  $region36: #{wavernn_forward.2} parent=0 // pred_region
    _
  $region37: #{wavernn_forward.2} parent=0 // pred_fallthru
    _
  // Predicated region
  $region38: #{wavernn_forward.2} parent=0 // pred_check
    _
  $region39: #{wavernn_forward.2} parent=0 // pred_check_branch
    %36 = sbr.rel (0) target = $region41
  $region40: #{wavernn_forward.2} parent=0 // pred_region
    _
  $region41: #{wavernn_forward.2} parent=0 // pred_fallthru
    _
  // Predicated region
  $region42: #{wavernn_forward.2} parent=0 // pred_check
    _
  $region43: #{wavernn_forward.2} parent=0 // pred_check_branch
    %38 = sbr.rel (0) target = $region45
  $region44: #{wavernn_forward.2} parent=0 // pred_region
    _
  $region45: #{wavernn_forward.2} parent=0 // pred_fallthru
    _
  // Predicated region
  $region46: #{wavernn_forward.2} parent=0 // pred_check
    _
  $region47: #{wavernn_forward.2} parent=0 // pred_check_branch
    %40 = sbr.rel (0) target = $region49
  $region48: #{wavernn_forward.2} parent=0 // pred_region
    _
  $region49: #{wavernn_forward.2} parent=0 // pred_fallthru
    _
  %v41 = vld [vmem:[%s0] sm:$0xff]
  %v42 = vld [vmem:[%s1] sm:$0xff]
  %v43 = vld [vmem:[%s1 + $0x8] sm:$0xff]
  %v44 = vld [vmem:[%s1 + $0x10] sm:$0xff]
  %v45 = vld [vmem:[%s1 + $0x18] sm:$0xff]
  %v46 = vld [vmem:[%s1 + $0x20] sm:$0xff]
  %vm47 = vcmask 326656
  %v49 = vsel %vm47, %v41, 0
  %51 = vmatprep.subr.mxu0 0.0
  %52 = vmatpush1.msra.mxu0 %v42
  %53 = vmatprep.subr.mxu0 0.0
  %54 = vmatpush1.msra.mxu0 %v43
  %55 = vmatprep.subr.mxu0 0.0
  %56 = vmatpush1.msra.mxu0 %v44
  %57 = vmatprep.subr.mxu0 0.0
  %58 = vmatpush1.msra.mxu0 %v45
  %59 = vmatprep.subr.mxu0 0.0
  %60 = vmatpush1.msra.mxu0 %v46
  %61 = vmatprep.subr.mxu0 0.0
  %62 = vmatpush1.msra.mxu0 0.0
  %63 = vmatprep.subr.mxu0 0.0
  %64 = vmatpush1.msra.mxu0 0.0
  %65 = vmatprep.subr.mxu0 0.0
  %66 = vmatpush1.msra.mxu0 0.0
  %67 = vmatprep.subr.mxu0 0.0
  %68 = vmatpush1.msra.mxu0 0.0
  %69 = vmatprep.subr.mxu0 0.0
  %70 = vmatpush1.msra.mxu0 0.0
  %71 = vmatprep.subr.mxu0 0.0
  %72 = vmatpush1.msra.mxu0 0.0
  %73 = vmatprep.subr.mxu0 0.0
  %74 = vmatpush1.msra.mxu0 0.0
  %75 = vmatprep.subr.mxu0 0.0
  %76 = vmatpush1.msra.mxu0 0.0
  %77 = vmatprep.subr.mxu0 0.0
  %78 = vmatpush1.msra.mxu0 0.0
  %79 = vmatprep.subr.mxu0 0.0
  %80 = vmatpush1.msra.mxu0 0.0
  %81 = vmatprep.subr.mxu0 0.0
  %82 = vmatpush1.msra.mxu0 0.0
  %83 = vmatprep.subr.mxu0 0.0
  %84 = vmatpush1.msra.mxu0 0.0
  %85 = vmatprep.subr.mxu0 0.0
  %86 = vmatpush1.msra.mxu0 0.0
  %87 = vmatprep.subr.mxu0 0.0
  %88 = vmatpush1.msra.mxu0 0.0
  %89 = vmatprep.subr.mxu0 0.0
  %90 = vmatpush1.msra.mxu0 0.0
  %91 = vmatprep.subr.mxu0 0.0
  %92 = vmatpush1.msra.mxu0 0.0
  %93 = vmatprep.subr.mxu0 0.0
  %94 = vmatpush1.msra.mxu0 0.0
  %95 = vmatprep.subr.mxu0 0.0
  %96 = vmatpush1.msra.mxu0 0.0
  %97 = vmatprep.subr.mxu0 0.0
  %98 = vmatpush1.msra.mxu0 0.0
  %99 = vmatprep.subr.mxu0 0.0
  %100 = vmatpush1.msra.mxu0 0.0
  %101 = vmatprep.subr.mxu0 0.0
  %102 = vmatpush1.msra.mxu0 0.0
  %103 = vmatprep.subr.mxu0 0.0
  %104 = vmatpush1.msra.mxu0 0.0
  %105 = vmatprep.subr.mxu0 0.0
  %106 = vmatpush1.msra.mxu0 0.0
  %107 = vmatprep.subr.mxu0 0.0
  %108 = vmatpush1.msra.mxu0 0.0
  %109 = vmatprep.subr.mxu0 0.0
  %110 = vmatpush1.msra.mxu0 0.0
  %111 = vmatprep.subr.mxu0 0.0
  %112 = vmatpush1.msra.mxu0 0.0
  %113 = vmatprep.subr.mxu0 0.0
  %114 = vmatpush1.msra.mxu0 0.0
  %115 = vmatprep.mubr.f32.mxu0 0.0
  %116 = vmatmul.mubr.f32.gmra.mrb[0].mxu0 %v49
  %v117 = vpop.f32.mrb[0].mxu0
  %v118 = vadd.f32 0.0, %v117
  %v119 = vpop.f32.mrb[0].mxu0
  %120 = vdwg.mxu0
  %v121 = vld [vmem:[%s2] sm:$0x1]
  %v122 = vld [vmem:[%s3] sm:$0x1]
  %vm123 = vcmask 130048
  %v124 = vsel %vm123, %v118, 0.0
  %v125 = vrot.slane %v124, 4
  %v126 = vadd.f32 %v124, %v125
  %v127 = vrot.slane %v126, 2
  %v128 = vadd.f32 %v126, %v127
  %v129 = vrot.slane %v128, 1
  %v130 = vadd.f32 %v128, %v129
  %v131 = vrcp.pop 8.0
  %v132 = vmul.f32 %v130, %v131
  %v133 = vsub.f32 %v118, %v132
  %v134 = vmul.f32 %v133, %v133
  %v135 = vsel %vm123, %v134, 0.0
  %v136 = vrot.slane %v135, 4
  %v137 = vadd.f32 %v135, %v136
  %v138 = vrot.slane %v137, 2
  %v139 = vadd.f32 %v137, %v138
  %v140 = vrot.slane %v139, 1
  %v141 = vadd.f32 %v139, %v140
  %v142 = vmul.f32 %v141, %v131
  %v143 = vadd.f32 %v142, 1e-05
  %v144 = vrsqrt.pop %v143
  %v145 = vmul.f32 %v143, %v144
  %vm146 = vcmp.eq.f32.partialorder %v143, inf
  %v147 = vsel %vm146, %v143, %v145
  %vm148 = vcmp.eq.f32.partialorder %v143, 0.0
  %v149 = vand.u32 %v143, 2147483648
  %v150 = vsel %vm148, %v149, %v147
  %v151 = vrcp.pop %v150
  %v152 = vmul.f32 %v133, %v151
  %v154 = vlaneseq
  %v155 = vshrl.u32 %v154, 7
  %v156 = vsub.s32 0, %v155
  %v157 = vrot.slane %v121, %v156
  %v159 = vmul.f32 %v152, %v157
  %v161 = vlaneseq
  %v162 = vshrl.u32 %v161, 7
  %v163 = vsub.s32 0, %v162
  %v164 = vrot.slane %v122, %v163
  %v166 = vadd.f32 %v159, %v164
  %v167 = vmax.f32 %v166, 0.0
  %v168 = vld [vmem:[%s4] sm:$0xff]
  %v169 = vld [vmem:[%s4 + $0x8] sm:$0xff]
  %v171 = vsel %vm123, %v167, 0
  %173 = vmatprep.subr.mxu0 0.0
  %174 = vmatpush1.msra.mxu0 %v168
  %175 = vmatprep.subr.mxu0 0.0
  %176 = vmatpush1.msra.mxu0 %v169
  %177 = vmatprep.subr.mxu0 0.0
  %178 = vmatpush1.msra.mxu0 0.0
  %179 = vmatprep.subr.mxu0 0.0
  %180 = vmatpush1.msra.mxu0 0.0
  %181 = vmatprep.subr.mxu0 0.0
  %182 = vmatpush1.msra.mxu0 0.0
  %183 = vmatprep.subr.mxu0 0.0
  %184 = vmatpush1.msra.mxu0 0.0
  %185 = vmatprep.subr.mxu0 0.0
  %186 = vmatpush1.msra.mxu0 0.0
  %187 = vmatprep.subr.mxu0 0.0
  %188 = vmatpush1.msra.mxu0 0.0
  %189 = vmatprep.subr.mxu0 0.0
  %190 = vmatpush1.msra.mxu0 0.0
  %191 = vmatprep.subr.mxu0 0.0
  %192 = vmatpush1.msra.mxu0 0.0
  %193 = vmatprep.subr.mxu0 0.0
  %194 = vmatpush1.msra.mxu0 0.0
  %195 = vmatprep.subr.mxu0 0.0
  %196 = vmatpush1.msra.mxu0 0.0
  %197 = vmatprep.subr.mxu0 0.0
  %198 = vmatpush1.msra.mxu0 0.0
  %199 = vmatprep.subr.mxu0 0.0
  %200 = vmatpush1.msra.mxu0 0.0
  %201 = vmatprep.subr.mxu0 0.0
  %202 = vmatpush1.msra.mxu0 0.0
  %203 = vmatprep.subr.mxu0 0.0
  %204 = vmatpush1.msra.mxu0 0.0
  %205 = vmatprep.subr.mxu0 0.0
  %206 = vmatpush1.msra.mxu0 0.0
  %207 = vmatprep.subr.mxu0 0.0
  %208 = vmatpush1.msra.mxu0 0.0
  %209 = vmatprep.subr.mxu0 0.0
  %210 = vmatpush1.msra.mxu0 0.0
  %211 = vmatprep.subr.mxu0 0.0
  %212 = vmatpush1.msra.mxu0 0.0
  %213 = vmatprep.subr.mxu0 0.0
  %214 = vmatpush1.msra.mxu0 0.0
  %215 = vmatprep.subr.mxu0 0.0
  %216 = vmatpush1.msra.mxu0 0.0
  %217 = vmatprep.subr.mxu0 0.0
  %218 = vmatpush1.msra.mxu0 0.0
  %219 = vmatprep.subr.mxu0 0.0
  %220 = vmatpush1.msra.mxu0 0.0
  %221 = vmatprep.subr.mxu0 0.0
  %222 = vmatpush1.msra.mxu0 0.0
  %223 = vmatprep.subr.mxu0 0.0
  %224 = vmatpush1.msra.mxu0 0.0
  %225 = vmatprep.subr.mxu0 0.0
  %226 = vmatpush1.msra.mxu0 0.0
  %227 = vmatprep.subr.mxu0 0.0
  %228 = vmatpush1.msra.mxu0 0.0
  %229 = vmatprep.subr.mxu0 0.0
  %230 = vmatpush1.msra.mxu0 0.0
  %231 = vmatprep.subr.mxu0 0.0
  %232 = vmatpush1.msra.mxu0 0.0
  %233 = vmatprep.subr.mxu0 0.0
  %234 = vmatpush1.msra.mxu0 0.0
  %235 = vmatprep.subr.mxu0 0.0
  %236 = vmatpush1.msra.mxu0 0.0
  %237 = vmatprep.mubr.f32.mxu0 0.0
  %238 = vmatmul.mubr.f32.gmra.mrb[0].mxu0 %v171
  %v239 = vpop.f32.mrb[0].mxu0
  %v240 = vadd.f32 0.0, %v239
  %v241 = vpop.f32.mrb[0].mxu0
  %242 = vdwg.mxu0
  %v243 = vld [vmem:[%s5] sm:$0x1]
  %v244 = vld [vmem:[%s6] sm:$0x1]
  %v245 = vsel %vm123, %v240, 0.0
  %v246 = vrot.slane %v245, 4
  %v247 = vadd.f32 %v245, %v246
  %v248 = vrot.slane %v247, 2
  %v249 = vadd.f32 %v247, %v248
  %v250 = vrot.slane %v249, 1
  %v251 = vadd.f32 %v249, %v250
  %v252 = vmul.f32 %v251, %v131
  %v253 = vsub.f32 %v240, %v252
  %v254 = vmul.f32 %v253, %v253
  %v255 = vsel %vm123, %v254, 0.0
  %v256 = vrot.slane %v255, 4
  %v257 = vadd.f32 %v255, %v256
  %v258 = vrot.slane %v257, 2
  %v259 = vadd.f32 %v257, %v258
  %v260 = vrot.slane %v259, 1
  %v261 = vadd.f32 %v259, %v260
  %v262 = vmul.f32 %v261, %v131
  %v263 = vadd.f32 %v262, 1e-05
  %v264 = vrsqrt.pop %v263
  %v265 = vmul.f32 %v263, %v264
  %vm266 = vcmp.eq.f32.partialorder %v263, inf
  %v267 = vsel %vm266, %v263, %v265
  %vm268 = vcmp.eq.f32.partialorder %v263, 0.0
  %v269 = vand.u32 %v263, 2147483648
  %v270 = vsel %vm268, %v269, %v267
  %v271 = vrcp.pop %v270
  %v272 = vmul.f32 %v253, %v271
  %v274 = vlaneseq
  %v275 = vshrl.u32 %v274, 7
  %v276 = vsub.s32 0, %v275
  %v277 = vrot.slane %v243, %v276
  %v279 = vmul.f32 %v272, %v277
  %v281 = vlaneseq
  %v282 = vshrl.u32 %v281, 7
  %v283 = vsub.s32 0, %v282
  %v284 = vrot.slane %v244, %v283
  %v286 = vadd.f32 %v279, %v284
  %v287 = vmax.f32 %v286, 0.0
  %v288 = vld [vmem:[%s7] sm:$0xff]
  %v289 = vld [vmem:[%s7 + $0x8] sm:$0xff]
  %v291 = vsel %vm123, %v287, 0
  %293 = vmatprep.subr.mxu0 0.0
  %294 = vmatpush1.msra.mxu0 %v288
  %295 = vmatprep.subr.mxu0 0.0
  %296 = vmatpush1.msra.mxu0 %v289
  %297 = vmatprep.subr.mxu0 0.0
  %298 = vmatpush1.msra.mxu0 0.0
  %299 = vmatprep.subr.mxu0 0.0
  %300 = vmatpush1.msra.mxu0 0.0
  %301 = vmatprep.subr.mxu0 0.0
  %302 = vmatpush1.msra.mxu0 0.0
  %303 = vmatprep.subr.mxu0 0.0
  %304 = vmatpush1.msra.mxu0 0.0
  %305 = vmatprep.subr.mxu0 0.0
  %306 = vmatpush1.msra.mxu0 0.0
  %307 = vmatprep.subr.mxu0 0.0
  %308 = vmatpush1.msra.mxu0 0.0
  %309 = vmatprep.subr.mxu0 0.0
  %310 = vmatpush1.msra.mxu0 0.0
  %311 = vmatprep.subr.mxu0 0.0
  %312 = vmatpush1.msra.mxu0 0.0
  %313 = vmatprep.subr.mxu0 0.0
  %314 = vmatpush1.msra.mxu0 0.0
  %315 = vmatprep.subr.mxu0 0.0
  %316 = vmatpush1.msra.mxu0 0.0
  %317 = vmatprep.subr.mxu0 0.0
  %318 = vmatpush1.msra.mxu0 0.0
  %319 = vmatprep.subr.mxu0 0.0
  %320 = vmatpush1.msra.mxu0 0.0
  %321 = vmatprep.subr.mxu0 0.0
  %322 = vmatpush1.msra.mxu0 0.0
  %323 = vmatprep.subr.mxu0 0.0
  %324 = vmatpush1.msra.mxu0 0.0
  %325 = vmatprep.subr.mxu0 0.0
  %326 = vmatpush1.msra.mxu0 0.0
  %327 = vmatprep.subr.mxu0 0.0
  %328 = vmatpush1.msra.mxu0 0.0
  %329 = vmatprep.subr.mxu0 0.0
  %330 = vmatpush1.msra.mxu0 0.0
  %331 = vmatprep.subr.mxu0 0.0
  %332 = vmatpush1.msra.mxu0 0.0
  %333 = vmatprep.subr.mxu0 0.0
  %334 = vmatpush1.msra.mxu0 0.0
  %335 = vmatprep.subr.mxu0 0.0
  %336 = vmatpush1.msra.mxu0 0.0
  %337 = vmatprep.subr.mxu0 0.0
  %338 = vmatpush1.msra.mxu0 0.0
  %339 = vmatprep.subr.mxu0 0.0
  %340 = vmatpush1.msra.mxu0 0.0
  %341 = vmatprep.subr.mxu0 0.0
  %342 = vmatpush1.msra.mxu0 0.0
  %343 = vmatprep.subr.mxu0 0.0
  %344 = vmatpush1.msra.mxu0 0.0
  %345 = vmatprep.subr.mxu0 0.0
  %346 = vmatpush1.msra.mxu0 0.0
  %347 = vmatprep.subr.mxu0 0.0
  %348 = vmatpush1.msra.mxu0 0.0
  %349 = vmatprep.subr.mxu0 0.0
  %350 = vmatpush1.msra.mxu0 0.0
  %351 = vmatprep.subr.mxu0 0.0
  %352 = vmatpush1.msra.mxu0 0.0
  %353 = vmatprep.subr.mxu0 0.0
  %354 = vmatpush1.msra.mxu0 0.0
  %355 = vmatprep.subr.mxu0 0.0
  %356 = vmatpush1.msra.mxu0 0.0
  %357 = vmatprep.mubr.f32.mxu0 0.0
  %358 = vmatmul.mubr.f32.gmra.mrb[0].mxu0 %v291
  %v359 = vpop.f32.mrb[0].mxu0
  %v360 = vadd.f32 0.0, %v359
  %v361 = vpop.f32.mrb[0].mxu0
  %362 = vdwg.mxu0
  %v363 = vld [vmem:[%s8] sm:$0x1]
  %v364 = vld [vmem:[%s9] sm:$0x1]
  %v365 = vsel %vm123, %v360, 0.0
  %v366 = vrot.slane %v365, 4
  %v367 = vadd.f32 %v365, %v366
  %v368 = vrot.slane %v367, 2
  %v369 = vadd.f32 %v367, %v368
  %v370 = vrot.slane %v369, 1
  %v371 = vadd.f32 %v369, %v370
  %v372 = vmul.f32 %v371, %v131
  %v373 = vsub.f32 %v360, %v372
  %v374 = vmul.f32 %v373, %v373
  %v375 = vsel %vm123, %v374, 0.0
  %v376 = vrot.slane %v375, 4
  %v377 = vadd.f32 %v375, %v376
  %v378 = vrot.slane %v377, 2
  %v379 = vadd.f32 %v377, %v378
  %v380 = vrot.slane %v379, 1
  %v381 = vadd.f32 %v379, %v380
  %v382 = vmul.f32 %v381, %v131
  %v383 = vadd.f32 %v382, 1e-05
  %v384 = vrsqrt.pop %v383
  %v385 = vmul.f32 %v383, %v384
  %vm386 = vcmp.eq.f32.partialorder %v383, inf
  %v387 = vsel %vm386, %v383, %v385
  %vm388 = vcmp.eq.f32.partialorder %v383, 0.0
  %v389 = vand.u32 %v383, 2147483648
  %v390 = vsel %vm388, %v389, %v387
  %v391 = vrcp.pop %v390
  %v392 = vmul.f32 %v373, %v391
  %v394 = vlaneseq
  %v395 = vshrl.u32 %v394, 7
  %v396 = vsub.s32 0, %v395
  %v397 = vrot.slane %v363, %v396
  %v399 = vmul.f32 %v392, %v397
  %v401 = vlaneseq
  %v402 = vshrl.u32 %v401, 7
  %v403 = vsub.s32 0, %v402
  %v404 = vrot.slane %v364, %v403
  %v406 = vadd.f32 %v399, %v404
  %v407 = vadd.f32 %v406, %v167
  %s408 = scalar_lea.vmem %s4, 16
  %v409 = vld [vmem:[%s408] sm:$0xff]
  %v410 = vld [vmem:[%s408 + $0x8] sm:$0xff]
  %v412 = vsel %vm123, %v407, 0
  %414 = vmatprep.subr.mxu0 0.0
  %415 = vmatpush1.msra.mxu0 %v409
  %416 = vmatprep.subr.mxu0 0.0
  %417 = vmatpush1.msra.mxu0 %v410
  %418 = vmatprep.subr.mxu0 0.0
  %419 = vmatpush1.msra.mxu0 0.0
  %420 = vmatprep.subr.mxu0 0.0
  %421 = vmatpush1.msra.mxu0 0.0
  %422 = vmatprep.subr.mxu0 0.0
  %423 = vmatpush1.msra.mxu0 0.0
  %424 = vmatprep.subr.mxu0 0.0
  %425 = vmatpush1.msra.mxu0 0.0
  %426 = vmatprep.subr.mxu0 0.0
  %427 = vmatpush1.msra.mxu0 0.0
  %428 = vmatprep.subr.mxu0 0.0
  %429 = vmatpush1.msra.mxu0 0.0
  %430 = vmatprep.subr.mxu0 0.0
  %431 = vmatpush1.msra.mxu0 0.0
  %432 = vmatprep.subr.mxu0 0.0
  %433 = vmatpush1.msra.mxu0 0.0
  %434 = vmatprep.subr.mxu0 0.0
  %435 = vmatpush1.msra.mxu0 0.0
  %436 = vmatprep.subr.mxu0 0.0
  %437 = vmatpush1.msra.mxu0 0.0
  %438 = vmatprep.subr.mxu0 0.0
  %439 = vmatpush1.msra.mxu0 0.0
  %440 = vmatprep.subr.mxu0 0.0
  %441 = vmatpush1.msra.mxu0 0.0
  %442 = vmatprep.subr.mxu0 0.0
  %443 = vmatpush1.msra.mxu0 0.0
  %444 = vmatprep.subr.mxu0 0.0
  %445 = vmatpush1.msra.mxu0 0.0
  %446 = vmatprep.subr.mxu0 0.0
  %447 = vmatpush1.msra.mxu0 0.0
  %448 = vmatprep.subr.mxu0 0.0
  %449 = vmatpush1.msra.mxu0 0.0
  %450 = vmatprep.subr.mxu0 0.0
  %451 = vmatpush1.msra.mxu0 0.0
  %452 = vmatprep.subr.mxu0 0.0
  %453 = vmatpush1.msra.mxu0 0.0
  %454 = vmatprep.subr.mxu0 0.0
  %455 = vmatpush1.msra.mxu0 0.0
  %456 = vmatprep.subr.mxu0 0.0
  %457 = vmatpush1.msra.mxu0 0.0
  %458 = vmatprep.subr.mxu0 0.0
  %459 = vmatpush1.msra.mxu0 0.0
  %460 = vmatprep.subr.mxu0 0.0
  %461 = vmatpush1.msra.mxu0 0.0
  %462 = vmatprep.subr.mxu0 0.0
  %463 = vmatpush1.msra.mxu0 0.0
  %464 = vmatprep.subr.mxu0 0.0
  %465 = vmatpush1.msra.mxu0 0.0
  %466 = vmatprep.subr.mxu0 0.0
  %467 = vmatpush1.msra.mxu0 0.0
  %468 = vmatprep.subr.mxu0 0.0
  %469 = vmatpush1.msra.mxu0 0.0
  %470 = vmatprep.subr.mxu0 0.0
  %471 = vmatpush1.msra.mxu0 0.0
  %472 = vmatprep.subr.mxu0 0.0
  %473 = vmatpush1.msra.mxu0 0.0
  %474 = vmatprep.subr.mxu0 0.0
  %475 = vmatpush1.msra.mxu0 0.0
  %476 = vmatprep.subr.mxu0 0.0
  %477 = vmatpush1.msra.mxu0 0.0
  %478 = vmatprep.mubr.f32.mxu0 0.0
  %479 = vmatmul.mubr.f32.gmra.mrb[0].mxu0 %v412
  %v480 = vpop.f32.mrb[0].mxu0
  %v481 = vadd.f32 0.0, %v480
  %v482 = vpop.f32.mrb[0].mxu0
  %483 = vdwg.mxu0
  %s484 = scalar_lea.vmem %s5, 1
  %v485 = vld [vmem:[%s484] sm:$0x1]
  %s486 = scalar_lea.vmem %s6, 1
  %v487 = vld [vmem:[%s486] sm:$0x1]
  %v488 = vsel %vm123, %v481, 0.0
  %v489 = vrot.slane %v488, 4
  %v490 = vadd.f32 %v488, %v489
  %v491 = vrot.slane %v490, 2
  %v492 = vadd.f32 %v490, %v491
  %v493 = vrot.slane %v492, 1
  %v494 = vadd.f32 %v492, %v493
  %v495 = vmul.f32 %v494, %v131
  %v496 = vsub.f32 %v481, %v495
  %v497 = vmul.f32 %v496, %v496
  %v498 = vsel %vm123, %v497, 0.0
  %v499 = vrot.slane %v498, 4
  %v500 = vadd.f32 %v498, %v499
  %v501 = vrot.slane %v500, 2
  %v502 = vadd.f32 %v500, %v501
  %v503 = vrot.slane %v502, 1
  %v504 = vadd.f32 %v502, %v503
  %v505 = vmul.f32 %v504, %v131
  %v506 = vadd.f32 %v505, 1e-05
  %v507 = vrsqrt.pop %v506
  %v508 = vmul.f32 %v506, %v507
  %vm509 = vcmp.eq.f32.partialorder %v506, inf
  %v510 = vsel %vm509, %v506, %v508
  %vm511 = vcmp.eq.f32.partialorder %v506, 0.0
  %v512 = vand.u32 %v506, 2147483648
  %v513 = vsel %vm511, %v512, %v510
  %v514 = vrcp.pop %v513
  %v515 = vmul.f32 %v496, %v514
  %v517 = vlaneseq
  %v518 = vshrl.u32 %v517, 7
  %v519 = vsub.s32 0, %v518
  %v520 = vrot.slane %v485, %v519
  %v522 = vmul.f32 %v515, %v520
  %v524 = vlaneseq
  %v525 = vshrl.u32 %v524, 7
  %v526 = vsub.s32 0, %v525
  %v527 = vrot.slane %v487, %v526
  %v529 = vadd.f32 %v522, %v527
  %v530 = vmax.f32 %v529, 0.0
  %s531 = scalar_lea.vmem %s7, 16
  %v532 = vld [vmem:[%s531] sm:$0xff]
  %v533 = vld [vmem:[%s531 + $0x8] sm:$0xff]
  %v535 = vsel %vm123, %v530, 0
  %537 = vmatprep.subr.mxu0 0.0
  %538 = vmatpush1.msra.mxu0 %v532
  %539 = vmatprep.subr.mxu0 0.0
  %540 = vmatpush1.msra.mxu0 %v533
  %541 = vmatprep.subr.mxu0 0.0
  %542 = vmatpush1.msra.mxu0 0.0
  %543 = vmatprep.subr.mxu0 0.0
  %544 = vmatpush1.msra.mxu0 0.0
  %545 = vmatprep.subr.mxu0 0.0
  %546 = vmatpush1.msra.mxu0 0.0
  %547 = vmatprep.subr.mxu0 0.0
  %548 = vmatpush1.msra.mxu0 0.0
  %549 = vmatprep.subr.mxu0 0.0
  %550 = vmatpush1.msra.mxu0 0.0
  %551 = vmatprep.subr.mxu0 0.0
  %552 = vmatpush1.msra.mxu0 0.0
  %553 = vmatprep.subr.mxu0 0.0
  %554 = vmatpush1.msra.mxu0 0.0
  %555 = vmatprep.subr.mxu0 0.0
  %556 = vmatpush1.msra.mxu0 0.0
  %557 = vmatprep.subr.mxu0 0.0
  %558 = vmatpush1.msra.mxu0 0.0
  %559 = vmatprep.subr.mxu0 0.0
  %560 = vmatpush1.msra.mxu0 0.0
  %561 = vmatprep.subr.mxu0 0.0
  %562 = vmatpush1.msra.mxu0 0.0
  %563 = vmatprep.subr.mxu0 0.0
  %564 = vmatpush1.msra.mxu0 0.0
  %565 = vmatprep.subr.mxu0 0.0
  %566 = vmatpush1.msra.mxu0 0.0
  %567 = vmatprep.subr.mxu0 0.0
  %568 = vmatpush1.msra.mxu0 0.0
  %569 = vmatprep.subr.mxu0 0.0
  %570 = vmatpush1.msra.mxu0 0.0
  %571 = vmatprep.subr.mxu0 0.0
  %572 = vmatpush1.msra.mxu0 0.0
  %573 = vmatprep.subr.mxu0 0.0
  %574 = vmatpush1.msra.mxu0 0.0
  %575 = vmatprep.subr.mxu0 0.0
  %576 = vmatpush1.msra.mxu0 0.0
  %577 = vmatprep.subr.mxu0 0.0
  %578 = vmatpush1.msra.mxu0 0.0
  %579 = vmatprep.subr.mxu0 0.0
  %580 = vmatpush1.msra.mxu0 0.0
  %581 = vmatprep.subr.mxu0 0.0
  %582 = vmatpush1.msra.mxu0 0.0
  %583 = vmatprep.subr.mxu0 0.0
  %584 = vmatpush1.msra.mxu0 0.0
  %585 = vmatprep.subr.mxu0 0.0
  %586 = vmatpush1.msra.mxu0 0.0
  %587 = vmatprep.subr.mxu0 0.0
  %588 = vmatpush1.msra.mxu0 0.0
  %589 = vmatprep.subr.mxu0 0.0
  %590 = vmatpush1.msra.mxu0 0.0
  %591 = vmatprep.subr.mxu0 0.0
  %592 = vmatpush1.msra.mxu0 0.0
  %593 = vmatprep.subr.mxu0 0.0
  %594 = vmatpush1.msra.mxu0 0.0
  %595 = vmatprep.subr.mxu0 0.0
  %596 = vmatpush1.msra.mxu0 0.0
  %597 = vmatprep.subr.mxu0 0.0
  %598 = vmatpush1.msra.mxu0 0.0
  %599 = vmatprep.subr.mxu0 0.0
  %600 = vmatpush1.msra.mxu0 0.0
  %601 = vmatprep.mubr.f32.mxu0 0.0
  %602 = vmatmul.mubr.f32.gmra.mrb[0].mxu0 %v535
  %v603 = vpop.f32.mrb[0].mxu0
  %v604 = vadd.f32 0.0, %v603
  %v605 = vpop.f32.mrb[0].mxu0
  %606 = vdwg.mxu0
  %s607 = scalar_lea.vmem %s8, 1
  %v608 = vld [vmem:[%s607] sm:$0x1]
  %s609 = scalar_lea.vmem %s9, 1
  %v610 = vld [vmem:[%s609] sm:$0x1]
  %v611 = vsel %vm123, %v604, 0.0
  %v612 = vrot.slane %v611, 4
  %v613 = vadd.f32 %v611, %v612
  %v614 = vrot.slane %v613, 2
  %v615 = vadd.f32 %v613, %v614
  %v616 = vrot.slane %v615, 1
  %v617 = vadd.f32 %v615, %v616
  %v618 = vmul.f32 %v617, %v131
  %v619 = vsub.f32 %v604, %v618
  %v620 = vmul.f32 %v619, %v619
  %v621 = vsel %vm123, %v620, 0.0
  %v622 = vrot.slane %v621, 4
  %v623 = vadd.f32 %v621, %v622
  %v624 = vrot.slane %v623, 2
  %v625 = vadd.f32 %v623, %v624
  %v626 = vrot.slane %v625, 1
  %v627 = vadd.f32 %v625, %v626
  %v628 = vmul.f32 %v627, %v131
  %v629 = vadd.f32 %v628, 1e-05
  %v630 = vrsqrt.pop %v629
  %v631 = vmul.f32 %v629, %v630
  %vm632 = vcmp.eq.f32.partialorder %v629, inf
  %v633 = vsel %vm632, %v629, %v631
  %vm634 = vcmp.eq.f32.partialorder %v629, 0.0
  %v635 = vand.u32 %v629, 2147483648
  %v636 = vsel %vm634, %v635, %v633
  %v637 = vrcp.pop %v636
  %v638 = vmul.f32 %v619, %v637
  %v640 = vlaneseq
  %v641 = vshrl.u32 %v640, 7
  %v642 = vsub.s32 0, %v641
  %v643 = vrot.slane %v608, %v642
  %v645 = vmul.f32 %v638, %v643
  %v647 = vlaneseq
  %v648 = vshrl.u32 %v647, 7
  %v649 = vsub.s32 0, %v648
  %v650 = vrot.slane %v610, %v649
  %v652 = vadd.f32 %v645, %v650
  %v653 = vadd.f32 %v652, %v407
  %v654 = vld [vmem:[%s10] sm:$0xff]
  %v655 = vld [vmem:[%s10 + $0x8] sm:$0xff]
  %v656 = vld [vmem:[%s11] sm:$0x1]
  %v658 = vlaneseq
  %v659 = vshrl.u32 %v658, 7
  %v660 = vsub.s32 0, %v659
  %v661 = vrot.slane %v656, %v660
  %v664 = vsel %vm123, %v653, 0
  %666 = vmatprep.subr.mxu0 0.0
  %667 = vmatpush1.msra.mxu0 %v654
  %668 = vmatprep.subr.mxu0 0.0
  %669 = vmatpush1.msra.mxu0 %v655
  %670 = vmatprep.subr.mxu0 0.0
  %671 = vmatpush1.msra.mxu0 0.0
  %672 = vmatprep.subr.mxu0 0.0
  %673 = vmatpush1.msra.mxu0 0.0
  %674 = vmatprep.subr.mxu0 0.0
  %675 = vmatpush1.msra.mxu0 0.0
  %676 = vmatprep.subr.mxu0 0.0
  %677 = vmatpush1.msra.mxu0 0.0
  %678 = vmatprep.subr.mxu0 0.0
  %679 = vmatpush1.msra.mxu0 0.0
  %680 = vmatprep.subr.mxu0 0.0
  %681 = vmatpush1.msra.mxu0 0.0
  %682 = vmatprep.subr.mxu0 0.0
  %683 = vmatpush1.msra.mxu0 0.0
  %684 = vmatprep.subr.mxu0 0.0
  %685 = vmatpush1.msra.mxu0 0.0
  %686 = vmatprep.subr.mxu0 0.0
  %687 = vmatpush1.msra.mxu0 0.0
  %688 = vmatprep.subr.mxu0 0.0
  %689 = vmatpush1.msra.mxu0 0.0
  %690 = vmatprep.subr.mxu0 0.0
  %691 = vmatpush1.msra.mxu0 0.0
  %692 = vmatprep.subr.mxu0 0.0
  %693 = vmatpush1.msra.mxu0 0.0
  %694 = vmatprep.subr.mxu0 0.0
  %695 = vmatpush1.msra.mxu0 0.0
  %696 = vmatprep.subr.mxu0 0.0
  %697 = vmatpush1.msra.mxu0 0.0
  %698 = vmatprep.subr.mxu0 0.0
  %699 = vmatpush1.msra.mxu0 0.0
  %700 = vmatprep.subr.mxu0 0.0
  %701 = vmatpush1.msra.mxu0 0.0
  %702 = vmatprep.subr.mxu0 0.0
  %703 = vmatpush1.msra.mxu0 0.0
  %704 = vmatprep.subr.mxu0 0.0
  %705 = vmatpush1.msra.mxu0 0.0
  %706 = vmatprep.subr.mxu0 0.0
  %707 = vmatpush1.msra.mxu0 0.0
  %708 = vmatprep.subr.mxu0 0.0
  %709 = vmatpush1.msra.mxu0 0.0
  %710 = vmatprep.subr.mxu0 0.0
  %711 = vmatpush1.msra.mxu0 0.0
  %712 = vmatprep.subr.mxu0 0.0
  %713 = vmatpush1.msra.mxu0 0.0
  %714 = vmatprep.subr.mxu0 0.0
  %715 = vmatpush1.msra.mxu0 0.0
  %716 = vmatprep.subr.mxu0 0.0
  %717 = vmatpush1.msra.mxu0 0.0
  %718 = vmatprep.subr.mxu0 0.0
  %719 = vmatpush1.msra.mxu0 0.0
  %720 = vmatprep.subr.mxu0 0.0
  %721 = vmatpush1.msra.mxu0 0.0
  %722 = vmatprep.subr.mxu0 0.0
  %723 = vmatpush1.msra.mxu0 0.0
  %724 = vmatprep.subr.mxu0 0.0
  %725 = vmatpush1.msra.mxu0 0.0
  %726 = vmatprep.subr.mxu0 0.0
  %727 = vmatpush1.msra.mxu0 0.0
  %728 = vmatprep.subr.mxu0 0.0
  %729 = vmatpush1.msra.mxu0 0.0
  %730 = vmatprep.mubr.f32.mxu0 0.0
  %731 = vmatmul.mubr.f32.gmra.mrb[0].mxu0 %v664
  %v732 = vpop.f32.mrb[0].mxu0
  %v733 = vadd.f32 %v661, %v732
  %v734 = vpop.f32.mrb[0].mxu0
  %735 = vdwg.mxu0
  %736 = vst.msk [vmem:[%s12] sm:$0xff] %vm123, %v733
  // Predicated region
  $region50: #{wavernn_forward.2} parent=0 // pred_check
    _
  $region51: #{wavernn_forward.2} parent=0 // pred_check_branch
    %738 = sbr.rel (0) target = $region53
  $region52: #{wavernn_forward.2} parent=0 // pred_region
    _
  $region53: #{wavernn_forward.2} parent=0 // pred_fallthru
    _
  // Predicated region
  $region54: #{wavernn_forward.2} parent=0 // pred_check
    _
  $region55: #{wavernn_forward.2} parent=0 // pred_check_branch
    %740 = sbr.rel (0) target = $region57
  $region56: #{wavernn_forward.2} parent=0 // pred_region
    _
  $region57: #{wavernn_forward.2} parent=0 // pred_fallthru
    _

// kernel: wavernn_forward.3
$region0: #{wavernn_forward.3}
  #allocation0 [shape = 'u32[]', space=smem, size = 0x4, offset = 0x4, fixed_abs, tag = 'smem constant byte address 0x4 - core index']
  #allocation1 [shape = 'u32[144,128]{1,0:T(1,128)}', space=vmem, size = 0x12000, scoped, tag = 'internal scratch']
  #allocation2 [shape = 'f32[32,32]{1,0:T(8,128)}', space=vmem, size = 0x4000, scoped, tag = 'scratch operand']
  #allocation3 [shape = 'f32[32,32]{1,0:T(8,128)}', space=vmem, size = 0x4000, scoped, tag = 'scratch operand']
  %s0 = inlined_call_operand.vmem [shape: f32[32,25], index: 0, kind: input, shape index: {}]
  %s1 = inlined_call_operand.vmem [shape: f32[25,32], index: 1, kind: input, shape index: {}]
  %s2 = inlined_call_operand.vmem [shape: f32[1,32], index: 2, kind: input, shape index: {}]
  %s3 = inlined_call_operand.vmem [shape: f32[32,96], index: 3, kind: input, shape index: {}]
  %s4 = inlined_call_operand.vmem [shape: f32[32,96], index: 4, kind: input, shape index: {}]
  %s5 = inlined_call_operand.vmem [shape: f32[1,96], index: 5, kind: input, shape index: {}]
  %s6 = inlined_call_operand.vmem [shape: f32[1,96], index: 6, kind: input, shape index: {}]
  %s7 = inlined_call_operand.vmem [shape: f32[32,96], index: 7, kind: input, shape index: {}]
  %s8 = inlined_call_operand.vmem [shape: f32[25,96], index: 8, kind: input, shape index: {}]
  %s9 = inlined_call_operand.vmem [shape: f32[32,96], index: 9, kind: input, shape index: {}]
  %s10 = inlined_call_operand.vmem [shape: f32[1,96], index: 10, kind: input, shape index: {}]
  %s11 = inlined_call_operand.vmem [shape: f32[1,96], index: 11, kind: input, shape index: {}]
  %s12 = inlined_call_operand.vmem [shape: f32[32,32], index: 12, kind: input, shape index: {}]
  %s13 = inlined_call_operand.vmem [shape: f32[25,32], index: 13, kind: input, shape index: {}]
  %s14 = inlined_call_operand.vmem [shape: f32[1,32], index: 14, kind: input, shape index: {}]
  %s15 = inlined_call_operand.vmem [shape: f32[32,32], index: 15, kind: input, shape index: {}]
  %s16 = inlined_call_operand.vmem [shape: f32[25,32], index: 16, kind: input, shape index: {}]
  %s17 = inlined_call_operand.vmem [shape: f32[1,32], index: 17, kind: input, shape index: {}]
  %s18 = inlined_call_operand.vmem [shape: f32[32,16], index: 18, kind: input, shape index: {}]
  %s19 = inlined_call_operand.vmem [shape: f32[1,16], index: 19, kind: input, shape index: {}]
  %s20 = inlined_call_operand.vmem [shape: f32[32,16], index: 20, kind: output, shape index: {}]
  %s21 = sld [smem:[#allocation0]]
  $region90: #{wavernn_forward.3} parent=0
    _
  %s23 = ssub.s32 1, %s21
  %s24 = scalar_select 0, %s23, %s21
  // Predicated region
  $region2: #{wavernn_forward.3} parent=0 // pred_check
    _
  $region3: #{wavernn_forward.3} parent=0 // pred_check_branch
    %26 = sbr.rel (0) target = $region5
  $region4: #{wavernn_forward.3} parent=0 // pred_region
    _
  $region5: #{wavernn_forward.3} parent=0 // pred_fallthru
    _
  // Predicated region
  $region6: #{wavernn_forward.3} parent=0 // pred_check
    _
  $region7: #{wavernn_forward.3} parent=0 // pred_check_branch
    %28 = sbr.rel (0) target = $region9
  $region8: #{wavernn_forward.3} parent=0 // pred_region
    _
  $region9: #{wavernn_forward.3} parent=0 // pred_fallthru
    _
  // Predicated region
  $region10: #{wavernn_forward.3} parent=0 // pred_check
    _
  $region11: #{wavernn_forward.3} parent=0 // pred_check_branch
    %30 = sbr.rel (0) target = $region13
  $region12: #{wavernn_forward.3} parent=0 // pred_region
    _
  $region13: #{wavernn_forward.3} parent=0 // pred_fallthru
    _
  // Predicated region
  $region14: #{wavernn_forward.3} parent=0 // pred_check
    _
  $region15: #{wavernn_forward.3} parent=0 // pred_check_branch
    %32 = sbr.rel (0) target = $region17
  $region16: #{wavernn_forward.3} parent=0 // pred_region
    _
  $region17: #{wavernn_forward.3} parent=0 // pred_fallthru
    _
  // Predicated region
  $region18: #{wavernn_forward.3} parent=0 // pred_check
    _
  $region19: #{wavernn_forward.3} parent=0 // pred_check_branch
    %34 = sbr.rel (0) target = $region21
  $region20: #{wavernn_forward.3} parent=0 // pred_region
    _
  $region21: #{wavernn_forward.3} parent=0 // pred_fallthru
    _
  // Predicated region
  $region22: #{wavernn_forward.3} parent=0 // pred_check
    _
  $region23: #{wavernn_forward.3} parent=0 // pred_check_branch
    %36 = sbr.rel (0) target = $region25
  $region24: #{wavernn_forward.3} parent=0 // pred_region
    _
  $region25: #{wavernn_forward.3} parent=0 // pred_fallthru
    _
  // Predicated region
  $region26: #{wavernn_forward.3} parent=0 // pred_check
    _
  $region27: #{wavernn_forward.3} parent=0 // pred_check_branch
    %38 = sbr.rel (0) target = $region29
  $region28: #{wavernn_forward.3} parent=0 // pred_region
    _
  $region29: #{wavernn_forward.3} parent=0 // pred_fallthru
    _
  // Predicated region
  $region30: #{wavernn_forward.3} parent=0 // pred_check
    _
  $region31: #{wavernn_forward.3} parent=0 // pred_check_branch
    %40 = sbr.rel (0) target = $region33
  $region32: #{wavernn_forward.3} parent=0 // pred_region
    _
  $region33: #{wavernn_forward.3} parent=0 // pred_fallthru
    _
  // Predicated region
  $region34: #{wavernn_forward.3} parent=0 // pred_check
    _
  $region35: #{wavernn_forward.3} parent=0 // pred_check_branch
    %42 = sbr.rel (0) target = $region37
  $region36: #{wavernn_forward.3} parent=0 // pred_region
    _
  $region37: #{wavernn_forward.3} parent=0 // pred_fallthru
    _
  // Predicated region
  $region38: #{wavernn_forward.3} parent=0 // pred_check
    _
  $region39: #{wavernn_forward.3} parent=0 // pred_check_branch
    %44 = sbr.rel (0) target = $region41
  $region40: #{wavernn_forward.3} parent=0 // pred_region
    _
  $region41: #{wavernn_forward.3} parent=0 // pred_fallthru
    _
  // Predicated region
  $region42: #{wavernn_forward.3} parent=0 // pred_check
    _
  $region43: #{wavernn_forward.3} parent=0 // pred_check_branch
    %46 = sbr.rel (0) target = $region45
  $region44: #{wavernn_forward.3} parent=0 // pred_region
    _
  $region45: #{wavernn_forward.3} parent=0 // pred_fallthru
    _
  // Predicated region
  $region46: #{wavernn_forward.3} parent=0 // pred_check
    _
  $region47: #{wavernn_forward.3} parent=0 // pred_check_branch
    %48 = sbr.rel (0) target = $region49
  $region48: #{wavernn_forward.3} parent=0 // pred_region
    _
  $region49: #{wavernn_forward.3} parent=0 // pred_fallthru
    _
  // Predicated region
  $region50: #{wavernn_forward.3} parent=0 // pred_check
    _
  $region51: #{wavernn_forward.3} parent=0 // pred_check_branch
    %50 = sbr.rel (0) target = $region53
  $region52: #{wavernn_forward.3} parent=0 // pred_region
    _
  $region53: #{wavernn_forward.3} parent=0 // pred_fallthru
    _
  // Predicated region
  $region54: #{wavernn_forward.3} parent=0 // pred_check
    _
  $region55: #{wavernn_forward.3} parent=0 // pred_check_branch
    %52 = sbr.rel (0) target = $region57
  $region56: #{wavernn_forward.3} parent=0 // pred_region
    _
  $region57: #{wavernn_forward.3} parent=0 // pred_fallthru
    _
  // Predicated region
  $region58: #{wavernn_forward.3} parent=0 // pred_check
    _
  $region59: #{wavernn_forward.3} parent=0 // pred_check_branch
    %54 = sbr.rel (0) target = $region61
  $region60: #{wavernn_forward.3} parent=0 // pred_region
    _
  $region61: #{wavernn_forward.3} parent=0 // pred_fallthru
    _
  // Predicated region
  $region62: #{wavernn_forward.3} parent=0 // pred_check
    _
  $region63: #{wavernn_forward.3} parent=0 // pred_check_branch
    %56 = sbr.rel (0) target = $region65
  $region64: #{wavernn_forward.3} parent=0 // pred_region
    _
  $region65: #{wavernn_forward.3} parent=0 // pred_fallthru
    _
  // Predicated region
  $region66: #{wavernn_forward.3} parent=0 // pred_check
    _
  $region67: #{wavernn_forward.3} parent=0 // pred_check_branch
    %58 = sbr.rel (0) target = $region69
  $region68: #{wavernn_forward.3} parent=0 // pred_region
    _
  $region69: #{wavernn_forward.3} parent=0 // pred_fallthru
    _
  // Predicated region
  $region70: #{wavernn_forward.3} parent=0 // pred_check
    _
  $region71: #{wavernn_forward.3} parent=0 // pred_check_branch
    %60 = sbr.rel (0) target = $region73
  $region72: #{wavernn_forward.3} parent=0 // pred_region
    _
  $region73: #{wavernn_forward.3} parent=0 // pred_fallthru
    _
  // Predicated region
  $region74: #{wavernn_forward.3} parent=0 // pred_check
    _
  $region75: #{wavernn_forward.3} parent=0 // pred_check_branch
    %62 = sbr.rel (0) target = $region77
  $region76: #{wavernn_forward.3} parent=0 // pred_region
    _
  $region77: #{wavernn_forward.3} parent=0 // pred_fallthru
    _
  // Predicated region
  $region78: #{wavernn_forward.3} parent=0 // pred_check
    _
  $region79: #{wavernn_forward.3} parent=0 // pred_check_branch
    %64 = sbr.rel (0) target = $region81
  $region80: #{wavernn_forward.3} parent=0 // pred_region
    _
  $region81: #{wavernn_forward.3} parent=0 // pred_fallthru
    _
  %v65 = vld [vmem:[%s0] sm:$0xff]
  %v66 = vld [vmem:[%s0 + $0x8] sm:$0xff]
  %v67 = vld [vmem:[%s0 + $0x10] sm:$0xff]
  %v68 = vld [vmem:[%s0 + $0x18] sm:$0xff]
  %v69 = vld [vmem:[%s1] sm:$0xff]
  %v70 = vld [vmem:[%s1 + $0x8] sm:$0xff]
  %v71 = vld [vmem:[%s1 + $0x10] sm:$0xff]
  %v72 = vld [vmem:[%s1 + $0x18] sm:$0x1]
  %v73 = vld [vmem:[%s2] sm:$0x1]
  %v75 = vlaneseq
  %v76 = vshrl.u32 %v75, 7
  %v77 = vsub.s32 0, %v76
  %v78 = vrot.slane %v73, %v77
  %vm80 = vcmask 203776
  %v82 = vsel %vm80, %v65, 0
  %v85 = vsel %vm80, %v66, 0
  %v88 = vsel %vm80, %v67, 0
  %v91 = vsel %vm80, %v68, 0
  %vm93 = vcmask 1040384
  %v95 = vsel %vm93, %v72, 0
  %97 = vmatprep.subr.mxu0 0.0
  %98 = vmatpush1.msra.mxu0 %v69
  %99 = vmatprep.subr.mxu0 0.0
  %100 = vmatpush1.msra.mxu0 %v70
  %101 = vmatprep.subr.mxu0 0.0
  %102 = vmatpush1.msra.mxu0 %v71
  %103 = vmatprep.subr.mxu0 0.0
  %104 = vmatpush1.msra.mxu0 %v95
  %105 = vmatprep.subr.mxu0 0.0
  %106 = vmatpush1.msra.mxu0 0.0
  %107 = vmatprep.subr.mxu0 0.0
  %108 = vmatpush1.msra.mxu0 0.0
  %109 = vmatprep.subr.mxu0 0.0
  %110 = vmatpush1.msra.mxu0 0.0
  %111 = vmatprep.subr.mxu0 0.0
  %112 = vmatpush1.msra.mxu0 0.0
  %113 = vmatprep.subr.mxu0 0.0
  %114 = vmatpush1.msra.mxu0 0.0
  %115 = vmatprep.subr.mxu0 0.0
  %116 = vmatpush1.msra.mxu0 0.0
  %117 = vmatprep.subr.mxu0 0.0
  %118 = vmatpush1.msra.mxu0 0.0
  %119 = vmatprep.subr.mxu0 0.0
  %120 = vmatpush1.msra.mxu0 0.0
  %121 = vmatprep.subr.mxu0 0.0
  %122 = vmatpush1.msra.mxu0 0.0
  %123 = vmatprep.subr.mxu0 0.0
  %124 = vmatpush1.msra.mxu0 0.0
  %125 = vmatprep.subr.mxu0 0.0
  %126 = vmatpush1.msra.mxu0 0.0
  %127 = vmatprep.subr.mxu0 0.0
  %128 = vmatpush1.msra.mxu0 0.0
  %129 = vmatprep.subr.mxu0 0.0
  %130 = vmatpush1.msra.mxu0 0.0
  %131 = vmatprep.subr.mxu0 0.0
  %132 = vmatpush1.msra.mxu0 0.0
  %133 = vmatprep.subr.mxu0 0.0
  %134 = vmatpush1.msra.mxu0 0.0
  %135 = vmatprep.subr.mxu0 0.0
  %136 = vmatpush1.msra.mxu0 0.0
  %137 = vmatprep.subr.mxu0 0.0
  %138 = vmatpush1.msra.mxu0 0.0
  %139 = vmatprep.subr.mxu0 0.0
  %140 = vmatpush1.msra.mxu0 0.0
  %141 = vmatprep.subr.mxu0 0.0
  %142 = vmatpush1.msra.mxu0 0.0
  %143 = vmatprep.subr.mxu0 0.0
  %144 = vmatpush1.msra.mxu0 0.0
  %145 = vmatprep.subr.mxu0 0.0
  %146 = vmatpush1.msra.mxu0 0.0
  %147 = vmatprep.subr.mxu0 0.0
  %148 = vmatpush1.msra.mxu0 0.0
  %149 = vmatprep.subr.mxu0 0.0
  %150 = vmatpush1.msra.mxu0 0.0
  %151 = vmatprep.subr.mxu0 0.0
  %152 = vmatpush1.msra.mxu0 0.0
  %153 = vmatprep.subr.mxu0 0.0
  %154 = vmatpush1.msra.mxu0 0.0
  %155 = vmatprep.subr.mxu0 0.0
  %156 = vmatpush1.msra.mxu0 0.0
  %157 = vmatprep.subr.mxu0 0.0
  %158 = vmatpush1.msra.mxu0 0.0
  %159 = vmatprep.subr.mxu0 0.0
  %160 = vmatpush1.msra.mxu0 0.0
  %161 = vmatprep.mubr.f32.mxu0 0.0
  %162 = vmatmul.mubr.f32.gmra.mrb[0].mxu0 %v82
  %v163 = vpop.f32.mrb[0].mxu0
  %v164 = vadd.f32 %v78, %v163
  %v165 = vpop.f32.mrb[0].mxu0
  %166 = vmatprep.mubr.f32.mxu0 0.0
  %167 = vmatmul.mubr.f32.gmra.mrb[0].mxu0 %v85
  %v168 = vpop.f32.mrb[0].mxu0
  %v169 = vadd.f32 %v78, %v168
  %v170 = vpop.f32.mrb[0].mxu0
  %171 = vmatprep.mubr.f32.mxu0 0.0
  %172 = vmatmul.mubr.f32.gmra.mrb[0].mxu0 %v88
  %v173 = vpop.f32.mrb[0].mxu0
  %v174 = vadd.f32 %v78, %v173
  %v175 = vpop.f32.mrb[0].mxu0
  %176 = vmatprep.mubr.f32.mxu0 0.0
  %177 = vmatmul.mubr.f32.gmra.mrb[0].mxu0 %v91
  %v178 = vpop.f32.mrb[0].mxu0
  %v179 = vadd.f32 %v78, %v178
  %v180 = vpop.f32.mrb[0].mxu0
  %181 = vdwg.mxu0
  %v182 = vld [vmem:[%s3] sm:$0xff]
  %v183 = vld [vmem:[%s3 + $0x8] sm:$0xff]
  %v184 = vld [vmem:[%s3 + $0x10] sm:$0xff]
  %v185 = vld [vmem:[%s3 + $0x18] sm:$0xff]
  %v186 = vld [vmem:[%s5] sm:$0x1]
  %v188 = vlaneseq
  %v189 = vshrl.u32 %v188, 7
  %v190 = vsub.s32 0, %v189
  %v191 = vrot.slane %v186, %v190
  %vm193 = vcmask 261120
  %v195 = vsel %vm193, %v164, 0
  %v198 = vsel %vm193, %v169, 0
  %v201 = vsel %vm193, %v174, 0
  %v204 = vsel %vm193, %v179, 0
  %206 = vmatprep.subr.mxu0 0.0
  %207 = vmatpush1.msra.mxu0 %v182
  %208 = vmatprep.subr.mxu0 0.0
  %209 = vmatpush1.msra.mxu0 %v183
  %210 = vmatprep.subr.mxu0 0.0
  %211 = vmatpush1.msra.mxu0 %v184
  %212 = vmatprep.subr.mxu0 0.0
  %213 = vmatpush1.msra.mxu0 %v185
  %214 = vmatprep.subr.mxu0 0.0
  %215 = vmatpush1.msra.mxu0 0.0
  %216 = vmatprep.subr.mxu0 0.0
  %217 = vmatpush1.msra.mxu0 0.0
  %218 = vmatprep.subr.mxu0 0.0
  %219 = vmatpush1.msra.mxu0 0.0
  %220 = vmatprep.subr.mxu0 0.0
  %221 = vmatpush1.msra.mxu0 0.0
  %222 = vmatprep.subr.mxu0 0.0
  %223 = vmatpush1.msra.mxu0 0.0
  %224 = vmatprep.subr.mxu0 0.0
  %225 = vmatpush1.msra.mxu0 0.0
  %226 = vmatprep.subr.mxu0 0.0
  %227 = vmatpush1.msra.mxu0 0.0
  %228 = vmatprep.subr.mxu0 0.0
  %229 = vmatpush1.msra.mxu0 0.0
  %230 = vmatprep.subr.mxu0 0.0
  %231 = vmatpush1.msra.mxu0 0.0
  %232 = vmatprep.subr.mxu0 0.0
  %233 = vmatpush1.msra.mxu0 0.0
  %234 = vmatprep.subr.mxu0 0.0
  %235 = vmatpush1.msra.mxu0 0.0
  %236 = vmatprep.subr.mxu0 0.0
  %237 = vmatpush1.msra.mxu0 0.0
  %238 = vmatprep.subr.mxu0 0.0
  %239 = vmatpush1.msra.mxu0 0.0
  %240 = vmatprep.subr.mxu0 0.0
  %241 = vmatpush1.msra.mxu0 0.0
  %242 = vmatprep.subr.mxu0 0.0
  %243 = vmatpush1.msra.mxu0 0.0
  %244 = vmatprep.subr.mxu0 0.0
  %245 = vmatpush1.msra.mxu0 0.0
  %246 = vmatprep.subr.mxu0 0.0
  %247 = vmatpush1.msra.mxu0 0.0
  %248 = vmatprep.subr.mxu0 0.0
  %249 = vmatpush1.msra.mxu0 0.0
  %250 = vmatprep.subr.mxu0 0.0
  %251 = vmatpush1.msra.mxu0 0.0
  %252 = vmatprep.subr.mxu0 0.0
  %253 = vmatpush1.msra.mxu0 0.0
  %254 = vmatprep.subr.mxu0 0.0
  %255 = vmatpush1.msra.mxu0 0.0
  %256 = vmatprep.subr.mxu0 0.0
  %257 = vmatpush1.msra.mxu0 0.0
  %258 = vmatprep.subr.mxu0 0.0
  %259 = vmatpush1.msra.mxu0 0.0
  %260 = vmatprep.subr.mxu0 0.0
  %261 = vmatpush1.msra.mxu0 0.0
  %262 = vmatprep.subr.mxu0 0.0
  %263 = vmatpush1.msra.mxu0 0.0
  %264 = vmatprep.subr.mxu0 0.0
  %265 = vmatpush1.msra.mxu0 0.0
  %266 = vmatprep.subr.mxu0 0.0
  %267 = vmatpush1.msra.mxu0 0.0
  %268 = vmatprep.subr.mxu0 0.0
  %269 = vmatpush1.msra.mxu0 0.0
  %270 = vmatprep.mubr.f32.mxu0 0.0
  %271 = vmatmul.mubr.f32.gmra.mrb[0].mxu0 %v195
  %v272 = vpop.f32.mrb[0].mxu0
  %v273 = vadd.f32 %v191, %v272
  %v274 = vpop.f32.mrb[0].mxu0
  %275 = vmatprep.mubr.f32.mxu0 0.0
  %276 = vmatmul.mubr.f32.gmra.mrb[0].mxu0 %v198
  %v277 = vpop.f32.mrb[0].mxu0
  %v278 = vadd.f32 %v191, %v277
  %v279 = vpop.f32.mrb[0].mxu0
  %280 = vmatprep.mubr.f32.mxu0 0.0
  %281 = vmatmul.mubr.f32.gmra.mrb[0].mxu0 %v201
  %v282 = vpop.f32.mrb[0].mxu0
  %v283 = vadd.f32 %v191, %v282
  %v284 = vpop.f32.mrb[0].mxu0
  %285 = vmatprep.mubr.f32.mxu0 0.0
  %286 = vmatmul.mubr.f32.gmra.mrb[0].mxu0 %v204
  %v287 = vpop.f32.mrb[0].mxu0
  %v288 = vadd.f32 %v191, %v287
  %v289 = vpop.f32.mrb[0].mxu0
  %290 = vdwg.mxu0
  %v291 = vld [vmem:[%s4] sm:$0xff]
  %v292 = vld [vmem:[%s4 + $0x8] sm:$0xff]
  %v293 = vld [vmem:[%s4 + $0x10] sm:$0xff]
  %v294 = vld [vmem:[%s4 + $0x18] sm:$0xff]
  %v295 = vld [vmem:[%s6] sm:$0x1]
  %v297 = vlaneseq
  %v298 = vshrl.u32 %v297, 7
  %v299 = vsub.s32 0, %v298
  %v300 = vrot.slane %v295, %v299
  %v303 = vsel %vm193, 0.0, 0
  %305 = vmatprep.subr.mxu0 0.0
  %306 = vmatpush1.msra.mxu0 %v291
  %307 = vmatprep.subr.mxu0 0.0
  %308 = vmatpush1.msra.mxu0 %v292
  %309 = vmatprep.subr.mxu0 0.0
  %310 = vmatpush1.msra.mxu0 %v293
  %311 = vmatprep.subr.mxu0 0.0
  %312 = vmatpush1.msra.mxu0 %v294
  %313 = vmatprep.subr.mxu0 0.0
  %314 = vmatpush1.msra.mxu0 0.0
  %315 = vmatprep.subr.mxu0 0.0
  %316 = vmatpush1.msra.mxu0 0.0
  %317 = vmatprep.subr.mxu0 0.0
  %318 = vmatpush1.msra.mxu0 0.0
  %319 = vmatprep.subr.mxu0 0.0
  %320 = vmatpush1.msra.mxu0 0.0
  %321 = vmatprep.subr.mxu0 0.0
  %322 = vmatpush1.msra.mxu0 0.0
  %323 = vmatprep.subr.mxu0 0.0
  %324 = vmatpush1.msra.mxu0 0.0
  %325 = vmatprep.subr.mxu0 0.0
  %326 = vmatpush1.msra.mxu0 0.0
  %327 = vmatprep.subr.mxu0 0.0
  %328 = vmatpush1.msra.mxu0 0.0
  %329 = vmatprep.subr.mxu0 0.0
  %330 = vmatpush1.msra.mxu0 0.0
  %331 = vmatprep.subr.mxu0 0.0
  %332 = vmatpush1.msra.mxu0 0.0
  %333 = vmatprep.subr.mxu0 0.0
  %334 = vmatpush1.msra.mxu0 0.0
  %335 = vmatprep.subr.mxu0 0.0
  %336 = vmatpush1.msra.mxu0 0.0
  %337 = vmatprep.subr.mxu0 0.0
  %338 = vmatpush1.msra.mxu0 0.0
  %339 = vmatprep.subr.mxu0 0.0
  %340 = vmatpush1.msra.mxu0 0.0
  %341 = vmatprep.subr.mxu0 0.0
  %342 = vmatpush1.msra.mxu0 0.0
  %343 = vmatprep.subr.mxu0 0.0
  %344 = vmatpush1.msra.mxu0 0.0
  %345 = vmatprep.subr.mxu0 0.0
  %346 = vmatpush1.msra.mxu0 0.0
  %347 = vmatprep.subr.mxu0 0.0
  %348 = vmatpush1.msra.mxu0 0.0
  %349 = vmatprep.subr.mxu0 0.0
  %350 = vmatpush1.msra.mxu0 0.0
  %351 = vmatprep.subr.mxu0 0.0
  %352 = vmatpush1.msra.mxu0 0.0
  %353 = vmatprep.subr.mxu0 0.0
  %354 = vmatpush1.msra.mxu0 0.0
  %355 = vmatprep.subr.mxu0 0.0
  %356 = vmatpush1.msra.mxu0 0.0
  %357 = vmatprep.subr.mxu0 0.0
  %358 = vmatpush1.msra.mxu0 0.0
  %359 = vmatprep.subr.mxu0 0.0
  %360 = vmatpush1.msra.mxu0 0.0
  %361 = vmatprep.subr.mxu0 0.0
  %362 = vmatpush1.msra.mxu0 0.0
  %363 = vmatprep.subr.mxu0 0.0
  %364 = vmatpush1.msra.mxu0 0.0
  %365 = vmatprep.subr.mxu0 0.0
  %366 = vmatpush1.msra.mxu0 0.0
  %367 = vmatprep.subr.mxu0 0.0
  %368 = vmatpush1.msra.mxu0 0.0
  %369 = vmatprep.mubr.f32.mxu0 0.0
  %370 = vmatmul.mubr.f32.gmra.mrb[0].mxu0 %v303
  %v371 = vpop.f32.mrb[0].mxu0
  %v372 = vadd.f32 %v300, %v371
  %v373 = vpop.f32.mrb[0].mxu0
  %374 = vdwg.mxu0
  %v375 = vadd.f32 %v273, %v372
  %v376 = vxor.u32 %v375, 2147483648
  %v377 = vmul.f32 %v376, 1.442695
  %v378 = vpow.pop %v377
  %v379 = vadd.f32 %v378, 1.0
  %v380 = vrcp.pop %v379
  %v381 = vmul.f32 1.0, %v380
  %383 = vrot.lane.b32.xlu0 %v372, 64
  %v384 = vpop.permute.xlu0 %383
  %v386 = vmul.f32 %v381, %v384
  %388 = vrot.lane.b32.xlu0 %v386, 64
  %v389 = vpop.permute.xlu0 %388
  %v391 = vadd.f32 %v273, %v389
  %v392 = vtanh.pop %v391
  %v393 = vsub.f32 1.0, %v381
  %395 = vrot.lane.b32.xlu0 %v392, 96
  %v396 = vpop.permute.xlu0 %395
  %v398 = vmul.f32 %v393, %v396
  %v399 = vmul.f32 %v381, 0.0
  %v400 = vadd.f32 %v398, %v399
  %402 = vrot.lane.b32.xlu0 %v400, 96
  %v403 = vpop.permute.xlu0 %402
  %vm405 = vcmask 254976
  %406 = vst.msk [vmem:[#allocation2] sm:$0x3] %vm405, %v403
  %v407 = vsel %vm193, %v403, 0
  %409 = vmatprep.subr.mxu0 0.0
  %410 = vmatpush1.msra.mxu0 %v291
  %411 = vmatprep.subr.mxu0 0.0
  %412 = vmatpush1.msra.mxu0 %v292
  %413 = vmatprep.subr.mxu0 0.0
  %414 = vmatpush1.msra.mxu0 %v293
  %415 = vmatprep.subr.mxu0 0.0
  %416 = vmatpush1.msra.mxu0 %v294
  %417 = vmatprep.subr.mxu0 0.0
  %418 = vmatpush1.msra.mxu0 0.0
  %419 = vmatprep.subr.mxu0 0.0
  %420 = vmatpush1.msra.mxu0 0.0
  %421 = vmatprep.subr.mxu0 0.0
  %422 = vmatpush1.msra.mxu0 0.0
  %423 = vmatprep.subr.mxu0 0.0
  %424 = vmatpush1.msra.mxu0 0.0
  %425 = vmatprep.subr.mxu0 0.0
  %426 = vmatpush1.msra.mxu0 0.0
  %427 = vmatprep.subr.mxu0 0.0
  %428 = vmatpush1.msra.mxu0 0.0
  %429 = vmatprep.subr.mxu0 0.0
  %430 = vmatpush1.msra.mxu0 0.0
  %431 = vmatprep.subr.mxu0 0.0
  %432 = vmatpush1.msra.mxu0 0.0
  %433 = vmatprep.subr.mxu0 0.0
  %434 = vmatpush1.msra.mxu0 0.0
  %435 = vmatprep.subr.mxu0 0.0
  %436 = vmatpush1.msra.mxu0 0.0
  %437 = vmatprep.subr.mxu0 0.0
  %438 = vmatpush1.msra.mxu0 0.0
  %439 = vmatprep.subr.mxu0 0.0
  %440 = vmatpush1.msra.mxu0 0.0
  %441 = vmatprep.subr.mxu0 0.0
  %442 = vmatpush1.msra.mxu0 0.0
  %443 = vmatprep.subr.mxu0 0.0
  %444 = vmatpush1.msra.mxu0 0.0
  %445 = vmatprep.subr.mxu0 0.0
  %446 = vmatpush1.msra.mxu0 0.0
  %447 = vmatprep.subr.mxu0 0.0
  %448 = vmatpush1.msra.mxu0 0.0
  %449 = vmatprep.subr.mxu0 0.0
  %450 = vmatpush1.msra.mxu0 0.0
  %451 = vmatprep.subr.mxu0 0.0
  %452 = vmatpush1.msra.mxu0 0.0
  %453 = vmatprep.subr.mxu0 0.0
  %454 = vmatpush1.msra.mxu0 0.0
  %455 = vmatprep.subr.mxu0 0.0
  %456 = vmatpush1.msra.mxu0 0.0
  %457 = vmatprep.subr.mxu0 0.0
  %458 = vmatpush1.msra.mxu0 0.0
  %459 = vmatprep.subr.mxu0 0.0
  %460 = vmatpush1.msra.mxu0 0.0
  %461 = vmatprep.subr.mxu0 0.0
  %462 = vmatpush1.msra.mxu0 0.0
  %463 = vmatprep.subr.mxu0 0.0
  %464 = vmatpush1.msra.mxu0 0.0
  %465 = vmatprep.subr.mxu0 0.0
  %466 = vmatpush1.msra.mxu0 0.0
  %467 = vmatprep.subr.mxu0 0.0
  %468 = vmatpush1.msra.mxu0 0.0
  %469 = vmatprep.subr.mxu0 0.0
  %470 = vmatpush1.msra.mxu0 0.0
  %471 = vmatprep.subr.mxu0 0.0
  %472 = vmatpush1.msra.mxu0 0.0
  %473 = vmatprep.mubr.f32.mxu0 0.0
  %474 = vmatmul.mubr.f32.gmra.mrb[0].mxu0 %v407
  %v475 = vpop.f32.mrb[0].mxu0
  %v476 = vadd.f32 %v300, %v475
  %v477 = vpop.f32.mrb[0].mxu0
  %478 = vdwg.mxu0
  %v480 = vrot.slane %v476, 6
  %v482 = vadd.f32 %v273, %v480
  %v483 = vxor.u32 %v482, 2147483648
  %v484 = vmul.f32 %v483, 1.442695
  %v485 = vpow.pop %v484
  %v486 = vadd.f32 %v485, 1.0
  %v487 = vrcp.pop %v486
  %v488 = vmul.f32 1.0, %v487
  %489 = vrot.lane.b32.xlu0 %v480, 64
  %v490 = vpop.permute.xlu0 %489
  %v492 = vmul.f32 %v488, %v490
  %494 = vrot.lane.b32.xlu0 %v492, 64
  %v495 = vpop.permute.xlu0 %494
  %v497 = vadd.f32 %v273, %v495
  %v498 = vtanh.pop %v497
  %v499 = vsub.f32 1.0, %v488
  %501 = vrot.lane.b32.xlu0 %v498, 96
  %v502 = vpop.permute.xlu0 %501
  %v504 = vmul.f32 %v499, %v502
  %v505 = vrot.slane %v400, 6
  %v507 = vmul.f32 %v488, %v505
  %v508 = vadd.f32 %v504, %v507
  %510 = vrot.lane.b32.xlu0 %v508, 96
  %v511 = vpop.permute.xlu0 %510
  %vm513 = vcmask 257026
  %514 = vst.msk [vmem:[#allocation2] sm:$0xc] %vm513, %v511
  %v515 = vrot.slane %v508, 2
  %516 = vrot.lane.b32.xlu0 %v515, 96
  %v517 = vpop.permute.xlu0 %516
  %v518 = vsel %vm193, %v517, 0
  %520 = vmatprep.subr.mxu0 0.0
  %521 = vmatpush1.msra.mxu0 %v291
  %522 = vmatprep.subr.mxu0 0.0
  %523 = vmatpush1.msra.mxu0 %v292
  %524 = vmatprep.subr.mxu0 0.0
  %525 = vmatpush1.msra.mxu0 %v293
  %526 = vmatprep.subr.mxu0 0.0
  %527 = vmatpush1.msra.mxu0 %v294
  %528 = vmatprep.subr.mxu0 0.0
  %529 = vmatpush1.msra.mxu0 0.0
  %530 = vmatprep.subr.mxu0 0.0
  %531 = vmatpush1.msra.mxu0 0.0
  %532 = vmatprep.subr.mxu0 0.0
  %533 = vmatpush1.msra.mxu0 0.0
  %534 = vmatprep.subr.mxu0 0.0
  %535 = vmatpush1.msra.mxu0 0.0
  %536 = vmatprep.subr.mxu0 0.0
  %537 = vmatpush1.msra.mxu0 0.0
  %538 = vmatprep.subr.mxu0 0.0
  %539 = vmatpush1.msra.mxu0 0.0
  %540 = vmatprep.subr.mxu0 0.0
  %541 = vmatpush1.msra.mxu0 0.0
  %542 = vmatprep.subr.mxu0 0.0
  %543 = vmatpush1.msra.mxu0 0.0
  %544 = vmatprep.subr.mxu0 0.0
  %545 = vmatpush1.msra.mxu0 0.0
  %546 = vmatprep.subr.mxu0 0.0
  %547 = vmatpush1.msra.mxu0 0.0
  %548 = vmatprep.subr.mxu0 0.0
  %549 = vmatpush1.msra.mxu0 0.0
  %550 = vmatprep.subr.mxu0 0.0
  %551 = vmatpush1.msra.mxu0 0.0
  %552 = vmatprep.subr.mxu0 0.0
  %553 = vmatpush1.msra.mxu0 0.0
  %554 = vmatprep.subr.mxu0 0.0
  %555 = vmatpush1.msra.mxu0 0.0
  %556 = vmatprep.subr.mxu0 0.0
  %557 = vmatpush1.msra.mxu0 0.0
  %558 = vmatprep.subr.mxu0 0.0
  %559 = vmatpush1.msra.mxu0 0.0
  %560 = vmatprep.subr.mxu0 0.0
  %561 = vmatpush1.msra.mxu0 0.0
  %562 = vmatprep.subr.mxu0 0.0
  %563 = vmatpush1.msra.mxu0 0.0
  %564 = vmatprep.subr.mxu0 0.0
  %565 = vmatpush1.msra.mxu0 0.0
  %566 = vmatprep.subr.mxu0 0.0
  %567 = vmatpush1.msra.mxu0 0.0
  %568 = vmatprep.subr.mxu0 0.0
  %569 = vmatpush1.msra.mxu0 0.0
  %570 = vmatprep.subr.mxu0 0.0
  %571 = vmatpush1.msra.mxu0 0.0
  %572 = vmatprep.subr.mxu0 0.0
  %573 = vmatpush1.msra.mxu0 0.0
  %574 = vmatprep.subr.mxu0 0.0
  %575 = vmatpush1.msra.mxu0 0.0
  %576 = vmatprep.subr.mxu0 0.0
  %577 = vmatpush1.msra.mxu0 0.0
  %578 = vmatprep.subr.mxu0 0.0
  %579 = vmatpush1.msra.mxu0 0.0
  %580 = vmatprep.subr.mxu0 0.0
  %581 = vmatpush1.msra.mxu0 0.0
  %582 = vmatprep.subr.mxu0 0.0
  %583 = vmatpush1.msra.mxu0 0.0
  %584 = vmatprep.mubr.f32.mxu0 0.0
  %585 = vmatmul.mubr.f32.gmra.mrb[0].mxu0 %v518
  %v586 = vpop.f32.mrb[0].mxu0
  %v587 = vadd.f32 %v300, %v586
  %v588 = vpop.f32.mrb[0].mxu0
  %589 = vdwg.mxu0
  %v591 = vrot.slane %v587, 4
  %v593 = vadd.f32 %v273, %v591
  %v594 = vxor.u32 %v593, 2147483648
  %v595 = vmul.f32 %v594, 1.442695
  %v596 = vpow.pop %v595
  %v597 = vadd.f32 %v596, 1.0
  %v598 = vrcp.pop %v597
  %v599 = vmul.f32 1.0, %v598
  %600 = vrot.lane.b32.xlu0 %v591, 64
  %v601 = vpop.permute.xlu0 %600
  %v603 = vmul.f32 %v599, %v601
  %605 = vrot.lane.b32.xlu0 %v603, 64
  %v606 = vpop.permute.xlu0 %605
  %v608 = vadd.f32 %v273, %v606
  %v609 = vtanh.pop %v608
  %v610 = vsub.f32 1.0, %v599
  %612 = vrot.lane.b32.xlu0 %v609, 96
  %v613 = vpop.permute.xlu0 %612
  %v615 = vmul.f32 %v610, %v613
  %v616 = vrot.slane %v508, 6
  %v618 = vmul.f32 %v599, %v616
  %v619 = vadd.f32 %v615, %v618
  %621 = vrot.lane.b32.xlu0 %v619, 96
  %v622 = vpop.permute.xlu0 %621
  %vm624 = vcmask 259076
  %625 = vst.msk [vmem:[#allocation2] sm:$0x30] %vm624, %v622
  %v626 = vrot.slane %v619, 4
  %627 = vrot.lane.b32.xlu0 %v626, 96
  %v628 = vpop.permute.xlu0 %627
  %v629 = vsel %vm193, %v628, 0
  %631 = vmatprep.subr.mxu0 0.0
  %632 = vmatpush1.msra.mxu0 %v291
  %633 = vmatprep.subr.mxu0 0.0
  %634 = vmatpush1.msra.mxu0 %v292
  %635 = vmatprep.subr.mxu0 0.0
  %636 = vmatpush1.msra.mxu0 %v293
  %637 = vmatprep.subr.mxu0 0.0
  %638 = vmatpush1.msra.mxu0 %v294
  %639 = vmatprep.subr.mxu0 0.0
  %640 = vmatpush1.msra.mxu0 0.0
  %641 = vmatprep.subr.mxu0 0.0
  %642 = vmatpush1.msra.mxu0 0.0
  %643 = vmatprep.subr.mxu0 0.0
  %644 = vmatpush1.msra.mxu0 0.0
  %645 = vmatprep.subr.mxu0 0.0
  %646 = vmatpush1.msra.mxu0 0.0
  %647 = vmatprep.subr.mxu0 0.0
  %648 = vmatpush1.msra.mxu0 0.0
  %649 = vmatprep.subr.mxu0 0.0
  %650 = vmatpush1.msra.mxu0 0.0
  %651 = vmatprep.subr.mxu0 0.0
  %652 = vmatpush1.msra.mxu0 0.0
  %653 = vmatprep.subr.mxu0 0.0
  %654 = vmatpush1.msra.mxu0 0.0
  %655 = vmatprep.subr.mxu0 0.0
  %656 = vmatpush1.msra.mxu0 0.0
  %657 = vmatprep.subr.mxu0 0.0
  %658 = vmatpush1.msra.mxu0 0.0
  %659 = vmatprep.subr.mxu0 0.0
  %660 = vmatpush1.msra.mxu0 0.0
  %661 = vmatprep.subr.mxu0 0.0
  %662 = vmatpush1.msra.mxu0 0.0
  %663 = vmatprep.subr.mxu0 0.0
  %664 = vmatpush1.msra.mxu0 0.0
  %665 = vmatprep.subr.mxu0 0.0
  %666 = vmatpush1.msra.mxu0 0.0
  %667 = vmatprep.subr.mxu0 0.0
  %668 = vmatpush1.msra.mxu0 0.0
  %669 = vmatprep.subr.mxu0 0.0
  %670 = vmatpush1.msra.mxu0 0.0
  %671 = vmatprep.subr.mxu0 0.0
  %672 = vmatpush1.msra.mxu0 0.0
  %673 = vmatprep.subr.mxu0 0.0
  %674 = vmatpush1.msra.mxu0 0.0
  %675 = vmatprep.subr.mxu0 0.0
  %676 = vmatpush1.msra.mxu0 0.0
  %677 = vmatprep.subr.mxu0 0.0
  %678 = vmatpush1.msra.mxu0 0.0
  %679 = vmatprep.subr.mxu0 0.0
  %680 = vmatpush1.msra.mxu0 0.0
  %681 = vmatprep.subr.mxu0 0.0
  %682 = vmatpush1.msra.mxu0 0.0
  %683 = vmatprep.subr.mxu0 0.0
  %684 = vmatpush1.msra.mxu0 0.0
  %685 = vmatprep.subr.mxu0 0.0
  %686 = vmatpush1.msra.mxu0 0.0
  %687 = vmatprep.subr.mxu0 0.0
  %688 = vmatpush1.msra.mxu0 0.0
  %689 = vmatprep.subr.mxu0 0.0
  %690 = vmatpush1.msra.mxu0 0.0
  %691 = vmatprep.subr.mxu0 0.0
  %692 = vmatpush1.msra.mxu0 0.0
  %693 = vmatprep.subr.mxu0 0.0
  %694 = vmatpush1.msra.mxu0 0.0
  %695 = vmatprep.mubr.f32.mxu0 0.0
  %696 = vmatmul.mubr.f32.gmra.mrb[0].mxu0 %v629
  %v697 = vpop.f32.mrb[0].mxu0
  %v698 = vadd.f32 %v300, %v697
  %v699 = vpop.f32.mrb[0].mxu0
  %700 = vdwg.mxu0
  %v702 = vrot.slane %v698, 2
  %v704 = vadd.f32 %v273, %v702
  %v705 = vxor.u32 %v704, 2147483648
  %v706 = vmul.f32 %v705, 1.442695
  %v707 = vpow.pop %v706
  %v708 = vadd.f32 %v707, 1.0
  %v709 = vrcp.pop %v708
  %v710 = vmul.f32 1.0, %v709
  %711 = vrot.lane.b32.xlu0 %v702, 64
  %v712 = vpop.permute.xlu0 %711
  %v714 = vmul.f32 %v710, %v712
  %716 = vrot.lane.b32.xlu0 %v714, 64
  %v717 = vpop.permute.xlu0 %716
  %v719 = vadd.f32 %v273, %v717
  %v720 = vtanh.pop %v719
  %v721 = vsub.f32 1.0, %v710
  %723 = vrot.lane.b32.xlu0 %v720, 96
  %v724 = vpop.permute.xlu0 %723
  %v726 = vmul.f32 %v721, %v724
  %v727 = vrot.slane %v619, 6
  %v729 = vmul.f32 %v710, %v727
  %v730 = vadd.f32 %v726, %v729
  %732 = vrot.lane.b32.xlu0 %v730, 96
  %v733 = vpop.permute.xlu0 %732
  %vm735 = vcmask 261126
  %736 = vst.msk [vmem:[#allocation2] sm:$0xc0] %vm735, %v733
  %v737 = vrot.slane %v730, 6
  %738 = vrot.lane.b32.xlu0 %v737, 96
  %v739 = vpop.permute.xlu0 %738
  %v740 = vsel %vm193, %v739, 0
  %742 = vmatprep.subr.mxu0 0.0
  %743 = vmatpush1.msra.mxu0 %v291
  %744 = vmatprep.subr.mxu0 0.0
  %745 = vmatpush1.msra.mxu0 %v292
  %746 = vmatprep.subr.mxu0 0.0
  %747 = vmatpush1.msra.mxu0 %v293
  %748 = vmatprep.subr.mxu0 0.0
  %749 = vmatpush1.msra.mxu0 %v294
  %750 = vmatprep.subr.mxu0 0.0
  %751 = vmatpush1.msra.mxu0 0.0
  %752 = vmatprep.subr.mxu0 0.0
  %753 = vmatpush1.msra.mxu0 0.0
  %754 = vmatprep.subr.mxu0 0.0
  %755 = vmatpush1.msra.mxu0 0.0
  %756 = vmatprep.subr.mxu0 0.0
  %757 = vmatpush1.msra.mxu0 0.0
  %758 = vmatprep.subr.mxu0 0.0
  %759 = vmatpush1.msra.mxu0 0.0
  %760 = vmatprep.subr.mxu0 0.0
  %761 = vmatpush1.msra.mxu0 0.0
  %762 = vmatprep.subr.mxu0 0.0
  %763 = vmatpush1.msra.mxu0 0.0
  %764 = vmatprep.subr.mxu0 0.0
  %765 = vmatpush1.msra.mxu0 0.0
  %766 = vmatprep.subr.mxu0 0.0
  %767 = vmatpush1.msra.mxu0 0.0
  %768 = vmatprep.subr.mxu0 0.0
  %769 = vmatpush1.msra.mxu0 0.0
  %770 = vmatprep.subr.mxu0 0.0
  %771 = vmatpush1.msra.mxu0 0.0
  %772 = vmatprep.subr.mxu0 0.0
  %773 = vmatpush1.msra.mxu0 0.0
  %774 = vmatprep.subr.mxu0 0.0
  %775 = vmatpush1.msra.mxu0 0.0
  %776 = vmatprep.subr.mxu0 0.0
  %777 = vmatpush1.msra.mxu0 0.0
  %778 = vmatprep.subr.mxu0 0.0
  %779 = vmatpush1.msra.mxu0 0.0
  %780 = vmatprep.subr.mxu0 0.0
  %781 = vmatpush1.msra.mxu0 0.0
  %782 = vmatprep.subr.mxu0 0.0
  %783 = vmatpush1.msra.mxu0 0.0
  %784 = vmatprep.subr.mxu0 0.0
  %785 = vmatpush1.msra.mxu0 0.0
  %786 = vmatprep.subr.mxu0 0.0
  %787 = vmatpush1.msra.mxu0 0.0
  %788 = vmatprep.subr.mxu0 0.0
  %789 = vmatpush1.msra.mxu0 0.0
  %790 = vmatprep.subr.mxu0 0.0
  %791 = vmatpush1.msra.mxu0 0.0
  %792 = vmatprep.subr.mxu0 0.0
  %793 = vmatpush1.msra.mxu0 0.0
  %794 = vmatprep.subr.mxu0 0.0
  %795 = vmatpush1.msra.mxu0 0.0
  %796 = vmatprep.subr.mxu0 0.0
  %797 = vmatpush1.msra.mxu0 0.0
  %798 = vmatprep.subr.mxu0 0.0
  %799 = vmatpush1.msra.mxu0 0.0
  %800 = vmatprep.subr.mxu0 0.0
  %801 = vmatpush1.msra.mxu0 0.0
  %802 = vmatprep.subr.mxu0 0.0
  %803 = vmatpush1.msra.mxu0 0.0
  %804 = vmatprep.subr.mxu0 0.0
  %805 = vmatpush1.msra.mxu0 0.0
  %806 = vmatprep.mubr.f32.mxu0 0.0
  %807 = vmatmul.mubr.f32.gmra.mrb[0].mxu0 %v740
  %v808 = vpop.f32.mrb[0].mxu0
  %v809 = vadd.f32 %v300, %v808
  %v810 = vpop.f32.mrb[0].mxu0
  %811 = vdwg.mxu0
  %v812 = vadd.f32 %v278, %v809
  %v813 = vxor.u32 %v812, 2147483648
  %v814 = vmul.f32 %v813, 1.442695
  %v815 = vpow.pop %v814
  %v816 = vadd.f32 %v815, 1.0
  %v817 = vrcp.pop %v816
  %v818 = vmul.f32 1.0, %v817
  %820 = vrot.lane.b32.xlu0 %v809, 64
  %v821 = vpop.permute.xlu0 %820
  %v823 = vmul.f32 %v818, %v821
  %825 = vrot.lane.b32.xlu0 %v823, 64
  %v826 = vpop.permute.xlu0 %825
  %v828 = vadd.f32 %v278, %v826
  %v829 = vtanh.pop %v828
  %v830 = vsub.f32 1.0, %v818
  %832 = vrot.lane.b32.xlu0 %v829, 96
  %v833 = vpop.permute.xlu0 %832
  %v835 = vmul.f32 %v830, %v833
  %v837 = vmul.f32 %v818, %v737
  %v838 = vadd.f32 %v835, %v837
  %840 = vrot.lane.b32.xlu0 %v838, 96
  %v841 = vpop.permute.xlu0 %840
  %843 = vst.msk [vmem:[#allocation2 + $0x8] sm:$0x3] %vm405, %v841
  %v844 = vsel %vm193, %v841, 0
  %846 = vmatprep.subr.mxu0 0.0
  %847 = vmatpush1.msra.mxu0 %v291
  %848 = vmatprep.subr.mxu0 0.0
  %849 = vmatpush1.msra.mxu0 %v292
  %850 = vmatprep.subr.mxu0 0.0
  %851 = vmatpush1.msra.mxu0 %v293
  %852 = vmatprep.subr.mxu0 0.0
  %853 = vmatpush1.msra.mxu0 %v294
  %854 = vmatprep.subr.mxu0 0.0
  %855 = vmatpush1.msra.mxu0 0.0
  %856 = vmatprep.subr.mxu0 0.0
  %857 = vmatpush1.msra.mxu0 0.0
  %858 = vmatprep.subr.mxu0 0.0
  %859 = vmatpush1.msra.mxu0 0.0
  %860 = vmatprep.subr.mxu0 0.0
  %861 = vmatpush1.msra.mxu0 0.0
  %862 = vmatprep.subr.mxu0 0.0
  %863 = vmatpush1.msra.mxu0 0.0
  %864 = vmatprep.subr.mxu0 0.0
  %865 = vmatpush1.msra.mxu0 0.0
  %866 = vmatprep.subr.mxu0 0.0
  %867 = vmatpush1.msra.mxu0 0.0
  %868 = vmatprep.subr.mxu0 0.0
  %869 = vmatpush1.msra.mxu0 0.0
  %870 = vmatprep.subr.mxu0 0.0
  %871 = vmatpush1.msra.mxu0 0.0
  %872 = vmatprep.subr.mxu0 0.0
  %873 = vmatpush1.msra.mxu0 0.0
  %874 = vmatprep.subr.mxu0 0.0
  %875 = vmatpush1.msra.mxu0 0.0
  %876 = vmatprep.subr.mxu0 0.0
  %877 = vmatpush1.msra.mxu0 0.0
  %878 = vmatprep.subr.mxu0 0.0
  %879 = vmatpush1.msra.mxu0 0.0
  %880 = vmatprep.subr.mxu0 0.0
  %881 = vmatpush1.msra.mxu0 0.0
  %882 = vmatprep.subr.mxu0 0.0
  %883 = vmatpush1.msra.mxu0 0.0
  %884 = vmatprep.subr.mxu0 0.0
  %885 = vmatpush1.msra.mxu0 0.0
  %886 = vmatprep.subr.mxu0 0.0
  %887 = vmatpush1.msra.mxu0 0.0
  %888 = vmatprep.subr.mxu0 0.0
  %889 = vmatpush1.msra.mxu0 0.0
  %890 = vmatprep.subr.mxu0 0.0
  %891 = vmatpush1.msra.mxu0 0.0
  %892 = vmatprep.subr.mxu0 0.0
  %893 = vmatpush1.msra.mxu0 0.0
  %894 = vmatprep.subr.mxu0 0.0
  %895 = vmatpush1.msra.mxu0 0.0
  %896 = vmatprep.subr.mxu0 0.0
  %897 = vmatpush1.msra.mxu0 0.0
  %898 = vmatprep.subr.mxu0 0.0
  %899 = vmatpush1.msra.mxu0 0.0
  %900 = vmatprep.subr.mxu0 0.0
  %901 = vmatpush1.msra.mxu0 0.0
  %902 = vmatprep.subr.mxu0 0.0
  %903 = vmatpush1.msra.mxu0 0.0
  %904 = vmatprep.subr.mxu0 0.0
  %905 = vmatpush1.msra.mxu0 0.0
  %906 = vmatprep.subr.mxu0 0.0
  %907 = vmatpush1.msra.mxu0 0.0
  %908 = vmatprep.subr.mxu0 0.0
  %909 = vmatpush1.msra.mxu0 0.0
  %910 = vmatprep.mubr.f32.mxu0 0.0
  %911 = vmatmul.mubr.f32.gmra.mrb[0].mxu0 %v844
  %v912 = vpop.f32.mrb[0].mxu0
  %v913 = vadd.f32 %v300, %v912
  %v914 = vpop.f32.mrb[0].mxu0
  %915 = vdwg.mxu0
  %v917 = vrot.slane %v913, 6
  %v919 = vadd.f32 %v278, %v917
  %v920 = vxor.u32 %v919, 2147483648
  %v921 = vmul.f32 %v920, 1.442695
  %v922 = vpow.pop %v921
  %v923 = vadd.f32 %v922, 1.0
  %v924 = vrcp.pop %v923
  %v925 = vmul.f32 1.0, %v924
  %926 = vrot.lane.b32.xlu0 %v917, 64
  %v927 = vpop.permute.xlu0 %926
  %v929 = vmul.f32 %v925, %v927
  %931 = vrot.lane.b32.xlu0 %v929, 64
  %v932 = vpop.permute.xlu0 %931
  %v934 = vadd.f32 %v278, %v932
  %v935 = vtanh.pop %v934
  %v936 = vsub.f32 1.0, %v925
  %938 = vrot.lane.b32.xlu0 %v935, 96
  %v939 = vpop.permute.xlu0 %938
  %v941 = vmul.f32 %v936, %v939
  %v942 = vrot.slane %v838, 6
  %v944 = vmul.f32 %v925, %v942
  %v945 = vadd.f32 %v941, %v944
  %947 = vrot.lane.b32.xlu0 %v945, 96
  %v948 = vpop.permute.xlu0 %947
  %950 = vst.msk [vmem:[#allocation2 + $0x8] sm:$0xc] %vm513, %v948
  %v951 = vrot.slane %v945, 2
  %952 = vrot.lane.b32.xlu0 %v951, 96
  %v953 = vpop.permute.xlu0 %952
  %v954 = vsel %vm193, %v953, 0
  %956 = vmatprep.subr.mxu0 0.0
  %957 = vmatpush1.msra.mxu0 %v291
  %958 = vmatprep.subr.mxu0 0.0
  %959 = vmatpush1.msra.mxu0 %v292
  %960 = vmatprep.subr.mxu0 0.0
  %961 = vmatpush1.msra.mxu0 %v293
  %962 = vmatprep.subr.mxu0 0.0
  %963 = vmatpush1.msra.mxu0 %v294
  %964 = vmatprep.subr.mxu0 0.0
  %965 = vmatpush1.msra.mxu0 0.0
  %966 = vmatprep.subr.mxu0 0.0
  %967 = vmatpush1.msra.mxu0 0.0
  %968 = vmatprep.subr.mxu0 0.0
  %969 = vmatpush1.msra.mxu0 0.0
  %970 = vmatprep.subr.mxu0 0.0
  %971 = vmatpush1.msra.mxu0 0.0
  %972 = vmatprep.subr.mxu0 0.0
  %973 = vmatpush1.msra.mxu0 0.0
  %974 = vmatprep.subr.mxu0 0.0
  %975 = vmatpush1.msra.mxu0 0.0
  %976 = vmatprep.subr.mxu0 0.0
  %977 = vmatpush1.msra.mxu0 0.0
  %978 = vmatprep.subr.mxu0 0.0
  %979 = vmatpush1.msra.mxu0 0.0
  %980 = vmatprep.subr.mxu0 0.0
  %981 = vmatpush1.msra.mxu0 0.0
  %982 = vmatprep.subr.mxu0 0.0
  %983 = vmatpush1.msra.mxu0 0.0
  %984 = vmatprep.subr.mxu0 0.0
  %985 = vmatpush1.msra.mxu0 0.0
  %986 = vmatprep.subr.mxu0 0.0
  %987 = vmatpush1.msra.mxu0 0.0
  %988 = vmatprep.subr.mxu0 0.0
  %989 = vmatpush1.msra.mxu0 0.0
  %990 = vmatprep.subr.mxu0 0.0
  %991 = vmatpush1.msra.mxu0 0.0
  %992 = vmatprep.subr.mxu0 0.0
  %993 = vmatpush1.msra.mxu0 0.0
  %994 = vmatprep.subr.mxu0 0.0
  %995 = vmatpush1.msra.mxu0 0.0
  %996 = vmatprep.subr.mxu0 0.0
  %997 = vmatpush1.msra.mxu0 0.0
  %998 = vmatprep.subr.mxu0 0.0
  %999 = vmatpush1.msra.mxu0 0.0
  %1000 = vmatprep.subr.mxu0 0.0
  %1001 = vmatpush1.msra.mxu0 0.0
  %1002 = vmatprep.subr.mxu0 0.0
  %1003 = vmatpush1.msra.mxu0 0.0
  %1004 = vmatprep.subr.mxu0 0.0
  %1005 = vmatpush1.msra.mxu0 0.0
  %1006 = vmatprep.subr.mxu0 0.0
  %1007 = vmatpush1.msra.mxu0 0.0
  %1008 = vmatprep.subr.mxu0 0.0
  %1009 = vmatpush1.msra.mxu0 0.0
  %1010 = vmatprep.subr.mxu0 0.0
  %1011 = vmatpush1.msra.mxu0 0.0
  %1012 = vmatprep.subr.mxu0 0.0
  %1013 = vmatpush1.msra.mxu0 0.0
  %1014 = vmatprep.subr.mxu0 0.0
  %1015 = vmatpush1.msra.mxu0 0.0
  %1016 = vmatprep.subr.mxu0 0.0
  %1017 = vmatpush1.msra.mxu0 0.0
  %1018 = vmatprep.subr.mxu0 0.0
  %1019 = vmatpush1.msra.mxu0 0.0
  %1020 = vmatprep.mubr.f32.mxu0 0.0
  %1021 = vmatmul.mubr.f32.gmra.mrb[0].mxu0 %v954
  %v1022 = vpop.f32.mrb[0].mxu0
  %v1023 = vadd.f32 %v300, %v1022
  %v1024 = vpop.f32.mrb[0].mxu0
  %1025 = vdwg.mxu0
  %v1027 = vrot.slane %v1023, 4
  %v1029 = vadd.f32 %v278, %v1027
  %v1030 = vxor.u32 %v1029, 2147483648
  %v1031 = vmul.f32 %v1030, 1.442695
  %v1032 = vpow.pop %v1031
  %v1033 = vadd.f32 %v1032, 1.0
  %v1034 = vrcp.pop %v1033
  %v1035 = vmul.f32 1.0, %v1034
  %1036 = vrot.lane.b32.xlu0 %v1027, 64
  %v1037 = vpop.permute.xlu0 %1036
  %v1039 = vmul.f32 %v1035, %v1037
  %1041 = vrot.lane.b32.xlu0 %v1039, 64
  %v1042 = vpop.permute.xlu0 %1041
  %v1044 = vadd.f32 %v278, %v1042
  %v1045 = vtanh.pop %v1044
  %v1046 = vsub.f32 1.0, %v1035
  %1048 = vrot.lane.b32.xlu0 %v1045, 96
  %v1049 = vpop.permute.xlu0 %1048
  %v1051 = vmul.f32 %v1046, %v1049
  %v1052 = vrot.slane %v945, 6
  %v1054 = vmul.f32 %v1035, %v1052
  %v1055 = vadd.f32 %v1051, %v1054
  %1057 = vrot.lane.b32.xlu0 %v1055, 96
  %v1058 = vpop.permute.xlu0 %1057
  %1060 = vst.msk [vmem:[#allocation2 + $0x8] sm:$0x30] %vm624, %v1058
  %v1061 = vrot.slane %v1055, 4
  %1062 = vrot.lane.b32.xlu0 %v1061, 96
  %v1063 = vpop.permute.xlu0 %1062
  %v1064 = vsel %vm193, %v1063, 0
  %1066 = vmatprep.subr.mxu0 0.0
  %1067 = vmatpush1.msra.mxu0 %v291
  %1068 = vmatprep.subr.mxu0 0.0
  %1069 = vmatpush1.msra.mxu0 %v292
  %1070 = vmatprep.subr.mxu0 0.0
  %1071 = vmatpush1.msra.mxu0 %v293
  %1072 = vmatprep.subr.mxu0 0.0
  %1073 = vmatpush1.msra.mxu0 %v294
  %1074 = vmatprep.subr.mxu0 0.0
  %1075 = vmatpush1.msra.mxu0 0.0
  %1076 = vmatprep.subr.mxu0 0.0
  %1077 = vmatpush1.msra.mxu0 0.0
  %1078 = vmatprep.subr.mxu0 0.0
  %1079 = vmatpush1.msra.mxu0 0.0
  %1080 = vmatprep.subr.mxu0 0.0
  %1081 = vmatpush1.msra.mxu0 0.0
  %1082 = vmatprep.subr.mxu0 0.0
  %1083 = vmatpush1.msra.mxu0 0.0
  %1084 = vmatprep.subr.mxu0 0.0
  %1085 = vmatpush1.msra.mxu0 0.0
  %1086 = vmatprep.subr.mxu0 0.0
  %1087 = vmatpush1.msra.mxu0 0.0
  %1088 = vmatprep.subr.mxu0 0.0
  %1089 = vmatpush1.msra.mxu0 0.0
  %1090 = vmatprep.subr.mxu0 0.0
  %1091 = vmatpush1.msra.mxu0 0.0
  %1092 = vmatprep.subr.mxu0 0.0
  %1093 = vmatpush1.msra.mxu0 0.0
  %1094 = vmatprep.subr.mxu0 0.0
  %1095 = vmatpush1.msra.mxu0 0.0
  %1096 = vmatprep.subr.mxu0 0.0
  %1097 = vmatpush1.msra.mxu0 0.0
  %1098 = vmatprep.subr.mxu0 0.0
  %1099 = vmatpush1.msra.mxu0 0.0
  %1100 = vmatprep.subr.mxu0 0.0
  %1101 = vmatpush1.msra.mxu0 0.0
  %1102 = vmatprep.subr.mxu0 0.0
  %1103 = vmatpush1.msra.mxu0 0.0
  %1104 = vmatprep.subr.mxu0 0.0
  %1105 = vmatpush1.msra.mxu0 0.0
  %1106 = vmatprep.subr.mxu0 0.0
  %1107 = vmatpush1.msra.mxu0 0.0
  %1108 = vmatprep.subr.mxu0 0.0
  %1109 = vmatpush1.msra.mxu0 0.0
  %1110 = vmatprep.subr.mxu0 0.0
  %1111 = vmatpush1.msra.mxu0 0.0
  %1112 = vmatprep.subr.mxu0 0.0
  %1113 = vmatpush1.msra.mxu0 0.0
  %1114 = vmatprep.subr.mxu0 0.0
  %1115 = vmatpush1.msra.mxu0 0.0
  %1116 = vmatprep.subr.mxu0 0.0
  %1117 = vmatpush1.msra.mxu0 0.0
  %1118 = vmatprep.subr.mxu0 0.0
  %1119 = vmatpush1.msra.mxu0 0.0
  %1120 = vmatprep.subr.mxu0 0.0
  %1121 = vmatpush1.msra.mxu0 0.0
  %1122 = vmatprep.subr.mxu0 0.0
  %1123 = vmatpush1.msra.mxu0 0.0
  %1124 = vmatprep.subr.mxu0 0.0
  %1125 = vmatpush1.msra.mxu0 0.0
  %1126 = vmatprep.subr.mxu0 0.0
  %1127 = vmatpush1.msra.mxu0 0.0
  %1128 = vmatprep.subr.mxu0 0.0
  %1129 = vmatpush1.msra.mxu0 0.0
  %1130 = vmatprep.mubr.f32.mxu0 0.0
  %1131 = vmatmul.mubr.f32.gmra.mrb[0].mxu0 %v1064
  %v1132 = vpop.f32.mrb[0].mxu0
  %v1133 = vadd.f32 %v300, %v1132
  %v1134 = vpop.f32.mrb[0].mxu0
  %1135 = vdwg.mxu0
  %v1137 = vrot.slane %v1133, 2
  %v1139 = vadd.f32 %v278, %v1137
  %v1140 = vxor.u32 %v1139, 2147483648
  %v1141 = vmul.f32 %v1140, 1.442695
  %v1142 = vpow.pop %v1141
  %v1143 = vadd.f32 %v1142, 1.0
  %v1144 = vrcp.pop %v1143
  %v1145 = vmul.f32 1.0, %v1144
  %1146 = vrot.lane.b32.xlu0 %v1137, 64
  %v1147 = vpop.permute.xlu0 %1146
  %v1149 = vmul.f32 %v1145, %v1147
  %1151 = vrot.lane.b32.xlu0 %v1149, 64
  %v1152 = vpop.permute.xlu0 %1151
  %v1154 = vadd.f32 %v278, %v1152
  %v1155 = vtanh.pop %v1154
  %v1156 = vsub.f32 1.0, %v1145
  %1158 = vrot.lane.b32.xlu0 %v1155, 96
  %v1159 = vpop.permute.xlu0 %1158
  %v1161 = vmul.f32 %v1156, %v1159
  %v1162 = vrot.slane %v1055, 6
  %v1164 = vmul.f32 %v1145, %v1162
  %v1165 = vadd.f32 %v1161, %v1164
  %1167 = vrot.lane.b32.xlu0 %v1165, 96
  %v1168 = vpop.permute.xlu0 %1167
  %1170 = vst.msk [vmem:[#allocation2 + $0x8] sm:$0xc0] %vm735, %v1168
  %v1171 = vrot.slane %v1165, 6
  %1172 = vrot.lane.b32.xlu0 %v1171, 96
  %v1173 = vpop.permute.xlu0 %1172
  %v1174 = vsel %vm193, %v1173, 0
  %1176 = vmatprep.subr.mxu0 0.0
  %1177 = vmatpush1.msra.mxu0 %v291
  %1178 = vmatprep.subr.mxu0 0.0
  %1179 = vmatpush1.msra.mxu0 %v292
  %1180 = vmatprep.subr.mxu0 0.0
  %1181 = vmatpush1.msra.mxu0 %v293
  %1182 = vmatprep.subr.mxu0 0.0
  %1183 = vmatpush1.msra.mxu0 %v294
  %1184 = vmatprep.subr.mxu0 0.0
  %1185 = vmatpush1.msra.mxu0 0.0
  %1186 = vmatprep.subr.mxu0 0.0
  %1187 = vmatpush1.msra.mxu0 0.0
  %1188 = vmatprep.subr.mxu0 0.0
  %1189 = vmatpush1.msra.mxu0 0.0
  %1190 = vmatprep.subr.mxu0 0.0
  %1191 = vmatpush1.msra.mxu0 0.0
  %1192 = vmatprep.subr.mxu0 0.0
  %1193 = vmatpush1.msra.mxu0 0.0
  %1194 = vmatprep.subr.mxu0 0.0
  %1195 = vmatpush1.msra.mxu0 0.0
  %1196 = vmatprep.subr.mxu0 0.0
  %1197 = vmatpush1.msra.mxu0 0.0
  %1198 = vmatprep.subr.mxu0 0.0
  %1199 = vmatpush1.msra.mxu0 0.0
  %1200 = vmatprep.subr.mxu0 0.0
  %1201 = vmatpush1.msra.mxu0 0.0
  %1202 = vmatprep.subr.mxu0 0.0
  %1203 = vmatpush1.msra.mxu0 0.0
  %1204 = vmatprep.subr.mxu0 0.0
  %1205 = vmatpush1.msra.mxu0 0.0
  %1206 = vmatprep.subr.mxu0 0.0
  %1207 = vmatpush1.msra.mxu0 0.0
  %1208 = vmatprep.subr.mxu0 0.0
  %1209 = vmatpush1.msra.mxu0 0.0
  %1210 = vmatprep.subr.mxu0 0.0
  %1211 = vmatpush1.msra.mxu0 0.0
  %1212 = vmatprep.subr.mxu0 0.0
  %1213 = vmatpush1.msra.mxu0 0.0
  %1214 = vmatprep.subr.mxu0 0.0
  %1215 = vmatpush1.msra.mxu0 0.0
  %1216 = vmatprep.subr.mxu0 0.0
  %1217 = vmatpush1.msra.mxu0 0.0
  %1218 = vmatprep.subr.mxu0 0.0
  %1219 = vmatpush1.msra.mxu0 0.0
  %1220 = vmatprep.subr.mxu0 0.0
  %1221 = vmatpush1.msra.mxu0 0.0
  %1222 = vmatprep.subr.mxu0 0.0
  %1223 = vmatpush1.msra.mxu0 0.0
  %1224 = vmatprep.subr.mxu0 0.0
  %1225 = vmatpush1.msra.mxu0 0.0
  %1226 = vmatprep.subr.mxu0 0.0
  %1227 = vmatpush1.msra.mxu0 0.0
  %1228 = vmatprep.subr.mxu0 0.0
  %1229 = vmatpush1.msra.mxu0 0.0
  %1230 = vmatprep.subr.mxu0 0.0
  %1231 = vmatpush1.msra.mxu0 0.0
  %1232 = vmatprep.subr.mxu0 0.0
  %1233 = vmatpush1.msra.mxu0 0.0
  %1234 = vmatprep.subr.mxu0 0.0
  %1235 = vmatpush1.msra.mxu0 0.0
  %1236 = vmatprep.subr.mxu0 0.0
  %1237 = vmatpush1.msra.mxu0 0.0
  %1238 = vmatprep.subr.mxu0 0.0
  %1239 = vmatpush1.msra.mxu0 0.0
  %1240 = vmatprep.mubr.f32.mxu0 0.0
  %1241 = vmatmul.mubr.f32.gmra.mrb[0].mxu0 %v1174
  %v1242 = vpop.f32.mrb[0].mxu0
  %v1243 = vadd.f32 %v300, %v1242
  %v1244 = vpop.f32.mrb[0].mxu0
  %1245 = vdwg.mxu0
  %v1246 = vadd.f32 %v283, %v1243
  %v1247 = vxor.u32 %v1246, 2147483648
  %v1248 = vmul.f32 %v1247, 1.442695
  %v1249 = vpow.pop %v1248
  %v1250 = vadd.f32 %v1249, 1.0
  %v1251 = vrcp.pop %v1250
  %v1252 = vmul.f32 1.0, %v1251
  %1254 = vrot.lane.b32.xlu0 %v1243, 64
  %v1255 = vpop.permute.xlu0 %1254
  %v1257 = vmul.f32 %v1252, %v1255
  %1259 = vrot.lane.b32.xlu0 %v1257, 64
  %v1260 = vpop.permute.xlu0 %1259
  %v1262 = vadd.f32 %v283, %v1260
  %v1263 = vtanh.pop %v1262
  %v1264 = vsub.f32 1.0, %v1252
  %1266 = vrot.lane.b32.xlu0 %v1263, 96
  %v1267 = vpop.permute.xlu0 %1266
  %v1269 = vmul.f32 %v1264, %v1267
  %v1271 = vmul.f32 %v1252, %v1171
  %v1272 = vadd.f32 %v1269, %v1271
  %1274 = vrot.lane.b32.xlu0 %v1272, 96
  %v1275 = vpop.permute.xlu0 %1274
  %1277 = vst.msk [vmem:[#allocation2 + $0x10] sm:$0x3] %vm405, %v1275
  %v1278 = vsel %vm193, %v1275, 0
  %1280 = vmatprep.subr.mxu0 0.0
  %1281 = vmatpush1.msra.mxu0 %v291
  %1282 = vmatprep.subr.mxu0 0.0
  %1283 = vmatpush1.msra.mxu0 %v292
  %1284 = vmatprep.subr.mxu0 0.0
  %1285 = vmatpush1.msra.mxu0 %v293
  %1286 = vmatprep.subr.mxu0 0.0
  %1287 = vmatpush1.msra.mxu0 %v294
  %1288 = vmatprep.subr.mxu0 0.0
  %1289 = vmatpush1.msra.mxu0 0.0
  %1290 = vmatprep.subr.mxu0 0.0
  %1291 = vmatpush1.msra.mxu0 0.0
  %1292 = vmatprep.subr.mxu0 0.0
  %1293 = vmatpush1.msra.mxu0 0.0
  %1294 = vmatprep.subr.mxu0 0.0
  %1295 = vmatpush1.msra.mxu0 0.0
  %1296 = vmatprep.subr.mxu0 0.0
  %1297 = vmatpush1.msra.mxu0 0.0
  %1298 = vmatprep.subr.mxu0 0.0
  %1299 = vmatpush1.msra.mxu0 0.0
  %1300 = vmatprep.subr.mxu0 0.0
  %1301 = vmatpush1.msra.mxu0 0.0
  %1302 = vmatprep.subr.mxu0 0.0
  %1303 = vmatpush1.msra.mxu0 0.0
  %1304 = vmatprep.subr.mxu0 0.0
  %1305 = vmatpush1.msra.mxu0 0.0
  %1306 = vmatprep.subr.mxu0 0.0
  %1307 = vmatpush1.msra.mxu0 0.0
  %1308 = vmatprep.subr.mxu0 0.0
  %1309 = vmatpush1.msra.mxu0 0.0
  %1310 = vmatprep.subr.mxu0 0.0
  %1311 = vmatpush1.msra.mxu0 0.0
  %1312 = vmatprep.subr.mxu0 0.0
  %1313 = vmatpush1.msra.mxu0 0.0
  %1314 = vmatprep.subr.mxu0 0.0
  %1315 = vmatpush1.msra.mxu0 0.0
  %1316 = vmatprep.subr.mxu0 0.0
  %1317 = vmatpush1.msra.mxu0 0.0
  %1318 = vmatprep.subr.mxu0 0.0
  %1319 = vmatpush1.msra.mxu0 0.0
  %1320 = vmatprep.subr.mxu0 0.0
  %1321 = vmatpush1.msra.mxu0 0.0
  %1322 = vmatprep.subr.mxu0 0.0
  %1323 = vmatpush1.msra.mxu0 0.0
  %1324 = vmatprep.subr.mxu0 0.0
  %1325 = vmatpush1.msra.mxu0 0.0
  %1326 = vmatprep.subr.mxu0 0.0
  %1327 = vmatpush1.msra.mxu0 0.0
  %1328 = vmatprep.subr.mxu0 0.0
  %1329 = vmatpush1.msra.mxu0 0.0
  %1330 = vmatprep.subr.mxu0 0.0
  %1331 = vmatpush1.msra.mxu0 0.0
  %1332 = vmatprep.subr.mxu0 0.0
  %1333 = vmatpush1.msra.mxu0 0.0
  %1334 = vmatprep.subr.mxu0 0.0
  %1335 = vmatpush1.msra.mxu0 0.0
  %1336 = vmatprep.subr.mxu0 0.0
  %1337 = vmatpush1.msra.mxu0 0.0
  %1338 = vmatprep.subr.mxu0 0.0
  %1339 = vmatpush1.msra.mxu0 0.0
  %1340 = vmatprep.subr.mxu0 0.0
  %1341 = vmatpush1.msra.mxu0 0.0
  %1342 = vmatprep.subr.mxu0 0.0
  %1343 = vmatpush1.msra.mxu0 0.0
  %1344 = vmatprep.mubr.f32.mxu0 0.0
  %1345 = vmatmul.mubr.f32.gmra.mrb[0].mxu0 %v1278
  %v1346 = vpop.f32.mrb[0].mxu0
  %v1347 = vadd.f32 %v300, %v1346
  %v1348 = vpop.f32.mrb[0].mxu0
  %1349 = vdwg.mxu0
  %v1351 = vrot.slane %v1347, 6
  %v1353 = vadd.f32 %v283, %v1351
  %v1354 = vxor.u32 %v1353, 2147483648
  %v1355 = vmul.f32 %v1354, 1.442695
  %v1356 = vpow.pop %v1355
  %v1357 = vadd.f32 %v1356, 1.0
  %v1358 = vrcp.pop %v1357
  %v1359 = vmul.f32 1.0, %v1358
  %1360 = vrot.lane.b32.xlu0 %v1351, 64
  %v1361 = vpop.permute.xlu0 %1360
  %v1363 = vmul.f32 %v1359, %v1361
  %1365 = vrot.lane.b32.xlu0 %v1363, 64
  %v1366 = vpop.permute.xlu0 %1365
  %v1368 = vadd.f32 %v283, %v1366
  %v1369 = vtanh.pop %v1368
  %v1370 = vsub.f32 1.0, %v1359
  %1372 = vrot.lane.b32.xlu0 %v1369, 96
  %v1373 = vpop.permute.xlu0 %1372
  %v1375 = vmul.f32 %v1370, %v1373
  %v1376 = vrot.slane %v1272, 6
  %v1378 = vmul.f32 %v1359, %v1376
  %v1379 = vadd.f32 %v1375, %v1378
  %1381 = vrot.lane.b32.xlu0 %v1379, 96
  %v1382 = vpop.permute.xlu0 %1381
  %1384 = vst.msk [vmem:[#allocation2 + $0x10] sm:$0xc] %vm513, %v1382
  %v1385 = vrot.slane %v1379, 2
  %1386 = vrot.lane.b32.xlu0 %v1385, 96
  %v1387 = vpop.permute.xlu0 %1386
  %v1388 = vsel %vm193, %v1387, 0
  %1390 = vmatprep.subr.mxu0 0.0
  %1391 = vmatpush1.msra.mxu0 %v291
  %1392 = vmatprep.subr.mxu0 0.0
  %1393 = vmatpush1.msra.mxu0 %v292
  %1394 = vmatprep.subr.mxu0 0.0
  %1395 = vmatpush1.msra.mxu0 %v293
  %1396 = vmatprep.subr.mxu0 0.0
  %1397 = vmatpush1.msra.mxu0 %v294
  %1398 = vmatprep.subr.mxu0 0.0
  %1399 = vmatpush1.msra.mxu0 0.0
  %1400 = vmatprep.subr.mxu0 0.0
  %1401 = vmatpush1.msra.mxu0 0.0
  %1402 = vmatprep.subr.mxu0 0.0
  %1403 = vmatpush1.msra.mxu0 0.0
  %1404 = vmatprep.subr.mxu0 0.0
  %1405 = vmatpush1.msra.mxu0 0.0
  %1406 = vmatprep.subr.mxu0 0.0
  %1407 = vmatpush1.msra.mxu0 0.0
  %1408 = vmatprep.subr.mxu0 0.0
  %1409 = vmatpush1.msra.mxu0 0.0
  %1410 = vmatprep.subr.mxu0 0.0
  %1411 = vmatpush1.msra.mxu0 0.0
  %1412 = vmatprep.subr.mxu0 0.0
  %1413 = vmatpush1.msra.mxu0 0.0
  %1414 = vmatprep.subr.mxu0 0.0
  %1415 = vmatpush1.msra.mxu0 0.0
  %1416 = vmatprep.subr.mxu0 0.0
  %1417 = vmatpush1.msra.mxu0 0.0
  %1418 = vmatprep.subr.mxu0 0.0
  %1419 = vmatpush1.msra.mxu0 0.0
  %1420 = vmatprep.subr.mxu0 0.0
  %1421 = vmatpush1.msra.mxu0 0.0
  %1422 = vmatprep.subr.mxu0 0.0
  %1423 = vmatpush1.msra.mxu0 0.0
  %1424 = vmatprep.subr.mxu0 0.0
  %1425 = vmatpush1.msra.mxu0 0.0
  %1426 = vmatprep.subr.mxu0 0.0
  %1427 = vmatpush1.msra.mxu0 0.0
  %1428 = vmatprep.subr.mxu0 0.0
  %1429 = vmatpush1.msra.mxu0 0.0
  %1430 = vmatprep.subr.mxu0 0.0
  %1431 = vmatpush1.msra.mxu0 0.0
  %1432 = vmatprep.subr.mxu0 0.0
  %1433 = vmatpush1.msra.mxu0 0.0
  %1434 = vmatprep.subr.mxu0 0.0
  %1435 = vmatpush1.msra.mxu0 0.0
  %1436 = vmatprep.subr.mxu0 0.0
  %1437 = vmatpush1.msra.mxu0 0.0
  %1438 = vmatprep.subr.mxu0 0.0
  %1439 = vmatpush1.msra.mxu0 0.0
  %1440 = vmatprep.subr.mxu0 0.0
  %1441 = vmatpush1.msra.mxu0 0.0
  %1442 = vmatprep.subr.mxu0 0.0
  %1443 = vmatpush1.msra.mxu0 0.0
  %1444 = vmatprep.subr.mxu0 0.0
  %1445 = vmatpush1.msra.mxu0 0.0
  %1446 = vmatprep.subr.mxu0 0.0
  %1447 = vmatpush1.msra.mxu0 0.0
  %1448 = vmatprep.subr.mxu0 0.0
  %1449 = vmatpush1.msra.mxu0 0.0
  %1450 = vmatprep.subr.mxu0 0.0
  %1451 = vmatpush1.msra.mxu0 0.0
  %1452 = vmatprep.subr.mxu0 0.0
  %1453 = vmatpush1.msra.mxu0 0.0
  %1454 = vmatprep.mubr.f32.mxu0 0.0
  %1455 = vmatmul.mubr.f32.gmra.mrb[0].mxu0 %v1388
  %v1456 = vpop.f32.mrb[0].mxu0
  %v1457 = vadd.f32 %v300, %v1456
  %v1458 = vpop.f32.mrb[0].mxu0
  %1459 = vdwg.mxu0
  %v1461 = vrot.slane %v1457, 4
  %v1463 = vadd.f32 %v283, %v1461
  %v1464 = vxor.u32 %v1463, 2147483648
  %v1465 = vmul.f32 %v1464, 1.442695
  %v1466 = vpow.pop %v1465
  %v1467 = vadd.f32 %v1466, 1.0
  %v1468 = vrcp.pop %v1467
  %v1469 = vmul.f32 1.0, %v1468
  %1470 = vrot.lane.b32.xlu0 %v1461, 64
  %v1471 = vpop.permute.xlu0 %1470
  %v1473 = vmul.f32 %v1469, %v1471
  %1475 = vrot.lane.b32.xlu0 %v1473, 64
  %v1476 = vpop.permute.xlu0 %1475
  %v1478 = vadd.f32 %v283, %v1476
  %v1479 = vtanh.pop %v1478
  %v1480 = vsub.f32 1.0, %v1469
  %1482 = vrot.lane.b32.xlu0 %v1479, 96
  %v1483 = vpop.permute.xlu0 %1482
  %v1485 = vmul.f32 %v1480, %v1483
  %v1486 = vrot.slane %v1379, 6
  %v1488 = vmul.f32 %v1469, %v1486
  %v1489 = vadd.f32 %v1485, %v1488
  %1491 = vrot.lane.b32.xlu0 %v1489, 96
  %v1492 = vpop.permute.xlu0 %1491
  %1494 = vst.msk [vmem:[#allocation2 + $0x10] sm:$0x30] %vm624, %v1492
  %v1495 = vrot.slane %v1489, 4
  %1496 = vrot.lane.b32.xlu0 %v1495, 96
  %v1497 = vpop.permute.xlu0 %1496
  %v1498 = vsel %vm193, %v1497, 0
  %1500 = vmatprep.subr.mxu0 0.0
  %1501 = vmatpush1.msra.mxu0 %v291
  %1502 = vmatprep.subr.mxu0 0.0
  %1503 = vmatpush1.msra.mxu0 %v292
  %1504 = vmatprep.subr.mxu0 0.0
  %1505 = vmatpush1.msra.mxu0 %v293
  %1506 = vmatprep.subr.mxu0 0.0
  %1507 = vmatpush1.msra.mxu0 %v294
  %1508 = vmatprep.subr.mxu0 0.0
  %1509 = vmatpush1.msra.mxu0 0.0
  %1510 = vmatprep.subr.mxu0 0.0
  %1511 = vmatpush1.msra.mxu0 0.0
  %1512 = vmatprep.subr.mxu0 0.0
  %1513 = vmatpush1.msra.mxu0 0.0
  %1514 = vmatprep.subr.mxu0 0.0
  %1515 = vmatpush1.msra.mxu0 0.0
  %1516 = vmatprep.subr.mxu0 0.0
  %1517 = vmatpush1.msra.mxu0 0.0
  %1518 = vmatprep.subr.mxu0 0.0
  %1519 = vmatpush1.msra.mxu0 0.0
  %1520 = vmatprep.subr.mxu0 0.0
  %1521 = vmatpush1.msra.mxu0 0.0
  %1522 = vmatprep.subr.mxu0 0.0
  %1523 = vmatpush1.msra.mxu0 0.0
  %1524 = vmatprep.subr.mxu0 0.0
  %1525 = vmatpush1.msra.mxu0 0.0
  %1526 = vmatprep.subr.mxu0 0.0
  %1527 = vmatpush1.msra.mxu0 0.0
  %1528 = vmatprep.subr.mxu0 0.0
  %1529 = vmatpush1.msra.mxu0 0.0
  %1530 = vmatprep.subr.mxu0 0.0
  %1531 = vmatpush1.msra.mxu0 0.0
  %1532 = vmatprep.subr.mxu0 0.0
  %1533 = vmatpush1.msra.mxu0 0.0
  %1534 = vmatprep.subr.mxu0 0.0
  %1535 = vmatpush1.msra.mxu0 0.0
  %1536 = vmatprep.subr.mxu0 0.0
  %1537 = vmatpush1.msra.mxu0 0.0
  %1538 = vmatprep.subr.mxu0 0.0
  %1539 = vmatpush1.msra.mxu0 0.0
  %1540 = vmatprep.subr.mxu0 0.0
  %1541 = vmatpush1.msra.mxu0 0.0
  %1542 = vmatprep.subr.mxu0 0.0
  %1543 = vmatpush1.msra.mxu0 0.0
  %1544 = vmatprep.subr.mxu0 0.0
  %1545 = vmatpush1.msra.mxu0 0.0
  %1546 = vmatprep.subr.mxu0 0.0
  %1547 = vmatpush1.msra.mxu0 0.0
  %1548 = vmatprep.subr.mxu0 0.0
  %1549 = vmatpush1.msra.mxu0 0.0
  %1550 = vmatprep.subr.mxu0 0.0
  %1551 = vmatpush1.msra.mxu0 0.0
  %1552 = vmatprep.subr.mxu0 0.0
  %1553 = vmatpush1.msra.mxu0 0.0
  %1554 = vmatprep.subr.mxu0 0.0
  %1555 = vmatpush1.msra.mxu0 0.0
  %1556 = vmatprep.subr.mxu0 0.0
  %1557 = vmatpush1.msra.mxu0 0.0
  %1558 = vmatprep.subr.mxu0 0.0
  %1559 = vmatpush1.msra.mxu0 0.0
  %1560 = vmatprep.subr.mxu0 0.0
  %1561 = vmatpush1.msra.mxu0 0.0
  %1562 = vmatprep.subr.mxu0 0.0
  %1563 = vmatpush1.msra.mxu0 0.0
  %1564 = vmatprep.mubr.f32.mxu0 0.0
  %1565 = vmatmul.mubr.f32.gmra.mrb[0].mxu0 %v1498
  %v1566 = vpop.f32.mrb[0].mxu0
  %v1567 = vadd.f32 %v300, %v1566
  %v1568 = vpop.f32.mrb[0].mxu0
  %1569 = vdwg.mxu0
  %v1571 = vrot.slane %v1567, 2
  %v1573 = vadd.f32 %v283, %v1571
  %v1574 = vxor.u32 %v1573, 2147483648
  %v1575 = vmul.f32 %v1574, 1.442695
  %v1576 = vpow.pop %v1575
  %v1577 = vadd.f32 %v1576, 1.0
  %v1578 = vrcp.pop %v1577
  %v1579 = vmul.f32 1.0, %v1578
  %1580 = vrot.lane.b32.xlu0 %v1571, 64
  %v1581 = vpop.permute.xlu0 %1580
  %v1583 = vmul.f32 %v1579, %v1581
  %1585 = vrot.lane.b32.xlu0 %v1583, 64
  %v1586 = vpop.permute.xlu0 %1585
  %v1588 = vadd.f32 %v283, %v1586
  %v1589 = vtanh.pop %v1588
  %v1590 = vsub.f32 1.0, %v1579
  %1592 = vrot.lane.b32.xlu0 %v1589, 96
  %v1593 = vpop.permute.xlu0 %1592
  %v1595 = vmul.f32 %v1590, %v1593
  %v1596 = vrot.slane %v1489, 6
  %v1598 = vmul.f32 %v1579, %v1596
  %v1599 = vadd.f32 %v1595, %v1598
  %1601 = vrot.lane.b32.xlu0 %v1599, 96
  %v1602 = vpop.permute.xlu0 %1601
  %1604 = vst.msk [vmem:[#allocation2 + $0x10] sm:$0xc0] %vm735, %v1602
  %v1605 = vrot.slane %v1599, 6
  %1606 = vrot.lane.b32.xlu0 %v1605, 96
  %v1607 = vpop.permute.xlu0 %1606
  %v1608 = vsel %vm193, %v1607, 0
  %1610 = vmatprep.subr.mxu0 0.0
  %1611 = vmatpush1.msra.mxu0 %v291
  %1612 = vmatprep.subr.mxu0 0.0
  %1613 = vmatpush1.msra.mxu0 %v292
  %1614 = vmatprep.subr.mxu0 0.0
  %1615 = vmatpush1.msra.mxu0 %v293
  %1616 = vmatprep.subr.mxu0 0.0
  %1617 = vmatpush1.msra.mxu0 %v294
  %1618 = vmatprep.subr.mxu0 0.0
  %1619 = vmatpush1.msra.mxu0 0.0
  %1620 = vmatprep.subr.mxu0 0.0
  %1621 = vmatpush1.msra.mxu0 0.0
  %1622 = vmatprep.subr.mxu0 0.0
  %1623 = vmatpush1.msra.mxu0 0.0
  %1624 = vmatprep.subr.mxu0 0.0
  %1625 = vmatpush1.msra.mxu0 0.0
  %1626 = vmatprep.subr.mxu0 0.0
  %1627 = vmatpush1.msra.mxu0 0.0
  %1628 = vmatprep.subr.mxu0 0.0
  %1629 = vmatpush1.msra.mxu0 0.0
  %1630 = vmatprep.subr.mxu0 0.0
  %1631 = vmatpush1.msra.mxu0 0.0
  %1632 = vmatprep.subr.mxu0 0.0
  %1633 = vmatpush1.msra.mxu0 0.0
  %1634 = vmatprep.subr.mxu0 0.0
  %1635 = vmatpush1.msra.mxu0 0.0
  %1636 = vmatprep.subr.mxu0 0.0
  %1637 = vmatpush1.msra.mxu0 0.0
  %1638 = vmatprep.subr.mxu0 0.0
  %1639 = vmatpush1.msra.mxu0 0.0
  %1640 = vmatprep.subr.mxu0 0.0
  %1641 = vmatpush1.msra.mxu0 0.0
  %1642 = vmatprep.subr.mxu0 0.0
  %1643 = vmatpush1.msra.mxu0 0.0
  %1644 = vmatprep.subr.mxu0 0.0
  %1645 = vmatpush1.msra.mxu0 0.0
  %1646 = vmatprep.subr.mxu0 0.0
  %1647 = vmatpush1.msra.mxu0 0.0
  %1648 = vmatprep.subr.mxu0 0.0
  %1649 = vmatpush1.msra.mxu0 0.0
  %1650 = vmatprep.subr.mxu0 0.0
  %1651 = vmatpush1.msra.mxu0 0.0
  %1652 = vmatprep.subr.mxu0 0.0
  %1653 = vmatpush1.msra.mxu0 0.0
  %1654 = vmatprep.subr.mxu0 0.0
  %1655 = vmatpush1.msra.mxu0 0.0
  %1656 = vmatprep.subr.mxu0 0.0
  %1657 = vmatpush1.msra.mxu0 0.0
  %1658 = vmatprep.subr.mxu0 0.0
  %1659 = vmatpush1.msra.mxu0 0.0
  %1660 = vmatprep.subr.mxu0 0.0
  %1661 = vmatpush1.msra.mxu0 0.0
  %1662 = vmatprep.subr.mxu0 0.0
  %1663 = vmatpush1.msra.mxu0 0.0
  %1664 = vmatprep.subr.mxu0 0.0
  %1665 = vmatpush1.msra.mxu0 0.0
  %1666 = vmatprep.subr.mxu0 0.0
  %1667 = vmatpush1.msra.mxu0 0.0
  %1668 = vmatprep.subr.mxu0 0.0
  %1669 = vmatpush1.msra.mxu0 0.0
  %1670 = vmatprep.subr.mxu0 0.0
  %1671 = vmatpush1.msra.mxu0 0.0
  %1672 = vmatprep.subr.mxu0 0.0
  %1673 = vmatpush1.msra.mxu0 0.0
  %1674 = vmatprep.mubr.f32.mxu0 0.0
  %1675 = vmatmul.mubr.f32.gmra.mrb[0].mxu0 %v1608
  %v1676 = vpop.f32.mrb[0].mxu0
  %v1677 = vadd.f32 %v300, %v1676
  %v1678 = vpop.f32.mrb[0].mxu0
  %1679 = vdwg.mxu0
  %v1680 = vadd.f32 %v288, %v1677
  %v1681 = vxor.u32 %v1680, 2147483648
  %v1682 = vmul.f32 %v1681, 1.442695
  %v1683 = vpow.pop %v1682
  %v1684 = vadd.f32 %v1683, 1.0
  %v1685 = vrcp.pop %v1684
  %v1686 = vmul.f32 1.0, %v1685
  %1688 = vrot.lane.b32.xlu0 %v1677, 64
  %v1689 = vpop.permute.xlu0 %1688
  %v1691 = vmul.f32 %v1686, %v1689
  %1693 = vrot.lane.b32.xlu0 %v1691, 64
  %v1694 = vpop.permute.xlu0 %1693
  %v1696 = vadd.f32 %v288, %v1694
  %v1697 = vtanh.pop %v1696
  %v1698 = vsub.f32 1.0, %v1686
  %1700 = vrot.lane.b32.xlu0 %v1697, 96
  %v1701 = vpop.permute.xlu0 %1700
  %v1703 = vmul.f32 %v1698, %v1701
  %v1705 = vmul.f32 %v1686, %v1605
  %v1706 = vadd.f32 %v1703, %v1705
  %1708 = vrot.lane.b32.xlu0 %v1706, 96
  %v1709 = vpop.permute.xlu0 %1708
  %1711 = vst.msk [vmem:[#allocation2 + $0x18] sm:$0x3] %vm405, %v1709
  %v1712 = vsel %vm193, %v1709, 0
  %1714 = vmatprep.subr.mxu0 0.0
  %1715 = vmatpush1.msra.mxu0 %v291
  %1716 = vmatprep.subr.mxu0 0.0
  %1717 = vmatpush1.msra.mxu0 %v292
  %1718 = vmatprep.subr.mxu0 0.0
  %1719 = vmatpush1.msra.mxu0 %v293
  %1720 = vmatprep.subr.mxu0 0.0
  %1721 = vmatpush1.msra.mxu0 %v294
  %1722 = vmatprep.subr.mxu0 0.0
  %1723 = vmatpush1.msra.mxu0 0.0
  %1724 = vmatprep.subr.mxu0 0.0
  %1725 = vmatpush1.msra.mxu0 0.0
  %1726 = vmatprep.subr.mxu0 0.0
  %1727 = vmatpush1.msra.mxu0 0.0
  %1728 = vmatprep.subr.mxu0 0.0
  %1729 = vmatpush1.msra.mxu0 0.0
  %1730 = vmatprep.subr.mxu0 0.0
  %1731 = vmatpush1.msra.mxu0 0.0
  %1732 = vmatprep.subr.mxu0 0.0
  %1733 = vmatpush1.msra.mxu0 0.0
  %1734 = vmatprep.subr.mxu0 0.0
  %1735 = vmatpush1.msra.mxu0 0.0
  %1736 = vmatprep.subr.mxu0 0.0
  %1737 = vmatpush1.msra.mxu0 0.0
  %1738 = vmatprep.subr.mxu0 0.0
  %1739 = vmatpush1.msra.mxu0 0.0
  %1740 = vmatprep.subr.mxu0 0.0
  %1741 = vmatpush1.msra.mxu0 0.0
  %1742 = vmatprep.subr.mxu0 0.0
  %1743 = vmatpush1.msra.mxu0 0.0
  %1744 = vmatprep.subr.mxu0 0.0
  %1745 = vmatpush1.msra.mxu0 0.0
  %1746 = vmatprep.subr.mxu0 0.0
  %1747 = vmatpush1.msra.mxu0 0.0
  %1748 = vmatprep.subr.mxu0 0.0
  %1749 = vmatpush1.msra.mxu0 0.0
  %1750 = vmatprep.subr.mxu0 0.0
  %1751 = vmatpush1.msra.mxu0 0.0
  %1752 = vmatprep.subr.mxu0 0.0
  %1753 = vmatpush1.msra.mxu0 0.0
  %1754 = vmatprep.subr.mxu0 0.0
  %1755 = vmatpush1.msra.mxu0 0.0
  %1756 = vmatprep.subr.mxu0 0.0
  %1757 = vmatpush1.msra.mxu0 0.0
  %1758 = vmatprep.subr.mxu0 0.0
  %1759 = vmatpush1.msra.mxu0 0.0
  %1760 = vmatprep.subr.mxu0 0.0
  %1761 = vmatpush1.msra.mxu0 0.0
  %1762 = vmatprep.subr.mxu0 0.0
  %1763 = vmatpush1.msra.mxu0 0.0
  %1764 = vmatprep.subr.mxu0 0.0
  %1765 = vmatpush1.msra.mxu0 0.0
  %1766 = vmatprep.subr.mxu0 0.0
  %1767 = vmatpush1.msra.mxu0 0.0
  %1768 = vmatprep.subr.mxu0 0.0
  %1769 = vmatpush1.msra.mxu0 0.0
  %1770 = vmatprep.subr.mxu0 0.0
  %1771 = vmatpush1.msra.mxu0 0.0
  %1772 = vmatprep.subr.mxu0 0.0
  %1773 = vmatpush1.msra.mxu0 0.0
  %1774 = vmatprep.subr.mxu0 0.0
  %1775 = vmatpush1.msra.mxu0 0.0
  %1776 = vmatprep.subr.mxu0 0.0
  %1777 = vmatpush1.msra.mxu0 0.0
  %1778 = vmatprep.mubr.f32.mxu0 0.0
  %1779 = vmatmul.mubr.f32.gmra.mrb[0].mxu0 %v1712
  %v1780 = vpop.f32.mrb[0].mxu0
  %v1781 = vadd.f32 %v300, %v1780
  %v1782 = vpop.f32.mrb[0].mxu0
  %1783 = vdwg.mxu0
  %v1785 = vrot.slane %v1781, 6
  %v1787 = vadd.f32 %v288, %v1785
  %v1788 = vxor.u32 %v1787, 2147483648
  %v1789 = vmul.f32 %v1788, 1.442695
  %v1790 = vpow.pop %v1789
  %v1791 = vadd.f32 %v1790, 1.0
  %v1792 = vrcp.pop %v1791
  %v1793 = vmul.f32 1.0, %v1792
  %1794 = vrot.lane.b32.xlu0 %v1785, 64
  %v1795 = vpop.permute.xlu0 %1794
  %v1797 = vmul.f32 %v1793, %v1795
  %1799 = vrot.lane.b32.xlu0 %v1797, 64
  %v1800 = vpop.permute.xlu0 %1799
  %v1802 = vadd.f32 %v288, %v1800
  %v1803 = vtanh.pop %v1802
  %v1804 = vsub.f32 1.0, %v1793
  %1806 = vrot.lane.b32.xlu0 %v1803, 96
  %v1807 = vpop.permute.xlu0 %1806
  %v1809 = vmul.f32 %v1804, %v1807
  %v1810 = vrot.slane %v1706, 6
  %v1812 = vmul.f32 %v1793, %v1810
  %v1813 = vadd.f32 %v1809, %v1812
  %1815 = vrot.lane.b32.xlu0 %v1813, 96
  %v1816 = vpop.permute.xlu0 %1815
  %1818 = vst.msk [vmem:[#allocation2 + $0x18] sm:$0xc] %vm513, %v1816
  %v1819 = vrot.slane %v1813, 2
  %1820 = vrot.lane.b32.xlu0 %v1819, 96
  %v1821 = vpop.permute.xlu0 %1820
  %v1822 = vsel %vm193, %v1821, 0
  %1824 = vmatprep.subr.mxu0 0.0
  %1825 = vmatpush1.msra.mxu0 %v291
  %1826 = vmatprep.subr.mxu0 0.0
  %1827 = vmatpush1.msra.mxu0 %v292
  %1828 = vmatprep.subr.mxu0 0.0
  %1829 = vmatpush1.msra.mxu0 %v293
  %1830 = vmatprep.subr.mxu0 0.0
  %1831 = vmatpush1.msra.mxu0 %v294
  %1832 = vmatprep.subr.mxu0 0.0
  %1833 = vmatpush1.msra.mxu0 0.0
  %1834 = vmatprep.subr.mxu0 0.0
  %1835 = vmatpush1.msra.mxu0 0.0
  %1836 = vmatprep.subr.mxu0 0.0
  %1837 = vmatpush1.msra.mxu0 0.0
  %1838 = vmatprep.subr.mxu0 0.0
  %1839 = vmatpush1.msra.mxu0 0.0
  %1840 = vmatprep.subr.mxu0 0.0
  %1841 = vmatpush1.msra.mxu0 0.0
  %1842 = vmatprep.subr.mxu0 0.0
  %1843 = vmatpush1.msra.mxu0 0.0
  %1844 = vmatprep.subr.mxu0 0.0
  %1845 = vmatpush1.msra.mxu0 0.0
  %1846 = vmatprep.subr.mxu0 0.0
  %1847 = vmatpush1.msra.mxu0 0.0
  %1848 = vmatprep.subr.mxu0 0.0
  %1849 = vmatpush1.msra.mxu0 0.0
  %1850 = vmatprep.subr.mxu0 0.0
  %1851 = vmatpush1.msra.mxu0 0.0
  %1852 = vmatprep.subr.mxu0 0.0
  %1853 = vmatpush1.msra.mxu0 0.0
  %1854 = vmatprep.subr.mxu0 0.0
  %1855 = vmatpush1.msra.mxu0 0.0
  %1856 = vmatprep.subr.mxu0 0.0
  %1857 = vmatpush1.msra.mxu0 0.0
  %1858 = vmatprep.subr.mxu0 0.0
  %1859 = vmatpush1.msra.mxu0 0.0
  %1860 = vmatprep.subr.mxu0 0.0
  %1861 = vmatpush1.msra.mxu0 0.0
  %1862 = vmatprep.subr.mxu0 0.0
  %1863 = vmatpush1.msra.mxu0 0.0
  %1864 = vmatprep.subr.mxu0 0.0
  %1865 = vmatpush1.msra.mxu0 0.0
  %1866 = vmatprep.subr.mxu0 0.0
  %1867 = vmatpush1.msra.mxu0 0.0
  %1868 = vmatprep.subr.mxu0 0.0
  %1869 = vmatpush1.msra.mxu0 0.0
  %1870 = vmatprep.subr.mxu0 0.0
  %1871 = vmatpush1.msra.mxu0 0.0
  %1872 = vmatprep.subr.mxu0 0.0
  %1873 = vmatpush1.msra.mxu0 0.0
  %1874 = vmatprep.subr.mxu0 0.0
  %1875 = vmatpush1.msra.mxu0 0.0
  %1876 = vmatprep.subr.mxu0 0.0
  %1877 = vmatpush1.msra.mxu0 0.0
  %1878 = vmatprep.subr.mxu0 0.0
  %1879 = vmatpush1.msra.mxu0 0.0
  %1880 = vmatprep.subr.mxu0 0.0
  %1881 = vmatpush1.msra.mxu0 0.0
  %1882 = vmatprep.subr.mxu0 0.0
  %1883 = vmatpush1.msra.mxu0 0.0
  %1884 = vmatprep.subr.mxu0 0.0
  %1885 = vmatpush1.msra.mxu0 0.0
  %1886 = vmatprep.subr.mxu0 0.0
  %1887 = vmatpush1.msra.mxu0 0.0
  %1888 = vmatprep.mubr.f32.mxu0 0.0
  %1889 = vmatmul.mubr.f32.gmra.mrb[0].mxu0 %v1822
  %v1890 = vpop.f32.mrb[0].mxu0
  %v1891 = vadd.f32 %v300, %v1890
  %v1892 = vpop.f32.mrb[0].mxu0
  %1893 = vdwg.mxu0
  %v1895 = vrot.slane %v1891, 4
  %v1897 = vadd.f32 %v288, %v1895
  %v1898 = vxor.u32 %v1897, 2147483648
  %v1899 = vmul.f32 %v1898, 1.442695
  %v1900 = vpow.pop %v1899
  %v1901 = vadd.f32 %v1900, 1.0
  %v1902 = vrcp.pop %v1901
  %v1903 = vmul.f32 1.0, %v1902
  %1904 = vrot.lane.b32.xlu0 %v1895, 64
  %v1905 = vpop.permute.xlu0 %1904
  %v1907 = vmul.f32 %v1903, %v1905
  %1909 = vrot.lane.b32.xlu0 %v1907, 64
  %v1910 = vpop.permute.xlu0 %1909
  %v1912 = vadd.f32 %v288, %v1910
  %v1913 = vtanh.pop %v1912
  %v1914 = vsub.f32 1.0, %v1903
  %1916 = vrot.lane.b32.xlu0 %v1913, 96
  %v1917 = vpop.permute.xlu0 %1916
  %v1919 = vmul.f32 %v1914, %v1917
  %v1920 = vrot.slane %v1813, 6
  %v1922 = vmul.f32 %v1903, %v1920
  %v1923 = vadd.f32 %v1919, %v1922
  %1925 = vrot.lane.b32.xlu0 %v1923, 96
  %v1926 = vpop.permute.xlu0 %1925
  %1928 = vst.msk [vmem:[#allocation2 + $0x18] sm:$0x30] %vm624, %v1926
  %v1929 = vrot.slane %v1923, 4
  %1930 = vrot.lane.b32.xlu0 %v1929, 96
  %v1931 = vpop.permute.xlu0 %1930
  %v1932 = vsel %vm193, %v1931, 0
  %1934 = vmatprep.subr.mxu0 0.0
  %1935 = vmatpush1.msra.mxu0 %v291
  %1936 = vmatprep.subr.mxu0 0.0
  %1937 = vmatpush1.msra.mxu0 %v292
  %1938 = vmatprep.subr.mxu0 0.0
  %1939 = vmatpush1.msra.mxu0 %v293
  %1940 = vmatprep.subr.mxu0 0.0
  %1941 = vmatpush1.msra.mxu0 %v294
  %1942 = vmatprep.subr.mxu0 0.0
  %1943 = vmatpush1.msra.mxu0 0.0
  %1944 = vmatprep.subr.mxu0 0.0
  %1945 = vmatpush1.msra.mxu0 0.0
  %1946 = vmatprep.subr.mxu0 0.0
  %1947 = vmatpush1.msra.mxu0 0.0
  %1948 = vmatprep.subr.mxu0 0.0
  %1949 = vmatpush1.msra.mxu0 0.0
  %1950 = vmatprep.subr.mxu0 0.0
  %1951 = vmatpush1.msra.mxu0 0.0
  %1952 = vmatprep.subr.mxu0 0.0
  %1953 = vmatpush1.msra.mxu0 0.0
  %1954 = vmatprep.subr.mxu0 0.0
  %1955 = vmatpush1.msra.mxu0 0.0
  %1956 = vmatprep.subr.mxu0 0.0
  %1957 = vmatpush1.msra.mxu0 0.0
  %1958 = vmatprep.subr.mxu0 0.0
  %1959 = vmatpush1.msra.mxu0 0.0
  %1960 = vmatprep.subr.mxu0 0.0
  %1961 = vmatpush1.msra.mxu0 0.0
  %1962 = vmatprep.subr.mxu0 0.0
  %1963 = vmatpush1.msra.mxu0 0.0
  %1964 = vmatprep.subr.mxu0 0.0
  %1965 = vmatpush1.msra.mxu0 0.0
  %1966 = vmatprep.subr.mxu0 0.0
  %1967 = vmatpush1.msra.mxu0 0.0
  %1968 = vmatprep.subr.mxu0 0.0
  %1969 = vmatpush1.msra.mxu0 0.0
  %1970 = vmatprep.subr.mxu0 0.0
  %1971 = vmatpush1.msra.mxu0 0.0
  %1972 = vmatprep.subr.mxu0 0.0
  %1973 = vmatpush1.msra.mxu0 0.0
  %1974 = vmatprep.subr.mxu0 0.0
  %1975 = vmatpush1.msra.mxu0 0.0
  %1976 = vmatprep.subr.mxu0 0.0
  %1977 = vmatpush1.msra.mxu0 0.0
  %1978 = vmatprep.subr.mxu0 0.0
  %1979 = vmatpush1.msra.mxu0 0.0
  %1980 = vmatprep.subr.mxu0 0.0
  %1981 = vmatpush1.msra.mxu0 0.0
  %1982 = vmatprep.subr.mxu0 0.0
  %1983 = vmatpush1.msra.mxu0 0.0
  %1984 = vmatprep.subr.mxu0 0.0
  %1985 = vmatpush1.msra.mxu0 0.0
  %1986 = vmatprep.subr.mxu0 0.0
  %1987 = vmatpush1.msra.mxu0 0.0
  %1988 = vmatprep.subr.mxu0 0.0
  %1989 = vmatpush1.msra.mxu0 0.0
  %1990 = vmatprep.subr.mxu0 0.0
  %1991 = vmatpush1.msra.mxu0 0.0
  %1992 = vmatprep.subr.mxu0 0.0
  %1993 = vmatpush1.msra.mxu0 0.0
  %1994 = vmatprep.subr.mxu0 0.0
  %1995 = vmatpush1.msra.mxu0 0.0
  %1996 = vmatprep.subr.mxu0 0.0
  %1997 = vmatpush1.msra.mxu0 0.0
  %1998 = vmatprep.mubr.f32.mxu0 0.0
  %1999 = vmatmul.mubr.f32.gmra.mrb[0].mxu0 %v1932
  %v2000 = vpop.f32.mrb[0].mxu0
  %v2001 = vadd.f32 %v300, %v2000
  %v2002 = vpop.f32.mrb[0].mxu0
  %2003 = vdwg.mxu0
  %v2005 = vrot.slane %v2001, 2
  %v2007 = vadd.f32 %v288, %v2005
  %v2008 = vxor.u32 %v2007, 2147483648
  %v2009 = vmul.f32 %v2008, 1.442695
  %v2010 = vpow.pop %v2009
  %v2011 = vadd.f32 %v2010, 1.0
  %v2012 = vrcp.pop %v2011
  %v2013 = vmul.f32 1.0, %v2012
  %2014 = vrot.lane.b32.xlu0 %v2005, 64
  %v2015 = vpop.permute.xlu0 %2014
  %v2017 = vmul.f32 %v2013, %v2015
  %2019 = vrot.lane.b32.xlu0 %v2017, 64
  %v2020 = vpop.permute.xlu0 %2019
  %v2022 = vadd.f32 %v288, %v2020
  %v2023 = vtanh.pop %v2022
  %v2024 = vsub.f32 1.0, %v2013
  %2026 = vrot.lane.b32.xlu0 %v2023, 96
  %v2027 = vpop.permute.xlu0 %2026
  %v2029 = vmul.f32 %v2024, %v2027
  %v2030 = vrot.slane %v1923, 6
  %v2032 = vmul.f32 %v2013, %v2030
  %v2033 = vadd.f32 %v2029, %v2032
  %2035 = vrot.lane.b32.xlu0 %v2033, 96
  %v2036 = vpop.permute.xlu0 %2035
  %2038 = vst.msk [vmem:[#allocation2 + $0x18] sm:$0xc0] %vm735, %v2036
  %v2039 = vld [vmem:[#allocation2] sm:$0xff]
  %v2040 = vld [vmem:[#allocation2 + $0x8] sm:$0xff]
  %v2041 = vld [vmem:[#allocation2 + $0x10] sm:$0xff]
  %v2042 = vld [vmem:[#allocation2 + $0x18] sm:$0xff]
  %v2043 = vadd.f32 %v2039, %v164
  %v2044 = vadd.f32 %v2040, %v169
  %v2045 = vadd.f32 %v2041, %v174
  %v2046 = vadd.f32 %v2042, %v179
  %v2047 = vld [vmem:[%s7] sm:$0xff]
  %v2048 = vld [vmem:[%s7 + $0x8] sm:$0xff]
  %v2049 = vld [vmem:[%s7 + $0x10] sm:$0xff]
  %v2050 = vld [vmem:[%s7 + $0x18] sm:$0xff]
  %v2051 = vld [vmem:[%s8] sm:$0xff]
  %v2052 = vld [vmem:[%s8 + $0x8] sm:$0xff]
  %v2053 = vld [vmem:[%s8 + $0x10] sm:$0xff]
  %v2054 = vld [vmem:[%s8 + $0x18] sm:$0x1]
  %v2056 = vsel %vm93, %v2054, 0
  %2058 = vmatprep.subr.mxu0 0.0
  %2059 = vmatpush1.msra.mxu0 %v2051
  %2060 = vmatprep.subr.mxu0 0.0
  %2061 = vmatpush1.msra.mxu0 %v2052
  %2062 = vmatprep.subr.mxu0 0.0
  %2063 = vmatpush1.msra.mxu0 %v2053
  %2064 = vmatprep.subr.mxu0 0.0
  %2065 = vmatpush1.msra.mxu0 %v2056
  %2066 = vmatprep.subr.mxu0 0.0
  %2067 = vmatpush1.msra.mxu0 0.0
  %2068 = vmatprep.subr.mxu0 0.0
  %2069 = vmatpush1.msra.mxu0 0.0
  %2070 = vmatprep.subr.mxu0 0.0
  %2071 = vmatpush1.msra.mxu0 0.0
  %2072 = vmatprep.subr.mxu0 0.0
  %2073 = vmatpush1.msra.mxu0 0.0
  %2074 = vmatprep.subr.mxu0 0.0
  %2075 = vmatpush1.msra.mxu0 0.0
  %2076 = vmatprep.subr.mxu0 0.0
  %2077 = vmatpush1.msra.mxu0 0.0
  %2078 = vmatprep.subr.mxu0 0.0
  %2079 = vmatpush1.msra.mxu0 0.0
  %2080 = vmatprep.subr.mxu0 0.0
  %2081 = vmatpush1.msra.mxu0 0.0
  %2082 = vmatprep.subr.mxu0 0.0
  %2083 = vmatpush1.msra.mxu0 0.0
  %2084 = vmatprep.subr.mxu0 0.0
  %2085 = vmatpush1.msra.mxu0 0.0
  %2086 = vmatprep.subr.mxu0 0.0
  %2087 = vmatpush1.msra.mxu0 0.0
  %2088 = vmatprep.subr.mxu0 0.0
  %2089 = vmatpush1.msra.mxu0 0.0
  %2090 = vmatprep.subr.mxu0 0.0
  %2091 = vmatpush1.msra.mxu0 0.0
  %2092 = vmatprep.subr.mxu0 0.0
  %2093 = vmatpush1.msra.mxu0 0.0
  %2094 = vmatprep.subr.mxu0 0.0
  %2095 = vmatpush1.msra.mxu0 0.0
  %2096 = vmatprep.subr.mxu0 0.0
  %2097 = vmatpush1.msra.mxu0 0.0
  %2098 = vmatprep.subr.mxu0 0.0
  %2099 = vmatpush1.msra.mxu0 0.0
  %2100 = vmatprep.subr.mxu0 0.0
  %2101 = vmatpush1.msra.mxu0 0.0
  %2102 = vmatprep.subr.mxu0 0.0
  %2103 = vmatpush1.msra.mxu0 0.0
  %2104 = vmatprep.subr.mxu0 0.0
  %2105 = vmatpush1.msra.mxu0 0.0
  %2106 = vmatprep.subr.mxu0 0.0
  %2107 = vmatpush1.msra.mxu0 0.0
  %2108 = vmatprep.subr.mxu0 0.0
  %2109 = vmatpush1.msra.mxu0 0.0
  %2110 = vmatprep.subr.mxu0 0.0
  %2111 = vmatpush1.msra.mxu0 0.0
  %2112 = vmatprep.subr.mxu0 0.0
  %2113 = vmatpush1.msra.mxu0 0.0
  %2114 = vmatprep.subr.mxu0 0.0
  %2115 = vmatpush1.msra.mxu0 0.0
  %2116 = vmatprep.subr.mxu0 0.0
  %2117 = vmatpush1.msra.mxu0 0.0
  %2118 = vmatprep.subr.mxu0 0.0
  %2119 = vmatpush1.msra.mxu0 0.0
  %2120 = vmatprep.subr.mxu0 0.0
  %2121 = vmatpush1.msra.mxu0 0.0
  %2122 = vmatprep.mubr.f32.mxu0 0.0
  %2123 = vmatmul.mubr.f32.gmra.mrb[0].mxu0 %v82
  %v2124 = vpop.f32.mrb[0].mxu0
  %v2125 = vadd.f32 0.0, %v2124
  %v2126 = vpop.f32.mrb[0].mxu0
  %2127 = vmatprep.mubr.f32.mxu0 0.0
  %2128 = vmatmul.mubr.f32.gmra.mrb[0].mxu0 %v85
  %v2129 = vpop.f32.mrb[0].mxu0
  %v2130 = vadd.f32 0.0, %v2129
  %v2131 = vpop.f32.mrb[0].mxu0
  %2132 = vmatprep.mubr.f32.mxu0 0.0
  %2133 = vmatmul.mubr.f32.gmra.mrb[0].mxu0 %v88
  %v2134 = vpop.f32.mrb[0].mxu0
  %v2135 = vadd.f32 0.0, %v2134
  %v2136 = vpop.f32.mrb[0].mxu0
  %2137 = vmatprep.mubr.f32.mxu0 0.0
  %2138 = vmatmul.mubr.f32.gmra.mrb[0].mxu0 %v91
  %v2139 = vpop.f32.mrb[0].mxu0
  %v2140 = vadd.f32 0.0, %v2139
  %v2141 = vpop.f32.mrb[0].mxu0
  %2142 = vdwg.mxu0
  %v2144 = vsel %vm193, %v2043, 0
  %v2147 = vsel %vm193, %v2044, 0
  %v2150 = vsel %vm193, %v2045, 0
  %v2153 = vsel %vm193, %v2046, 0
  %2155 = vmatprep.subr.mxu0 0.0
  %2156 = vmatpush1.msra.mxu0 %v2047
  %2157 = vmatprep.subr.mxu0 0.0
  %2158 = vmatpush1.msra.mxu0 %v2048
  %2159 = vmatprep.subr.mxu0 0.0
  %2160 = vmatpush1.msra.mxu0 %v2049
  %2161 = vmatprep.subr.mxu0 0.0
  %2162 = vmatpush1.msra.mxu0 %v2050
  %2163 = vmatprep.subr.mxu0 0.0
  %2164 = vmatpush1.msra.mxu0 0.0
  %2165 = vmatprep.subr.mxu0 0.0
  %2166 = vmatpush1.msra.mxu0 0.0
  %2167 = vmatprep.subr.mxu0 0.0
  %2168 = vmatpush1.msra.mxu0 0.0
  %2169 = vmatprep.subr.mxu0 0.0
  %2170 = vmatpush1.msra.mxu0 0.0
  %2171 = vmatprep.subr.mxu0 0.0
  %2172 = vmatpush1.msra.mxu0 0.0
  %2173 = vmatprep.subr.mxu0 0.0
  %2174 = vmatpush1.msra.mxu0 0.0
  %2175 = vmatprep.subr.mxu0 0.0
  %2176 = vmatpush1.msra.mxu0 0.0
  %2177 = vmatprep.subr.mxu0 0.0
  %2178 = vmatpush1.msra.mxu0 0.0
  %2179 = vmatprep.subr.mxu0 0.0
  %2180 = vmatpush1.msra.mxu0 0.0
  %2181 = vmatprep.subr.mxu0 0.0
  %2182 = vmatpush1.msra.mxu0 0.0
  %2183 = vmatprep.subr.mxu0 0.0
  %2184 = vmatpush1.msra.mxu0 0.0
  %2185 = vmatprep.subr.mxu0 0.0
  %2186 = vmatpush1.msra.mxu0 0.0
  %2187 = vmatprep.subr.mxu0 0.0
  %2188 = vmatpush1.msra.mxu0 0.0
  %2189 = vmatprep.subr.mxu0 0.0
  %2190 = vmatpush1.msra.mxu0 0.0
  %2191 = vmatprep.subr.mxu0 0.0
  %2192 = vmatpush1.msra.mxu0 0.0
  %2193 = vmatprep.subr.mxu0 0.0
  %2194 = vmatpush1.msra.mxu0 0.0
  %2195 = vmatprep.subr.mxu0 0.0
  %2196 = vmatpush1.msra.mxu0 0.0
  %2197 = vmatprep.subr.mxu0 0.0
  %2198 = vmatpush1.msra.mxu0 0.0
  %2199 = vmatprep.subr.mxu0 0.0
  %2200 = vmatpush1.msra.mxu0 0.0
  %2201 = vmatprep.subr.mxu0 0.0
  %2202 = vmatpush1.msra.mxu0 0.0
  %2203 = vmatprep.subr.mxu0 0.0
  %2204 = vmatpush1.msra.mxu0 0.0
  %2205 = vmatprep.subr.mxu0 0.0
  %2206 = vmatpush1.msra.mxu0 0.0
  %2207 = vmatprep.subr.mxu0 0.0
  %2208 = vmatpush1.msra.mxu0 0.0
  %2209 = vmatprep.subr.mxu0 0.0
  %2210 = vmatpush1.msra.mxu0 0.0
  %2211 = vmatprep.subr.mxu0 0.0
  %2212 = vmatpush1.msra.mxu0 0.0
  %2213 = vmatprep.subr.mxu0 0.0
  %2214 = vmatpush1.msra.mxu0 0.0
  %2215 = vmatprep.subr.mxu0 0.0
  %2216 = vmatpush1.msra.mxu0 0.0
  %2217 = vmatprep.subr.mxu0 0.0
  %2218 = vmatpush1.msra.mxu0 0.0
  %2219 = vmatprep.mubr.f32.mxu0 0.0
  %2220 = vmatmul.mubr.f32.gmra.mrb[0].mxu0 %v2144
  %v2221 = vpop.f32.mrb[0].mxu0
  %v2222 = vadd.f32 %v2125, %v2221
  %v2223 = vpop.f32.mrb[0].mxu0
  %2224 = vmatprep.mubr.f32.mxu0 0.0
  %2225 = vmatmul.mubr.f32.gmra.mrb[0].mxu0 %v2147
  %v2226 = vpop.f32.mrb[0].mxu0
  %v2227 = vadd.f32 %v2130, %v2226
  %v2228 = vpop.f32.mrb[0].mxu0
  %2229 = vmatprep.mubr.f32.mxu0 0.0
  %2230 = vmatmul.mubr.f32.gmra.mrb[0].mxu0 %v2150
  %v2231 = vpop.f32.mrb[0].mxu0
  %v2232 = vadd.f32 %v2135, %v2231
  %v2233 = vpop.f32.mrb[0].mxu0
  %2234 = vmatprep.mubr.f32.mxu0 0.0
  %2235 = vmatmul.mubr.f32.gmra.mrb[0].mxu0 %v2153
  %v2236 = vpop.f32.mrb[0].mxu0
  %v2237 = vadd.f32 %v2140, %v2236
  %v2238 = vpop.f32.mrb[0].mxu0
  %2239 = vdwg.mxu0
  %v2240 = vld [vmem:[%s10] sm:$0x1]
  %v2242 = vlaneseq
  %v2243 = vshrl.u32 %v2242, 7
  %v2244 = vsub.s32 0, %v2243
  %v2245 = vrot.slane %v2240, %v2244
  %v2247 = vadd.f32 %v2222, %v2245
  %v2248 = vadd.f32 %v2227, %v2245
  %v2249 = vadd.f32 %v2232, %v2245
  %v2250 = vadd.f32 %v2237, %v2245
  %v2251 = vld [vmem:[%s9] sm:$0xff]
  %v2252 = vld [vmem:[%s9 + $0x8] sm:$0xff]
  %v2253 = vld [vmem:[%s9 + $0x10] sm:$0xff]
  %v2254 = vld [vmem:[%s9 + $0x18] sm:$0xff]
  %v2255 = vld [vmem:[%s11] sm:$0x1]
  %v2257 = vlaneseq
  %v2258 = vshrl.u32 %v2257, 7
  %v2259 = vsub.s32 0, %v2258
  %v2260 = vrot.slane %v2255, %v2259
  %2262 = vmatprep.subr.mxu0 0.0
  %2263 = vmatpush1.msra.mxu0 %v2251
  %2264 = vmatprep.subr.mxu0 0.0
  %2265 = vmatpush1.msra.mxu0 %v2252
  %2266 = vmatprep.subr.mxu0 0.0
  %2267 = vmatpush1.msra.mxu0 %v2253
  %2268 = vmatprep.subr.mxu0 0.0
  %2269 = vmatpush1.msra.mxu0 %v2254
  %2270 = vmatprep.subr.mxu0 0.0
  %2271 = vmatpush1.msra.mxu0 0.0
  %2272 = vmatprep.subr.mxu0 0.0
  %2273 = vmatpush1.msra.mxu0 0.0
  %2274 = vmatprep.subr.mxu0 0.0
  %2275 = vmatpush1.msra.mxu0 0.0
  %2276 = vmatprep.subr.mxu0 0.0
  %2277 = vmatpush1.msra.mxu0 0.0
  %2278 = vmatprep.subr.mxu0 0.0
  %2279 = vmatpush1.msra.mxu0 0.0
  %2280 = vmatprep.subr.mxu0 0.0
  %2281 = vmatpush1.msra.mxu0 0.0
  %2282 = vmatprep.subr.mxu0 0.0
  %2283 = vmatpush1.msra.mxu0 0.0
  %2284 = vmatprep.subr.mxu0 0.0
  %2285 = vmatpush1.msra.mxu0 0.0
  %2286 = vmatprep.subr.mxu0 0.0
  %2287 = vmatpush1.msra.mxu0 0.0
  %2288 = vmatprep.subr.mxu0 0.0
  %2289 = vmatpush1.msra.mxu0 0.0
  %2290 = vmatprep.subr.mxu0 0.0
  %2291 = vmatpush1.msra.mxu0 0.0
  %2292 = vmatprep.subr.mxu0 0.0
  %2293 = vmatpush1.msra.mxu0 0.0
  %2294 = vmatprep.subr.mxu0 0.0
  %2295 = vmatpush1.msra.mxu0 0.0
  %2296 = vmatprep.subr.mxu0 0.0
  %2297 = vmatpush1.msra.mxu0 0.0
  %2298 = vmatprep.subr.mxu0 0.0
  %2299 = vmatpush1.msra.mxu0 0.0
  %2300 = vmatprep.subr.mxu0 0.0
  %2301 = vmatpush1.msra.mxu0 0.0
  %2302 = vmatprep.subr.mxu0 0.0
  %2303 = vmatpush1.msra.mxu0 0.0
  %2304 = vmatprep.subr.mxu0 0.0
  %2305 = vmatpush1.msra.mxu0 0.0
  %2306 = vmatprep.subr.mxu0 0.0
  %2307 = vmatpush1.msra.mxu0 0.0
  %2308 = vmatprep.subr.mxu0 0.0
  %2309 = vmatpush1.msra.mxu0 0.0
  %2310 = vmatprep.subr.mxu0 0.0
  %2311 = vmatpush1.msra.mxu0 0.0
  %2312 = vmatprep.subr.mxu0 0.0
  %2313 = vmatpush1.msra.mxu0 0.0
  %2314 = vmatprep.subr.mxu0 0.0
  %2315 = vmatpush1.msra.mxu0 0.0
  %2316 = vmatprep.subr.mxu0 0.0
  %2317 = vmatpush1.msra.mxu0 0.0
  %2318 = vmatprep.subr.mxu0 0.0
  %2319 = vmatpush1.msra.mxu0 0.0
  %2320 = vmatprep.subr.mxu0 0.0
  %2321 = vmatpush1.msra.mxu0 0.0
  %2322 = vmatprep.subr.mxu0 0.0
  %2323 = vmatpush1.msra.mxu0 0.0
  %2324 = vmatprep.subr.mxu0 0.0
  %2325 = vmatpush1.msra.mxu0 0.0
  %2326 = vmatprep.mubr.f32.mxu0 0.0
  %2327 = vmatmul.mubr.f32.gmra.mrb[0].mxu0 %v303
  %v2328 = vpop.f32.mrb[0].mxu0
  %v2329 = vadd.f32 %v2260, %v2328
  %v2330 = vpop.f32.mrb[0].mxu0
  %2331 = vdwg.mxu0
  %v2332 = vadd.f32 %v2247, %v2329
  %v2333 = vxor.u32 %v2332, 2147483648
  %v2334 = vmul.f32 %v2333, 1.442695
  %v2335 = vpow.pop %v2334
  %v2336 = vadd.f32 %v2335, 1.0
  %v2337 = vrcp.pop %v2336
  %v2338 = vmul.f32 1.0, %v2337
  %2340 = vrot.lane.b32.xlu0 %v2329, 64
  %v2341 = vpop.permute.xlu0 %2340
  %v2343 = vmul.f32 %v2338, %v2341
  %2345 = vrot.lane.b32.xlu0 %v2343, 64
  %v2346 = vpop.permute.xlu0 %2345
  %v2348 = vadd.f32 %v2247, %v2346
  %v2349 = vtanh.pop %v2348
  %v2350 = vsub.f32 1.0, %v2338
  %2352 = vrot.lane.b32.xlu0 %v2349, 96
  %v2353 = vpop.permute.xlu0 %2352
  %v2355 = vmul.f32 %v2350, %v2353
  %v2356 = vmul.f32 %v2338, 0.0
  %v2357 = vadd.f32 %v2355, %v2356
  %2359 = vrot.lane.b32.xlu0 %v2357, 96
  %v2360 = vpop.permute.xlu0 %2359
  %2362 = vst.msk [vmem:[#allocation3] sm:$0x3] %vm405, %v2360
  %v2363 = vsel %vm193, %v2360, 0
  %2365 = vmatprep.subr.mxu0 0.0
  %2366 = vmatpush1.msra.mxu0 %v2251
  %2367 = vmatprep.subr.mxu0 0.0
  %2368 = vmatpush1.msra.mxu0 %v2252
  %2369 = vmatprep.subr.mxu0 0.0
  %2370 = vmatpush1.msra.mxu0 %v2253
  %2371 = vmatprep.subr.mxu0 0.0
  %2372 = vmatpush1.msra.mxu0 %v2254
  %2373 = vmatprep.subr.mxu0 0.0
  %2374 = vmatpush1.msra.mxu0 0.0
  %2375 = vmatprep.subr.mxu0 0.0
  %2376 = vmatpush1.msra.mxu0 0.0
  %2377 = vmatprep.subr.mxu0 0.0
  %2378 = vmatpush1.msra.mxu0 0.0
  %2379 = vmatprep.subr.mxu0 0.0
  %2380 = vmatpush1.msra.mxu0 0.0
  %2381 = vmatprep.subr.mxu0 0.0
  %2382 = vmatpush1.msra.mxu0 0.0
  %2383 = vmatprep.subr.mxu0 0.0
  %2384 = vmatpush1.msra.mxu0 0.0
  %2385 = vmatprep.subr.mxu0 0.0
  %2386 = vmatpush1.msra.mxu0 0.0
  %2387 = vmatprep.subr.mxu0 0.0
  %2388 = vmatpush1.msra.mxu0 0.0
  %2389 = vmatprep.subr.mxu0 0.0
  %2390 = vmatpush1.msra.mxu0 0.0
  %2391 = vmatprep.subr.mxu0 0.0
  %2392 = vmatpush1.msra.mxu0 0.0
  %2393 = vmatprep.subr.mxu0 0.0
  %2394 = vmatpush1.msra.mxu0 0.0
  %2395 = vmatprep.subr.mxu0 0.0
  %2396 = vmatpush1.msra.mxu0 0.0
  %2397 = vmatprep.subr.mxu0 0.0
  %2398 = vmatpush1.msra.mxu0 0.0
  %2399 = vmatprep.subr.mxu0 0.0
  %2400 = vmatpush1.msra.mxu0 0.0
  %2401 = vmatprep.subr.mxu0 0.0
  %2402 = vmatpush1.msra.mxu0 0.0
  %2403 = vmatprep.subr.mxu0 0.0
  %2404 = vmatpush1.msra.mxu0 0.0
  %2405 = vmatprep.subr.mxu0 0.0
  %2406 = vmatpush1.msra.mxu0 0.0
  %2407 = vmatprep.subr.mxu0 0.0
  %2408 = vmatpush1.msra.mxu0 0.0
  %2409 = vmatprep.subr.mxu0 0.0
  %2410 = vmatpush1.msra.mxu0 0.0
  %2411 = vmatprep.subr.mxu0 0.0
  %2412 = vmatpush1.msra.mxu0 0.0
  %2413 = vmatprep.subr.mxu0 0.0
  %2414 = vmatpush1.msra.mxu0 0.0
  %2415 = vmatprep.subr.mxu0 0.0
  %2416 = vmatpush1.msra.mxu0 0.0
  %2417 = vmatprep.subr.mxu0 0.0
  %2418 = vmatpush1.msra.mxu0 0.0
  %2419 = vmatprep.subr.mxu0 0.0
  %2420 = vmatpush1.msra.mxu0 0.0
  %2421 = vmatprep.subr.mxu0 0.0
  %2422 = vmatpush1.msra.mxu0 0.0
  %2423 = vmatprep.subr.mxu0 0.0
  %2424 = vmatpush1.msra.mxu0 0.0
  %2425 = vmatprep.subr.mxu0 0.0
  %2426 = vmatpush1.msra.mxu0 0.0
  %2427 = vmatprep.subr.mxu0 0.0
  %2428 = vmatpush1.msra.mxu0 0.0
  %2429 = vmatprep.mubr.f32.mxu0 0.0
  %2430 = vmatmul.mubr.f32.gmra.mrb[0].mxu0 %v2363
  %v2431 = vpop.f32.mrb[0].mxu0
  %v2432 = vadd.f32 %v2260, %v2431
  %v2433 = vpop.f32.mrb[0].mxu0
  %2434 = vdwg.mxu0
  %v2436 = vrot.slane %v2432, 6
  %v2438 = vadd.f32 %v2247, %v2436
  %v2439 = vxor.u32 %v2438, 2147483648
  %v2440 = vmul.f32 %v2439, 1.442695
  %v2441 = vpow.pop %v2440
  %v2442 = vadd.f32 %v2441, 1.0
  %v2443 = vrcp.pop %v2442
  %v2444 = vmul.f32 1.0, %v2443
  %2445 = vrot.lane.b32.xlu0 %v2436, 64
  %v2446 = vpop.permute.xlu0 %2445
  %v2448 = vmul.f32 %v2444, %v2446
  %2450 = vrot.lane.b32.xlu0 %v2448, 64
  %v2451 = vpop.permute.xlu0 %2450
  %v2453 = vadd.f32 %v2247, %v2451
  %v2454 = vtanh.pop %v2453
  %v2455 = vsub.f32 1.0, %v2444
  %2457 = vrot.lane.b32.xlu0 %v2454, 96
  %v2458 = vpop.permute.xlu0 %2457
  %v2460 = vmul.f32 %v2455, %v2458
  %v2461 = vrot.slane %v2357, 6
  %v2463 = vmul.f32 %v2444, %v2461
  %v2464 = vadd.f32 %v2460, %v2463
  %2466 = vrot.lane.b32.xlu0 %v2464, 96
  %v2467 = vpop.permute.xlu0 %2466
  %2469 = vst.msk [vmem:[#allocation3] sm:$0xc] %vm513, %v2467
  %v2470 = vrot.slane %v2464, 2
  %2471 = vrot.lane.b32.xlu0 %v2470, 96
  %v2472 = vpop.permute.xlu0 %2471
  %v2473 = vsel %vm193, %v2472, 0
  %2475 = vmatprep.subr.mxu0 0.0
  %2476 = vmatpush1.msra.mxu0 %v2251
  %2477 = vmatprep.subr.mxu0 0.0
  %2478 = vmatpush1.msra.mxu0 %v2252
  %2479 = vmatprep.subr.mxu0 0.0
  %2480 = vmatpush1.msra.mxu0 %v2253
  %2481 = vmatprep.subr.mxu0 0.0
  %2482 = vmatpush1.msra.mxu0 %v2254
  %2483 = vmatprep.subr.mxu0 0.0
  %2484 = vmatpush1.msra.mxu0 0.0
  %2485 = vmatprep.subr.mxu0 0.0
  %2486 = vmatpush1.msra.mxu0 0.0
  %2487 = vmatprep.subr.mxu0 0.0
  %2488 = vmatpush1.msra.mxu0 0.0
  %2489 = vmatprep.subr.mxu0 0.0
  %2490 = vmatpush1.msra.mxu0 0.0
  %2491 = vmatprep.subr.mxu0 0.0
  %2492 = vmatpush1.msra.mxu0 0.0
  %2493 = vmatprep.subr.mxu0 0.0
  %2494 = vmatpush1.msra.mxu0 0.0
  %2495 = vmatprep.subr.mxu0 0.0
  %2496 = vmatpush1.msra.mxu0 0.0
  %2497 = vmatprep.subr.mxu0 0.0
  %2498 = vmatpush1.msra.mxu0 0.0
  %2499 = vmatprep.subr.mxu0 0.0
  %2500 = vmatpush1.msra.mxu0 0.0
  %2501 = vmatprep.subr.mxu0 0.0
  %2502 = vmatpush1.msra.mxu0 0.0
  %2503 = vmatprep.subr.mxu0 0.0
  %2504 = vmatpush1.msra.mxu0 0.0
  %2505 = vmatprep.subr.mxu0 0.0
  %2506 = vmatpush1.msra.mxu0 0.0
  %2507 = vmatprep.subr.mxu0 0.0
  %2508 = vmatpush1.msra.mxu0 0.0
  %2509 = vmatprep.subr.mxu0 0.0
  %2510 = vmatpush1.msra.mxu0 0.0
  %2511 = vmatprep.subr.mxu0 0.0
  %2512 = vmatpush1.msra.mxu0 0.0
  %2513 = vmatprep.subr.mxu0 0.0
  %2514 = vmatpush1.msra.mxu0 0.0
  %2515 = vmatprep.subr.mxu0 0.0
  %2516 = vmatpush1.msra.mxu0 0.0
  %2517 = vmatprep.subr.mxu0 0.0
  %2518 = vmatpush1.msra.mxu0 0.0
  %2519 = vmatprep.subr.mxu0 0.0
  %2520 = vmatpush1.msra.mxu0 0.0
  %2521 = vmatprep.subr.mxu0 0.0
  %2522 = vmatpush1.msra.mxu0 0.0
  %2523 = vmatprep.subr.mxu0 0.0
  %2524 = vmatpush1.msra.mxu0 0.0
  %2525 = vmatprep.subr.mxu0 0.0
  %2526 = vmatpush1.msra.mxu0 0.0
  %2527 = vmatprep.subr.mxu0 0.0
  %2528 = vmatpush1.msra.mxu0 0.0
  %2529 = vmatprep.subr.mxu0 0.0
  %2530 = vmatpush1.msra.mxu0 0.0
  %2531 = vmatprep.subr.mxu0 0.0
  %2532 = vmatpush1.msra.mxu0 0.0
  %2533 = vmatprep.subr.mxu0 0.0
  %2534 = vmatpush1.msra.mxu0 0.0
  %2535 = vmatprep.subr.mxu0 0.0
  %2536 = vmatpush1.msra.mxu0 0.0
  %2537 = vmatprep.subr.mxu0 0.0
  %2538 = vmatpush1.msra.mxu0 0.0
  %2539 = vmatprep.mubr.f32.mxu0 0.0
  %2540 = vmatmul.mubr.f32.gmra.mrb[0].mxu0 %v2473
  %v2541 = vpop.f32.mrb[0].mxu0
  %v2542 = vadd.f32 %v2260, %v2541
  %v2543 = vpop.f32.mrb[0].mxu0
  %2544 = vdwg.mxu0
  %v2546 = vrot.slane %v2542, 4
  %v2548 = vadd.f32 %v2247, %v2546
  %v2549 = vxor.u32 %v2548, 2147483648
  %v2550 = vmul.f32 %v2549, 1.442695
  %v2551 = vpow.pop %v2550
  %v2552 = vadd.f32 %v2551, 1.0
  %v2553 = vrcp.pop %v2552
  %v2554 = vmul.f32 1.0, %v2553
  %2555 = vrot.lane.b32.xlu0 %v2546, 64
  %v2556 = vpop.permute.xlu0 %2555
  %v2558 = vmul.f32 %v2554, %v2556
  %2560 = vrot.lane.b32.xlu0 %v2558, 64
  %v2561 = vpop.permute.xlu0 %2560
  %v2563 = vadd.f32 %v2247, %v2561
  %v2564 = vtanh.pop %v2563
  %v2565 = vsub.f32 1.0, %v2554
  %2567 = vrot.lane.b32.xlu0 %v2564, 96
  %v2568 = vpop.permute.xlu0 %2567
  %v2570 = vmul.f32 %v2565, %v2568
  %v2571 = vrot.slane %v2464, 6
  %v2573 = vmul.f32 %v2554, %v2571
  %v2574 = vadd.f32 %v2570, %v2573
  %2576 = vrot.lane.b32.xlu0 %v2574, 96
  %v2577 = vpop.permute.xlu0 %2576
  %2579 = vst.msk [vmem:[#allocation3] sm:$0x30] %vm624, %v2577
  %v2580 = vrot.slane %v2574, 4
  %2581 = vrot.lane.b32.xlu0 %v2580, 96
  %v2582 = vpop.permute.xlu0 %2581
  %v2583 = vsel %vm193, %v2582, 0
  %2585 = vmatprep.subr.mxu0 0.0
  %2586 = vmatpush1.msra.mxu0 %v2251
  %2587 = vmatprep.subr.mxu0 0.0
  %2588 = vmatpush1.msra.mxu0 %v2252
  %2589 = vmatprep.subr.mxu0 0.0
  %2590 = vmatpush1.msra.mxu0 %v2253
  %2591 = vmatprep.subr.mxu0 0.0
  %2592 = vmatpush1.msra.mxu0 %v2254
  %2593 = vmatprep.subr.mxu0 0.0
  %2594 = vmatpush1.msra.mxu0 0.0
  %2595 = vmatprep.subr.mxu0 0.0
  %2596 = vmatpush1.msra.mxu0 0.0
  %2597 = vmatprep.subr.mxu0 0.0
  %2598 = vmatpush1.msra.mxu0 0.0
  %2599 = vmatprep.subr.mxu0 0.0
  %2600 = vmatpush1.msra.mxu0 0.0
  %2601 = vmatprep.subr.mxu0 0.0
  %2602 = vmatpush1.msra.mxu0 0.0
  %2603 = vmatprep.subr.mxu0 0.0
  %2604 = vmatpush1.msra.mxu0 0.0
  %2605 = vmatprep.subr.mxu0 0.0
  %2606 = vmatpush1.msra.mxu0 0.0
  %2607 = vmatprep.subr.mxu0 0.0
  %2608 = vmatpush1.msra.mxu0 0.0
  %2609 = vmatprep.subr.mxu0 0.0
  %2610 = vmatpush1.msra.mxu0 0.0
  %2611 = vmatprep.subr.mxu0 0.0
  %2612 = vmatpush1.msra.mxu0 0.0
  %2613 = vmatprep.subr.mxu0 0.0
  %2614 = vmatpush1.msra.mxu0 0.0
  %2615 = vmatprep.subr.mxu0 0.0
  %2616 = vmatpush1.msra.mxu0 0.0
  %2617 = vmatprep.subr.mxu0 0.0
  %2618 = vmatpush1.msra.mxu0 0.0
  %2619 = vmatprep.subr.mxu0 0.0
  %2620 = vmatpush1.msra.mxu0 0.0
  %2621 = vmatprep.subr.mxu0 0.0
  %2622 = vmatpush1.msra.mxu0 0.0
  %2623 = vmatprep.subr.mxu0 0.0
  %2624 = vmatpush1.msra.mxu0 0.0
  %2625 = vmatprep.subr.mxu0 0.0
  %2626 = vmatpush1.msra.mxu0 0.0
  %2627 = vmatprep.subr.mxu0 0.0
  %2628 = vmatpush1.msra.mxu0 0.0
  %2629 = vmatprep.subr.mxu0 0.0
  %2630 = vmatpush1.msra.mxu0 0.0
  %2631 = vmatprep.subr.mxu0 0.0
  %2632 = vmatpush1.msra.mxu0 0.0
  %2633 = vmatprep.subr.mxu0 0.0
  %2634 = vmatpush1.msra.mxu0 0.0
  %2635 = vmatprep.subr.mxu0 0.0
  %2636 = vmatpush1.msra.mxu0 0.0
  %2637 = vmatprep.subr.mxu0 0.0
  %2638 = vmatpush1.msra.mxu0 0.0
  %2639 = vmatprep.subr.mxu0 0.0
  %2640 = vmatpush1.msra.mxu0 0.0
  %2641 = vmatprep.subr.mxu0 0.0
  %2642 = vmatpush1.msra.mxu0 0.0
  %2643 = vmatprep.subr.mxu0 0.0
  %2644 = vmatpush1.msra.mxu0 0.0
  %2645 = vmatprep.subr.mxu0 0.0
  %2646 = vmatpush1.msra.mxu0 0.0
  %2647 = vmatprep.subr.mxu0 0.0
  %2648 = vmatpush1.msra.mxu0 0.0
  %2649 = vmatprep.mubr.f32.mxu0 0.0
  %2650 = vmatmul.mubr.f32.gmra.mrb[0].mxu0 %v2583
  %v2651 = vpop.f32.mrb[0].mxu0
  %v2652 = vadd.f32 %v2260, %v2651
  %v2653 = vpop.f32.mrb[0].mxu0
  %2654 = vdwg.mxu0
  %v2656 = vrot.slane %v2652, 2
  %v2658 = vadd.f32 %v2247, %v2656
  %v2659 = vxor.u32 %v2658, 2147483648
  %v2660 = vmul.f32 %v2659, 1.442695
  %v2661 = vpow.pop %v2660
  %v2662 = vadd.f32 %v2661, 1.0
  %v2663 = vrcp.pop %v2662
  %v2664 = vmul.f32 1.0, %v2663
  %2665 = vrot.lane.b32.xlu0 %v2656, 64
  %v2666 = vpop.permute.xlu0 %2665
  %v2668 = vmul.f32 %v2664, %v2666
  %2670 = vrot.lane.b32.xlu0 %v2668, 64
  %v2671 = vpop.permute.xlu0 %2670
  %v2673 = vadd.f32 %v2247, %v2671
  %v2674 = vtanh.pop %v2673
  %v2675 = vsub.f32 1.0, %v2664
  %2677 = vrot.lane.b32.xlu0 %v2674, 96
  %v2678 = vpop.permute.xlu0 %2677
  %v2680 = vmul.f32 %v2675, %v2678
  %v2681 = vrot.slane %v2574, 6
  %v2683 = vmul.f32 %v2664, %v2681
  %v2684 = vadd.f32 %v2680, %v2683
  %2686 = vrot.lane.b32.xlu0 %v2684, 96
  %v2687 = vpop.permute.xlu0 %2686
  %2689 = vst.msk [vmem:[#allocation3] sm:$0xc0] %vm735, %v2687
  %v2690 = vrot.slane %v2684, 6
  %2691 = vrot.lane.b32.xlu0 %v2690, 96
  %v2692 = vpop.permute.xlu0 %2691
  %v2693 = vsel %vm193, %v2692, 0
  %2695 = vmatprep.subr.mxu0 0.0
  %2696 = vmatpush1.msra.mxu0 %v2251
  %2697 = vmatprep.subr.mxu0 0.0
  %2698 = vmatpush1.msra.mxu0 %v2252
  %2699 = vmatprep.subr.mxu0 0.0
  %2700 = vmatpush1.msra.mxu0 %v2253
  %2701 = vmatprep.subr.mxu0 0.0
  %2702 = vmatpush1.msra.mxu0 %v2254
  %2703 = vmatprep.subr.mxu0 0.0
  %2704 = vmatpush1.msra.mxu0 0.0
  %2705 = vmatprep.subr.mxu0 0.0
  %2706 = vmatpush1.msra.mxu0 0.0
  %2707 = vmatprep.subr.mxu0 0.0
  %2708 = vmatpush1.msra.mxu0 0.0
  %2709 = vmatprep.subr.mxu0 0.0
  %2710 = vmatpush1.msra.mxu0 0.0
  %2711 = vmatprep.subr.mxu0 0.0
  %2712 = vmatpush1.msra.mxu0 0.0
  %2713 = vmatprep.subr.mxu0 0.0
  %2714 = vmatpush1.msra.mxu0 0.0
  %2715 = vmatprep.subr.mxu0 0.0
  %2716 = vmatpush1.msra.mxu0 0.0
  %2717 = vmatprep.subr.mxu0 0.0
  %2718 = vmatpush1.msra.mxu0 0.0
  %2719 = vmatprep.subr.mxu0 0.0
  %2720 = vmatpush1.msra.mxu0 0.0
  %2721 = vmatprep.subr.mxu0 0.0
  %2722 = vmatpush1.msra.mxu0 0.0
  %2723 = vmatprep.subr.mxu0 0.0
  %2724 = vmatpush1.msra.mxu0 0.0
  %2725 = vmatprep.subr.mxu0 0.0
  %2726 = vmatpush1.msra.mxu0 0.0
  %2727 = vmatprep.subr.mxu0 0.0
  %2728 = vmatpush1.msra.mxu0 0.0
  %2729 = vmatprep.subr.mxu0 0.0
  %2730 = vmatpush1.msra.mxu0 0.0
  %2731 = vmatprep.subr.mxu0 0.0
  %2732 = vmatpush1.msra.mxu0 0.0
  %2733 = vmatprep.subr.mxu0 0.0
  %2734 = vmatpush1.msra.mxu0 0.0
  %2735 = vmatprep.subr.mxu0 0.0
  %2736 = vmatpush1.msra.mxu0 0.0
  %2737 = vmatprep.subr.mxu0 0.0
  %2738 = vmatpush1.msra.mxu0 0.0
  %2739 = vmatprep.subr.mxu0 0.0
  %2740 = vmatpush1.msra.mxu0 0.0
  %2741 = vmatprep.subr.mxu0 0.0
  %2742 = vmatpush1.msra.mxu0 0.0
  %2743 = vmatprep.subr.mxu0 0.0
  %2744 = vmatpush1.msra.mxu0 0.0
  %2745 = vmatprep.subr.mxu0 0.0
  %2746 = vmatpush1.msra.mxu0 0.0
  %2747 = vmatprep.subr.mxu0 0.0
  %2748 = vmatpush1.msra.mxu0 0.0
  %2749 = vmatprep.subr.mxu0 0.0
  %2750 = vmatpush1.msra.mxu0 0.0
  %2751 = vmatprep.subr.mxu0 0.0
  %2752 = vmatpush1.msra.mxu0 0.0
  %2753 = vmatprep.subr.mxu0 0.0
  %2754 = vmatpush1.msra.mxu0 0.0
  %2755 = vmatprep.subr.mxu0 0.0
  %2756 = vmatpush1.msra.mxu0 0.0
  %2757 = vmatprep.subr.mxu0 0.0
  %2758 = vmatpush1.msra.mxu0 0.0
  %2759 = vmatprep.mubr.f32.mxu0 0.0
  %2760 = vmatmul.mubr.f32.gmra.mrb[0].mxu0 %v2693
  %v2761 = vpop.f32.mrb[0].mxu0
  %v2762 = vadd.f32 %v2260, %v2761
  %v2763 = vpop.f32.mrb[0].mxu0
  %2764 = vdwg.mxu0
  %v2765 = vadd.f32 %v2248, %v2762
  %v2766 = vxor.u32 %v2765, 2147483648
  %v2767 = vmul.f32 %v2766, 1.442695
  %v2768 = vpow.pop %v2767
  %v2769 = vadd.f32 %v2768, 1.0
  %v2770 = vrcp.pop %v2769
  %v2771 = vmul.f32 1.0, %v2770
  %2773 = vrot.lane.b32.xlu0 %v2762, 64
  %v2774 = vpop.permute.xlu0 %2773
  %v2776 = vmul.f32 %v2771, %v2774
  %2778 = vrot.lane.b32.xlu0 %v2776, 64
  %v2779 = vpop.permute.xlu0 %2778
  %v2781 = vadd.f32 %v2248, %v2779
  %v2782 = vtanh.pop %v2781
  %v2783 = vsub.f32 1.0, %v2771
  %2785 = vrot.lane.b32.xlu0 %v2782, 96
  %v2786 = vpop.permute.xlu0 %2785
  %v2788 = vmul.f32 %v2783, %v2786
  %v2790 = vmul.f32 %v2771, %v2690
  %v2791 = vadd.f32 %v2788, %v2790
  %2793 = vrot.lane.b32.xlu0 %v2791, 96
  %v2794 = vpop.permute.xlu0 %2793
  %2796 = vst.msk [vmem:[#allocation3 + $0x8] sm:$0x3] %vm405, %v2794
  %v2797 = vsel %vm193, %v2794, 0
  %2799 = vmatprep.subr.mxu0 0.0
  %2800 = vmatpush1.msra.mxu0 %v2251
  %2801 = vmatprep.subr.mxu0 0.0
  %2802 = vmatpush1.msra.mxu0 %v2252
  %2803 = vmatprep.subr.mxu0 0.0
  %2804 = vmatpush1.msra.mxu0 %v2253
  %2805 = vmatprep.subr.mxu0 0.0
  %2806 = vmatpush1.msra.mxu0 %v2254
  %2807 = vmatprep.subr.mxu0 0.0
  %2808 = vmatpush1.msra.mxu0 0.0
  %2809 = vmatprep.subr.mxu0 0.0
  %2810 = vmatpush1.msra.mxu0 0.0
  %2811 = vmatprep.subr.mxu0 0.0
  %2812 = vmatpush1.msra.mxu0 0.0
  %2813 = vmatprep.subr.mxu0 0.0
  %2814 = vmatpush1.msra.mxu0 0.0
  %2815 = vmatprep.subr.mxu0 0.0
  %2816 = vmatpush1.msra.mxu0 0.0
  %2817 = vmatprep.subr.mxu0 0.0
  %2818 = vmatpush1.msra.mxu0 0.0
  %2819 = vmatprep.subr.mxu0 0.0
  %2820 = vmatpush1.msra.mxu0 0.0
  %2821 = vmatprep.subr.mxu0 0.0
  %2822 = vmatpush1.msra.mxu0 0.0
  %2823 = vmatprep.subr.mxu0 0.0
  %2824 = vmatpush1.msra.mxu0 0.0
  %2825 = vmatprep.subr.mxu0 0.0
  %2826 = vmatpush1.msra.mxu0 0.0
  %2827 = vmatprep.subr.mxu0 0.0
  %2828 = vmatpush1.msra.mxu0 0.0
  %2829 = vmatprep.subr.mxu0 0.0
  %2830 = vmatpush1.msra.mxu0 0.0
  %2831 = vmatprep.subr.mxu0 0.0
  %2832 = vmatpush1.msra.mxu0 0.0
  %2833 = vmatprep.subr.mxu0 0.0
  %2834 = vmatpush1.msra.mxu0 0.0
  %2835 = vmatprep.subr.mxu0 0.0
  %2836 = vmatpush1.msra.mxu0 0.0
  %2837 = vmatprep.subr.mxu0 0.0
  %2838 = vmatpush1.msra.mxu0 0.0
  %2839 = vmatprep.subr.mxu0 0.0
  %2840 = vmatpush1.msra.mxu0 0.0
  %2841 = vmatprep.subr.mxu0 0.0
  %2842 = vmatpush1.msra.mxu0 0.0
  %2843 = vmatprep.subr.mxu0 0.0
  %2844 = vmatpush1.msra.mxu0 0.0
  %2845 = vmatprep.subr.mxu0 0.0
  %2846 = vmatpush1.msra.mxu0 0.0
  %2847 = vmatprep.subr.mxu0 0.0
  %2848 = vmatpush1.msra.mxu0 0.0
  %2849 = vmatprep.subr.mxu0 0.0
  %2850 = vmatpush1.msra.mxu0 0.0
  %2851 = vmatprep.subr.mxu0 0.0
  %2852 = vmatpush1.msra.mxu0 0.0
  %2853 = vmatprep.subr.mxu0 0.0
  %2854 = vmatpush1.msra.mxu0 0.0
  %2855 = vmatprep.subr.mxu0 0.0
  %2856 = vmatpush1.msra.mxu0 0.0
  %2857 = vmatprep.subr.mxu0 0.0
  %2858 = vmatpush1.msra.mxu0 0.0
  %2859 = vmatprep.subr.mxu0 0.0
  %2860 = vmatpush1.msra.mxu0 0.0
  %2861 = vmatprep.subr.mxu0 0.0
  %2862 = vmatpush1.msra.mxu0 0.0
  %2863 = vmatprep.mubr.f32.mxu0 0.0
  %2864 = vmatmul.mubr.f32.gmra.mrb[0].mxu0 %v2797
  %v2865 = vpop.f32.mrb[0].mxu0
  %v2866 = vadd.f32 %v2260, %v2865
  %v2867 = vpop.f32.mrb[0].mxu0
  %2868 = vdwg.mxu0
  %v2870 = vrot.slane %v2866, 6
  %v2872 = vadd.f32 %v2248, %v2870
  %v2873 = vxor.u32 %v2872, 2147483648
  %v2874 = vmul.f32 %v2873, 1.442695
  %v2875 = vpow.pop %v2874
  %v2876 = vadd.f32 %v2875, 1.0
  %v2877 = vrcp.pop %v2876
  %v2878 = vmul.f32 1.0, %v2877
  %2879 = vrot.lane.b32.xlu0 %v2870, 64
  %v2880 = vpop.permute.xlu0 %2879
  %v2882 = vmul.f32 %v2878, %v2880
  %2884 = vrot.lane.b32.xlu0 %v2882, 64
  %v2885 = vpop.permute.xlu0 %2884
  %v2887 = vadd.f32 %v2248, %v2885
  %v2888 = vtanh.pop %v2887
  %v2889 = vsub.f32 1.0, %v2878
  %2891 = vrot.lane.b32.xlu0 %v2888, 96
  %v2892 = vpop.permute.xlu0 %2891
  %v2894 = vmul.f32 %v2889, %v2892
  %v2895 = vrot.slane %v2791, 6
  %v2897 = vmul.f32 %v2878, %v2895
  %v2898 = vadd.f32 %v2894, %v2897
  %2900 = vrot.lane.b32.xlu0 %v2898, 96
  %v2901 = vpop.permute.xlu0 %2900
  %2903 = vst.msk [vmem:[#allocation3 + $0x8] sm:$0xc] %vm513, %v2901
  %v2904 = vrot.slane %v2898, 2
  %2905 = vrot.lane.b32.xlu0 %v2904, 96
  %v2906 = vpop.permute.xlu0 %2905
  %v2907 = vsel %vm193, %v2906, 0
  %2909 = vmatprep.subr.mxu0 0.0
  %2910 = vmatpush1.msra.mxu0 %v2251
  %2911 = vmatprep.subr.mxu0 0.0
  %2912 = vmatpush1.msra.mxu0 %v2252
  %2913 = vmatprep.subr.mxu0 0.0
  %2914 = vmatpush1.msra.mxu0 %v2253
  %2915 = vmatprep.subr.mxu0 0.0
  %2916 = vmatpush1.msra.mxu0 %v2254
  %2917 = vmatprep.subr.mxu0 0.0
  %2918 = vmatpush1.msra.mxu0 0.0
  %2919 = vmatprep.subr.mxu0 0.0
  %2920 = vmatpush1.msra.mxu0 0.0
  %2921 = vmatprep.subr.mxu0 0.0
  %2922 = vmatpush1.msra.mxu0 0.0
  %2923 = vmatprep.subr.mxu0 0.0
  %2924 = vmatpush1.msra.mxu0 0.0
  %2925 = vmatprep.subr.mxu0 0.0
  %2926 = vmatpush1.msra.mxu0 0.0
  %2927 = vmatprep.subr.mxu0 0.0
  %2928 = vmatpush1.msra.mxu0 0.0
  %2929 = vmatprep.subr.mxu0 0.0
  %2930 = vmatpush1.msra.mxu0 0.0
  %2931 = vmatprep.subr.mxu0 0.0
  %2932 = vmatpush1.msra.mxu0 0.0
  %2933 = vmatprep.subr.mxu0 0.0
  %2934 = vmatpush1.msra.mxu0 0.0
  %2935 = vmatprep.subr.mxu0 0.0
  %2936 = vmatpush1.msra.mxu0 0.0
  %2937 = vmatprep.subr.mxu0 0.0
  %2938 = vmatpush1.msra.mxu0 0.0
  %2939 = vmatprep.subr.mxu0 0.0
  %2940 = vmatpush1.msra.mxu0 0.0
  %2941 = vmatprep.subr.mxu0 0.0
  %2942 = vmatpush1.msra.mxu0 0.0
  %2943 = vmatprep.subr.mxu0 0.0
  %2944 = vmatpush1.msra.mxu0 0.0
  %2945 = vmatprep.subr.mxu0 0.0
  %2946 = vmatpush1.msra.mxu0 0.0
  %2947 = vmatprep.subr.mxu0 0.0
  %2948 = vmatpush1.msra.mxu0 0.0
  %2949 = vmatprep.subr.mxu0 0.0
  %2950 = vmatpush1.msra.mxu0 0.0
  %2951 = vmatprep.subr.mxu0 0.0
  %2952 = vmatpush1.msra.mxu0 0.0
  %2953 = vmatprep.subr.mxu0 0.0
  %2954 = vmatpush1.msra.mxu0 0.0
  %2955 = vmatprep.subr.mxu0 0.0
  %2956 = vmatpush1.msra.mxu0 0.0
  %2957 = vmatprep.subr.mxu0 0.0
  %2958 = vmatpush1.msra.mxu0 0.0
  %2959 = vmatprep.subr.mxu0 0.0
  %2960 = vmatpush1.msra.mxu0 0.0
  %2961 = vmatprep.subr.mxu0 0.0
  %2962 = vmatpush1.msra.mxu0 0.0
  %2963 = vmatprep.subr.mxu0 0.0
  %2964 = vmatpush1.msra.mxu0 0.0
  %2965 = vmatprep.subr.mxu0 0.0
  %2966 = vmatpush1.msra.mxu0 0.0
  %2967 = vmatprep.subr.mxu0 0.0
  %2968 = vmatpush1.msra.mxu0 0.0
  %2969 = vmatprep.subr.mxu0 0.0
  %2970 = vmatpush1.msra.mxu0 0.0
  %2971 = vmatprep.subr.mxu0 0.0
  %2972 = vmatpush1.msra.mxu0 0.0
  %2973 = vmatprep.mubr.f32.mxu0 0.0
  %2974 = vmatmul.mubr.f32.gmra.mrb[0].mxu0 %v2907
  %v2975 = vpop.f32.mrb[0].mxu0
  %v2976 = vadd.f32 %v2260, %v2975
  %v2977 = vpop.f32.mrb[0].mxu0
  %2978 = vdwg.mxu0
  %v2980 = vrot.slane %v2976, 4
  %v2982 = vadd.f32 %v2248, %v2980
  %v2983 = vxor.u32 %v2982, 2147483648
  %v2984 = vmul.f32 %v2983, 1.442695
  %v2985 = vpow.pop %v2984
  %v2986 = vadd.f32 %v2985, 1.0
  %v2987 = vrcp.pop %v2986
  %v2988 = vmul.f32 1.0, %v2987
  %2989 = vrot.lane.b32.xlu0 %v2980, 64
  %v2990 = vpop.permute.xlu0 %2989
  %v2992 = vmul.f32 %v2988, %v2990
  %2994 = vrot.lane.b32.xlu0 %v2992, 64
  %v2995 = vpop.permute.xlu0 %2994
  %v2997 = vadd.f32 %v2248, %v2995
  %v2998 = vtanh.pop %v2997
  %v2999 = vsub.f32 1.0, %v2988
  %3001 = vrot.lane.b32.xlu0 %v2998, 96
  %v3002 = vpop.permute.xlu0 %3001
  %v3004 = vmul.f32 %v2999, %v3002
  %v3005 = vrot.slane %v2898, 6
  %v3007 = vmul.f32 %v2988, %v3005
  %v3008 = vadd.f32 %v3004, %v3007
  %3010 = vrot.lane.b32.xlu0 %v3008, 96
  %v3011 = vpop.permute.xlu0 %3010
  %3013 = vst.msk [vmem:[#allocation3 + $0x8] sm:$0x30] %vm624, %v3011
  %v3014 = vrot.slane %v3008, 4
  %3015 = vrot.lane.b32.xlu0 %v3014, 96
  %v3016 = vpop.permute.xlu0 %3015
  %v3017 = vsel %vm193, %v3016, 0
  %3019 = vmatprep.subr.mxu0 0.0
  %3020 = vmatpush1.msra.mxu0 %v2251
  %3021 = vmatprep.subr.mxu0 0.0
  %3022 = vmatpush1.msra.mxu0 %v2252
  %3023 = vmatprep.subr.mxu0 0.0
  %3024 = vmatpush1.msra.mxu0 %v2253
  %3025 = vmatprep.subr.mxu0 0.0
  %3026 = vmatpush1.msra.mxu0 %v2254
  %3027 = vmatprep.subr.mxu0 0.0
  %3028 = vmatpush1.msra.mxu0 0.0
  %3029 = vmatprep.subr.mxu0 0.0
  %3030 = vmatpush1.msra.mxu0 0.0
  %3031 = vmatprep.subr.mxu0 0.0
  %3032 = vmatpush1.msra.mxu0 0.0
  %3033 = vmatprep.subr.mxu0 0.0
  %3034 = vmatpush1.msra.mxu0 0.0
  %3035 = vmatprep.subr.mxu0 0.0
  %3036 = vmatpush1.msra.mxu0 0.0
  %3037 = vmatprep.subr.mxu0 0.0
  %3038 = vmatpush1.msra.mxu0 0.0
  %3039 = vmatprep.subr.mxu0 0.0
  %3040 = vmatpush1.msra.mxu0 0.0
  %3041 = vmatprep.subr.mxu0 0.0
  %3042 = vmatpush1.msra.mxu0 0.0
  %3043 = vmatprep.subr.mxu0 0.0
  %3044 = vmatpush1.msra.mxu0 0.0
  %3045 = vmatprep.subr.mxu0 0.0
  %3046 = vmatpush1.msra.mxu0 0.0
  %3047 = vmatprep.subr.mxu0 0.0
  %3048 = vmatpush1.msra.mxu0 0.0
  %3049 = vmatprep.subr.mxu0 0.0
  %3050 = vmatpush1.msra.mxu0 0.0
  %3051 = vmatprep.subr.mxu0 0.0
  %3052 = vmatpush1.msra.mxu0 0.0
  %3053 = vmatprep.subr.mxu0 0.0
  %3054 = vmatpush1.msra.mxu0 0.0
  %3055 = vmatprep.subr.mxu0 0.0
  %3056 = vmatpush1.msra.mxu0 0.0
  %3057 = vmatprep.subr.mxu0 0.0
  %3058 = vmatpush1.msra.mxu0 0.0
  %3059 = vmatprep.subr.mxu0 0.0
  %3060 = vmatpush1.msra.mxu0 0.0
  %3061 = vmatprep.subr.mxu0 0.0
  %3062 = vmatpush1.msra.mxu0 0.0
  %3063 = vmatprep.subr.mxu0 0.0
  %3064 = vmatpush1.msra.mxu0 0.0
  %3065 = vmatprep.subr.mxu0 0.0
  %3066 = vmatpush1.msra.mxu0 0.0
  %3067 = vmatprep.subr.mxu0 0.0
  %3068 = vmatpush1.msra.mxu0 0.0
  %3069 = vmatprep.subr.mxu0 0.0
  %3070 = vmatpush1.msra.mxu0 0.0
  %3071 = vmatprep.subr.mxu0 0.0
  %3072 = vmatpush1.msra.mxu0 0.0
  %3073 = vmatprep.subr.mxu0 0.0
  %3074 = vmatpush1.msra.mxu0 0.0
  %3075 = vmatprep.subr.mxu0 0.0
  %3076 = vmatpush1.msra.mxu0 0.0
  %3077 = vmatprep.subr.mxu0 0.0
  %3078 = vmatpush1.msra.mxu0 0.0
  %3079 = vmatprep.subr.mxu0 0.0
  %3080 = vmatpush1.msra.mxu0 0.0
  %3081 = vmatprep.subr.mxu0 0.0
  %3082 = vmatpush1.msra.mxu0 0.0
  %3083 = vmatprep.mubr.f32.mxu0 0.0
  %3084 = vmatmul.mubr.f32.gmra.mrb[0].mxu0 %v3017
  %v3085 = vpop.f32.mrb[0].mxu0
  %v3086 = vadd.f32 %v2260, %v3085
  %v3087 = vpop.f32.mrb[0].mxu0
  %3088 = vdwg.mxu0
  %v3090 = vrot.slane %v3086, 2
  %v3092 = vadd.f32 %v2248, %v3090
  %v3093 = vxor.u32 %v3092, 2147483648
  %v3094 = vmul.f32 %v3093, 1.442695
  %v3095 = vpow.pop %v3094
  %v3096 = vadd.f32 %v3095, 1.0
  %v3097 = vrcp.pop %v3096
  %v3098 = vmul.f32 1.0, %v3097
  %3099 = vrot.lane.b32.xlu0 %v3090, 64
  %v3100 = vpop.permute.xlu0 %3099
  %v3102 = vmul.f32 %v3098, %v3100
  %3104 = vrot.lane.b32.xlu0 %v3102, 64
  %v3105 = vpop.permute.xlu0 %3104
  %v3107 = vadd.f32 %v2248, %v3105
  %v3108 = vtanh.pop %v3107
  %v3109 = vsub.f32 1.0, %v3098
  %3111 = vrot.lane.b32.xlu0 %v3108, 96
  %v3112 = vpop.permute.xlu0 %3111
  %v3114 = vmul.f32 %v3109, %v3112
  %v3115 = vrot.slane %v3008, 6
  %v3117 = vmul.f32 %v3098, %v3115
  %v3118 = vadd.f32 %v3114, %v3117
  %3120 = vrot.lane.b32.xlu0 %v3118, 96
  %v3121 = vpop.permute.xlu0 %3120
  %3123 = vst.msk [vmem:[#allocation3 + $0x8] sm:$0xc0] %vm735, %v3121
  %v3124 = vrot.slane %v3118, 6
  %3125 = vrot.lane.b32.xlu0 %v3124, 96
  %v3126 = vpop.permute.xlu0 %3125
  %v3127 = vsel %vm193, %v3126, 0
  %3129 = vmatprep.subr.mxu0 0.0
  %3130 = vmatpush1.msra.mxu0 %v2251
  %3131 = vmatprep.subr.mxu0 0.0
  %3132 = vmatpush1.msra.mxu0 %v2252
  %3133 = vmatprep.subr.mxu0 0.0
  %3134 = vmatpush1.msra.mxu0 %v2253
  %3135 = vmatprep.subr.mxu0 0.0
  %3136 = vmatpush1.msra.mxu0 %v2254
  %3137 = vmatprep.subr.mxu0 0.0
  %3138 = vmatpush1.msra.mxu0 0.0
  %3139 = vmatprep.subr.mxu0 0.0
  %3140 = vmatpush1.msra.mxu0 0.0
  %3141 = vmatprep.subr.mxu0 0.0
  %3142 = vmatpush1.msra.mxu0 0.0
  %3143 = vmatprep.subr.mxu0 0.0
  %3144 = vmatpush1.msra.mxu0 0.0
  %3145 = vmatprep.subr.mxu0 0.0
  %3146 = vmatpush1.msra.mxu0 0.0
  %3147 = vmatprep.subr.mxu0 0.0
  %3148 = vmatpush1.msra.mxu0 0.0
  %3149 = vmatprep.subr.mxu0 0.0
  %3150 = vmatpush1.msra.mxu0 0.0
  %3151 = vmatprep.subr.mxu0 0.0
  %3152 = vmatpush1.msra.mxu0 0.0
  %3153 = vmatprep.subr.mxu0 0.0
  %3154 = vmatpush1.msra.mxu0 0.0
  %3155 = vmatprep.subr.mxu0 0.0
  %3156 = vmatpush1.msra.mxu0 0.0
  %3157 = vmatprep.subr.mxu0 0.0
  %3158 = vmatpush1.msra.mxu0 0.0
  %3159 = vmatprep.subr.mxu0 0.0
  %3160 = vmatpush1.msra.mxu0 0.0
  %3161 = vmatprep.subr.mxu0 0.0
  %3162 = vmatpush1.msra.mxu0 0.0
  %3163 = vmatprep.subr.mxu0 0.0
  %3164 = vmatpush1.msra.mxu0 0.0
  %3165 = vmatprep.subr.mxu0 0.0
  %3166 = vmatpush1.msra.mxu0 0.0
  %3167 = vmatprep.subr.mxu0 0.0
  %3168 = vmatpush1.msra.mxu0 0.0
  %3169 = vmatprep.subr.mxu0 0.0
  %3170 = vmatpush1.msra.mxu0 0.0
  %3171 = vmatprep.subr.mxu0 0.0
  %3172 = vmatpush1.msra.mxu0 0.0
  %3173 = vmatprep.subr.mxu0 0.0
  %3174 = vmatpush1.msra.mxu0 0.0
  %3175 = vmatprep.subr.mxu0 0.0
  %3176 = vmatpush1.msra.mxu0 0.0
  %3177 = vmatprep.subr.mxu0 0.0
  %3178 = vmatpush1.msra.mxu0 0.0
  %3179 = vmatprep.subr.mxu0 0.0
  %3180 = vmatpush1.msra.mxu0 0.0
  %3181 = vmatprep.subr.mxu0 0.0
  %3182 = vmatpush1.msra.mxu0 0.0
  %3183 = vmatprep.subr.mxu0 0.0
  %3184 = vmatpush1.msra.mxu0 0.0
  %3185 = vmatprep.subr.mxu0 0.0
  %3186 = vmatpush1.msra.mxu0 0.0
  %3187 = vmatprep.subr.mxu0 0.0
  %3188 = vmatpush1.msra.mxu0 0.0
  %3189 = vmatprep.subr.mxu0 0.0
  %3190 = vmatpush1.msra.mxu0 0.0
  %3191 = vmatprep.subr.mxu0 0.0
  %3192 = vmatpush1.msra.mxu0 0.0
  %3193 = vmatprep.mubr.f32.mxu0 0.0
  %3194 = vmatmul.mubr.f32.gmra.mrb[0].mxu0 %v3127
  %v3195 = vpop.f32.mrb[0].mxu0
  %v3196 = vadd.f32 %v2260, %v3195
  %v3197 = vpop.f32.mrb[0].mxu0
  %3198 = vdwg.mxu0
  %v3199 = vadd.f32 %v2249, %v3196
  %v3200 = vxor.u32 %v3199, 2147483648
  %v3201 = vmul.f32 %v3200, 1.442695
  %v3202 = vpow.pop %v3201
  %v3203 = vadd.f32 %v3202, 1.0
  %v3204 = vrcp.pop %v3203
  %v3205 = vmul.f32 1.0, %v3204
  %3207 = vrot.lane.b32.xlu0 %v3196, 64
  %v3208 = vpop.permute.xlu0 %3207
  %v3210 = vmul.f32 %v3205, %v3208
  %3212 = vrot.lane.b32.xlu0 %v3210, 64
  %v3213 = vpop.permute.xlu0 %3212
  %v3215 = vadd.f32 %v2249, %v3213
  %v3216 = vtanh.pop %v3215
  %v3217 = vsub.f32 1.0, %v3205
  %3219 = vrot.lane.b32.xlu0 %v3216, 96
  %v3220 = vpop.permute.xlu0 %3219
  %v3222 = vmul.f32 %v3217, %v3220
  %v3224 = vmul.f32 %v3205, %v3124
  %v3225 = vadd.f32 %v3222, %v3224
  %3227 = vrot.lane.b32.xlu0 %v3225, 96
  %v3228 = vpop.permute.xlu0 %3227
  %3230 = vst.msk [vmem:[#allocation3 + $0x10] sm:$0x3] %vm405, %v3228
  %v3231 = vsel %vm193, %v3228, 0
  %3233 = vmatprep.subr.mxu0 0.0
  %3234 = vmatpush1.msra.mxu0 %v2251
  %3235 = vmatprep.subr.mxu0 0.0
  %3236 = vmatpush1.msra.mxu0 %v2252
  %3237 = vmatprep.subr.mxu0 0.0
  %3238 = vmatpush1.msra.mxu0 %v2253
  %3239 = vmatprep.subr.mxu0 0.0
  %3240 = vmatpush1.msra.mxu0 %v2254
  %3241 = vmatprep.subr.mxu0 0.0
  %3242 = vmatpush1.msra.mxu0 0.0
  %3243 = vmatprep.subr.mxu0 0.0
  %3244 = vmatpush1.msra.mxu0 0.0
  %3245 = vmatprep.subr.mxu0 0.0
  %3246 = vmatpush1.msra.mxu0 0.0
  %3247 = vmatprep.subr.mxu0 0.0
  %3248 = vmatpush1.msra.mxu0 0.0
  %3249 = vmatprep.subr.mxu0 0.0
  %3250 = vmatpush1.msra.mxu0 0.0
  %3251 = vmatprep.subr.mxu0 0.0
  %3252 = vmatpush1.msra.mxu0 0.0
  %3253 = vmatprep.subr.mxu0 0.0
  %3254 = vmatpush1.msra.mxu0 0.0
  %3255 = vmatprep.subr.mxu0 0.0
  %3256 = vmatpush1.msra.mxu0 0.0
  %3257 = vmatprep.subr.mxu0 0.0
  %3258 = vmatpush1.msra.mxu0 0.0
  %3259 = vmatprep.subr.mxu0 0.0
  %3260 = vmatpush1.msra.mxu0 0.0
  %3261 = vmatprep.subr.mxu0 0.0
  %3262 = vmatpush1.msra.mxu0 0.0
  %3263 = vmatprep.subr.mxu0 0.0
  %3264 = vmatpush1.msra.mxu0 0.0
  %3265 = vmatprep.subr.mxu0 0.0
  %3266 = vmatpush1.msra.mxu0 0.0
  %3267 = vmatprep.subr.mxu0 0.0
  %3268 = vmatpush1.msra.mxu0 0.0
  %3269 = vmatprep.subr.mxu0 0.0
  %3270 = vmatpush1.msra.mxu0 0.0
  %3271 = vmatprep.subr.mxu0 0.0
  %3272 = vmatpush1.msra.mxu0 0.0
  %3273 = vmatprep.subr.mxu0 0.0
  %3274 = vmatpush1.msra.mxu0 0.0
  %3275 = vmatprep.subr.mxu0 0.0
  %3276 = vmatpush1.msra.mxu0 0.0
  %3277 = vmatprep.subr.mxu0 0.0
  %3278 = vmatpush1.msra.mxu0 0.0
  %3279 = vmatprep.subr.mxu0 0.0
  %3280 = vmatpush1.msra.mxu0 0.0
  %3281 = vmatprep.subr.mxu0 0.0
  %3282 = vmatpush1.msra.mxu0 0.0
  %3283 = vmatprep.subr.mxu0 0.0
  %3284 = vmatpush1.msra.mxu0 0.0
  %3285 = vmatprep.subr.mxu0 0.0
  %3286 = vmatpush1.msra.mxu0 0.0
  %3287 = vmatprep.subr.mxu0 0.0
  %3288 = vmatpush1.msra.mxu0 0.0
  %3289 = vmatprep.subr.mxu0 0.0
  %3290 = vmatpush1.msra.mxu0 0.0
  %3291 = vmatprep.subr.mxu0 0.0
  %3292 = vmatpush1.msra.mxu0 0.0
  %3293 = vmatprep.subr.mxu0 0.0
  %3294 = vmatpush1.msra.mxu0 0.0
  %3295 = vmatprep.subr.mxu0 0.0
  %3296 = vmatpush1.msra.mxu0 0.0
  %3297 = vmatprep.mubr.f32.mxu0 0.0
  %3298 = vmatmul.mubr.f32.gmra.mrb[0].mxu0 %v3231
  %v3299 = vpop.f32.mrb[0].mxu0
  %v3300 = vadd.f32 %v2260, %v3299
  %v3301 = vpop.f32.mrb[0].mxu0
  %3302 = vdwg.mxu0
  %v3304 = vrot.slane %v3300, 6
  %v3306 = vadd.f32 %v2249, %v3304
  %v3307 = vxor.u32 %v3306, 2147483648
  %v3308 = vmul.f32 %v3307, 1.442695
  %v3309 = vpow.pop %v3308
  %v3310 = vadd.f32 %v3309, 1.0
  %v3311 = vrcp.pop %v3310
  %v3312 = vmul.f32 1.0, %v3311
  %3313 = vrot.lane.b32.xlu0 %v3304, 64
  %v3314 = vpop.permute.xlu0 %3313
  %v3316 = vmul.f32 %v3312, %v3314
  %3318 = vrot.lane.b32.xlu0 %v3316, 64
  %v3319 = vpop.permute.xlu0 %3318
  %v3321 = vadd.f32 %v2249, %v3319
  %v3322 = vtanh.pop %v3321
  %v3323 = vsub.f32 1.0, %v3312
  %3325 = vrot.lane.b32.xlu0 %v3322, 96
  %v3326 = vpop.permute.xlu0 %3325
  %v3328 = vmul.f32 %v3323, %v3326
  %v3329 = vrot.slane %v3225, 6
  %v3331 = vmul.f32 %v3312, %v3329
  %v3332 = vadd.f32 %v3328, %v3331
  %3334 = vrot.lane.b32.xlu0 %v3332, 96
  %v3335 = vpop.permute.xlu0 %3334
  %3337 = vst.msk [vmem:[#allocation3 + $0x10] sm:$0xc] %vm513, %v3335
  %v3338 = vrot.slane %v3332, 2
  %3339 = vrot.lane.b32.xlu0 %v3338, 96
  %v3340 = vpop.permute.xlu0 %3339
  %v3341 = vsel %vm193, %v3340, 0
  %3343 = vmatprep.subr.mxu0 0.0
  %3344 = vmatpush1.msra.mxu0 %v2251
  %3345 = vmatprep.subr.mxu0 0.0
  %3346 = vmatpush1.msra.mxu0 %v2252
  %3347 = vmatprep.subr.mxu0 0.0
  %3348 = vmatpush1.msra.mxu0 %v2253
  %3349 = vmatprep.subr.mxu0 0.0
  %3350 = vmatpush1.msra.mxu0 %v2254
  %3351 = vmatprep.subr.mxu0 0.0
  %3352 = vmatpush1.msra.mxu0 0.0
  %3353 = vmatprep.subr.mxu0 0.0
  %3354 = vmatpush1.msra.mxu0 0.0
  %3355 = vmatprep.subr.mxu0 0.0
  %3356 = vmatpush1.msra.mxu0 0.0
  %3357 = vmatprep.subr.mxu0 0.0
  %3358 = vmatpush1.msra.mxu0 0.0
  %3359 = vmatprep.subr.mxu0 0.0
  %3360 = vmatpush1.msra.mxu0 0.0
  %3361 = vmatprep.subr.mxu0 0.0
  %3362 = vmatpush1.msra.mxu0 0.0
  %3363 = vmatprep.subr.mxu0 0.0
  %3364 = vmatpush1.msra.mxu0 0.0
  %3365 = vmatprep.subr.mxu0 0.0
  %3366 = vmatpush1.msra.mxu0 0.0
  %3367 = vmatprep.subr.mxu0 0.0
  %3368 = vmatpush1.msra.mxu0 0.0
  %3369 = vmatprep.subr.mxu0 0.0
  %3370 = vmatpush1.msra.mxu0 0.0
  %3371 = vmatprep.subr.mxu0 0.0
  %3372 = vmatpush1.msra.mxu0 0.0
  %3373 = vmatprep.subr.mxu0 0.0
  %3374 = vmatpush1.msra.mxu0 0.0
  %3375 = vmatprep.subr.mxu0 0.0
  %3376 = vmatpush1.msra.mxu0 0.0
  %3377 = vmatprep.subr.mxu0 0.0
  %3378 = vmatpush1.msra.mxu0 0.0
  %3379 = vmatprep.subr.mxu0 0.0
  %3380 = vmatpush1.msra.mxu0 0.0
  %3381 = vmatprep.subr.mxu0 0.0
  %3382 = vmatpush1.msra.mxu0 0.0
  %3383 = vmatprep.subr.mxu0 0.0
  %3384 = vmatpush1.msra.mxu0 0.0
  %3385 = vmatprep.subr.mxu0 0.0
  %3386 = vmatpush1.msra.mxu0 0.0
  %3387 = vmatprep.subr.mxu0 0.0
  %3388 = vmatpush1.msra.mxu0 0.0
  %3389 = vmatprep.subr.mxu0 0.0
  %3390 = vmatpush1.msra.mxu0 0.0
  %3391 = vmatprep.subr.mxu0 0.0
  %3392 = vmatpush1.msra.mxu0 0.0
  %3393 = vmatprep.subr.mxu0 0.0
  %3394 = vmatpush1.msra.mxu0 0.0
  %3395 = vmatprep.subr.mxu0 0.0
  %3396 = vmatpush1.msra.mxu0 0.0
  %3397 = vmatprep.subr.mxu0 0.0
  %3398 = vmatpush1.msra.mxu0 0.0
  %3399 = vmatprep.subr.mxu0 0.0
  %3400 = vmatpush1.msra.mxu0 0.0
  %3401 = vmatprep.subr.mxu0 0.0
  %3402 = vmatpush1.msra.mxu0 0.0
  %3403 = vmatprep.subr.mxu0 0.0
  %3404 = vmatpush1.msra.mxu0 0.0
  %3405 = vmatprep.subr.mxu0 0.0
  %3406 = vmatpush1.msra.mxu0 0.0
  %3407 = vmatprep.mubr.f32.mxu0 0.0
  %3408 = vmatmul.mubr.f32.gmra.mrb[0].mxu0 %v3341
  %v3409 = vpop.f32.mrb[0].mxu0
  %v3410 = vadd.f32 %v2260, %v3409
  %v3411 = vpop.f32.mrb[0].mxu0
  %3412 = vdwg.mxu0
  %v3414 = vrot.slane %v3410, 4
  %v3416 = vadd.f32 %v2249, %v3414
  %v3417 = vxor.u32 %v3416, 2147483648
  %v3418 = vmul.f32 %v3417, 1.442695
  %v3419 = vpow.pop %v3418
  %v3420 = vadd.f32 %v3419, 1.0
  %v3421 = vrcp.pop %v3420
  %v3422 = vmul.f32 1.0, %v3421
  %3423 = vrot.lane.b32.xlu0 %v3414, 64
  %v3424 = vpop.permute.xlu0 %3423
  %v3426 = vmul.f32 %v3422, %v3424
  %3428 = vrot.lane.b32.xlu0 %v3426, 64
  %v3429 = vpop.permute.xlu0 %3428
  %v3431 = vadd.f32 %v2249, %v3429
  %v3432 = vtanh.pop %v3431
  %v3433 = vsub.f32 1.0, %v3422
  %3435 = vrot.lane.b32.xlu0 %v3432, 96
  %v3436 = vpop.permute.xlu0 %3435
  %v3438 = vmul.f32 %v3433, %v3436
  %v3439 = vrot.slane %v3332, 6
  %v3441 = vmul.f32 %v3422, %v3439
  %v3442 = vadd.f32 %v3438, %v3441
  %3444 = vrot.lane.b32.xlu0 %v3442, 96
  %v3445 = vpop.permute.xlu0 %3444
  %3447 = vst.msk [vmem:[#allocation3 + $0x10] sm:$0x30] %vm624, %v3445
  %v3448 = vrot.slane %v3442, 4
  %3449 = vrot.lane.b32.xlu0 %v3448, 96
  %v3450 = vpop.permute.xlu0 %3449
  %v3451 = vsel %vm193, %v3450, 0
  %3453 = vmatprep.subr.mxu0 0.0
  %3454 = vmatpush1.msra.mxu0 %v2251
  %3455 = vmatprep.subr.mxu0 0.0
  %3456 = vmatpush1.msra.mxu0 %v2252
  %3457 = vmatprep.subr.mxu0 0.0
  %3458 = vmatpush1.msra.mxu0 %v2253
  %3459 = vmatprep.subr.mxu0 0.0
  %3460 = vmatpush1.msra.mxu0 %v2254
  %3461 = vmatprep.subr.mxu0 0.0
  %3462 = vmatpush1.msra.mxu0 0.0
  %3463 = vmatprep.subr.mxu0 0.0
  %3464 = vmatpush1.msra.mxu0 0.0
  %3465 = vmatprep.subr.mxu0 0.0
  %3466 = vmatpush1.msra.mxu0 0.0
  %3467 = vmatprep.subr.mxu0 0.0
  %3468 = vmatpush1.msra.mxu0 0.0
  %3469 = vmatprep.subr.mxu0 0.0
  %3470 = vmatpush1.msra.mxu0 0.0
  %3471 = vmatprep.subr.mxu0 0.0
  %3472 = vmatpush1.msra.mxu0 0.0
  %3473 = vmatprep.subr.mxu0 0.0
  %3474 = vmatpush1.msra.mxu0 0.0
  %3475 = vmatprep.subr.mxu0 0.0
  %3476 = vmatpush1.msra.mxu0 0.0
  %3477 = vmatprep.subr.mxu0 0.0
  %3478 = vmatpush1.msra.mxu0 0.0
  %3479 = vmatprep.subr.mxu0 0.0
  %3480 = vmatpush1.msra.mxu0 0.0
  %3481 = vmatprep.subr.mxu0 0.0
  %3482 = vmatpush1.msra.mxu0 0.0
  %3483 = vmatprep.subr.mxu0 0.0
  %3484 = vmatpush1.msra.mxu0 0.0
  %3485 = vmatprep.subr.mxu0 0.0
  %3486 = vmatpush1.msra.mxu0 0.0
  %3487 = vmatprep.subr.mxu0 0.0
  %3488 = vmatpush1.msra.mxu0 0.0
  %3489 = vmatprep.subr.mxu0 0.0
  %3490 = vmatpush1.msra.mxu0 0.0
  %3491 = vmatprep.subr.mxu0 0.0
  %3492 = vmatpush1.msra.mxu0 0.0
  %3493 = vmatprep.subr.mxu0 0.0
  %3494 = vmatpush1.msra.mxu0 0.0
  %3495 = vmatprep.subr.mxu0 0.0
  %3496 = vmatpush1.msra.mxu0 0.0
  %3497 = vmatprep.subr.mxu0 0.0
  %3498 = vmatpush1.msra.mxu0 0.0
  %3499 = vmatprep.subr.mxu0 0.0
  %3500 = vmatpush1.msra.mxu0 0.0
  %3501 = vmatprep.subr.mxu0 0.0
  %3502 = vmatpush1.msra.mxu0 0.0
  %3503 = vmatprep.subr.mxu0 0.0
  %3504 = vmatpush1.msra.mxu0 0.0
  %3505 = vmatprep.subr.mxu0 0.0
  %3506 = vmatpush1.msra.mxu0 0.0
  %3507 = vmatprep.subr.mxu0 0.0
  %3508 = vmatpush1.msra.mxu0 0.0
  %3509 = vmatprep.subr.mxu0 0.0
  %3510 = vmatpush1.msra.mxu0 0.0
  %3511 = vmatprep.subr.mxu0 0.0
  %3512 = vmatpush1.msra.mxu0 0.0
  %3513 = vmatprep.subr.mxu0 0.0
  %3514 = vmatpush1.msra.mxu0 0.0
  %3515 = vmatprep.subr.mxu0 0.0
  %3516 = vmatpush1.msra.mxu0 0.0
  %3517 = vmatprep.mubr.f32.mxu0 0.0
  %3518 = vmatmul.mubr.f32.gmra.mrb[0].mxu0 %v3451
  %v3519 = vpop.f32.mrb[0].mxu0
  %v3520 = vadd.f32 %v2260, %v3519
  %v3521 = vpop.f32.mrb[0].mxu0
  %3522 = vdwg.mxu0
  %v3524 = vrot.slane %v3520, 2
  %v3526 = vadd.f32 %v2249, %v3524
  %v3527 = vxor.u32 %v3526, 2147483648
  %v3528 = vmul.f32 %v3527, 1.442695
  %v3529 = vpow.pop %v3528
  %v3530 = vadd.f32 %v3529, 1.0
  %v3531 = vrcp.pop %v3530
  %v3532 = vmul.f32 1.0, %v3531
  %3533 = vrot.lane.b32.xlu0 %v3524, 64
  %v3534 = vpop.permute.xlu0 %3533
  %v3536 = vmul.f32 %v3532, %v3534
  %3538 = vrot.lane.b32.xlu0 %v3536, 64
  %v3539 = vpop.permute.xlu0 %3538
  %v3541 = vadd.f32 %v2249, %v3539
  %v3542 = vtanh.pop %v3541
  %v3543 = vsub.f32 1.0, %v3532
  %3545 = vrot.lane.b32.xlu0 %v3542, 96
  %v3546 = vpop.permute.xlu0 %3545
  %v3548 = vmul.f32 %v3543, %v3546
  %v3549 = vrot.slane %v3442, 6
  %v3551 = vmul.f32 %v3532, %v3549
  %v3552 = vadd.f32 %v3548, %v3551
  %3554 = vrot.lane.b32.xlu0 %v3552, 96
  %v3555 = vpop.permute.xlu0 %3554
  %3557 = vst.msk [vmem:[#allocation3 + $0x10] sm:$0xc0] %vm735, %v3555
  %v3558 = vrot.slane %v3552, 6
  %3559 = vrot.lane.b32.xlu0 %v3558, 96
  %v3560 = vpop.permute.xlu0 %3559
  %v3561 = vsel %vm193, %v3560, 0
  %3563 = vmatprep.subr.mxu0 0.0
  %3564 = vmatpush1.msra.mxu0 %v2251
  %3565 = vmatprep.subr.mxu0 0.0
  %3566 = vmatpush1.msra.mxu0 %v2252
  %3567 = vmatprep.subr.mxu0 0.0
  %3568 = vmatpush1.msra.mxu0 %v2253
  %3569 = vmatprep.subr.mxu0 0.0
  %3570 = vmatpush1.msra.mxu0 %v2254
  %3571 = vmatprep.subr.mxu0 0.0
  %3572 = vmatpush1.msra.mxu0 0.0
  %3573 = vmatprep.subr.mxu0 0.0
  %3574 = vmatpush1.msra.mxu0 0.0
  %3575 = vmatprep.subr.mxu0 0.0
  %3576 = vmatpush1.msra.mxu0 0.0
  %3577 = vmatprep.subr.mxu0 0.0
  %3578 = vmatpush1.msra.mxu0 0.0
  %3579 = vmatprep.subr.mxu0 0.0
  %3580 = vmatpush1.msra.mxu0 0.0
  %3581 = vmatprep.subr.mxu0 0.0
  %3582 = vmatpush1.msra.mxu0 0.0
  %3583 = vmatprep.subr.mxu0 0.0
  %3584 = vmatpush1.msra.mxu0 0.0
  %3585 = vmatprep.subr.mxu0 0.0
  %3586 = vmatpush1.msra.mxu0 0.0
  %3587 = vmatprep.subr.mxu0 0.0
  %3588 = vmatpush1.msra.mxu0 0.0
  %3589 = vmatprep.subr.mxu0 0.0
  %3590 = vmatpush1.msra.mxu0 0.0
  %3591 = vmatprep.subr.mxu0 0.0
  %3592 = vmatpush1.msra.mxu0 0.0
  %3593 = vmatprep.subr.mxu0 0.0
  %3594 = vmatpush1.msra.mxu0 0.0
  %3595 = vmatprep.subr.mxu0 0.0
  %3596 = vmatpush1.msra.mxu0 0.0
  %3597 = vmatprep.subr.mxu0 0.0
  %3598 = vmatpush1.msra.mxu0 0.0
  %3599 = vmatprep.subr.mxu0 0.0
  %3600 = vmatpush1.msra.mxu0 0.0
  %3601 = vmatprep.subr.mxu0 0.0
  %3602 = vmatpush1.msra.mxu0 0.0
  %3603 = vmatprep.subr.mxu0 0.0
  %3604 = vmatpush1.msra.mxu0 0.0
  %3605 = vmatprep.subr.mxu0 0.0
  %3606 = vmatpush1.msra.mxu0 0.0
  %3607 = vmatprep.subr.mxu0 0.0
  %3608 = vmatpush1.msra.mxu0 0.0
  %3609 = vmatprep.subr.mxu0 0.0
  %3610 = vmatpush1.msra.mxu0 0.0
  %3611 = vmatprep.subr.mxu0 0.0
  %3612 = vmatpush1.msra.mxu0 0.0
  %3613 = vmatprep.subr.mxu0 0.0
  %3614 = vmatpush1.msra.mxu0 0.0
  %3615 = vmatprep.subr.mxu0 0.0
  %3616 = vmatpush1.msra.mxu0 0.0
  %3617 = vmatprep.subr.mxu0 0.0
  %3618 = vmatpush1.msra.mxu0 0.0
  %3619 = vmatprep.subr.mxu0 0.0
  %3620 = vmatpush1.msra.mxu0 0.0
  %3621 = vmatprep.subr.mxu0 0.0
  %3622 = vmatpush1.msra.mxu0 0.0
  %3623 = vmatprep.subr.mxu0 0.0
  %3624 = vmatpush1.msra.mxu0 0.0
  %3625 = vmatprep.subr.mxu0 0.0
  %3626 = vmatpush1.msra.mxu0 0.0
  %3627 = vmatprep.mubr.f32.mxu0 0.0
  %3628 = vmatmul.mubr.f32.gmra.mrb[0].mxu0 %v3561
  %v3629 = vpop.f32.mrb[0].mxu0
  %v3630 = vadd.f32 %v2260, %v3629
  %v3631 = vpop.f32.mrb[0].mxu0
  %3632 = vdwg.mxu0
  %v3633 = vadd.f32 %v2250, %v3630
  %v3634 = vxor.u32 %v3633, 2147483648
  %v3635 = vmul.f32 %v3634, 1.442695
  %v3636 = vpow.pop %v3635
  %v3637 = vadd.f32 %v3636, 1.0
  %v3638 = vrcp.pop %v3637
  %v3639 = vmul.f32 1.0, %v3638
  %3641 = vrot.lane.b32.xlu0 %v3630, 64
  %v3642 = vpop.permute.xlu0 %3641
  %v3644 = vmul.f32 %v3639, %v3642
  %3646 = vrot.lane.b32.xlu0 %v3644, 64
  %v3647 = vpop.permute.xlu0 %3646
  %v3649 = vadd.f32 %v2250, %v3647
  %v3650 = vtanh.pop %v3649
  %v3651 = vsub.f32 1.0, %v3639
  %3653 = vrot.lane.b32.xlu0 %v3650, 96
  %v3654 = vpop.permute.xlu0 %3653
  %v3656 = vmul.f32 %v3651, %v3654
  %v3658 = vmul.f32 %v3639, %v3558
  %v3659 = vadd.f32 %v3656, %v3658
  %3661 = vrot.lane.b32.xlu0 %v3659, 96
  %v3662 = vpop.permute.xlu0 %3661
  %3664 = vst.msk [vmem:[#allocation3 + $0x18] sm:$0x3] %vm405, %v3662
  %v3665 = vsel %vm193, %v3662, 0
  %3667 = vmatprep.subr.mxu0 0.0
  %3668 = vmatpush1.msra.mxu0 %v2251
  %3669 = vmatprep.subr.mxu0 0.0
  %3670 = vmatpush1.msra.mxu0 %v2252
  %3671 = vmatprep.subr.mxu0 0.0
  %3672 = vmatpush1.msra.mxu0 %v2253
  %3673 = vmatprep.subr.mxu0 0.0
  %3674 = vmatpush1.msra.mxu0 %v2254
  %3675 = vmatprep.subr.mxu0 0.0
  %3676 = vmatpush1.msra.mxu0 0.0
  %3677 = vmatprep.subr.mxu0 0.0
  %3678 = vmatpush1.msra.mxu0 0.0
  %3679 = vmatprep.subr.mxu0 0.0
  %3680 = vmatpush1.msra.mxu0 0.0
  %3681 = vmatprep.subr.mxu0 0.0
  %3682 = vmatpush1.msra.mxu0 0.0
  %3683 = vmatprep.subr.mxu0 0.0
  %3684 = vmatpush1.msra.mxu0 0.0
  %3685 = vmatprep.subr.mxu0 0.0
  %3686 = vmatpush1.msra.mxu0 0.0
  %3687 = vmatprep.subr.mxu0 0.0
  %3688 = vmatpush1.msra.mxu0 0.0
  %3689 = vmatprep.subr.mxu0 0.0
  %3690 = vmatpush1.msra.mxu0 0.0
  %3691 = vmatprep.subr.mxu0 0.0
  %3692 = vmatpush1.msra.mxu0 0.0
  %3693 = vmatprep.subr.mxu0 0.0
  %3694 = vmatpush1.msra.mxu0 0.0
  %3695 = vmatprep.subr.mxu0 0.0
  %3696 = vmatpush1.msra.mxu0 0.0
  %3697 = vmatprep.subr.mxu0 0.0
  %3698 = vmatpush1.msra.mxu0 0.0
  %3699 = vmatprep.subr.mxu0 0.0
  %3700 = vmatpush1.msra.mxu0 0.0
  %3701 = vmatprep.subr.mxu0 0.0
  %3702 = vmatpush1.msra.mxu0 0.0
  %3703 = vmatprep.subr.mxu0 0.0
  %3704 = vmatpush1.msra.mxu0 0.0
  %3705 = vmatprep.subr.mxu0 0.0
  %3706 = vmatpush1.msra.mxu0 0.0
  %3707 = vmatprep.subr.mxu0 0.0
  %3708 = vmatpush1.msra.mxu0 0.0
  %3709 = vmatprep.subr.mxu0 0.0
  %3710 = vmatpush1.msra.mxu0 0.0
  %3711 = vmatprep.subr.mxu0 0.0
  %3712 = vmatpush1.msra.mxu0 0.0
  %3713 = vmatprep.subr.mxu0 0.0
  %3714 = vmatpush1.msra.mxu0 0.0
  %3715 = vmatprep.subr.mxu0 0.0
  %3716 = vmatpush1.msra.mxu0 0.0
  %3717 = vmatprep.subr.mxu0 0.0
  %3718 = vmatpush1.msra.mxu0 0.0
  %3719 = vmatprep.subr.mxu0 0.0
  %3720 = vmatpush1.msra.mxu0 0.0
  %3721 = vmatprep.subr.mxu0 0.0
  %3722 = vmatpush1.msra.mxu0 0.0
  %3723 = vmatprep.subr.mxu0 0.0
  %3724 = vmatpush1.msra.mxu0 0.0
  %3725 = vmatprep.subr.mxu0 0.0
  %3726 = vmatpush1.msra.mxu0 0.0
  %3727 = vmatprep.subr.mxu0 0.0
  %3728 = vmatpush1.msra.mxu0 0.0
  %3729 = vmatprep.subr.mxu0 0.0
  %3730 = vmatpush1.msra.mxu0 0.0
  %3731 = vmatprep.mubr.f32.mxu0 0.0
  %3732 = vmatmul.mubr.f32.gmra.mrb[0].mxu0 %v3665
  %v3733 = vpop.f32.mrb[0].mxu0
  %v3734 = vadd.f32 %v2260, %v3733
  %v3735 = vpop.f32.mrb[0].mxu0
  %3736 = vdwg.mxu0
  %v3738 = vrot.slane %v3734, 6
  %v3740 = vadd.f32 %v2250, %v3738
  %v3741 = vxor.u32 %v3740, 2147483648
  %v3742 = vmul.f32 %v3741, 1.442695
  %v3743 = vpow.pop %v3742
  %v3744 = vadd.f32 %v3743, 1.0
  %v3745 = vrcp.pop %v3744
  %v3746 = vmul.f32 1.0, %v3745
  %3747 = vrot.lane.b32.xlu0 %v3738, 64
  %v3748 = vpop.permute.xlu0 %3747
  %v3750 = vmul.f32 %v3746, %v3748
  %3752 = vrot.lane.b32.xlu0 %v3750, 64
  %v3753 = vpop.permute.xlu0 %3752
  %v3755 = vadd.f32 %v2250, %v3753
  %v3756 = vtanh.pop %v3755
  %v3757 = vsub.f32 1.0, %v3746
  %3759 = vrot.lane.b32.xlu0 %v3756, 96
  %v3760 = vpop.permute.xlu0 %3759
  %v3762 = vmul.f32 %v3757, %v3760
  %v3763 = vrot.slane %v3659, 6
  %v3765 = vmul.f32 %v3746, %v3763
  %v3766 = vadd.f32 %v3762, %v3765
  %3768 = vrot.lane.b32.xlu0 %v3766, 96
  %v3769 = vpop.permute.xlu0 %3768
  %3771 = vst.msk [vmem:[#allocation3 + $0x18] sm:$0xc] %vm513, %v3769
  %v3772 = vrot.slane %v3766, 2
  %3773 = vrot.lane.b32.xlu0 %v3772, 96
  %v3774 = vpop.permute.xlu0 %3773
  %v3775 = vsel %vm193, %v3774, 0
  %3777 = vmatprep.subr.mxu0 0.0
  %3778 = vmatpush1.msra.mxu0 %v2251
  %3779 = vmatprep.subr.mxu0 0.0
  %3780 = vmatpush1.msra.mxu0 %v2252
  %3781 = vmatprep.subr.mxu0 0.0
  %3782 = vmatpush1.msra.mxu0 %v2253
  %3783 = vmatprep.subr.mxu0 0.0
  %3784 = vmatpush1.msra.mxu0 %v2254
  %3785 = vmatprep.subr.mxu0 0.0
  %3786 = vmatpush1.msra.mxu0 0.0
  %3787 = vmatprep.subr.mxu0 0.0
  %3788 = vmatpush1.msra.mxu0 0.0
  %3789 = vmatprep.subr.mxu0 0.0
  %3790 = vmatpush1.msra.mxu0 0.0
  %3791 = vmatprep.subr.mxu0 0.0
  %3792 = vmatpush1.msra.mxu0 0.0
  %3793 = vmatprep.subr.mxu0 0.0
  %3794 = vmatpush1.msra.mxu0 0.0
  %3795 = vmatprep.subr.mxu0 0.0
  %3796 = vmatpush1.msra.mxu0 0.0
  %3797 = vmatprep.subr.mxu0 0.0
  %3798 = vmatpush1.msra.mxu0 0.0
  %3799 = vmatprep.subr.mxu0 0.0
  %3800 = vmatpush1.msra.mxu0 0.0
  %3801 = vmatprep.subr.mxu0 0.0
  %3802 = vmatpush1.msra.mxu0 0.0
  %3803 = vmatprep.subr.mxu0 0.0
  %3804 = vmatpush1.msra.mxu0 0.0
  %3805 = vmatprep.subr.mxu0 0.0
  %3806 = vmatpush1.msra.mxu0 0.0
  %3807 = vmatprep.subr.mxu0 0.0
  %3808 = vmatpush1.msra.mxu0 0.0
  %3809 = vmatprep.subr.mxu0 0.0
  %3810 = vmatpush1.msra.mxu0 0.0
  %3811 = vmatprep.subr.mxu0 0.0
  %3812 = vmatpush1.msra.mxu0 0.0
  %3813 = vmatprep.subr.mxu0 0.0
  %3814 = vmatpush1.msra.mxu0 0.0
  %3815 = vmatprep.subr.mxu0 0.0
  %3816 = vmatpush1.msra.mxu0 0.0
  %3817 = vmatprep.subr.mxu0 0.0
  %3818 = vmatpush1.msra.mxu0 0.0
  %3819 = vmatprep.subr.mxu0 0.0
  %3820 = vmatpush1.msra.mxu0 0.0
  %3821 = vmatprep.subr.mxu0 0.0
  %3822 = vmatpush1.msra.mxu0 0.0
  %3823 = vmatprep.subr.mxu0 0.0
  %3824 = vmatpush1.msra.mxu0 0.0
  %3825 = vmatprep.subr.mxu0 0.0
  %3826 = vmatpush1.msra.mxu0 0.0
  %3827 = vmatprep.subr.mxu0 0.0
  %3828 = vmatpush1.msra.mxu0 0.0
  %3829 = vmatprep.subr.mxu0 0.0
  %3830 = vmatpush1.msra.mxu0 0.0
  %3831 = vmatprep.subr.mxu0 0.0
  %3832 = vmatpush1.msra.mxu0 0.0
  %3833 = vmatprep.subr.mxu0 0.0
  %3834 = vmatpush1.msra.mxu0 0.0
  %3835 = vmatprep.subr.mxu0 0.0
  %3836 = vmatpush1.msra.mxu0 0.0
  %3837 = vmatprep.subr.mxu0 0.0
  %3838 = vmatpush1.msra.mxu0 0.0
  %3839 = vmatprep.subr.mxu0 0.0
  %3840 = vmatpush1.msra.mxu0 0.0
  %3841 = vmatprep.mubr.f32.mxu0 0.0
  %3842 = vmatmul.mubr.f32.gmra.mrb[0].mxu0 %v3775
  %v3843 = vpop.f32.mrb[0].mxu0
  %v3844 = vadd.f32 %v2260, %v3843
  %v3845 = vpop.f32.mrb[0].mxu0
  %3846 = vdwg.mxu0
  %v3848 = vrot.slane %v3844, 4
  %v3850 = vadd.f32 %v2250, %v3848
  %v3851 = vxor.u32 %v3850, 2147483648
  %v3852 = vmul.f32 %v3851, 1.442695
  %v3853 = vpow.pop %v3852
  %v3854 = vadd.f32 %v3853, 1.0
  %v3855 = vrcp.pop %v3854
  %v3856 = vmul.f32 1.0, %v3855
  %3857 = vrot.lane.b32.xlu0 %v3848, 64
  %v3858 = vpop.permute.xlu0 %3857
  %v3860 = vmul.f32 %v3856, %v3858
  %3862 = vrot.lane.b32.xlu0 %v3860, 64
  %v3863 = vpop.permute.xlu0 %3862
  %v3865 = vadd.f32 %v2250, %v3863
  %v3866 = vtanh.pop %v3865
  %v3867 = vsub.f32 1.0, %v3856
  %3869 = vrot.lane.b32.xlu0 %v3866, 96
  %v3870 = vpop.permute.xlu0 %3869
  %v3872 = vmul.f32 %v3867, %v3870
  %v3873 = vrot.slane %v3766, 6
  %v3875 = vmul.f32 %v3856, %v3873
  %v3876 = vadd.f32 %v3872, %v3875
  %3878 = vrot.lane.b32.xlu0 %v3876, 96
  %v3879 = vpop.permute.xlu0 %3878
  %3881 = vst.msk [vmem:[#allocation3 + $0x18] sm:$0x30] %vm624, %v3879
  %v3882 = vrot.slane %v3876, 4
  %3883 = vrot.lane.b32.xlu0 %v3882, 96
  %v3884 = vpop.permute.xlu0 %3883
  %v3885 = vsel %vm193, %v3884, 0
  %3887 = vmatprep.subr.mxu0 0.0
  %3888 = vmatpush1.msra.mxu0 %v2251
  %3889 = vmatprep.subr.mxu0 0.0
  %3890 = vmatpush1.msra.mxu0 %v2252
  %3891 = vmatprep.subr.mxu0 0.0
  %3892 = vmatpush1.msra.mxu0 %v2253
  %3893 = vmatprep.subr.mxu0 0.0
  %3894 = vmatpush1.msra.mxu0 %v2254
  %3895 = vmatprep.subr.mxu0 0.0
  %3896 = vmatpush1.msra.mxu0 0.0
  %3897 = vmatprep.subr.mxu0 0.0
  %3898 = vmatpush1.msra.mxu0 0.0
  %3899 = vmatprep.subr.mxu0 0.0
  %3900 = vmatpush1.msra.mxu0 0.0
  %3901 = vmatprep.subr.mxu0 0.0
  %3902 = vmatpush1.msra.mxu0 0.0
  %3903 = vmatprep.subr.mxu0 0.0
  %3904 = vmatpush1.msra.mxu0 0.0
  %3905 = vmatprep.subr.mxu0 0.0
  %3906 = vmatpush1.msra.mxu0 0.0
  %3907 = vmatprep.subr.mxu0 0.0
  %3908 = vmatpush1.msra.mxu0 0.0
  %3909 = vmatprep.subr.mxu0 0.0
  %3910 = vmatpush1.msra.mxu0 0.0
  %3911 = vmatprep.subr.mxu0 0.0
  %3912 = vmatpush1.msra.mxu0 0.0
  %3913 = vmatprep.subr.mxu0 0.0
  %3914 = vmatpush1.msra.mxu0 0.0
  %3915 = vmatprep.subr.mxu0 0.0
  %3916 = vmatpush1.msra.mxu0 0.0
  %3917 = vmatprep.subr.mxu0 0.0
  %3918 = vmatpush1.msra.mxu0 0.0
  %3919 = vmatprep.subr.mxu0 0.0
  %3920 = vmatpush1.msra.mxu0 0.0
  %3921 = vmatprep.subr.mxu0 0.0
  %3922 = vmatpush1.msra.mxu0 0.0
  %3923 = vmatprep.subr.mxu0 0.0
  %3924 = vmatpush1.msra.mxu0 0.0
  %3925 = vmatprep.subr.mxu0 0.0
  %3926 = vmatpush1.msra.mxu0 0.0
  %3927 = vmatprep.subr.mxu0 0.0
  %3928 = vmatpush1.msra.mxu0 0.0
  %3929 = vmatprep.subr.mxu0 0.0
  %3930 = vmatpush1.msra.mxu0 0.0
  %3931 = vmatprep.subr.mxu0 0.0
  %3932 = vmatpush1.msra.mxu0 0.0
  %3933 = vmatprep.subr.mxu0 0.0
  %3934 = vmatpush1.msra.mxu0 0.0
  %3935 = vmatprep.subr.mxu0 0.0
  %3936 = vmatpush1.msra.mxu0 0.0
  %3937 = vmatprep.subr.mxu0 0.0
  %3938 = vmatpush1.msra.mxu0 0.0
  %3939 = vmatprep.subr.mxu0 0.0
  %3940 = vmatpush1.msra.mxu0 0.0
  %3941 = vmatprep.subr.mxu0 0.0
  %3942 = vmatpush1.msra.mxu0 0.0
  %3943 = vmatprep.subr.mxu0 0.0
  %3944 = vmatpush1.msra.mxu0 0.0
  %3945 = vmatprep.subr.mxu0 0.0
  %3946 = vmatpush1.msra.mxu0 0.0
  %3947 = vmatprep.subr.mxu0 0.0
  %3948 = vmatpush1.msra.mxu0 0.0
  %3949 = vmatprep.subr.mxu0 0.0
  %3950 = vmatpush1.msra.mxu0 0.0
  %3951 = vmatprep.mubr.f32.mxu0 0.0
  %3952 = vmatmul.mubr.f32.gmra.mrb[0].mxu0 %v3885
  %v3953 = vpop.f32.mrb[0].mxu0
  %v3954 = vadd.f32 %v2260, %v3953
  %v3955 = vpop.f32.mrb[0].mxu0
  %3956 = vdwg.mxu0
  %v3958 = vrot.slane %v3954, 2
  %v3960 = vadd.f32 %v2250, %v3958
  %v3961 = vxor.u32 %v3960, 2147483648
  %v3962 = vmul.f32 %v3961, 1.442695
  %v3963 = vpow.pop %v3962
  %v3964 = vadd.f32 %v3963, 1.0
  %v3965 = vrcp.pop %v3964
  %v3966 = vmul.f32 1.0, %v3965
  %3967 = vrot.lane.b32.xlu0 %v3958, 64
  %v3968 = vpop.permute.xlu0 %3967
  %v3970 = vmul.f32 %v3966, %v3968
  %3972 = vrot.lane.b32.xlu0 %v3970, 64
  %v3973 = vpop.permute.xlu0 %3972
  %v3975 = vadd.f32 %v2250, %v3973
  %v3976 = vtanh.pop %v3975
  %v3977 = vsub.f32 1.0, %v3966
  %3979 = vrot.lane.b32.xlu0 %v3976, 96
  %v3980 = vpop.permute.xlu0 %3979
  %v3982 = vmul.f32 %v3977, %v3980
  %v3983 = vrot.slane %v3876, 6
  %v3985 = vmul.f32 %v3966, %v3983
  %v3986 = vadd.f32 %v3982, %v3985
  %3988 = vrot.lane.b32.xlu0 %v3986, 96
  %v3989 = vpop.permute.xlu0 %3988
  %3991 = vst.msk [vmem:[#allocation3 + $0x18] sm:$0xc0] %vm735, %v3989
  %v3992 = vld [vmem:[#allocation3] sm:$0xff]
  %v3993 = vld [vmem:[#allocation3 + $0x8] sm:$0xff]
  %v3994 = vld [vmem:[#allocation3 + $0x10] sm:$0xff]
  %v3995 = vld [vmem:[#allocation3 + $0x18] sm:$0xff]
  %v3996 = vadd.f32 %v3992, %v2043
  %v3997 = vadd.f32 %v3993, %v2044
  %v3998 = vadd.f32 %v3994, %v2045
  %v3999 = vadd.f32 %v3995, %v2046
  %v4000 = vld [vmem:[%s12] sm:$0xff]
  %v4001 = vld [vmem:[%s12 + $0x8] sm:$0xff]
  %v4002 = vld [vmem:[%s12 + $0x10] sm:$0xff]
  %v4003 = vld [vmem:[%s12 + $0x18] sm:$0xff]
  %v4004 = vld [vmem:[%s13] sm:$0xff]
  %v4005 = vld [vmem:[%s13 + $0x8] sm:$0xff]
  %v4006 = vld [vmem:[%s13 + $0x10] sm:$0xff]
  %v4007 = vld [vmem:[%s13 + $0x18] sm:$0x1]
  %v4009 = vsel %vm93, %v4007, 0
  %4011 = vmatprep.subr.mxu0 0.0
  %4012 = vmatpush1.msra.mxu0 %v4004
  %4013 = vmatprep.subr.mxu0 0.0
  %4014 = vmatpush1.msra.mxu0 %v4005
  %4015 = vmatprep.subr.mxu0 0.0
  %4016 = vmatpush1.msra.mxu0 %v4006
  %4017 = vmatprep.subr.mxu0 0.0
  %4018 = vmatpush1.msra.mxu0 %v4009
  %4019 = vmatprep.subr.mxu0 0.0
  %4020 = vmatpush1.msra.mxu0 0.0
  %4021 = vmatprep.subr.mxu0 0.0
  %4022 = vmatpush1.msra.mxu0 0.0
  %4023 = vmatprep.subr.mxu0 0.0
  %4024 = vmatpush1.msra.mxu0 0.0
  %4025 = vmatprep.subr.mxu0 0.0
  %4026 = vmatpush1.msra.mxu0 0.0
  %4027 = vmatprep.subr.mxu0 0.0
  %4028 = vmatpush1.msra.mxu0 0.0
  %4029 = vmatprep.subr.mxu0 0.0
  %4030 = vmatpush1.msra.mxu0 0.0
  %4031 = vmatprep.subr.mxu0 0.0
  %4032 = vmatpush1.msra.mxu0 0.0
  %4033 = vmatprep.subr.mxu0 0.0
  %4034 = vmatpush1.msra.mxu0 0.0
  %4035 = vmatprep.subr.mxu0 0.0
  %4036 = vmatpush1.msra.mxu0 0.0
  %4037 = vmatprep.subr.mxu0 0.0
  %4038 = vmatpush1.msra.mxu0 0.0
  %4039 = vmatprep.subr.mxu0 0.0
  %4040 = vmatpush1.msra.mxu0 0.0
  %4041 = vmatprep.subr.mxu0 0.0
  %4042 = vmatpush1.msra.mxu0 0.0
  %4043 = vmatprep.subr.mxu0 0.0
  %4044 = vmatpush1.msra.mxu0 0.0
  %4045 = vmatprep.subr.mxu0 0.0
  %4046 = vmatpush1.msra.mxu0 0.0
  %4047 = vmatprep.subr.mxu0 0.0
  %4048 = vmatpush1.msra.mxu0 0.0
  %4049 = vmatprep.subr.mxu0 0.0
  %4050 = vmatpush1.msra.mxu0 0.0
  %4051 = vmatprep.subr.mxu0 0.0
  %4052 = vmatpush1.msra.mxu0 0.0
  %4053 = vmatprep.subr.mxu0 0.0
  %4054 = vmatpush1.msra.mxu0 0.0
  %4055 = vmatprep.subr.mxu0 0.0
  %4056 = vmatpush1.msra.mxu0 0.0
  %4057 = vmatprep.subr.mxu0 0.0
  %4058 = vmatpush1.msra.mxu0 0.0
  %4059 = vmatprep.subr.mxu0 0.0
  %4060 = vmatpush1.msra.mxu0 0.0
  %4061 = vmatprep.subr.mxu0 0.0
  %4062 = vmatpush1.msra.mxu0 0.0
  %4063 = vmatprep.subr.mxu0 0.0
  %4064 = vmatpush1.msra.mxu0 0.0
  %4065 = vmatprep.subr.mxu0 0.0
  %4066 = vmatpush1.msra.mxu0 0.0
  %4067 = vmatprep.subr.mxu0 0.0
  %4068 = vmatpush1.msra.mxu0 0.0
  %4069 = vmatprep.subr.mxu0 0.0
  %4070 = vmatpush1.msra.mxu0 0.0
  %4071 = vmatprep.subr.mxu0 0.0
  %4072 = vmatpush1.msra.mxu0 0.0
  %4073 = vmatprep.subr.mxu0 0.0
  %4074 = vmatpush1.msra.mxu0 0.0
  %4075 = vmatprep.mubr.f32.mxu0 0.0
  %4076 = vmatmul.mubr.f32.gmra.mrb[0].mxu0 %v82
  %v4077 = vpop.f32.mrb[0].mxu0
  %v4078 = vadd.f32 0.0, %v4077
  %v4079 = vpop.f32.mrb[0].mxu0
  %4080 = vmatprep.mubr.f32.mxu0 0.0
  %4081 = vmatmul.mubr.f32.gmra.mrb[0].mxu0 %v85
  %v4082 = vpop.f32.mrb[0].mxu0
  %v4083 = vadd.f32 0.0, %v4082
  %v4084 = vpop.f32.mrb[0].mxu0
  %4085 = vmatprep.mubr.f32.mxu0 0.0
  %4086 = vmatmul.mubr.f32.gmra.mrb[0].mxu0 %v88
  %v4087 = vpop.f32.mrb[0].mxu0
  %v4088 = vadd.f32 0.0, %v4087
  %v4089 = vpop.f32.mrb[0].mxu0
  %4090 = vmatprep.mubr.f32.mxu0 0.0
  %4091 = vmatmul.mubr.f32.gmra.mrb[0].mxu0 %v91
  %v4092 = vpop.f32.mrb[0].mxu0
  %v4093 = vadd.f32 0.0, %v4092
  %v4094 = vpop.f32.mrb[0].mxu0
  %4095 = vdwg.mxu0
  %v4097 = vsel %vm193, %v3996, 0
  %v4100 = vsel %vm193, %v3997, 0
  %v4103 = vsel %vm193, %v3998, 0
  %v4106 = vsel %vm193, %v3999, 0
  %4108 = vmatprep.subr.mxu0 0.0
  %4109 = vmatpush1.msra.mxu0 %v4000
  %4110 = vmatprep.subr.mxu0 0.0
  %4111 = vmatpush1.msra.mxu0 %v4001
  %4112 = vmatprep.subr.mxu0 0.0
  %4113 = vmatpush1.msra.mxu0 %v4002
  %4114 = vmatprep.subr.mxu0 0.0
  %4115 = vmatpush1.msra.mxu0 %v4003
  %4116 = vmatprep.subr.mxu0 0.0
  %4117 = vmatpush1.msra.mxu0 0.0
  %4118 = vmatprep.subr.mxu0 0.0
  %4119 = vmatpush1.msra.mxu0 0.0
  %4120 = vmatprep.subr.mxu0 0.0
  %4121 = vmatpush1.msra.mxu0 0.0
  %4122 = vmatprep.subr.mxu0 0.0
  %4123 = vmatpush1.msra.mxu0 0.0
  %4124 = vmatprep.subr.mxu0 0.0
  %4125 = vmatpush1.msra.mxu0 0.0
  %4126 = vmatprep.subr.mxu0 0.0
  %4127 = vmatpush1.msra.mxu0 0.0
  %4128 = vmatprep.subr.mxu0 0.0
  %4129 = vmatpush1.msra.mxu0 0.0
  %4130 = vmatprep.subr.mxu0 0.0
  %4131 = vmatpush1.msra.mxu0 0.0
  %4132 = vmatprep.subr.mxu0 0.0
  %4133 = vmatpush1.msra.mxu0 0.0
  %4134 = vmatprep.subr.mxu0 0.0
  %4135 = vmatpush1.msra.mxu0 0.0
  %4136 = vmatprep.subr.mxu0 0.0
  %4137 = vmatpush1.msra.mxu0 0.0
  %4138 = vmatprep.subr.mxu0 0.0
  %4139 = vmatpush1.msra.mxu0 0.0
  %4140 = vmatprep.subr.mxu0 0.0
  %4141 = vmatpush1.msra.mxu0 0.0
  %4142 = vmatprep.subr.mxu0 0.0
  %4143 = vmatpush1.msra.mxu0 0.0
  %4144 = vmatprep.subr.mxu0 0.0
  %4145 = vmatpush1.msra.mxu0 0.0
  %4146 = vmatprep.subr.mxu0 0.0
  %4147 = vmatpush1.msra.mxu0 0.0
  %4148 = vmatprep.subr.mxu0 0.0
  %4149 = vmatpush1.msra.mxu0 0.0
  %4150 = vmatprep.subr.mxu0 0.0
  %4151 = vmatpush1.msra.mxu0 0.0
  %4152 = vmatprep.subr.mxu0 0.0
  %4153 = vmatpush1.msra.mxu0 0.0
  %4154 = vmatprep.subr.mxu0 0.0
  %4155 = vmatpush1.msra.mxu0 0.0
  %4156 = vmatprep.subr.mxu0 0.0
  %4157 = vmatpush1.msra.mxu0 0.0
  %4158 = vmatprep.subr.mxu0 0.0
  %4159 = vmatpush1.msra.mxu0 0.0
  %4160 = vmatprep.subr.mxu0 0.0
  %4161 = vmatpush1.msra.mxu0 0.0
  %4162 = vmatprep.subr.mxu0 0.0
  %4163 = vmatpush1.msra.mxu0 0.0
  %4164 = vmatprep.subr.mxu0 0.0
  %4165 = vmatpush1.msra.mxu0 0.0
  %4166 = vmatprep.subr.mxu0 0.0
  %4167 = vmatpush1.msra.mxu0 0.0
  %4168 = vmatprep.subr.mxu0 0.0
  %4169 = vmatpush1.msra.mxu0 0.0
  %4170 = vmatprep.subr.mxu0 0.0
  %4171 = vmatpush1.msra.mxu0 0.0
  %4172 = vmatprep.mubr.f32.mxu0 0.0
  %4173 = vmatmul.mubr.f32.gmra.mrb[0].mxu0 %v4097
  %v4174 = vpop.f32.mrb[0].mxu0
  %v4175 = vadd.f32 %v4078, %v4174
  %v4176 = vpop.f32.mrb[0].mxu0
  %4177 = vmatprep.mubr.f32.mxu0 0.0
  %4178 = vmatmul.mubr.f32.gmra.mrb[0].mxu0 %v4100
  %v4179 = vpop.f32.mrb[0].mxu0
  %v4180 = vadd.f32 %v4083, %v4179
  %v4181 = vpop.f32.mrb[0].mxu0
  %4182 = vmatprep.mubr.f32.mxu0 0.0
  %4183 = vmatmul.mubr.f32.gmra.mrb[0].mxu0 %v4103
  %v4184 = vpop.f32.mrb[0].mxu0
  %v4185 = vadd.f32 %v4088, %v4184
  %v4186 = vpop.f32.mrb[0].mxu0
  %4187 = vmatprep.mubr.f32.mxu0 0.0
  %4188 = vmatmul.mubr.f32.gmra.mrb[0].mxu0 %v4106
  %v4189 = vpop.f32.mrb[0].mxu0
  %v4190 = vadd.f32 %v4093, %v4189
  %v4191 = vpop.f32.mrb[0].mxu0
  %4192 = vdwg.mxu0
  %v4193 = vld [vmem:[%s14] sm:$0x1]
  %v4195 = vlaneseq
  %v4196 = vshrl.u32 %v4195, 7
  %v4197 = vsub.s32 0, %v4196
  %v4198 = vrot.slane %v4193, %v4197
  %v4200 = vadd.f32 %v4175, %v4198
  %v4201 = vadd.f32 %v4180, %v4198
  %v4202 = vadd.f32 %v4185, %v4198
  %v4203 = vadd.f32 %v4190, %v4198
  %v4204 = vmax.f32 %v4200, 0.0
  %v4205 = vmax.f32 %v4201, 0.0
  %v4206 = vmax.f32 %v4202, 0.0
  %v4207 = vmax.f32 %v4203, 0.0
  %v4208 = vld [vmem:[%s15] sm:$0xff]
  %v4209 = vld [vmem:[%s15 + $0x8] sm:$0xff]
  %v4210 = vld [vmem:[%s15 + $0x10] sm:$0xff]
  %v4211 = vld [vmem:[%s15 + $0x18] sm:$0xff]
  %v4212 = vld [vmem:[%s16] sm:$0xff]
  %v4213 = vld [vmem:[%s16 + $0x8] sm:$0xff]
  %v4214 = vld [vmem:[%s16 + $0x10] sm:$0xff]
  %v4215 = vld [vmem:[%s16 + $0x18] sm:$0x1]
  %v4217 = vsel %vm93, %v4215, 0
  %4219 = vmatprep.subr.mxu0 0.0
  %4220 = vmatpush1.msra.mxu0 %v4212
  %4221 = vmatprep.subr.mxu0 0.0
  %4222 = vmatpush1.msra.mxu0 %v4213
  %4223 = vmatprep.subr.mxu0 0.0
  %4224 = vmatpush1.msra.mxu0 %v4214
  %4225 = vmatprep.subr.mxu0 0.0
  %4226 = vmatpush1.msra.mxu0 %v4217
  %4227 = vmatprep.subr.mxu0 0.0
  %4228 = vmatpush1.msra.mxu0 0.0
  %4229 = vmatprep.subr.mxu0 0.0
  %4230 = vmatpush1.msra.mxu0 0.0
  %4231 = vmatprep.subr.mxu0 0.0
  %4232 = vmatpush1.msra.mxu0 0.0
  %4233 = vmatprep.subr.mxu0 0.0
  %4234 = vmatpush1.msra.mxu0 0.0
  %4235 = vmatprep.subr.mxu0 0.0
  %4236 = vmatpush1.msra.mxu0 0.0
  %4237 = vmatprep.subr.mxu0 0.0
  %4238 = vmatpush1.msra.mxu0 0.0
  %4239 = vmatprep.subr.mxu0 0.0
  %4240 = vmatpush1.msra.mxu0 0.0
  %4241 = vmatprep.subr.mxu0 0.0
  %4242 = vmatpush1.msra.mxu0 0.0
  %4243 = vmatprep.subr.mxu0 0.0
  %4244 = vmatpush1.msra.mxu0 0.0
  %4245 = vmatprep.subr.mxu0 0.0
  %4246 = vmatpush1.msra.mxu0 0.0
  %4247 = vmatprep.subr.mxu0 0.0
  %4248 = vmatpush1.msra.mxu0 0.0
  %4249 = vmatprep.subr.mxu0 0.0
  %4250 = vmatpush1.msra.mxu0 0.0
  %4251 = vmatprep.subr.mxu0 0.0
  %4252 = vmatpush1.msra.mxu0 0.0
  %4253 = vmatprep.subr.mxu0 0.0
  %4254 = vmatpush1.msra.mxu0 0.0
  %4255 = vmatprep.subr.mxu0 0.0
  %4256 = vmatpush1.msra.mxu0 0.0
  %4257 = vmatprep.subr.mxu0 0.0
  %4258 = vmatpush1.msra.mxu0 0.0
  %4259 = vmatprep.subr.mxu0 0.0
  %4260 = vmatpush1.msra.mxu0 0.0
  %4261 = vmatprep.subr.mxu0 0.0
  %4262 = vmatpush1.msra.mxu0 0.0
  %4263 = vmatprep.subr.mxu0 0.0
  %4264 = vmatpush1.msra.mxu0 0.0
  %4265 = vmatprep.subr.mxu0 0.0
  %4266 = vmatpush1.msra.mxu0 0.0
  %4267 = vmatprep.subr.mxu0 0.0
  %4268 = vmatpush1.msra.mxu0 0.0
  %4269 = vmatprep.subr.mxu0 0.0
  %4270 = vmatpush1.msra.mxu0 0.0
  %4271 = vmatprep.subr.mxu0 0.0
  %4272 = vmatpush1.msra.mxu0 0.0
  %4273 = vmatprep.subr.mxu0 0.0
  %4274 = vmatpush1.msra.mxu0 0.0
  %4275 = vmatprep.subr.mxu0 0.0
  %4276 = vmatpush1.msra.mxu0 0.0
  %4277 = vmatprep.subr.mxu0 0.0
  %4278 = vmatpush1.msra.mxu0 0.0
  %4279 = vmatprep.subr.mxu0 0.0
  %4280 = vmatpush1.msra.mxu0 0.0
  %4281 = vmatprep.subr.mxu0 0.0
  %4282 = vmatpush1.msra.mxu0 0.0
  %4283 = vmatprep.mubr.f32.mxu0 0.0
  %4284 = vmatmul.mubr.f32.gmra.mrb[0].mxu0 %v82
  %v4285 = vpop.f32.mrb[0].mxu0
  %v4286 = vadd.f32 0.0, %v4285
  %v4287 = vpop.f32.mrb[0].mxu0
  %4288 = vmatprep.mubr.f32.mxu0 0.0
  %4289 = vmatmul.mubr.f32.gmra.mrb[0].mxu0 %v85
  %v4290 = vpop.f32.mrb[0].mxu0
  %v4291 = vadd.f32 0.0, %v4290
  %v4292 = vpop.f32.mrb[0].mxu0
  %4293 = vmatprep.mubr.f32.mxu0 0.0
  %4294 = vmatmul.mubr.f32.gmra.mrb[0].mxu0 %v88
  %v4295 = vpop.f32.mrb[0].mxu0
  %v4296 = vadd.f32 0.0, %v4295
  %v4297 = vpop.f32.mrb[0].mxu0
  %4298 = vmatprep.mubr.f32.mxu0 0.0
  %4299 = vmatmul.mubr.f32.gmra.mrb[0].mxu0 %v91
  %v4300 = vpop.f32.mrb[0].mxu0
  %v4301 = vadd.f32 0.0, %v4300
  %v4302 = vpop.f32.mrb[0].mxu0
  %4303 = vdwg.mxu0
  %v4305 = vsel %vm193, %v4204, 0
  %v4308 = vsel %vm193, %v4205, 0
  %v4311 = vsel %vm193, %v4206, 0
  %v4314 = vsel %vm193, %v4207, 0
  %4316 = vmatprep.subr.mxu0 0.0
  %4317 = vmatpush1.msra.mxu0 %v4208
  %4318 = vmatprep.subr.mxu0 0.0
  %4319 = vmatpush1.msra.mxu0 %v4209
  %4320 = vmatprep.subr.mxu0 0.0
  %4321 = vmatpush1.msra.mxu0 %v4210
  %4322 = vmatprep.subr.mxu0 0.0
  %4323 = vmatpush1.msra.mxu0 %v4211
  %4324 = vmatprep.subr.mxu0 0.0
  %4325 = vmatpush1.msra.mxu0 0.0
  %4326 = vmatprep.subr.mxu0 0.0
  %4327 = vmatpush1.msra.mxu0 0.0
  %4328 = vmatprep.subr.mxu0 0.0
  %4329 = vmatpush1.msra.mxu0 0.0
  %4330 = vmatprep.subr.mxu0 0.0
  %4331 = vmatpush1.msra.mxu0 0.0
  %4332 = vmatprep.subr.mxu0 0.0
  %4333 = vmatpush1.msra.mxu0 0.0
  %4334 = vmatprep.subr.mxu0 0.0
  %4335 = vmatpush1.msra.mxu0 0.0
  %4336 = vmatprep.subr.mxu0 0.0
  %4337 = vmatpush1.msra.mxu0 0.0
  %4338 = vmatprep.subr.mxu0 0.0
  %4339 = vmatpush1.msra.mxu0 0.0
  %4340 = vmatprep.subr.mxu0 0.0
  %4341 = vmatpush1.msra.mxu0 0.0
  %4342 = vmatprep.subr.mxu0 0.0
  %4343 = vmatpush1.msra.mxu0 0.0
  %4344 = vmatprep.subr.mxu0 0.0
  %4345 = vmatpush1.msra.mxu0 0.0
  %4346 = vmatprep.subr.mxu0 0.0
  %4347 = vmatpush1.msra.mxu0 0.0
  %4348 = vmatprep.subr.mxu0 0.0
  %4349 = vmatpush1.msra.mxu0 0.0
  %4350 = vmatprep.subr.mxu0 0.0
  %4351 = vmatpush1.msra.mxu0 0.0
  %4352 = vmatprep.subr.mxu0 0.0
  %4353 = vmatpush1.msra.mxu0 0.0
  %4354 = vmatprep.subr.mxu0 0.0
  %4355 = vmatpush1.msra.mxu0 0.0
  %4356 = vmatprep.subr.mxu0 0.0
  %4357 = vmatpush1.msra.mxu0 0.0
  %4358 = vmatprep.subr.mxu0 0.0
  %4359 = vmatpush1.msra.mxu0 0.0
  %4360 = vmatprep.subr.mxu0 0.0
  %4361 = vmatpush1.msra.mxu0 0.0
  %4362 = vmatprep.subr.mxu0 0.0
  %4363 = vmatpush1.msra.mxu0 0.0
  %4364 = vmatprep.subr.mxu0 0.0
  %4365 = vmatpush1.msra.mxu0 0.0
  %4366 = vmatprep.subr.mxu0 0.0
  %4367 = vmatpush1.msra.mxu0 0.0
  %4368 = vmatprep.subr.mxu0 0.0
  %4369 = vmatpush1.msra.mxu0 0.0
  %4370 = vmatprep.subr.mxu0 0.0
  %4371 = vmatpush1.msra.mxu0 0.0
  %4372 = vmatprep.subr.mxu0 0.0
  %4373 = vmatpush1.msra.mxu0 0.0
  %4374 = vmatprep.subr.mxu0 0.0
  %4375 = vmatpush1.msra.mxu0 0.0
  %4376 = vmatprep.subr.mxu0 0.0
  %4377 = vmatpush1.msra.mxu0 0.0
  %4378 = vmatprep.subr.mxu0 0.0
  %4379 = vmatpush1.msra.mxu0 0.0
  %4380 = vmatprep.mubr.f32.mxu0 0.0
  %4381 = vmatmul.mubr.f32.gmra.mrb[0].mxu0 %v4305
  %v4382 = vpop.f32.mrb[0].mxu0
  %v4383 = vadd.f32 %v4286, %v4382
  %v4384 = vpop.f32.mrb[0].mxu0
  %4385 = vmatprep.mubr.f32.mxu0 0.0
  %4386 = vmatmul.mubr.f32.gmra.mrb[0].mxu0 %v4308
  %v4387 = vpop.f32.mrb[0].mxu0
  %v4388 = vadd.f32 %v4291, %v4387
  %v4389 = vpop.f32.mrb[0].mxu0
  %4390 = vmatprep.mubr.f32.mxu0 0.0
  %4391 = vmatmul.mubr.f32.gmra.mrb[0].mxu0 %v4311
  %v4392 = vpop.f32.mrb[0].mxu0
  %v4393 = vadd.f32 %v4296, %v4392
  %v4394 = vpop.f32.mrb[0].mxu0
  %4395 = vmatprep.mubr.f32.mxu0 0.0
  %4396 = vmatmul.mubr.f32.gmra.mrb[0].mxu0 %v4314
  %v4397 = vpop.f32.mrb[0].mxu0
  %v4398 = vadd.f32 %v4301, %v4397
  %v4399 = vpop.f32.mrb[0].mxu0
  %4400 = vdwg.mxu0
  %v4401 = vld [vmem:[%s17] sm:$0x1]
  %v4403 = vlaneseq
  %v4404 = vshrl.u32 %v4403, 7
  %v4405 = vsub.s32 0, %v4404
  %v4406 = vrot.slane %v4401, %v4405
  %v4408 = vadd.f32 %v4383, %v4406
  %v4409 = vadd.f32 %v4388, %v4406
  %v4410 = vadd.f32 %v4393, %v4406
  %v4411 = vadd.f32 %v4398, %v4406
  %v4412 = vmax.f32 %v4408, 0.0
  %v4413 = vmax.f32 %v4409, 0.0
  %v4414 = vmax.f32 %v4410, 0.0
  %v4415 = vmax.f32 %v4411, 0.0
  %v4416 = vld [vmem:[%s18] sm:$0xff]
  %v4417 = vld [vmem:[%s18 + $0x8] sm:$0xff]
  %v4418 = vld [vmem:[%s18 + $0x10] sm:$0xff]
  %v4419 = vld [vmem:[%s18 + $0x18] sm:$0xff]
  %v4420 = vld [vmem:[%s19] sm:$0x1]
  %v4422 = vlaneseq
  %v4423 = vshrl.u32 %v4422, 7
  %v4424 = vsub.s32 0, %v4423
  %v4425 = vrot.slane %v4420, %v4424
  %v4428 = vsel %vm193, %v4412, 0
  %v4431 = vsel %vm193, %v4413, 0
  %v4434 = vsel %vm193, %v4414, 0
  %v4437 = vsel %vm193, %v4415, 0
  %4439 = vmatprep.subr.mxu0 0.0
  %4440 = vmatpush1.msra.mxu0 %v4416
  %4441 = vmatprep.subr.mxu0 0.0
  %4442 = vmatpush1.msra.mxu0 %v4417
  %4443 = vmatprep.subr.mxu0 0.0
  %4444 = vmatpush1.msra.mxu0 %v4418
  %4445 = vmatprep.subr.mxu0 0.0
  %4446 = vmatpush1.msra.mxu0 %v4419
  %4447 = vmatprep.subr.mxu0 0.0
  %4448 = vmatpush1.msra.mxu0 0.0
  %4449 = vmatprep.subr.mxu0 0.0
  %4450 = vmatpush1.msra.mxu0 0.0
  %4451 = vmatprep.subr.mxu0 0.0
  %4452 = vmatpush1.msra.mxu0 0.0
  %4453 = vmatprep.subr.mxu0 0.0
  %4454 = vmatpush1.msra.mxu0 0.0
  %4455 = vmatprep.subr.mxu0 0.0
  %4456 = vmatpush1.msra.mxu0 0.0
  %4457 = vmatprep.subr.mxu0 0.0
  %4458 = vmatpush1.msra.mxu0 0.0
  %4459 = vmatprep.subr.mxu0 0.0
  %4460 = vmatpush1.msra.mxu0 0.0
  %4461 = vmatprep.subr.mxu0 0.0
  %4462 = vmatpush1.msra.mxu0 0.0
  %4463 = vmatprep.subr.mxu0 0.0
  %4464 = vmatpush1.msra.mxu0 0.0
  %4465 = vmatprep.subr.mxu0 0.0
  %4466 = vmatpush1.msra.mxu0 0.0
  %4467 = vmatprep.subr.mxu0 0.0
  %4468 = vmatpush1.msra.mxu0 0.0
  %4469 = vmatprep.subr.mxu0 0.0
  %4470 = vmatpush1.msra.mxu0 0.0
  %4471 = vmatprep.subr.mxu0 0.0
  %4472 = vmatpush1.msra.mxu0 0.0
  %4473 = vmatprep.subr.mxu0 0.0
  %4474 = vmatpush1.msra.mxu0 0.0
  %4475 = vmatprep.subr.mxu0 0.0
  %4476 = vmatpush1.msra.mxu0 0.0
  %4477 = vmatprep.subr.mxu0 0.0
  %4478 = vmatpush1.msra.mxu0 0.0
  %4479 = vmatprep.subr.mxu0 0.0
  %4480 = vmatpush1.msra.mxu0 0.0
  %4481 = vmatprep.subr.mxu0 0.0
  %4482 = vmatpush1.msra.mxu0 0.0
  %4483 = vmatprep.subr.mxu0 0.0
  %4484 = vmatpush1.msra.mxu0 0.0
  %4485 = vmatprep.subr.mxu0 0.0
  %4486 = vmatpush1.msra.mxu0 0.0
  %4487 = vmatprep.subr.mxu0 0.0
  %4488 = vmatpush1.msra.mxu0 0.0
  %4489 = vmatprep.subr.mxu0 0.0
  %4490 = vmatpush1.msra.mxu0 0.0
  %4491 = vmatprep.subr.mxu0 0.0
  %4492 = vmatpush1.msra.mxu0 0.0
  %4493 = vmatprep.subr.mxu0 0.0
  %4494 = vmatpush1.msra.mxu0 0.0
  %4495 = vmatprep.subr.mxu0 0.0
  %4496 = vmatpush1.msra.mxu0 0.0
  %4497 = vmatprep.subr.mxu0 0.0
  %4498 = vmatpush1.msra.mxu0 0.0
  %4499 = vmatprep.subr.mxu0 0.0
  %4500 = vmatpush1.msra.mxu0 0.0
  %4501 = vmatprep.subr.mxu0 0.0
  %4502 = vmatpush1.msra.mxu0 0.0
  %4503 = vmatprep.mubr.f32.mxu0 0.0
  %4504 = vmatmul.mubr.f32.gmra.mrb[0].mxu0 %v4428
  %v4505 = vpop.f32.mrb[0].mxu0
  %v4506 = vadd.f32 %v4425, %v4505
  %v4507 = vpop.f32.mrb[0].mxu0
  %4508 = vmatprep.mubr.f32.mxu0 0.0
  %4509 = vmatmul.mubr.f32.gmra.mrb[0].mxu0 %v4431
  %v4510 = vpop.f32.mrb[0].mxu0
  %v4511 = vadd.f32 %v4425, %v4510
  %v4512 = vpop.f32.mrb[0].mxu0
  %4513 = vmatprep.mubr.f32.mxu0 0.0
  %4514 = vmatmul.mubr.f32.gmra.mrb[0].mxu0 %v4434
  %v4515 = vpop.f32.mrb[0].mxu0
  %v4516 = vadd.f32 %v4425, %v4515
  %v4517 = vpop.f32.mrb[0].mxu0
  %4518 = vmatprep.mubr.f32.mxu0 0.0
  %4519 = vmatmul.mubr.f32.gmra.mrb[0].mxu0 %v4437
  %v4520 = vpop.f32.mrb[0].mxu0
  %v4521 = vadd.f32 %v4425, %v4520
  %v4522 = vpop.f32.mrb[0].mxu0
  %4523 = vdwg.mxu0
  %vm4524 = vcmask 130048
  %4525 = vst.msk [vmem:[%s20] sm:$0xff] %vm4524, %v4506
  %4526 = vst.msk [vmem:[%s20 + $0x8] sm:$0xff] %vm4524, %v4511
  %4527 = vst.msk [vmem:[%s20 + $0x10] sm:$0xff] %vm4524, %v4516
  %4528 = vst.msk [vmem:[%s20 + $0x18] sm:$0xff] %vm4524, %v4521
  // Predicated region
  $region82: #{wavernn_forward.3} parent=0 // pred_check
    _
  $region83: #{wavernn_forward.3} parent=0 // pred_check_branch
    %4530 = sbr.rel (0) target = $region85
  $region84: #{wavernn_forward.3} parent=0 // pred_region
    _
  $region85: #{wavernn_forward.3} parent=0 // pred_fallthru
    _
  // Predicated region
  $region86: #{wavernn_forward.3} parent=0 // pred_check
    _
  $region87: #{wavernn_forward.3} parent=0 // pred_check_branch
    %4532 = sbr.rel (0) target = $region89
  $region88: #{wavernn_forward.3} parent=0 // pred_region
    _
  $region89: #{wavernn_forward.3} parent=0 // pred_fallthru
    _

</llo_original>
